<compile_context>
chip_gen: v7x
topology: tpu7x:2x2x1
jax: 0.10.0
libtpu: 0.0.40
codegen_flags: <defaults>
</compile_context>

<pallas_src>
import jax
import jax.numpy as jnp
from jax import lax
from jax.experimental import pallas as pl
from jax.experimental.pallas import tpu as pltpu


def _sigmoid(x):
    return jax.nn.sigmoid(x)


def _fuse_gates(w4):
    """(4, in, H) per-gate weights -> (in, 4H) fused, gate order [i|f|g|o]."""
    four, din, h = w4.shape
    return jnp.transpose(w4, (1, 0, 2)).reshape(din, four * h)


# ----------------------- fused encoder+decoder kernel ---------------------- #
def seq2seq_kernel(src_ref, emb_ref,
                   enc_w_ih_ref, enc_w_hh_ref, enc_b_ref,
                   wa_h_ref, wa_e_ref, ba_ref, v_ref,
                   w_emb_ref, b_emb_ref,
                   w_gate_hw_ref, w_out_hw_ref,
                   out_ref,
                   enc_out_ref, xp_ref, base_ref):
    B, S, D = src_ref.shape
    _, T, E = emb_ref.shape
    H = enc_w_hh_ref.shape[0]
    G = 4 * H
    A = wa_h_ref.shape[-1]
    OUTP = out_ref.shape[-1]
    f32 = jnp.float32

    # ------------------------------ encoder -------------------------------- #
    # Hoisted batched input projection: one (B*S, D) x (D, 4H) matmul instead
    # of 4 sublane-starved dots per recurrent step; only h/c terms stay serial.
    src2d = src_ref[...].reshape(B * S, D)
    xp = (jnp.dot(src2d, enc_w_ih_ref[...], preferred_element_type=f32)
          + enc_b_ref[...])                                   # (B*S, 4H)
    xp_ref[...] = xp.reshape(B, S, G)

    w_hh = enc_w_hh_ref[...]                                  # (H, 4H)

    def enc_step(t, carry):
        h, c = carry
        xp_t = xp_ref[:, pl.ds(t, 1), :][:, 0, :]             # (B, 4H)
        gates = xp_t + jnp.dot(h, w_hh, preferred_element_type=f32)
        i = _sigmoid(gates[:, 0 * H:1 * H])
        f = _sigmoid(gates[:, 1 * H:2 * H])
        g = jnp.tanh(gates[:, 2 * H:3 * H])
        o = _sigmoid(gates[:, 3 * H:4 * H])
        c_new = f * c + i * g
        h_new = o * jnp.tanh(c_new)
        enc_out_ref[:, pl.ds(t, 1), :] = h_new[:, None, :]
        return (h_new, c_new)

    h0 = jnp.zeros((B, H), f32)
    c0 = jnp.zeros((B, H), f32)
    h_enc, c_enc = lax.fori_loop(0, S, enc_step, (h0, c0), unroll=True)

    # ------------------------------ decoder -------------------------------- #
    # Single fused hoisted embedded-input projection: columns [gates | logits].
    emb2d = emb_ref[...].reshape(B * T, E)
    base = (jnp.dot(emb2d, w_emb_ref[...], preferred_element_type=f32)
            + b_emb_ref[...])                                 # (B*T, 4H+OUTP)
    base_ref[...] = base.reshape(B, T, G + OUTP)

    # Loop-invariant attention terms (hoisted; JAX does not CSE these).
    enc_out = enc_out_ref[...]                                # (B, S, H)
    enc_proj_b = (jnp.dot(enc_out.reshape(B * S, H), wa_e_ref[...],
                          preferred_element_type=f32).reshape(B, S, A)
                  + ba_ref[...][None, :, :])                  # (B, S, A)
    v_b = v_ref[...][None, :, :]                              # (1, 1, A)

    wa_h = wa_h_ref[...]                                      # (H, A)
    w_gate_hw = w_gate_hw_ref[...]                            # (2H, 4H) [weighted|h]
    w_out_hw = w_out_hw_ref[...]                              # (2H, OUTP) [h_new|weighted]

    def dec_step(t, carry):
        h, c = carry

        # ---- additive attention: softmax over source positions ----
        h_proj = jnp.dot(h, wa_h, preferred_element_type=f32)            # (B, A)
        energy = jnp.tanh(h_proj[:, None, :] + enc_proj_b)               # (B, S, A)
        scores = jnp.sum(energy * v_b, axis=-1)                          # (B, S)
        scores = scores - jnp.max(scores, axis=-1, keepdims=True)
        exp_s = jnp.exp(scores)
        attn = exp_s * pl.reciprocal(
            jnp.sum(exp_s, axis=-1, keepdims=True), approx=True)         # (B, S)
        weighted = jnp.sum(attn[:, :, None] * enc_out, axis=1)           # (B, H)

        # ---- fused LSTM cell: gates = emb_base[t] + [weighted|h] @ W ----
        base_t = base_ref[:, pl.ds(t, 1), :][:, 0, :]                    # (B, 4H+OUTP)
        gb_t = base_t[:, :G]                                             # (B, 4H)
        lb_t = base_t[:, G:]                                             # (B, OUTP)
        wh = jnp.concatenate([weighted, h], axis=-1)                     # (B, 2H)
        gates = gb_t + jnp.dot(wh, w_gate_hw, preferred_element_type=f32)
        i = _sigmoid(gates[:, 0 * H:1 * H])
        f = _sigmoid(gates[:, 1 * H:2 * H])
        g = jnp.tanh(gates[:, 2 * H:3 * H])
        o = _sigmoid(gates[:, 3 * H:4 * H])
        c_new = f * c + i * g
        h_new = o * jnp.tanh(c_new)

        # ---- fused, lane-dense output projection (OUT padded to 128) ----
        hw = jnp.concatenate([h_new, weighted], axis=-1)                 # (B, 2H)
        logits = lb_t + jnp.dot(hw, w_out_hw, preferred_element_type=f32)
        out_ref[:, pl.ds(t, 1), :] = logits[:, None, :]
        return (h_new, c_new)

    lax.fori_loop(0, T, dec_step, (h_enc, c_enc), unroll=True)


# ------------------------------- wrapper ----------------------------------- #
def init_params(key, input_dim, emb_dim, hid_dim, attn_dim, output_dim):
    ks = jax.random.split(key, 16)

    def w(k, shape, scale=0.1):
        return (scale * jax.random.normal(k, shape)).astype(jnp.float32)

    return dict(
        enc_w_ih=w(ks[0], (4, input_dim, hid_dim)),
        enc_w_hh=w(ks[1], (4, hid_dim, hid_dim)),
        enc_b=w(ks[2], (4, hid_dim)),
        embedding=w(ks[3], (output_dim, emb_dim)),
        attn_w_h=w(ks[4], (hid_dim, attn_dim)),
        attn_w_e=w(ks[5], (hid_dim, attn_dim)),
        attn_b=w(ks[6], (1, attn_dim)),
        attn_v=w(ks[7], (1, attn_dim)),
        dec_w_ih_e=w(ks[8], (4, emb_dim, hid_dim)),
        dec_w_ih_w=w(ks[9], (4, hid_dim, hid_dim)),
        dec_w_hh=w(ks[10], (4, hid_dim, hid_dim)),
        dec_b=w(ks[11], (4, hid_dim)),
        out_w_h=w(ks[12], (hid_dim, output_dim)),
        out_w_w=w(ks[13], (hid_dim, output_dim)),
        out_w_e=w(ks[14], (emb_dim, output_dim)),
        out_b=w(ks[15], (1, output_dim)),
    )


def encoder_decoder_attn_forward(params, src, trg, teacher_forcing_ratio=0.5):
    B, S, _ = src.shape
    _, T = trg.shape
    H = params["enc_w_hh"].shape[-1]
    OUT = params["out_b"].shape[-1]
    OUTP = 128 * pl.cdiv(OUT, 128)          # lane-dense padded vocab width
    f32 = jnp.float32

    # ---- pack weights: fused gates (4H = 128 lane-dense), concat h/weighted,
    #      pad output projection to OUTP lanes, fuse both emb projections ----
    enc_w_ih = _fuse_gates(params["enc_w_ih"])                    # (D, 4H)
    enc_w_hh = _fuse_gates(params["enc_w_hh"])                    # (H, 4H)
    enc_b = params["enc_b"].reshape(1, 4 * H)

    dec_w_x = _fuse_gates(params["dec_w_ih_e"])                   # (E, 4H)
    dec_w_hw = jnp.concatenate(                                   # (2H, 4H)
        [_fuse_gates(params["dec_w_ih_w"]),                       # rows 0:H  -> weighted
         _fuse_gates(params["dec_w_hh"])], axis=0)                # rows H:2H -> h
    dec_b = params["dec_b"].reshape(1, 4 * H)

    pad = [(0, 0), (0, OUTP - OUT)]
    out_w_x = jnp.pad(params["out_w_e"], pad)                     # (E, OUTP)
    out_w_hw = jnp.pad(jnp.concatenate([params["out_w_h"],        # rows 0:H  -> h_new
                                        params["out_w_w"]],       # rows H:2H -> weighted
                                       axis=0), pad)              # (2H, OUTP)
    out_b = jnp.pad(params["out_b"], pad)                         # (1, OUTP)

    # Fused embedded-input projection: columns [gate base (4H) | logit base (OUTP)].
    w_emb = jnp.concatenate([dec_w_x, out_w_x], axis=1)           # (E, 4H+OUTP)
    b_emb = jnp.concatenate([dec_b, out_b], axis=1)               # (1, 4H+OUTP)

    # Reference loop semantics: decoder input at step 0 is trg[:, 0]; at step
    # t >= 1 it is trg[:, t-1]; logits are produced for all T steps.
    # TODO(synk): the torch.rand(1) teacher-forcing draw never changes which
    # token is fed in the reference forward, so it is intentionally omitted.
    tok = jnp.concatenate([trg[:, :1], trg[:, : T - 1]], axis=1)      # (B, T)
    emb = jnp.take(params["embedding"], tok, axis=0)                  # (B, T, E)

    vmem = pl.BlockSpec(memory_space=pltpu.MemorySpace.VMEM)

    # Gridless single-core launch; everything (weights + activations) fits in
    # VMEM many times over, so a single fused call removes the second launch
    # and the HBM round-trip of encoder outputs / final state.
    out_pad = pl.pallas_call(
        seq2seq_kernel,
        out_shape=jax.ShapeDtypeStruct((B, T, OUTP), f32),
        in_specs=[vmem] * 13,
        out_specs=vmem,
        scratch_shapes=[pltpu.VMEM((B, S, H), f32),               # encoder outputs
                        pltpu.VMEM((B, S, 4 * H), f32),           # encoder input proj
                        pltpu.VMEM((B, T, 4 * H + OUTP), f32)],   # decoder emb proj
    )(src, emb,
      enc_w_ih, enc_w_hh, enc_b,
      params["attn_w_h"], params["attn_w_e"], params["attn_b"], params["attn_v"],
      w_emb, b_emb,
      dec_w_hw, out_w_hw)

    return out_pad[:, :, :OUT]


if __name__ == "__main__":
    key = jax.random.PRNGKey(0)
    kp, ksrc, ktrg = jax.random.split(key, 3)

    B, S_SRC, D_IN, T_TRG = 2, 16, 8, 8        # batch, src_len, eeg feat dim, trg_len
    EMB, HID, ATTN, OUT = 16, 32, 32, 40       # emb dim, hidden, attn dim, phoneme vocab

    params = init_params(kp, D_IN, EMB, HID, ATTN, OUT)
    src = jax.random.normal(ksrc, (B, S_SRC, D_IN), dtype=jnp.float32)
    trg = jax.random.randint(ktrg, (B, T_TRG), 0, OUT, dtype=jnp.int32)

    out = encoder_decoder_attn_forward(params, src, trg)
    out = jax.block_until_ready(out)
    assert out.shape == (B, T_TRG, OUT)
    assert bool(jnp.all(jnp.isfinite(out)))
    print("KERNEL_OK")
</pallas_src>

<mosaic_0001>
module attributes {stable_mosaic.version = 11 : i64} {
  func.func @seq2seq_kernel(%arg0: memref<2x16x8xf32, #tpu.memory_space<vmem>>, %arg1: memref<2x8x16xf32, #tpu.memory_space<vmem>>, %arg2: memref<8x128xf32, #tpu.memory_space<vmem>>, %arg3: memref<32x128xf32, #tpu.memory_space<vmem>>, %arg4: memref<1x128xf32, #tpu.memory_space<vmem>>, %arg5: memref<32x32xf32, #tpu.memory_space<vmem>>, %arg6: memref<32x32xf32, #tpu.memory_space<vmem>>, %arg7: memref<1x32xf32, #tpu.memory_space<vmem>>, %arg8: memref<1x32xf32, #tpu.memory_space<vmem>>, %arg9: memref<16x256xf32, #tpu.memory_space<vmem>>, %arg10: memref<1x256xf32, #tpu.memory_space<vmem>>, %arg11: memref<64x128xf32, #tpu.memory_space<vmem>>, %arg12: memref<64x128xf32, #tpu.memory_space<vmem>>, %arg13: memref<2x8x128xf32, #tpu.memory_space<vmem>>, %arg14: memref<2x16x32xf32, #tpu.memory_space<vmem>>, %arg15: memref<2x16x128xf32, #tpu.memory_space<vmem>>, %arg16: memref<2x8x256xf32, #tpu.memory_space<vmem>>) attributes {dimension_semantics = [], scalar_prefetch = 0 : i64, scratch_operands = 3 : i64, tpu.core_type = #tpu.core_type<tc>} {
    %c0 = arith.constant 0 : index
    %c0_0 = arith.constant 0 : index
    %c0_1 = arith.constant 0 : index
    %0 = vector.load %arg0[%c0, %c0_0, %c0_1] : memref<2x16x8xf32, #tpu.memory_space<vmem>>, vector<2x16x8xf32>
    %1 = vector.shape_cast %0 : vector<2x16x8xf32> to vector<32x8xf32>
    %c0_2 = arith.constant 0 : index
    %c0_3 = arith.constant 0 : index
    %2 = vector.load %arg2[%c0_2, %c0_3] : memref<8x128xf32, #tpu.memory_space<vmem>>, vector<8x128xf32>
    %cst = arith.constant dense<0.000000e+00> : vector<32x128xf32>
    %3 = tpu.matmul %1, %2, %cst {dimension_numbers = #tpu.dot_dimension_numbers<[1], [0], [0], [1], [0, 0, 1, 1], [], []>} : vector<32x8xf32>, vector<8x128xf32>, vector<32x128xf32> -> vector<32x128xf32>
    %c0_4 = arith.constant 0 : index
    %c0_5 = arith.constant 0 : index
    %4 = vector.load %arg4[%c0_4, %c0_5] : memref<1x128xf32, #tpu.memory_space<vmem>>, vector<1x128xf32>
    %5 = vector.broadcast %4 : vector<1x128xf32> to vector<32x128xf32>
    %6 = arith.addf %3, %5 : vector<32x128xf32>
    %7 = vector.shape_cast %6 : vector<32x128xf32> to vector<2x16x128xf32>
    %c0_6 = arith.constant 0 : index
    %c0_7 = arith.constant 0 : index
    %c0_8 = arith.constant 0 : index
    %8 = vector.load %arg15[%c0_6, %c0_7, %c0_8] : memref<2x16x128xf32, #tpu.memory_space<vmem>>, vector<2x16x128xf32>
    tpu.vector_store %arg15[%c0_6, %c0_7, %c0_8], %7 {strides = array<i32>} : memref<2x16x128xf32, #tpu.memory_space<vmem>>, vector<2x16x128xf32>,
    %c0_9 = arith.constant 0 : index
    %c0_10 = arith.constant 0 : index
    %9 = vector.load %arg3[%c0_9, %c0_10] : memref<32x128xf32, #tpu.memory_space<vmem>>, vector<32x128xf32>
    %cst_11 = arith.constant 0.000000e+00 : f32
    %10 = vector.broadcast %cst_11 : f32 to vector<2x32xf32>
    %cst_12 = arith.constant 0.000000e+00 : f32
    %11 = vector.broadcast %cst_12 : f32 to vector<2x32xf32>
    %c0_i32 = arith.constant 0 : i32
    %c0_13 = arith.constant 0 : index
    %12 = arith.index_cast %c0_i32 : i32 to index
    %c0_14 = arith.constant 0 : index
    %13 = vector.load %arg15[%c0_13, %12, %c0_14] : memref<2x16x128xf32, #tpu.memory_space<vmem>>, vector<2x1x128xf32>
    %14 = vector.shape_cast %13 : vector<2x1x128xf32> to vector<2x128xf32>
    %cst_15 = arith.constant dense<0.000000e+00> : vector<2x128xf32>
    %15 = tpu.matmul %10, %9, %cst_15 {dimension_numbers = #tpu.dot_dimension_numbers<[1], [0], [0], [1], [0, 0, 1, 1], [], []>} : vector<2x32xf32>, vector<32x128xf32>, vector<2x128xf32> -> vector<2x128xf32>
    %16 = arith.addf %14, %15 : vector<2x128xf32>
    %17 = vector.extract_strided_slice %16 {offsets = [0, 0], sizes = [2, 32], strides = [1, 1]} : vector<2x128xf32> to vector<2x32xf32>
    %18 = arith.negf %17 : vector<2x32xf32>
    %19 = math.exp %18 : vector<2x32xf32>
    %cst_16 = arith.constant 1.000000e+00 : f32
    %20 = vector.broadcast %cst_16 : f32 to vector<2x32xf32>
    %21 = arith.addf %20, %19 : vector<2x32xf32>
    %22 = arith.divf %20, %21 : vector<2x32xf32>
    %23 = vector.extract_strided_slice %16 {offsets = [0, 32], sizes = [2, 32], strides = [1, 1]} : vector<2x128xf32> to vector<2x32xf32>
    %24 = arith.negf %23 : vector<2x32xf32>
    %25 = math.exp %24 : vector<2x32xf32>
    %cst_17 = arith.constant 1.000000e+00 : f32
    %26 = vector.broadcast %cst_17 : f32 to vector<2x32xf32>
    %27 = arith.addf %26, %25 : vector<2x32xf32>
    %28 = arith.divf %26, %27 : vector<2x32xf32>
    %29 = vector.extract_strided_slice %16 {offsets = [0, 64], sizes = [2, 32], strides = [1, 1]} : vector<2x128xf32> to vector<2x32xf32>
    %30 = math.tanh %29 : vector<2x32xf32>
    %31 = vector.extract_strided_slice %16 {offsets = [0, 96], sizes = [2, 32], strides = [1, 1]} : vector<2x128xf32> to vector<2x32xf32>
    %32 = arith.negf %31 : vector<2x32xf32>
    %33 = math.exp %32 : vector<2x32xf32>
    %cst_18 = arith.constant 1.000000e+00 : f32
    %34 = vector.broadcast %cst_18 : f32 to vector<2x32xf32>
    %35 = arith.addf %34, %33 : vector<2x32xf32>
    %36 = arith.divf %34, %35 : vector<2x32xf32>
    %37 = arith.mulf %28, %11 : vector<2x32xf32>
    %38 = arith.mulf %22, %30 : vector<2x32xf32>
    %39 = arith.addf %37, %38 : vector<2x32xf32>
    %40 = math.tanh %39 : vector<2x32xf32>
    %41 = arith.mulf %36, %40 : vector<2x32xf32>
    %42 = vector.shape_cast %41 : vector<2x32xf32> to vector<2x1x32xf32>
    %c0_19 = arith.constant 0 : index
    %43 = arith.index_cast %c0_i32 : i32 to index
    %c0_20 = arith.constant 0 : index
    %44 = vector.load %arg14[%c0_19, %43, %c0_20] : memref<2x16x32xf32, #tpu.memory_space<vmem>>, vector<2x1x32xf32>
    tpu.vector_store %arg14[%c0_19, %43, %c0_20], %42 {strides = array<i32>} : memref<2x16x32xf32, #tpu.memory_space<vmem>>, vector<2x1x32xf32>,
    %c1_i32 = arith.constant 1 : i32
    %c0_21 = arith.constant 0 : index
    %45 = arith.index_cast %c1_i32 : i32 to index
    %c0_22 = arith.constant 0 : index
    %46 = vector.load %arg15[%c0_21, %45, %c0_22] : memref<2x16x128xf32, #tpu.memory_space<vmem>>, vector<2x1x128xf32>
    %47 = vector.shape_cast %46 : vector<2x1x128xf32> to vector<2x128xf32>
    %cst_23 = arith.constant dense<0.000000e+00> : vector<2x128xf32>
    %48 = tpu.matmul %41, %9, %cst_23 {dimension_numbers = #tpu.dot_dimension_numbers<[1], [0], [0], [1], [0, 0, 1, 1], [], []>} : vector<2x32xf32>, vector<32x128xf32>, vector<2x128xf32> -> vector<2x128xf32>
    %49 = arith.addf %47, %48 : vector<2x128xf32>
    %50 = vector.extract_strided_slice %49 {offsets = [0, 0], sizes = [2, 32], strides = [1, 1]} : vector<2x128xf32> to vector<2x32xf32>
    %51 = arith.negf %50 : vector<2x32xf32>
    %52 = math.exp %51 : vector<2x32xf32>
    %cst_24 = arith.constant 1.000000e+00 : f32
    %53 = vector.broadcast %cst_24 : f32 to vector<2x32xf32>
    %54 = arith.addf %53, %52 : vector<2x32xf32>
    %55 = arith.divf %53, %54 : vector<2x32xf32>
    %56 = vector.extract_strided_slice %49 {offsets = [0, 32], sizes = [2, 32], strides = [1, 1]} : vector<2x128xf32> to vector<2x32xf32>
    %57 = arith.negf %56 : vector<2x32xf32>
    %58 = math.exp %57 : vector<2x32xf32>
    %cst_25 = arith.constant 1.000000e+00 : f32
    %59 = vector.broadcast %cst_25 : f32 to vector<2x32xf32>
    %60 = arith.addf %59, %58 : vector<2x32xf32>
    %61 = arith.divf %59, %60 : vector<2x32xf32>
    %62 = vector.extract_strided_slice %49 {offsets = [0, 64], sizes = [2, 32], strides = [1, 1]} : vector<2x128xf32> to vector<2x32xf32>
    %63 = math.tanh %62 : vector<2x32xf32>
    %64 = vector.extract_strided_slice %49 {offsets = [0, 96], sizes = [2, 32], strides = [1, 1]} : vector<2x128xf32> to vector<2x32xf32>
    %65 = arith.negf %64 : vector<2x32xf32>
    %66 = math.exp %65 : vector<2x32xf32>
    %cst_26 = arith.constant 1.000000e+00 : f32
    %67 = vector.broadcast %cst_26 : f32 to vector<2x32xf32>
    %68 = arith.addf %67, %66 : vector<2x32xf32>
    %69 = arith.divf %67, %68 : vector<2x32xf32>
    %70 = arith.mulf %61, %39 : vector<2x32xf32>
    %71 = arith.mulf %55, %63 : vector<2x32xf32>
    %72 = arith.addf %70, %71 : vector<2x32xf32>
    %73 = math.tanh %72 : vector<2x32xf32>
    %74 = arith.mulf %69, %73 : vector<2x32xf32>
    %75 = vector.shape_cast %74 : vector<2x32xf32> to vector<2x1x32xf32>
    %c0_27 = arith.constant 0 : index
    %76 = arith.index_cast %c1_i32 : i32 to index
    %c0_28 = arith.constant 0 : index
    %77 = vector.load %arg14[%c0_27, %76, %c0_28] : memref<2x16x32xf32, #tpu.memory_space<vmem>>, vector<2x1x32xf32>
    tpu.vector_store %arg14[%c0_27, %76, %c0_28], %75 {strides = array<i32>} : memref<2x16x32xf32, #tpu.memory_space<vmem>>, vector<2x1x32xf32>,
    %c2_i32 = arith.constant 2 : i32
    %c0_29 = arith.constant 0 : index
    %78 = arith.index_cast %c2_i32 : i32 to index
    %c0_30 = arith.constant 0 : index
    %79 = vector.load %arg15[%c0_29, %78, %c0_30] : memref<2x16x128xf32, #tpu.memory_space<vmem>>, vector<2x1x128xf32>
    %80 = vector.shape_cast %79 : vector<2x1x128xf32> to vector<2x128xf32>
    %cst_31 = arith.constant dense<0.000000e+00> : vector<2x128xf32>
    %81 = tpu.matmul %74, %9, %cst_31 {dimension_numbers = #tpu.dot_dimension_numbers<[1], [0], [0], [1], [0, 0, 1, 1], [], []>} : vector<2x32xf32>, vector<32x128xf32>, vector<2x128xf32> -> vector<2x128xf32>
    %82 = arith.addf %80, %81 : vector<2x128xf32>
    %83 = vector.extract_strided_slice %82 {offsets = [0, 0], sizes = [2, 32], strides = [1, 1]} : vector<2x128xf32> to vector<2x32xf32>
    %84 = arith.negf %83 : vector<2x32xf32>
    %85 = math.exp %84 : vector<2x32xf32>
    %cst_32 = arith.constant 1.000000e+00 : f32
    %86 = vector.broadcast %cst_32 : f32 to vector<2x32xf32>
    %87 = arith.addf %86, %85 : vector<2x32xf32>
    %88 = arith.divf %86, %87 : vector<2x32xf32>
    %89 = vector.extract_strided_slice %82 {offsets = [0, 32], sizes = [2, 32], strides = [1, 1]} : vector<2x128xf32> to vector<2x32xf32>
    %90 = arith.negf %89 : vector<2x32xf32>
    %91 = math.exp %90 : vector<2x32xf32>
    %cst_33 = arith.constant 1.000000e+00 : f32
    %92 = vector.broadcast %cst_33 : f32 to vector<2x32xf32>
    %93 = arith.addf %92, %91 : vector<2x32xf32>
    %94 = arith.divf %92, %93 : vector<2x32xf32>
    %95 = vector.extract_strided_slice %82 {offsets = [0, 64], sizes = [2, 32], strides = [1, 1]} : vector<2x128xf32> to vector<2x32xf32>
    %96 = math.tanh %95 : vector<2x32xf32>
    %97 = vector.extract_strided_slice %82 {offsets = [0, 96], sizes = [2, 32], strides = [1, 1]} : vector<2x128xf32> to vector<2x32xf32>
    %98 = arith.negf %97 : vector<2x32xf32>
    %99 = math.exp %98 : vector<2x32xf32>
    %cst_34 = arith.constant 1.000000e+00 : f32
    %100 = vector.broadcast %cst_34 : f32 to vector<2x32xf32>
    %101 = arith.addf %100, %99 : vector<2x32xf32>
    %102 = arith.divf %100, %101 : vector<2x32xf32>
    %103 = arith.mulf %94, %72 : vector<2x32xf32>
    %104 = arith.mulf %88, %96 : vector<2x32xf32>
    %105 = arith.addf %103, %104 : vector<2x32xf32>
    %106 = math.tanh %105 : vector<2x32xf32>
    %107 = arith.mulf %102, %106 : vector<2x32xf32>
    %108 = vector.shape_cast %107 : vector<2x32xf32> to vector<2x1x32xf32>
    %c0_35 = arith.constant 0 : index
    %109 = arith.index_cast %c2_i32 : i32 to index
    %c0_36 = arith.constant 0 : index
    %110 = vector.load %arg14[%c0_35, %109, %c0_36] : memref<2x16x32xf32, #tpu.memory_space<vmem>>, vector<2x1x32xf32>
    tpu.vector_store %arg14[%c0_35, %109, %c0_36], %108 {strides = array<i32>} : memref<2x16x32xf32, #tpu.memory_space<vmem>>, vector<2x1x32xf32>,
    %c3_i32 = arith.constant 3 : i32
    %c0_37 = arith.constant 0 : index
    %111 = arith.index_cast %c3_i32 : i32 to index
    %c0_38 = arith.constant 0 : index
    %112 = vector.load %arg15[%c0_37, %111, %c0_38] : memref<2x16x128xf32, #tpu.memory_space<vmem>>, vector<2x1x128xf32>
    %113 = vector.shape_cast %112 : vector<2x1x128xf32> to vector<2x128xf32>
    %cst_39 = arith.constant dense<0.000000e+00> : vector<2x128xf32>
    %114 = tpu.matmul %107, %9, %cst_39 {dimension_numbers = #tpu.dot_dimension_numbers<[1], [0], [0], [1], [0, 0, 1, 1], [], []>} : vector<2x32xf32>, vector<32x128xf32>, vector<2x128xf32> -> vector<2x128xf32>
    %115 = arith.addf %113, %114 : vector<2x128xf32>
    %116 = vector.extract_strided_slice %115 {offsets = [0, 0], sizes = [2, 32], strides = [1, 1]} : vector<2x128xf32> to vector<2x32xf32>
    %117 = arith.negf %116 : vector<2x32xf32>
    %118 = math.exp %117 : vector<2x32xf32>
    %cst_40 = arith.constant 1.000000e+00 : f32
    %119 = vector.broadcast %cst_40 : f32 to vector<2x32xf32>
    %120 = arith.addf %119, %118 : vector<2x32xf32>
    %121 = arith.divf %119, %120 : vector<2x32xf32>
    %122 = vector.extract_strided_slice %115 {offsets = [0, 32], sizes = [2, 32], strides = [1, 1]} : vector<2x128xf32> to vector<2x32xf32>
    %123 = arith.negf %122 : vector<2x32xf32>
    %124 = math.exp %123 : vector<2x32xf32>
    %cst_41 = arith.constant 1.000000e+00 : f32
    %125 = vector.broadcast %cst_41 : f32 to vector<2x32xf32>
    %126 = arith.addf %125, %124 : vector<2x32xf32>
    %127 = arith.divf %125, %126 : vector<2x32xf32>
    %128 = vector.extract_strided_slice %115 {offsets = [0, 64], sizes = [2, 32], strides = [1, 1]} : vector<2x128xf32> to vector<2x32xf32>
    %129 = math.tanh %128 : vector<2x32xf32>
    %130 = vector.extract_strided_slice %115 {offsets = [0, 96], sizes = [2, 32], strides = [1, 1]} : vector<2x128xf32> to vector<2x32xf32>
    %131 = arith.negf %130 : vector<2x32xf32>
    %132 = math.exp %131 : vector<2x32xf32>
    %cst_42 = arith.constant 1.000000e+00 : f32
    %133 = vector.broadcast %cst_42 : f32 to vector<2x32xf32>
    %134 = arith.addf %133, %132 : vector<2x32xf32>
    %135 = arith.divf %133, %134 : vector<2x32xf32>
    %136 = arith.mulf %127, %105 : vector<2x32xf32>
    %137 = arith.mulf %121, %129 : vector<2x32xf32>
    %138 = arith.addf %136, %137 : vector<2x32xf32>
    %139 = math.tanh %138 : vector<2x32xf32>
    %140 = arith.mulf %135, %139 : vector<2x32xf32>
    %141 = vector.shape_cast %140 : vector<2x32xf32> to vector<2x1x32xf32>
    %c0_43 = arith.constant 0 : index
    %142 = arith.index_cast %c3_i32 : i32 to index
    %c0_44 = arith.constant 0 : index
    %143 = vector.load %arg14[%c0_43, %142, %c0_44] : memref<2x16x32xf32, #tpu.memory_space<vmem>>, vector<2x1x32xf32>
    tpu.vector_store %arg14[%c0_43, %142, %c0_44], %141 {strides = array<i32>} : memref<2x16x32xf32, #tpu.memory_space<vmem>>, vector<2x1x32xf32>,
    %c4_i32 = arith.constant 4 : i32
    %c0_45 = arith.constant 0 : index
    %144 = arith.index_cast %c4_i32 : i32 to index
    %c0_46 = arith.constant 0 : index
    %145 = vector.load %arg15[%c0_45, %144, %c0_46] : memref<2x16x128xf32, #tpu.memory_space<vmem>>, vector<2x1x128xf32>
    %146 = vector.shape_cast %145 : vector<2x1x128xf32> to vector<2x128xf32>
    %cst_47 = arith.constant dense<0.000000e+00> : vector<2x128xf32>
    %147 = tpu.matmul %140, %9, %cst_47 {dimension_numbers = #tpu.dot_dimension_numbers<[1], [0], [0], [1], [0, 0, 1, 1], [], []>} : vector<2x32xf32>, vector<32x128xf32>, vector<2x128xf32> -> vector<2x128xf32>
    %148 = arith.addf %146, %147 : vector<2x128xf32>
    %149 = vector.extract_strided_slice %148 {offsets = [0, 0], sizes = [2, 32], strides = [1, 1]} : vector<2x128xf32> to vector<2x32xf32>
    %150 = arith.negf %149 : vector<2x32xf32>
    %151 = math.exp %150 : vector<2x32xf32>
    %cst_48 = arith.constant 1.000000e+00 : f32
    %152 = vector.broadcast %cst_48 : f32 to vector<2x32xf32>
    %153 = arith.addf %152, %151 : vector<2x32xf32>
    %154 = arith.divf %152, %153 : vector<2x32xf32>
    %155 = vector.extract_strided_slice %148 {offsets = [0, 32], sizes = [2, 32], strides = [1, 1]} : vector<2x128xf32> to vector<2x32xf32>
    %156 = arith.negf %155 : vector<2x32xf32>
    %157 = math.exp %156 : vector<2x32xf32>
    %cst_49 = arith.constant 1.000000e+00 : f32
    %158 = vector.broadcast %cst_49 : f32 to vector<2x32xf32>
    %159 = arith.addf %158, %157 : vector<2x32xf32>
    %160 = arith.divf %158, %159 : vector<2x32xf32>
    %161 = vector.extract_strided_slice %148 {offsets = [0, 64], sizes = [2, 32], strides = [1, 1]} : vector<2x128xf32> to vector<2x32xf32>
    %162 = math.tanh %161 : vector<2x32xf32>
    %163 = vector.extract_strided_slice %148 {offsets = [0, 96], sizes = [2, 32], strides = [1, 1]} : vector<2x128xf32> to vector<2x32xf32>
    %164 = arith.negf %163 : vector<2x32xf32>
    %165 = math.exp %164 : vector<2x32xf32>
    %cst_50 = arith.constant 1.000000e+00 : f32
    %166 = vector.broadcast %cst_50 : f32 to vector<2x32xf32>
    %167 = arith.addf %166, %165 : vector<2x32xf32>
    %168 = arith.divf %166, %167 : vector<2x32xf32>
    %169 = arith.mulf %160, %138 : vector<2x32xf32>
    %170 = arith.mulf %154, %162 : vector<2x32xf32>
    %171 = arith.addf %169, %170 : vector<2x32xf32>
    %172 = math.tanh %171 : vector<2x32xf32>
    %173 = arith.mulf %168, %172 : vector<2x32xf32>
    %174 = vector.shape_cast %173 : vector<2x32xf32> to vector<2x1x32xf32>
    %c0_51 = arith.constant 0 : index
    %175 = arith.index_cast %c4_i32 : i32 to index
    %c0_52 = arith.constant 0 : index
    %176 = vector.load %arg14[%c0_51, %175, %c0_52] : memref<2x16x32xf32, #tpu.memory_space<vmem>>, vector<2x1x32xf32>
    tpu.vector_store %arg14[%c0_51, %175, %c0_52], %174 {strides = array<i32>} : memref<2x16x32xf32, #tpu.memory_space<vmem>>, vector<2x1x32xf32>,
    %c5_i32 = arith.constant 5 : i32
    %c0_53 = arith.constant 0 : index
    %177 = arith.index_cast %c5_i32 : i32 to index
    %c0_54 = arith.constant 0 : index
    %178 = vector.load %arg15[%c0_53, %177, %c0_54] : memref<2x16x128xf32, #tpu.memory_space<vmem>>, vector<2x1x128xf32>
    %179 = vector.shape_cast %178 : vector<2x1x128xf32> to vector<2x128xf32>
    %cst_55 = arith.constant dense<0.000000e+00> : vector<2x128xf32>
    %180 = tpu.matmul %173, %9, %cst_55 {dimension_numbers = #tpu.dot_dimension_numbers<[1], [0], [0], [1], [0, 0, 1, 1], [], []>} : vector<2x32xf32>, vector<32x128xf32>, vector<2x128xf32> -> vector<2x128xf32>
    %181 = arith.addf %179, %180 : vector<2x128xf32>
    %182 = vector.extract_strided_slice %181 {offsets = [0, 0], sizes = [2, 32], strides = [1, 1]} : vector<2x128xf32> to vector<2x32xf32>
    %183 = arith.negf %182 : vector<2x32xf32>
    %184 = math.exp %183 : vector<2x32xf32>
    %cst_56 = arith.constant 1.000000e+00 : f32
    %185 = vector.broadcast %cst_56 : f32 to vector<2x32xf32>
    %186 = arith.addf %185, %184 : vector<2x32xf32>
    %187 = arith.divf %185, %186 : vector<2x32xf32>
    %188 = vector.extract_strided_slice %181 {offsets = [0, 32], sizes = [2, 32], strides = [1, 1]} : vector<2x128xf32> to vector<2x32xf32>
    %189 = arith.negf %188 : vector<2x32xf32>
    %190 = math.exp %189 : vector<2x32xf32>
    %cst_57 = arith.constant 1.000000e+00 : f32
    %191 = vector.broadcast %cst_57 : f32 to vector<2x32xf32>
    %192 = arith.addf %191, %190 : vector<2x32xf32>
    %193 = arith.divf %191, %192 : vector<2x32xf32>
    %194 = vector.extract_strided_slice %181 {offsets = [0, 64], sizes = [2, 32], strides = [1, 1]} : vector<2x128xf32> to vector<2x32xf32>
    %195 = math.tanh %194 : vector<2x32xf32>
    %196 = vector.extract_strided_slice %181 {offsets = [0, 96], sizes = [2, 32], strides = [1, 1]} : vector<2x128xf32> to vector<2x32xf32>
    %197 = arith.negf %196 : vector<2x32xf32>
    %198 = math.exp %197 : vector<2x32xf32>
    %cst_58 = arith.constant 1.000000e+00 : f32
    %199 = vector.broadcast %cst_58 : f32 to vector<2x32xf32>
    %200 = arith.addf %199, %198 : vector<2x32xf32>
    %201 = arith.divf %199, %200 : vector<2x32xf32>
    %202 = arith.mulf %193, %171 : vector<2x32xf32>
    %203 = arith.mulf %187, %195 : vector<2x32xf32>
    %204 = arith.addf %202, %203 : vector<2x32xf32>
    %205 = math.tanh %204 : vector<2x32xf32>
    %206 = arith.mulf %201, %205 : vector<2x32xf32>
    %207 = vector.shape_cast %206 : vector<2x32xf32> to vector<2x1x32xf32>
    %c0_59 = arith.constant 0 : index
    %208 = arith.index_cast %c5_i32 : i32 to index
    %c0_60 = arith.constant 0 : index
    %209 = vector.load %arg14[%c0_59, %208, %c0_60] : memref<2x16x32xf32, #tpu.memory_space<vmem>>, vector<2x1x32xf32>
    tpu.vector_store %arg14[%c0_59, %208, %c0_60], %207 {strides = array<i32>} : memref<2x16x32xf32, #tpu.memory_space<vmem>>, vector<2x1x32xf32>,
    %c6_i32 = arith.constant 6 : i32
    %c0_61 = arith.constant 0 : index
    %210 = arith.index_cast %c6_i32 : i32 to index
    %c0_62 = arith.constant 0 : index
    %211 = vector.load %arg15[%c0_61, %210, %c0_62] : memref<2x16x128xf32, #tpu.memory_space<vmem>>, vector<2x1x128xf32>
    %212 = vector.shape_cast %211 : vector<2x1x128xf32> to vector<2x128xf32>
    %cst_63 = arith.constant dense<0.000000e+00> : vector<2x128xf32>
    %213 = tpu.matmul %206, %9, %cst_63 {dimension_numbers = #tpu.dot_dimension_numbers<[1], [0], [0], [1], [0, 0, 1, 1], [], []>} : vector<2x32xf32>, vector<32x128xf32>, vector<2x128xf32> -> vector<2x128xf32>
    %214 = arith.addf %212, %213 : vector<2x128xf32>
    %215 = vector.extract_strided_slice %214 {offsets = [0, 0], sizes = [2, 32], strides = [1, 1]} : vector<2x128xf32> to vector<2x32xf32>
    %216 = arith.negf %215 : vector<2x32xf32>
    %217 = math.exp %216 : vector<2x32xf32>
    %cst_64 = arith.constant 1.000000e+00 : f32
    %218 = vector.broadcast %cst_64 : f32 to vector<2x32xf32>
    %219 = arith.addf %218, %217 : vector<2x32xf32>
    %220 = arith.divf %218, %219 : vector<2x32xf32>
    %221 = vector.extract_strided_slice %214 {offsets = [0, 32], sizes = [2, 32], strides = [1, 1]} : vector<2x128xf32> to vector<2x32xf32>
    %222 = arith.negf %221 : vector<2x32xf32>
    %223 = math.exp %222 : vector<2x32xf32>
    %cst_65 = arith.constant 1.000000e+00 : f32
    %224 = vector.broadcast %cst_65 : f32 to vector<2x32xf32>
    %225 = arith.addf %224, %223 : vector<2x32xf32>
    %226 = arith.divf %224, %225 : vector<2x32xf32>
    %227 = vector.extract_strided_slice %214 {offsets = [0, 64], sizes = [2, 32], strides = [1, 1]} : vector<2x128xf32> to vector<2x32xf32>
    %228 = math.tanh %227 : vector<2x32xf32>
    %229 = vector.extract_strided_slice %214 {offsets = [0, 96], sizes = [2, 32], strides = [1, 1]} : vector<2x128xf32> to vector<2x32xf32>
    %230 = arith.negf %229 : vector<2x32xf32>
    %231 = math.exp %230 : vector<2x32xf32>
    %cst_66 = arith.constant 1.000000e+00 : f32
    %232 = vector.broadcast %cst_66 : f32 to vector<2x32xf32>
    %233 = arith.addf %232, %231 : vector<2x32xf32>
    %234 = arith.divf %232, %233 : vector<2x32xf32>
    %235 = arith.mulf %226, %204 : vector<2x32xf32>
    %236 = arith.mulf %220, %228 : vector<2x32xf32>
    %237 = arith.addf %235, %236 : vector<2x32xf32>
    %238 = math.tanh %237 : vector<2x32xf32>
    %239 = arith.mulf %234, %238 : vector<2x32xf32>
    %240 = vector.shape_cast %239 : vector<2x32xf32> to vector<2x1x32xf32>
    %c0_67 = arith.constant 0 : index
    %241 = arith.index_cast %c6_i32 : i32 to index
    %c0_68 = arith.constant 0 : index
    %242 = vector.load %arg14[%c0_67, %241, %c0_68] : memref<2x16x32xf32, #tpu.memory_space<vmem>>, vector<2x1x32xf32>
    tpu.vector_store %arg14[%c0_67, %241, %c0_68], %240 {strides = array<i32>} : memref<2x16x32xf32, #tpu.memory_space<vmem>>, vector<2x1x32xf32>,
    %c7_i32 = arith.constant 7 : i32
    %c0_69 = arith.constant 0 : index
    %243 = arith.index_cast %c7_i32 : i32 to index
    %c0_70 = arith.constant 0 : index
    %244 = vector.load %arg15[%c0_69, %243, %c0_70] : memref<2x16x128xf32, #tpu.memory_space<vmem>>, vector<2x1x128xf32>
    %245 = vector.shape_cast %244 : vector<2x1x128xf32> to vector<2x128xf32>
    %cst_71 = arith.constant dense<0.000000e+00> : vector<2x128xf32>
    %246 = tpu.matmul %239, %9, %cst_71 {dimension_numbers = #tpu.dot_dimension_numbers<[1], [0], [0], [1], [0, 0, 1, 1], [], []>} : vector<2x32xf32>, vector<32x128xf32>, vector<2x128xf32> -> vector<2x128xf32>
    %247 = arith.addf %245, %246 : vector<2x128xf32>
    %248 = vector.extract_strided_slice %247 {offsets = [0, 0], sizes = [2, 32], strides = [1, 1]} : vector<2x128xf32> to vector<2x32xf32>
    %249 = arith.negf %248 : vector<2x32xf32>
    %250 = math.exp %249 : vector<2x32xf32>
    %cst_72 = arith.constant 1.000000e+00 : f32
    %251 = vector.broadcast %cst_72 : f32 to vector<2x32xf32>
    %252 = arith.addf %251, %250 : vector<2x32xf32>
    %253 = arith.divf %251, %252 : vector<2x32xf32>
    %254 = vector.extract_strided_slice %247 {offsets = [0, 32], sizes = [2, 32], strides = [1, 1]} : vector<2x128xf32> to vector<2x32xf32>
    %255 = arith.negf %254 : vector<2x32xf32>
    %256 = math.exp %255 : vector<2x32xf32>
    %cst_73 = arith.constant 1.000000e+00 : f32
    %257 = vector.broadcast %cst_73 : f32 to vector<2x32xf32>
    %258 = arith.addf %257, %256 : vector<2x32xf32>
    %259 = arith.divf %257, %258 : vector<2x32xf32>
    %260 = vector.extract_strided_slice %247 {offsets = [0, 64], sizes = [2, 32], strides = [1, 1]} : vector<2x128xf32> to vector<2x32xf32>
    %261 = math.tanh %260 : vector<2x32xf32>
    %262 = vector.extract_strided_slice %247 {offsets = [0, 96], sizes = [2, 32], strides = [1, 1]} : vector<2x128xf32> to vector<2x32xf32>
    %263 = arith.negf %262 : vector<2x32xf32>
    %264 = math.exp %263 : vector<2x32xf32>
    %cst_74 = arith.constant 1.000000e+00 : f32
    %265 = vector.broadcast %cst_74 : f32 to vector<2x32xf32>
    %266 = arith.addf %265, %264 : vector<2x32xf32>
    %267 = arith.divf %265, %266 : vector<2x32xf32>
    %268 = arith.mulf %259, %237 : vector<2x32xf32>
    %269 = arith.mulf %253, %261 : vector<2x32xf32>
    %270 = arith.addf %268, %269 : vector<2x32xf32>
    %271 = math.tanh %270 : vector<2x32xf32>
    %272 = arith.mulf %267, %271 : vector<2x32xf32>
    %273 = vector.shape_cast %272 : vector<2x32xf32> to vector<2x1x32xf32>
    %c0_75 = arith.constant 0 : index
    %274 = arith.index_cast %c7_i32 : i32 to index
    %c0_76 = arith.constant 0 : index
    %275 = vector.load %arg14[%c0_75, %274, %c0_76] : memref<2x16x32xf32, #tpu.memory_space<vmem>>, vector<2x1x32xf32>
    tpu.vector_store %arg14[%c0_75, %274, %c0_76], %273 {strides = array<i32>} : memref<2x16x32xf32, #tpu.memory_space<vmem>>, vector<2x1x32xf32>,
    %c8_i32 = arith.constant 8 : i32
    %c0_77 = arith.constant 0 : index
    %276 = arith.index_cast %c8_i32 : i32 to index
    %c0_78 = arith.constant 0 : index
    %277 = vector.load %arg15[%c0_77, %276, %c0_78] : memref<2x16x128xf32, #tpu.memory_space<vmem>>, vector<2x1x128xf32>
    %278 = vector.shape_cast %277 : vector<2x1x128xf32> to vector<2x128xf32>
    %cst_79 = arith.constant dense<0.000000e+00> : vector<2x128xf32>
    %279 = tpu.matmul %272, %9, %cst_79 {dimension_numbers = #tpu.dot_dimension_numbers<[1], [0], [0], [1], [0, 0, 1, 1], [], []>} : vector<2x32xf32>, vector<32x128xf32>, vector<2x128xf32> -> vector<2x128xf32>
    %280 = arith.addf %278, %279 : vector<2x128xf32>
    %281 = vector.extract_strided_slice %280 {offsets = [0, 0], sizes = [2, 32], strides = [1, 1]} : vector<2x128xf32> to vector<2x32xf32>
    %282 = arith.negf %281 : vector<2x32xf32>
    %283 = math.exp %282 : vector<2x32xf32>
    %cst_80 = arith.constant 1.000000e+00 : f32
    %284 = vector.broadcast %cst_80 : f32 to vector<2x32xf32>
    %285 = arith.addf %284, %283 : vector<2x32xf32>
    %286 = arith.divf %284, %285 : vector<2x32xf32>
    %287 = vector.extract_strided_slice %280 {offsets = [0, 32], sizes = [2, 32], strides = [1, 1]} : vector<2x128xf32> to vector<2x32xf32>
    %288 = arith.negf %287 : vector<2x32xf32>
    %289 = math.exp %288 : vector<2x32xf32>
    %cst_81 = arith.constant 1.000000e+00 : f32
    %290 = vector.broadcast %cst_81 : f32 to vector<2x32xf32>
    %291 = arith.addf %290, %289 : vector<2x32xf32>
    %292 = arith.divf %290, %291 : vector<2x32xf32>
    %293 = vector.extract_strided_slice %280 {offsets = [0, 64], sizes = [2, 32], strides = [1, 1]} : vector<2x128xf32> to vector<2x32xf32>
    %294 = math.tanh %293 : vector<2x32xf32>
    %295 = vector.extract_strided_slice %280 {offsets = [0, 96], sizes = [2, 32], strides = [1, 1]} : vector<2x128xf32> to vector<2x32xf32>
    %296 = arith.negf %295 : vector<2x32xf32>
    %297 = math.exp %296 : vector<2x32xf32>
    %cst_82 = arith.constant 1.000000e+00 : f32
    %298 = vector.broadcast %cst_82 : f32 to vector<2x32xf32>
    %299 = arith.addf %298, %297 : vector<2x32xf32>
    %300 = arith.divf %298, %299 : vector<2x32xf32>
    %301 = arith.mulf %292, %270 : vector<2x32xf32>
    %302 = arith.mulf %286, %294 : vector<2x32xf32>
    %303 = arith.addf %301, %302 : vector<2x32xf32>
    %304 = math.tanh %303 : vector<2x32xf32>
    %305 = arith.mulf %300, %304 : vector<2x32xf32>
    %306 = vector.shape_cast %305 : vector<2x32xf32> to vector<2x1x32xf32>
    %c0_83 = arith.constant 0 : index
    %307 = arith.index_cast %c8_i32 : i32 to index
    %c0_84 = arith.constant 0 : index
    %308 = vector.load %arg14[%c0_83, %307, %c0_84] : memref<2x16x32xf32, #tpu.memory_space<vmem>>, vector<2x1x32xf32>
    tpu.vector_store %arg14[%c0_83, %307, %c0_84], %306 {strides = array<i32>} : memref<2x16x32xf32, #tpu.memory_space<vmem>>, vector<2x1x32xf32>,
    %c9_i32 = arith.constant 9 : i32
    %c0_85 = arith.constant 0 : index
    %309 = arith.index_cast %c9_i32 : i32 to index
    %c0_86 = arith.constant 0 : index
    %310 = vector.load %arg15[%c0_85, %309, %c0_86] : memref<2x16x128xf32, #tpu.memory_space<vmem>>, vector<2x1x128xf32>
    %311 = vector.shape_cast %310 : vector<2x1x128xf32> to vector<2x128xf32>
    %cst_87 = arith.constant dense<0.000000e+00> : vector<2x128xf32>
    %312 = tpu.matmul %305, %9, %cst_87 {dimension_numbers = #tpu.dot_dimension_numbers<[1], [0], [0], [1], [0, 0, 1, 1], [], []>} : vector<2x32xf32>, vector<32x128xf32>, vector<2x128xf32> -> vector<2x128xf32>
    %313 = arith.addf %311, %312 : vector<2x128xf32>
    %314 = vector.extract_strided_slice %313 {offsets = [0, 0], sizes = [2, 32], strides = [1, 1]} : vector<2x128xf32> to vector<2x32xf32>
    %315 = arith.negf %314 : vector<2x32xf32>
    %316 = math.exp %315 : vector<2x32xf32>
    %cst_88 = arith.constant 1.000000e+00 : f32
    %317 = vector.broadcast %cst_88 : f32 to vector<2x32xf32>
    %318 = arith.addf %317, %316 : vector<2x32xf32>
    %319 = arith.divf %317, %318 : vector<2x32xf32>
    %320 = vector.extract_strided_slice %313 {offsets = [0, 32], sizes = [2, 32], strides = [1, 1]} : vector<2x128xf32> to vector<2x32xf32>
    %321 = arith.negf %320 : vector<2x32xf32>
    %322 = math.exp %321 : vector<2x32xf32>
    %cst_89 = arith.constant 1.000000e+00 : f32
    %323 = vector.broadcast %cst_89 : f32 to vector<2x32xf32>
    %324 = arith.addf %323, %322 : vector<2x32xf32>
    %325 = arith.divf %323, %324 : vector<2x32xf32>
    %326 = vector.extract_strided_slice %313 {offsets = [0, 64], sizes = [2, 32], strides = [1, 1]} : vector<2x128xf32> to vector<2x32xf32>
    %327 = math.tanh %326 : vector<2x32xf32>
    %328 = vector.extract_strided_slice %313 {offsets = [0, 96], sizes = [2, 32], strides = [1, 1]} : vector<2x128xf32> to vector<2x32xf32>
    %329 = arith.negf %328 : vector<2x32xf32>
    %330 = math.exp %329 : vector<2x32xf32>
    %cst_90 = arith.constant 1.000000e+00 : f32
    %331 = vector.broadcast %cst_90 : f32 to vector<2x32xf32>
    %332 = arith.addf %331, %330 : vector<2x32xf32>
    %333 = arith.divf %331, %332 : vector<2x32xf32>
    %334 = arith.mulf %325, %303 : vector<2x32xf32>
    %335 = arith.mulf %319, %327 : vector<2x32xf32>
    %336 = arith.addf %334, %335 : vector<2x32xf32>
    %337 = math.tanh %336 : vector<2x32xf32>
    %338 = arith.mulf %333, %337 : vector<2x32xf32>
    %339 = vector.shape_cast %338 : vector<2x32xf32> to vector<2x1x32xf32>
    %c0_91 = arith.constant 0 : index
    %340 = arith.index_cast %c9_i32 : i32 to index
    %c0_92 = arith.constant 0 : index
    %341 = vector.load %arg14[%c0_91, %340, %c0_92] : memref<2x16x32xf32, #tpu.memory_space<vmem>>, vector<2x1x32xf32>
    tpu.vector_store %arg14[%c0_91, %340, %c0_92], %339 {strides = array<i32>} : memref<2x16x32xf32, #tpu.memory_space<vmem>>, vector<2x1x32xf32>,
    %c10_i32 = arith.constant 10 : i32
    %c0_93 = arith.constant 0 : index
    %342 = arith.index_cast %c10_i32 : i32 to index
    %c0_94 = arith.constant 0 : index
    %343 = vector.load %arg15[%c0_93, %342, %c0_94] : memref<2x16x128xf32, #tpu.memory_space<vmem>>, vector<2x1x128xf32>
    %344 = vector.shape_cast %343 : vector<2x1x128xf32> to vector<2x128xf32>
    %cst_95 = arith.constant dense<0.000000e+00> : vector<2x128xf32>
    %345 = tpu.matmul %338, %9, %cst_95 {dimension_numbers = #tpu.dot_dimension_numbers<[1], [0], [0], [1], [0, 0, 1, 1], [], []>} : vector<2x32xf32>, vector<32x128xf32>, vector<2x128xf32> -> vector<2x128xf32>
    %346 = arith.addf %344, %345 : vector<2x128xf32>
    %347 = vector.extract_strided_slice %346 {offsets = [0, 0], sizes = [2, 32], strides = [1, 1]} : vector<2x128xf32> to vector<2x32xf32>
    %348 = arith.negf %347 : vector<2x32xf32>
    %349 = math.exp %348 : vector<2x32xf32>
    %cst_96 = arith.constant 1.000000e+00 : f32
    %350 = vector.broadcast %cst_96 : f32 to vector<2x32xf32>
    %351 = arith.addf %350, %349 : vector<2x32xf32>
    %352 = arith.divf %350, %351 : vector<2x32xf32>
    %353 = vector.extract_strided_slice %346 {offsets = [0, 32], sizes = [2, 32], strides = [1, 1]} : vector<2x128xf32> to vector<2x32xf32>
    %354 = arith.negf %353 : vector<2x32xf32>
    %355 = math.exp %354 : vector<2x32xf32>
    %cst_97 = arith.constant 1.000000e+00 : f32
    %356 = vector.broadcast %cst_97 : f32 to vector<2x32xf32>
    %357 = arith.addf %356, %355 : vector<2x32xf32>
    %358 = arith.divf %356, %357 : vector<2x32xf32>
    %359 = vector.extract_strided_slice %346 {offsets = [0, 64], sizes = [2, 32], strides = [1, 1]} : vector<2x128xf32> to vector<2x32xf32>
    %360 = math.tanh %359 : vector<2x32xf32>
    %361 = vector.extract_strided_slice %346 {offsets = [0, 96], sizes = [2, 32], strides = [1, 1]} : vector<2x128xf32> to vector<2x32xf32>
    %362 = arith.negf %361 : vector<2x32xf32>
    %363 = math.exp %362 : vector<2x32xf32>
    %cst_98 = arith.constant 1.000000e+00 : f32
    %364 = vector.broadcast %cst_98 : f32 to vector<2x32xf32>
    %365 = arith.addf %364, %363 : vector<2x32xf32>
    %366 = arith.divf %364, %365 : vector<2x32xf32>
    %367 = arith.mulf %358, %336 : vector<2x32xf32>
    %368 = arith.mulf %352, %360 : vector<2x32xf32>
    %369 = arith.addf %367, %368 : vector<2x32xf32>
    %370 = math.tanh %369 : vector<2x32xf32>
    %371 = arith.mulf %366, %370 : vector<2x32xf32>
    %372 = vector.shape_cast %371 : vector<2x32xf32> to vector<2x1x32xf32>
    %c0_99 = arith.constant 0 : index
    %373 = arith.index_cast %c10_i32 : i32 to index
    %c0_100 = arith.constant 0 : index
    %374 = vector.load %arg14[%c0_99, %373, %c0_100] : memref<2x16x32xf32, #tpu.memory_space<vmem>>, vector<2x1x32xf32>
    tpu.vector_store %arg14[%c0_99, %373, %c0_100], %372 {strides = array<i32>} : memref<2x16x32xf32, #tpu.memory_space<vmem>>, vector<2x1x32xf32>,
    %c11_i32 = arith.constant 11 : i32
    %c0_101 = arith.constant 0 : index
    %375 = arith.index_cast %c11_i32 : i32 to index
    %c0_102 = arith.constant 0 : index
    %376 = vector.load %arg15[%c0_101, %375, %c0_102] : memref<2x16x128xf32, #tpu.memory_space<vmem>>, vector<2x1x128xf32>
    %377 = vector.shape_cast %376 : vector<2x1x128xf32> to vector<2x128xf32>
    %cst_103 = arith.constant dense<0.000000e+00> : vector<2x128xf32>
    %378 = tpu.matmul %371, %9, %cst_103 {dimension_numbers = #tpu.dot_dimension_numbers<[1], [0], [0], [1], [0, 0, 1, 1], [], []>} : vector<2x32xf32>, vector<32x128xf32>, vector<2x128xf32> -> vector<2x128xf32>
    %379 = arith.addf %377, %378 : vector<2x128xf32>
    %380 = vector.extract_strided_slice %379 {offsets = [0, 0], sizes = [2, 32], strides = [1, 1]} : vector<2x128xf32> to vector<2x32xf32>
    %381 = arith.negf %380 : vector<2x32xf32>
    %382 = math.exp %381 : vector<2x32xf32>
    %cst_104 = arith.constant 1.000000e+00 : f32
    %383 = vector.broadcast %cst_104 : f32 to vector<2x32xf32>
    %384 = arith.addf %383, %382 : vector<2x32xf32>
    %385 = arith.divf %383, %384 : vector<2x32xf32>
    %386 = vector.extract_strided_slice %379 {offsets = [0, 32], sizes = [2, 32], strides = [1, 1]} : vector<2x128xf32> to vector<2x32xf32>
    %387 = arith.negf %386 : vector<2x32xf32>
    %388 = math.exp %387 : vector<2x32xf32>
    %cst_105 = arith.constant 1.000000e+00 : f32
    %389 = vector.broadcast %cst_105 : f32 to vector<2x32xf32>
    %390 = arith.addf %389, %388 : vector<2x32xf32>
    %391 = arith.divf %389, %390 : vector<2x32xf32>
    %392 = vector.extract_strided_slice %379 {offsets = [0, 64], sizes = [2, 32], strides = [1, 1]} : vector<2x128xf32> to vector<2x32xf32>
    %393 = math.tanh %392 : vector<2x32xf32>
    %394 = vector.extract_strided_slice %379 {offsets = [0, 96], sizes = [2, 32], strides = [1, 1]} : vector<2x128xf32> to vector<2x32xf32>
    %395 = arith.negf %394 : vector<2x32xf32>
    %396 = math.exp %395 : vector<2x32xf32>
    %cst_106 = arith.constant 1.000000e+00 : f32
    %397 = vector.broadcast %cst_106 : f32 to vector<2x32xf32>
    %398 = arith.addf %397, %396 : vector<2x32xf32>
    %399 = arith.divf %397, %398 : vector<2x32xf32>
    %400 = arith.mulf %391, %369 : vector<2x32xf32>
    %401 = arith.mulf %385, %393 : vector<2x32xf32>
    %402 = arith.addf %400, %401 : vector<2x32xf32>
    %403 = math.tanh %402 : vector<2x32xf32>
    %404 = arith.mulf %399, %403 : vector<2x32xf32>
    %405 = vector.shape_cast %404 : vector<2x32xf32> to vector<2x1x32xf32>
    %c0_107 = arith.constant 0 : index
    %406 = arith.index_cast %c11_i32 : i32 to index
    %c0_108 = arith.constant 0 : index
    %407 = vector.load %arg14[%c0_107, %406, %c0_108] : memref<2x16x32xf32, #tpu.memory_space<vmem>>, vector<2x1x32xf32>
    tpu.vector_store %arg14[%c0_107, %406, %c0_108], %405 {strides = array<i32>} : memref<2x16x32xf32, #tpu.memory_space<vmem>>, vector<2x1x32xf32>,
    %c12_i32 = arith.constant 12 : i32
    %c0_109 = arith.constant 0 : index
    %408 = arith.index_cast %c12_i32 : i32 to index
    %c0_110 = arith.constant 0 : index
    %409 = vector.load %arg15[%c0_109, %408, %c0_110] : memref<2x16x128xf32, #tpu.memory_space<vmem>>, vector<2x1x128xf32>
    %410 = vector.shape_cast %409 : vector<2x1x128xf32> to vector<2x128xf32>
    %cst_111 = arith.constant dense<0.000000e+00> : vector<2x128xf32>
    %411 = tpu.matmul %404, %9, %cst_111 {dimension_numbers = #tpu.dot_dimension_numbers<[1], [0], [0], [1], [0, 0, 1, 1], [], []>} : vector<2x32xf32>, vector<32x128xf32>, vector<2x128xf32> -> vector<2x128xf32>
    %412 = arith.addf %410, %411 : vector<2x128xf32>
    %413 = vector.extract_strided_slice %412 {offsets = [0, 0], sizes = [2, 32], strides = [1, 1]} : vector<2x128xf32> to vector<2x32xf32>
    %414 = arith.negf %413 : vector<2x32xf32>
    %415 = math.exp %414 : vector<2x32xf32>
    %cst_112 = arith.constant 1.000000e+00 : f32
    %416 = vector.broadcast %cst_112 : f32 to vector<2x32xf32>
    %417 = arith.addf %416, %415 : vector<2x32xf32>
    %418 = arith.divf %416, %417 : vector<2x32xf32>
    %419 = vector.extract_strided_slice %412 {offsets = [0, 32], sizes = [2, 32], strides = [1, 1]} : vector<2x128xf32> to vector<2x32xf32>
    %420 = arith.negf %419 : vector<2x32xf32>
    %421 = math.exp %420 : vector<2x32xf32>
    %cst_113 = arith.constant 1.000000e+00 : f32
    %422 = vector.broadcast %cst_113 : f32 to vector<2x32xf32>
    %423 = arith.addf %422, %421 : vector<2x32xf32>
    %424 = arith.divf %422, %423 : vector<2x32xf32>
    %425 = vector.extract_strided_slice %412 {offsets = [0, 64], sizes = [2, 32], strides = [1, 1]} : vector<2x128xf32> to vector<2x32xf32>
    %426 = math.tanh %425 : vector<2x32xf32>
    %427 = vector.extract_strided_slice %412 {offsets = [0, 96], sizes = [2, 32], strides = [1, 1]} : vector<2x128xf32> to vector<2x32xf32>
    %428 = arith.negf %427 : vector<2x32xf32>
    %429 = math.exp %428 : vector<2x32xf32>
    %cst_114 = arith.constant 1.000000e+00 : f32
    %430 = vector.broadcast %cst_114 : f32 to vector<2x32xf32>
    %431 = arith.addf %430, %429 : vector<2x32xf32>
    %432 = arith.divf %430, %431 : vector<2x32xf32>
    %433 = arith.mulf %424, %402 : vector<2x32xf32>
    %434 = arith.mulf %418, %426 : vector<2x32xf32>
    %435 = arith.addf %433, %434 : vector<2x32xf32>
    %436 = math.tanh %435 : vector<2x32xf32>
    %437 = arith.mulf %432, %436 : vector<2x32xf32>
    %438 = vector.shape_cast %437 : vector<2x32xf32> to vector<2x1x32xf32>
    %c0_115 = arith.constant 0 : index
    %439 = arith.index_cast %c12_i32 : i32 to index
    %c0_116 = arith.constant 0 : index
    %440 = vector.load %arg14[%c0_115, %439, %c0_116] : memref<2x16x32xf32, #tpu.memory_space<vmem>>, vector<2x1x32xf32>
    tpu.vector_store %arg14[%c0_115, %439, %c0_116], %438 {strides = array<i32>} : memref<2x16x32xf32, #tpu.memory_space<vmem>>, vector<2x1x32xf32>,
    %c13_i32 = arith.constant 13 : i32
    %c0_117 = arith.constant 0 : index
    %441 = arith.index_cast %c13_i32 : i32 to index
    %c0_118 = arith.constant 0 : index
    %442 = vector.load %arg15[%c0_117, %441, %c0_118] : memref<2x16x128xf32, #tpu.memory_space<vmem>>, vector<2x1x128xf32>
    %443 = vector.shape_cast %442 : vector<2x1x128xf32> to vector<2x128xf32>
    %cst_119 = arith.constant dense<0.000000e+00> : vector<2x128xf32>
    %444 = tpu.matmul %437, %9, %cst_119 {dimension_numbers = #tpu.dot_dimension_numbers<[1], [0], [0], [1], [0, 0, 1, 1], [], []>} : vector<2x32xf32>, vector<32x128xf32>, vector<2x128xf32> -> vector<2x128xf32>
    %445 = arith.addf %443, %444 : vector<2x128xf32>
    %446 = vector.extract_strided_slice %445 {offsets = [0, 0], sizes = [2, 32], strides = [1, 1]} : vector<2x128xf32> to vector<2x32xf32>
    %447 = arith.negf %446 : vector<2x32xf32>
    %448 = math.exp %447 : vector<2x32xf32>
    %cst_120 = arith.constant 1.000000e+00 : f32
    %449 = vector.broadcast %cst_120 : f32 to vector<2x32xf32>
    %450 = arith.addf %449, %448 : vector<2x32xf32>
    %451 = arith.divf %449, %450 : vector<2x32xf32>
    %452 = vector.extract_strided_slice %445 {offsets = [0, 32], sizes = [2, 32], strides = [1, 1]} : vector<2x128xf32> to vector<2x32xf32>
    %453 = arith.negf %452 : vector<2x32xf32>
    %454 = math.exp %453 : vector<2x32xf32>
    %cst_121 = arith.constant 1.000000e+00 : f32
    %455 = vector.broadcast %cst_121 : f32 to vector<2x32xf32>
    %456 = arith.addf %455, %454 : vector<2x32xf32>
    %457 = arith.divf %455, %456 : vector<2x32xf32>
    %458 = vector.extract_strided_slice %445 {offsets = [0, 64], sizes = [2, 32], strides = [1, 1]} : vector<2x128xf32> to vector<2x32xf32>
    %459 = math.tanh %458 : vector<2x32xf32>
    %460 = vector.extract_strided_slice %445 {offsets = [0, 96], sizes = [2, 32], strides = [1, 1]} : vector<2x128xf32> to vector<2x32xf32>
    %461 = arith.negf %460 : vector<2x32xf32>
    %462 = math.exp %461 : vector<2x32xf32>
    %cst_122 = arith.constant 1.000000e+00 : f32
    %463 = vector.broadcast %cst_122 : f32 to vector<2x32xf32>
    %464 = arith.addf %463, %462 : vector<2x32xf32>
    %465 = arith.divf %463, %464 : vector<2x32xf32>
    %466 = arith.mulf %457, %435 : vector<2x32xf32>
    %467 = arith.mulf %451, %459 : vector<2x32xf32>
    %468 = arith.addf %466, %467 : vector<2x32xf32>
    %469 = math.tanh %468 : vector<2x32xf32>
    %470 = arith.mulf %465, %469 : vector<2x32xf32>
    %471 = vector.shape_cast %470 : vector<2x32xf32> to vector<2x1x32xf32>
    %c0_123 = arith.constant 0 : index
    %472 = arith.index_cast %c13_i32 : i32 to index
    %c0_124 = arith.constant 0 : index
    %473 = vector.load %arg14[%c0_123, %472, %c0_124] : memref<2x16x32xf32, #tpu.memory_space<vmem>>, vector<2x1x32xf32>
    tpu.vector_store %arg14[%c0_123, %472, %c0_124], %471 {strides = array<i32>} : memref<2x16x32xf32, #tpu.memory_space<vmem>>, vector<2x1x32xf32>,
    %c14_i32 = arith.constant 14 : i32
    %c0_125 = arith.constant 0 : index
    %474 = arith.index_cast %c14_i32 : i32 to index
    %c0_126 = arith.constant 0 : index
    %475 = vector.load %arg15[%c0_125, %474, %c0_126] : memref<2x16x128xf32, #tpu.memory_space<vmem>>, vector<2x1x128xf32>
    %476 = vector.shape_cast %475 : vector<2x1x128xf32> to vector<2x128xf32>
    %cst_127 = arith.constant dense<0.000000e+00> : vector<2x128xf32>
    %477 = tpu.matmul %470, %9, %cst_127 {dimension_numbers = #tpu.dot_dimension_numbers<[1], [0], [0], [1], [0, 0, 1, 1], [], []>} : vector<2x32xf32>, vector<32x128xf32>, vector<2x128xf32> -> vector<2x128xf32>
    %478 = arith.addf %476, %477 : vector<2x128xf32>
    %479 = vector.extract_strided_slice %478 {offsets = [0, 0], sizes = [2, 32], strides = [1, 1]} : vector<2x128xf32> to vector<2x32xf32>
    %480 = arith.negf %479 : vector<2x32xf32>
    %481 = math.exp %480 : vector<2x32xf32>
    %cst_128 = arith.constant 1.000000e+00 : f32
    %482 = vector.broadcast %cst_128 : f32 to vector<2x32xf32>
    %483 = arith.addf %482, %481 : vector<2x32xf32>
    %484 = arith.divf %482, %483 : vector<2x32xf32>
    %485 = vector.extract_strided_slice %478 {offsets = [0, 32], sizes = [2, 32], strides = [1, 1]} : vector<2x128xf32> to vector<2x32xf32>
    %486 = arith.negf %485 : vector<2x32xf32>
    %487 = math.exp %486 : vector<2x32xf32>
    %cst_129 = arith.constant 1.000000e+00 : f32
    %488 = vector.broadcast %cst_129 : f32 to vector<2x32xf32>
    %489 = arith.addf %488, %487 : vector<2x32xf32>
    %490 = arith.divf %488, %489 : vector<2x32xf32>
    %491 = vector.extract_strided_slice %478 {offsets = [0, 64], sizes = [2, 32], strides = [1, 1]} : vector<2x128xf32> to vector<2x32xf32>
    %492 = math.tanh %491 : vector<2x32xf32>
    %493 = vector.extract_strided_slice %478 {offsets = [0, 96], sizes = [2, 32], strides = [1, 1]} : vector<2x128xf32> to vector<2x32xf32>
    %494 = arith.negf %493 : vector<2x32xf32>
    %495 = math.exp %494 : vector<2x32xf32>
    %cst_130 = arith.constant 1.000000e+00 : f32
    %496 = vector.broadcast %cst_130 : f32 to vector<2x32xf32>
    %497 = arith.addf %496, %495 : vector<2x32xf32>
    %498 = arith.divf %496, %497 : vector<2x32xf32>
    %499 = arith.mulf %490, %468 : vector<2x32xf32>
    %500 = arith.mulf %484, %492 : vector<2x32xf32>
    %501 = arith.addf %499, %500 : vector<2x32xf32>
    %502 = math.tanh %501 : vector<2x32xf32>
    %503 = arith.mulf %498, %502 : vector<2x32xf32>
    %504 = vector.shape_cast %503 : vector<2x32xf32> to vector<2x1x32xf32>
    %c0_131 = arith.constant 0 : index
    %505 = arith.index_cast %c14_i32 : i32 to index
    %c0_132 = arith.constant 0 : index
    %506 = vector.load %arg14[%c0_131, %505, %c0_132] : memref<2x16x32xf32, #tpu.memory_space<vmem>>, vector<2x1x32xf32>
    tpu.vector_store %arg14[%c0_131, %505, %c0_132], %504 {strides = array<i32>} : memref<2x16x32xf32, #tpu.memory_space<vmem>>, vector<2x1x32xf32>,
    %c15_i32 = arith.constant 15 : i32
    %c0_133 = arith.constant 0 : index
    %507 = arith.index_cast %c15_i32 : i32 to index
    %c0_134 = arith.constant 0 : index
    %508 = vector.load %arg15[%c0_133, %507, %c0_134] : memref<2x16x128xf32, #tpu.memory_space<vmem>>, vector<2x1x128xf32>
    %509 = vector.shape_cast %508 : vector<2x1x128xf32> to vector<2x128xf32>
    %cst_135 = arith.constant dense<0.000000e+00> : vector<2x128xf32>
    %510 = tpu.matmul %503, %9, %cst_135 {dimension_numbers = #tpu.dot_dimension_numbers<[1], [0], [0], [1], [0, 0, 1, 1], [], []>} : vector<2x32xf32>, vector<32x128xf32>, vector<2x128xf32> -> vector<2x128xf32>
    %511 = arith.addf %509, %510 : vector<2x128xf32>
    %512 = vector.extract_strided_slice %511 {offsets = [0, 0], sizes = [2, 32], strides = [1, 1]} : vector<2x128xf32> to vector<2x32xf32>
    %513 = arith.negf %512 : vector<2x32xf32>
    %514 = math.exp %513 : vector<2x32xf32>
    %cst_136 = arith.constant 1.000000e+00 : f32
    %515 = vector.broadcast %cst_136 : f32 to vector<2x32xf32>
    %516 = arith.addf %515, %514 : vector<2x32xf32>
    %517 = arith.divf %515, %516 : vector<2x32xf32>
    %518 = vector.extract_strided_slice %511 {offsets = [0, 32], sizes = [2, 32], strides = [1, 1]} : vector<2x128xf32> to vector<2x32xf32>
    %519 = arith.negf %518 : vector<2x32xf32>
    %520 = math.exp %519 : vector<2x32xf32>
    %cst_137 = arith.constant 1.000000e+00 : f32
    %521 = vector.broadcast %cst_137 : f32 to vector<2x32xf32>
    %522 = arith.addf %521, %520 : vector<2x32xf32>
    %523 = arith.divf %521, %522 : vector<2x32xf32>
    %524 = vector.extract_strided_slice %511 {offsets = [0, 64], sizes = [2, 32], strides = [1, 1]} : vector<2x128xf32> to vector<2x32xf32>
    %525 = math.tanh %524 : vector<2x32xf32>
    %526 = vector.extract_strided_slice %511 {offsets = [0, 96], sizes = [2, 32], strides = [1, 1]} : vector<2x128xf32> to vector<2x32xf32>
    %527 = arith.negf %526 : vector<2x32xf32>
    %528 = math.exp %527 : vector<2x32xf32>
    %cst_138 = arith.constant 1.000000e+00 : f32
    %529 = vector.broadcast %cst_138 : f32 to vector<2x32xf32>
    %530 = arith.addf %529, %528 : vector<2x32xf32>
    %531 = arith.divf %529, %530 : vector<2x32xf32>
    %532 = arith.mulf %523, %501 : vector<2x32xf32>
    %533 = arith.mulf %517, %525 : vector<2x32xf32>
    %534 = arith.addf %532, %533 : vector<2x32xf32>
    %535 = math.tanh %534 : vector<2x32xf32>
    %536 = arith.mulf %531, %535 : vector<2x32xf32>
    %537 = vector.shape_cast %536 : vector<2x32xf32> to vector<2x1x32xf32>
    %c0_139 = arith.constant 0 : index
    %538 = arith.index_cast %c15_i32 : i32 to index
    %c0_140 = arith.constant 0 : index
    %539 = vector.load %arg14[%c0_139, %538, %c0_140] : memref<2x16x32xf32, #tpu.memory_space<vmem>>, vector<2x1x32xf32>
    tpu.vector_store %arg14[%c0_139, %538, %c0_140], %537 {strides = array<i32>} : memref<2x16x32xf32, #tpu.memory_space<vmem>>, vector<2x1x32xf32>,
    %c16_i32 = arith.constant 16 : i32
    %c0_141 = arith.constant 0 : index
    %c0_142 = arith.constant 0 : index
    %c0_143 = arith.constant 0 : index
    %540 = vector.load %arg1[%c0_141, %c0_142, %c0_143] : memref<2x8x16xf32, #tpu.memory_space<vmem>>, vector<2x8x16xf32>
    %541 = vector.shape_cast %540 : vector<2x8x16xf32> to vector<16x16xf32>
    %c0_144 = arith.constant 0 : index
    %c0_145 = arith.constant 0 : index
    %542 = vector.load %arg9[%c0_144, %c0_145] : memref<16x256xf32, #tpu.memory_space<vmem>>, vector<16x256xf32>
    %cst_146 = arith.constant dense<0.000000e+00> : vector<16x256xf32>
    %543 = tpu.matmul %541, %542, %cst_146 {dimension_numbers = #tpu.dot_dimension_numbers<[1], [0], [0], [1], [0, 0, 1, 1], [], []>} : vector<16x16xf32>, vector<16x256xf32>, vector<16x256xf32> -> vector<16x256xf32>
    %c0_147 = arith.constant 0 : index
    %c0_148 = arith.constant 0 : index
    %544 = vector.load %arg10[%c0_147, %c0_148] : memref<1x256xf32, #tpu.memory_space<vmem>>, vector<1x256xf32>
    %545 = vector.broadcast %544 : vector<1x256xf32> to vector<16x256xf32>
    %546 = arith.addf %543, %545 : vector<16x256xf32>
    %547 = vector.shape_cast %546 : vector<16x256xf32> to vector<2x8x256xf32>
    %c0_149 = arith.constant 0 : index
    %c0_150 = arith.constant 0 : index
    %c0_151 = arith.constant 0 : index
    %548 = vector.load %arg16[%c0_149, %c0_150, %c0_151] : memref<2x8x256xf32, #tpu.memory_space<vmem>>, vector<2x8x256xf32>
    tpu.vector_store %arg16[%c0_149, %c0_150, %c0_151], %547 {strides = array<i32>} : memref<2x8x256xf32, #tpu.memory_space<vmem>>, vector<2x8x256xf32>,
    %c0_152 = arith.constant 0 : index
    %c0_153 = arith.constant 0 : index
    %c0_154 = arith.constant 0 : index
    %549 = vector.load %arg14[%c0_152, %c0_153, %c0_154] : memref<2x16x32xf32, #tpu.memory_space<vmem>>, vector<2x16x32xf32>
    %550 = vector.shape_cast %549 : vector<2x16x32xf32> to vector<32x32xf32>
    %c0_155 = arith.constant 0 : index
    %c0_156 = arith.constant 0 : index
    %551 = vector.load %arg6[%c0_155, %c0_156] : memref<32x32xf32, #tpu.memory_space<vmem>>, vector<32x32xf32>
    %cst_157 = arith.constant dense<0.000000e+00> : vector<32x32xf32>
    %552 = tpu.matmul %550, %551, %cst_157 {dimension_numbers = #tpu.dot_dimension_numbers<[1], [0], [0], [1], [0, 0, 1, 1], [], []>} : vector<32x32xf32>, vector<32x32xf32>, vector<32x32xf32> -> vector<32x32xf32>
    %553 = vector.shape_cast %552 : vector<32x32xf32> to vector<2x16x32xf32>
    %c0_158 = arith.constant 0 : index
    %c0_159 = arith.constant 0 : index
    %554 = vector.load %arg7[%c0_158, %c0_159] : memref<1x32xf32, #tpu.memory_space<vmem>>, vector<1x32xf32>
    %555 = vector.shape_cast %554 : vector<1x32xf32> to vector<1x1x32xf32>
    %556 = vector.broadcast %555 : vector<1x1x32xf32> to vector<2x16x32xf32>
    %557 = arith.addf %553, %556 : vector<2x16x32xf32>
    %c0_160 = arith.constant 0 : index
    %c0_161 = arith.constant 0 : index
    %558 = vector.load %arg8[%c0_160, %c0_161] : memref<1x32xf32, #tpu.memory_space<vmem>>, vector<1x32xf32>
    %559 = vector.shape_cast %558 : vector<1x32xf32> to vector<1x1x32xf32>
    %c0_162 = arith.constant 0 : index
    %c0_163 = arith.constant 0 : index
    %560 = vector.load %arg5[%c0_162, %c0_163] : memref<32x32xf32, #tpu.memory_space<vmem>>, vector<32x32xf32>
    %c0_164 = arith.constant 0 : index
    %c0_165 = arith.constant 0 : index
    %561 = vector.load %arg11[%c0_164, %c0_165] : memref<64x128xf32, #tpu.memory_space<vmem>>, vector<64x128xf32>
    %c0_166 = arith.constant 0 : index
    %c0_167 = arith.constant 0 : index
    %562 = vector.load %arg12[%c0_166, %c0_167] : memref<64x128xf32, #tpu.memory_space<vmem>>, vector<64x128xf32>
    %c0_i32_168 = arith.constant 0 : i32
    %cst_169 = arith.constant dense<0.000000e+00> : vector<2x32xf32>
    %563 = tpu.matmul %536, %560, %cst_169 {dimension_numbers = #tpu.dot_dimension_numbers<[1], [0], [0], [1], [0, 0, 1, 1], [], []>} : vector<2x32xf32>, vector<32x32xf32>, vector<2x32xf32> -> vector<2x32xf32>
    %564 = vector.shape_cast %563 : vector<2x32xf32> to vector<2x1x32xf32>
    %565 = vector.broadcast %564 : vector<2x1x32xf32> to vector<2x16x32xf32>
    %566 = arith.addf %565, %557 : vector<2x16x32xf32>
    %567 = math.tanh %566 : vector<2x16x32xf32>
    %568 = vector.broadcast %559 : vector<1x1x32xf32> to vector<2x16x32xf32>
    %569 = arith.mulf %567, %568 : vector<2x16x32xf32>
    %cst_170 = arith.constant dense<0.000000e+00> : vector<2x16xf32>
    %570 = vector.multi_reduction <add>, %569, %cst_170 [2] : vector<2x16x32xf32> to vector<2x16xf32>
    %cst_171 = arith.constant dense<0xFF800000> : vector<2xf32>
    %571 = vector.multi_reduction <maximumf>, %570, %cst_171 [1] : vector<2x16xf32> to vector<2xf32>
    %572 = vector.shape_cast %571 : vector<2xf32> to vector<2x1xf32>
    %573 = vector.broadcast %572 : vector<2x1xf32> to vector<2x16xf32>
    %574 = arith.subf %570, %573 : vector<2x16xf32>
    %575 = math.exp %574 : vector<2x16xf32>
    %cst_172 = arith.constant dense<0.000000e+00> : vector<2xf32>
    %576 = vector.multi_reduction <add>, %575, %cst_172 [1] : vector<2x16xf32> to vector<2xf32>
    %577 = vector.shape_cast %576 : vector<2xf32> to vector<2x1xf32>
    %578 = tpu.reciprocal %577 {approx = true} : vector<2x1xf32> -> vector<2x1xf32>
    %579 = vector.broadcast %578 : vector<2x1xf32> to vector<2x16xf32>
    %580 = arith.mulf %575, %579 : vector<2x16xf32>
    %581 = vector.shape_cast %580 : vector<2x16xf32> to vector<2x16x1xf32>
    %582 = vector.broadcast %581 : vector<2x16x1xf32> to vector<2x16x32xf32>
    %583 = arith.mulf %582, %549 : vector<2x16x32xf32>
    %cst_173 = arith.constant dense<0.000000e+00> : vector<2x32xf32>
    %584 = vector.multi_reduction <add>, %583, %cst_173 [1] : vector<2x16x32xf32> to vector<2x32xf32>
    %c0_174 = arith.constant 0 : index
    %585 = arith.index_cast %c0_i32_168 : i32 to index
    %c0_175 = arith.constant 0 : index
    %586 = vector.load %arg16[%c0_174, %585, %c0_175] : memref<2x8x256xf32, #tpu.memory_space<vmem>>, vector<2x1x256xf32>
    %587 = vector.shape_cast %586 : vector<2x1x256xf32> to vector<2x256xf32>
    %588 = vector.extract_strided_slice %587 {offsets = [0, 0], sizes = [2, 128], strides = [1, 1]} : vector<2x256xf32> to vector<2x128xf32>
    %589 = vector.extract_strided_slice %587 {offsets = [0, 128], sizes = [2, 128], strides = [1, 1]} : vector<2x256xf32> to vector<2x128xf32>
    %590 = tpu.concatenate %584, %536 in 1 : vector<2x32xf32>, vector<2x32xf32> -> vector<2x64xf32>
    %cst_176 = arith.constant dense<0.000000e+00> : vector<2x128xf32>
    %591 = tpu.matmul %590, %561, %cst_176 {dimension_numbers = #tpu.dot_dimension_numbers<[1], [0], [0], [1], [0, 0, 1, 1], [], []>} : vector<2x64xf32>, vector<64x128xf32>, vector<2x128xf32> -> vector<2x128xf32>
    %592 = arith.addf %588, %591 : vector<2x128xf32>
    %593 = vector.extract_strided_slice %592 {offsets = [0, 0], sizes = [2, 32], strides = [1, 1]} : vector<2x128xf32> to vector<2x32xf32>
    %594 = arith.negf %593 : vector<2x32xf32>
    %595 = math.exp %594 : vector<2x32xf32>
    %cst_177 = arith.constant 1.000000e+00 : f32
    %596 = vector.broadcast %cst_177 : f32 to vector<2x32xf32>
    %597 = arith.addf %596, %595 : vector<2x32xf32>
    %598 = arith.divf %596, %597 : vector<2x32xf32>
    %599 = vector.extract_strided_slice %592 {offsets = [0, 32], sizes = [2, 32], strides = [1, 1]} : vector<2x128xf32> to vector<2x32xf32>
    %600 = arith.negf %599 : vector<2x32xf32>
    %601 = math.exp %600 : vector<2x32xf32>
    %cst_178 = arith.constant 1.000000e+00 : f32
    %602 = vector.broadcast %cst_178 : f32 to vector<2x32xf32>
    %603 = arith.addf %602, %601 : vector<2x32xf32>
    %604 = arith.divf %602, %603 : vector<2x32xf32>
    %605 = vector.extract_strided_slice %592 {offsets = [0, 64], sizes = [2, 32], strides = [1, 1]} : vector<2x128xf32> to vector<2x32xf32>
    %606 = math.tanh %605 : vector<2x32xf32>
    %607 = vector.extract_strided_slice %592 {offsets = [0, 96], sizes = [2, 32], strides = [1, 1]} : vector<2x128xf32> to vector<2x32xf32>
    %608 = arith.negf %607 : vector<2x32xf32>
    %609 = math.exp %608 : vector<2x32xf32>
    %cst_179 = arith.constant 1.000000e+00 : f32
    %610 = vector.broadcast %cst_179 : f32 to vector<2x32xf32>
    %611 = arith.addf %610, %609 : vector<2x32xf32>
    %612 = arith.divf %610, %611 : vector<2x32xf32>
    %613 = arith.mulf %604, %534 : vector<2x32xf32>
    %614 = arith.mulf %598, %606 : vector<2x32xf32>
    %615 = arith.addf %613, %614 : vector<2x32xf32>
    %616 = math.tanh %615 : vector<2x32xf32>
    %617 = arith.mulf %612, %616 : vector<2x32xf32>
    %618 = tpu.concatenate %617, %584 in 1 : vector<2x32xf32>, vector<2x32xf32> -> vector<2x64xf32>
    %cst_180 = arith.constant dense<0.000000e+00> : vector<2x128xf32>
    %619 = tpu.matmul %618, %562, %cst_180 {dimension_numbers = #tpu.dot_dimension_numbers<[1], [0], [0], [1], [0, 0, 1, 1], [], []>} : vector<2x64xf32>, vector<64x128xf32>, vector<2x128xf32> -> vector<2x128xf32>
    %620 = arith.addf %589, %619 : vector<2x128xf32>
    %621 = vector.shape_cast %620 : vector<2x128xf32> to vector<2x1x128xf32>
    %c0_181 = arith.constant 0 : index
    %622 = arith.index_cast %c0_i32_168 : i32 to index
    %c0_182 = arith.constant 0 : index
    %623 = vector.load %arg13[%c0_181, %622, %c0_182] : memref<2x8x128xf32, #tpu.memory_space<vmem>>, vector<2x1x128xf32>
    tpu.vector_store %arg13[%c0_181, %622, %c0_182], %621 {strides = array<i32>} : memref<2x8x128xf32, #tpu.memory_space<vmem>>, vector<2x1x128xf32>,
    %c1_i32_183 = arith.constant 1 : i32
    %cst_184 = arith.constant dense<0.000000e+00> : vector<2x32xf32>
    %624 = tpu.matmul %617, %560, %cst_184 {dimension_numbers = #tpu.dot_dimension_numbers<[1], [0], [0], [1], [0, 0, 1, 1], [], []>} : vector<2x32xf32>, vector<32x32xf32>, vector<2x32xf32> -> vector<2x32xf32>
    %625 = vector.shape_cast %624 : vector<2x32xf32> to vector<2x1x32xf32>
    %626 = vector.broadcast %625 : vector<2x1x32xf32> to vector<2x16x32xf32>
    %627 = arith.addf %626, %557 : vector<2x16x32xf32>
    %628 = math.tanh %627 : vector<2x16x32xf32>
    %629 = vector.broadcast %559 : vector<1x1x32xf32> to vector<2x16x32xf32>
    %630 = arith.mulf %628, %629 : vector<2x16x32xf32>
    %cst_185 = arith.constant dense<0.000000e+00> : vector<2x16xf32>
    %631 = vector.multi_reduction <add>, %630, %cst_185 [2] : vector<2x16x32xf32> to vector<2x16xf32>
    %cst_186 = arith.constant dense<0xFF800000> : vector<2xf32>
    %632 = vector.multi_reduction <maximumf>, %631, %cst_186 [1] : vector<2x16xf32> to vector<2xf32>
    %633 = vector.shape_cast %632 : vector<2xf32> to vector<2x1xf32>
    %634 = vector.broadcast %633 : vector<2x1xf32> to vector<2x16xf32>
    %635 = arith.subf %631, %634 : vector<2x16xf32>
    %636 = math.exp %635 : vector<2x16xf32>
    %cst_187 = arith.constant dense<0.000000e+00> : vector<2xf32>
    %637 = vector.multi_reduction <add>, %636, %cst_187 [1] : vector<2x16xf32> to vector<2xf32>
    %638 = vector.shape_cast %637 : vector<2xf32> to vector<2x1xf32>
    %639 = tpu.reciprocal %638 {approx = true} : vector<2x1xf32> -> vector<2x1xf32>
    %640 = vector.broadcast %639 : vector<2x1xf32> to vector<2x16xf32>
    %641 = arith.mulf %636, %640 : vector<2x16xf32>
    %642 = vector.shape_cast %641 : vector<2x16xf32> to vector<2x16x1xf32>
    %643 = vector.broadcast %642 : vector<2x16x1xf32> to vector<2x16x32xf32>
    %644 = arith.mulf %643, %549 : vector<2x16x32xf32>
    %cst_188 = arith.constant dense<0.000000e+00> : vector<2x32xf32>
    %645 = vector.multi_reduction <add>, %644, %cst_188 [1] : vector<2x16x32xf32> to vector<2x32xf32>
    %c0_189 = arith.constant 0 : index
    %646 = arith.index_cast %c1_i32_183 : i32 to index
    %c0_190 = arith.constant 0 : index
    %647 = vector.load %arg16[%c0_189, %646, %c0_190] : memref<2x8x256xf32, #tpu.memory_space<vmem>>, vector<2x1x256xf32>
    %648 = vector.shape_cast %647 : vector<2x1x256xf32> to vector<2x256xf32>
    %649 = vector.extract_strided_slice %648 {offsets = [0, 0], sizes = [2, 128], strides = [1, 1]} : vector<2x256xf32> to vector<2x128xf32>
    %650 = vector.extract_strided_slice %648 {offsets = [0, 128], sizes = [2, 128], strides = [1, 1]} : vector<2x256xf32> to vector<2x128xf32>
    %651 = tpu.concatenate %645, %617 in 1 : vector<2x32xf32>, vector<2x32xf32> -> vector<2x64xf32>
    %cst_191 = arith.constant dense<0.000000e+00> : vector<2x128xf32>
    %652 = tpu.matmul %651, %561, %cst_191 {dimension_numbers = #tpu.dot_dimension_numbers<[1], [0], [0], [1], [0, 0, 1, 1], [], []>} : vector<2x64xf32>, vector<64x128xf32>, vector<2x128xf32> -> vector<2x128xf32>
    %653 = arith.addf %649, %652 : vector<2x128xf32>
    %654 = vector.extract_strided_slice %653 {offsets = [0, 0], sizes = [2, 32], strides = [1, 1]} : vector<2x128xf32> to vector<2x32xf32>
    %655 = arith.negf %654 : vector<2x32xf32>
    %656 = math.exp %655 : vector<2x32xf32>
    %cst_192 = arith.constant 1.000000e+00 : f32
    %657 = vector.broadcast %cst_192 : f32 to vector<2x32xf32>
    %658 = arith.addf %657, %656 : vector<2x32xf32>
    %659 = arith.divf %657, %658 : vector<2x32xf32>
    %660 = vector.extract_strided_slice %653 {offsets = [0, 32], sizes = [2, 32], strides = [1, 1]} : vector<2x128xf32> to vector<2x32xf32>
    %661 = arith.negf %660 : vector<2x32xf32>
    %662 = math.exp %661 : vector<2x32xf32>
    %cst_193 = arith.constant 1.000000e+00 : f32
    %663 = vector.broadcast %cst_193 : f32 to vector<2x32xf32>
    %664 = arith.addf %663, %662 : vector<2x32xf32>
    %665 = arith.divf %663, %664 : vector<2x32xf32>
    %666 = vector.extract_strided_slice %653 {offsets = [0, 64], sizes = [2, 32], strides = [1, 1]} : vector<2x128xf32> to vector<2x32xf32>
    %667 = math.tanh %666 : vector<2x32xf32>
    %668 = vector.extract_strided_slice %653 {offsets = [0, 96], sizes = [2, 32], strides = [1, 1]} : vector<2x128xf32> to vector<2x32xf32>
    %669 = arith.negf %668 : vector<2x32xf32>
    %670 = math.exp %669 : vector<2x32xf32>
    %cst_194 = arith.constant 1.000000e+00 : f32
    %671 = vector.broadcast %cst_194 : f32 to vector<2x32xf32>
    %672 = arith.addf %671, %670 : vector<2x32xf32>
    %673 = arith.divf %671, %672 : vector<2x32xf32>
    %674 = arith.mulf %665, %615 : vector<2x32xf32>
    %675 = arith.mulf %659, %667 : vector<2x32xf32>
    %676 = arith.addf %674, %675 : vector<2x32xf32>
    %677 = math.tanh %676 : vector<2x32xf32>
    %678 = arith.mulf %673, %677 : vector<2x32xf32>
    %679 = tpu.concatenate %678, %645 in 1 : vector<2x32xf32>, vector<2x32xf32> -> vector<2x64xf32>
    %cst_195 = arith.constant dense<0.000000e+00> : vector<2x128xf32>
    %680 = tpu.matmul %679, %562, %cst_195 {dimension_numbers = #tpu.dot_dimension_numbers<[1], [0], [0], [1], [0, 0, 1, 1], [], []>} : vector<2x64xf32>, vector<64x128xf32>, vector<2x128xf32> -> vector<2x128xf32>
    %681 = arith.addf %650, %680 : vector<2x128xf32>
    %682 = vector.shape_cast %681 : vector<2x128xf32> to vector<2x1x128xf32>
    %c0_196 = arith.constant 0 : index
    %683 = arith.index_cast %c1_i32_183 : i32 to index
    %c0_197 = arith.constant 0 : index
    %684 = vector.load %arg13[%c0_196, %683, %c0_197] : memref<2x8x128xf32, #tpu.memory_space<vmem>>, vector<2x1x128xf32>
    tpu.vector_store %arg13[%c0_196, %683, %c0_197], %682 {strides = array<i32>} : memref<2x8x128xf32, #tpu.memory_space<vmem>>, vector<2x1x128xf32>,
    %c2_i32_198 = arith.constant 2 : i32
    %cst_199 = arith.constant dense<0.000000e+00> : vector<2x32xf32>
    %685 = tpu.matmul %678, %560, %cst_199 {dimension_numbers = #tpu.dot_dimension_numbers<[1], [0], [0], [1], [0, 0, 1, 1], [], []>} : vector<2x32xf32>, vector<32x32xf32>, vector<2x32xf32> -> vector<2x32xf32>
    %686 = vector.shape_cast %685 : vector<2x32xf32> to vector<2x1x32xf32>
    %687 = vector.broadcast %686 : vector<2x1x32xf32> to vector<2x16x32xf32>
    %688 = arith.addf %687, %557 : vector<2x16x32xf32>
    %689 = math.tanh %688 : vector<2x16x32xf32>
    %690 = vector.broadcast %559 : vector<1x1x32xf32> to vector<2x16x32xf32>
    %691 = arith.mulf %689, %690 : vector<2x16x32xf32>
    %cst_200 = arith.constant dense<0.000000e+00> : vector<2x16xf32>
    %692 = vector.multi_reduction <add>, %691, %cst_200 [2] : vector<2x16x32xf32> to vector<2x16xf32>
    %cst_201 = arith.constant dense<0xFF800000> : vector<2xf32>
    %693 = vector.multi_reduction <maximumf>, %692, %cst_201 [1] : vector<2x16xf32> to vector<2xf32>
    %694 = vector.shape_cast %693 : vector<2xf32> to vector<2x1xf32>
    %695 = vector.broadcast %694 : vector<2x1xf32> to vector<2x16xf32>
    %696 = arith.subf %692, %695 : vector<2x16xf32>
    %697 = math.exp %696 : vector<2x16xf32>
    %cst_202 = arith.constant dense<0.000000e+00> : vector<2xf32>
    %698 = vector.multi_reduction <add>, %697, %cst_202 [1] : vector<2x16xf32> to vector<2xf32>
    %699 = vector.shape_cast %698 : vector<2xf32> to vector<2x1xf32>
    %700 = tpu.reciprocal %699 {approx = true} : vector<2x1xf32> -> vector<2x1xf32>
    %701 = vector.broadcast %700 : vector<2x1xf32> to vector<2x16xf32>
    %702 = arith.mulf %697, %701 : vector<2x16xf32>
    %703 = vector.shape_cast %702 : vector<2x16xf32> to vector<2x16x1xf32>
    %704 = vector.broadcast %703 : vector<2x16x1xf32> to vector<2x16x32xf32>
    %705 = arith.mulf %704, %549 : vector<2x16x32xf32>
    %cst_203 = arith.constant dense<0.000000e+00> : vector<2x32xf32>
    %706 = vector.multi_reduction <add>, %705, %cst_203 [1] : vector<2x16x32xf32> to vector<2x32xf32>
    %c0_204 = arith.constant 0 : index
    %707 = arith.index_cast %c2_i32_198 : i32 to index
    %c0_205 = arith.constant 0 : index
    %708 = vector.load %arg16[%c0_204, %707, %c0_205] : memref<2x8x256xf32, #tpu.memory_space<vmem>>, vector<2x1x256xf32>
    %709 = vector.shape_cast %708 : vector<2x1x256xf32> to vector<2x256xf32>
    %710 = vector.extract_strided_slice %709 {offsets = [0, 0], sizes = [2, 128], strides = [1, 1]} : vector<2x256xf32> to vector<2x128xf32>
    %711 = vector.extract_strided_slice %709 {offsets = [0, 128], sizes = [2, 128], strides = [1, 1]} : vector<2x256xf32> to vector<2x128xf32>
    %712 = tpu.concatenate %706, %678 in 1 : vector<2x32xf32>, vector<2x32xf32> -> vector<2x64xf32>
    %cst_206 = arith.constant dense<0.000000e+00> : vector<2x128xf32>
    %713 = tpu.matmul %712, %561, %cst_206 {dimension_numbers = #tpu.dot_dimension_numbers<[1], [0], [0], [1], [0, 0, 1, 1], [], []>} : vector<2x64xf32>, vector<64x128xf32>, vector<2x128xf32> -> vector<2x128xf32>
    %714 = arith.addf %710, %713 : vector<2x128xf32>
    %715 = vector.extract_strided_slice %714 {offsets = [0, 0], sizes = [2, 32], strides = [1, 1]} : vector<2x128xf32> to vector<2x32xf32>
    %716 = arith.negf %715 : vector<2x32xf32>
    %717 = math.exp %716 : vector<2x32xf32>
    %cst_207 = arith.constant 1.000000e+00 : f32
    %718 = vector.broadcast %cst_207 : f32 to vector<2x32xf32>
    %719 = arith.addf %718, %717 : vector<2x32xf32>
    %720 = arith.divf %718, %719 : vector<2x32xf32>
    %721 = vector.extract_strided_slice %714 {offsets = [0, 32], sizes = [2, 32], strides = [1, 1]} : vector<2x128xf32> to vector<2x32xf32>
    %722 = arith.negf %721 : vector<2x32xf32>
    %723 = math.exp %722 : vector<2x32xf32>
    %cst_208 = arith.constant 1.000000e+00 : f32
    %724 = vector.broadcast %cst_208 : f32 to vector<2x32xf32>
    %725 = arith.addf %724, %723 : vector<2x32xf32>
    %726 = arith.divf %724, %725 : vector<2x32xf32>
    %727 = vector.extract_strided_slice %714 {offsets = [0, 64], sizes = [2, 32], strides = [1, 1]} : vector<2x128xf32> to vector<2x32xf32>
    %728 = math.tanh %727 : vector<2x32xf32>
    %729 = vector.extract_strided_slice %714 {offsets = [0, 96], sizes = [2, 32], strides = [1, 1]} : vector<2x128xf32> to vector<2x32xf32>
    %730 = arith.negf %729 : vector<2x32xf32>
    %731 = math.exp %730 : vector<2x32xf32>
    %cst_209 = arith.constant 1.000000e+00 : f32
    %732 = vector.broadcast %cst_209 : f32 to vector<2x32xf32>
    %733 = arith.addf %732, %731 : vector<2x32xf32>
    %734 = arith.divf %732, %733 : vector<2x32xf32>
    %735 = arith.mulf %726, %676 : vector<2x32xf32>
    %736 = arith.mulf %720, %728 : vector<2x32xf32>
    %737 = arith.addf %735, %736 : vector<2x32xf32>
    %738 = math.tanh %737 : vector<2x32xf32>
    %739 = arith.mulf %734, %738 : vector<2x32xf32>
    %740 = tpu.concatenate %739, %706 in 1 : vector<2x32xf32>, vector<2x32xf32> -> vector<2x64xf32>
    %cst_210 = arith.constant dense<0.000000e+00> : vector<2x128xf32>
    %741 = tpu.matmul %740, %562, %cst_210 {dimension_numbers = #tpu.dot_dimension_numbers<[1], [0], [0], [1], [0, 0, 1, 1], [], []>} : vector<2x64xf32>, vector<64x128xf32>, vector<2x128xf32> -> vector<2x128xf32>
    %742 = arith.addf %711, %741 : vector<2x128xf32>
    %743 = vector.shape_cast %742 : vector<2x128xf32> to vector<2x1x128xf32>
    %c0_211 = arith.constant 0 : index
    %744 = arith.index_cast %c2_i32_198 : i32 to index
    %c0_212 = arith.constant 0 : index
    %745 = vector.load %arg13[%c0_211, %744, %c0_212] : memref<2x8x128xf32, #tpu.memory_space<vmem>>, vector<2x1x128xf32>
    tpu.vector_store %arg13[%c0_211, %744, %c0_212], %743 {strides = array<i32>} : memref<2x8x128xf32, #tpu.memory_space<vmem>>, vector<2x1x128xf32>,
    %c3_i32_213 = arith.constant 3 : i32
    %cst_214 = arith.constant dense<0.000000e+00> : vector<2x32xf32>
    %746 = tpu.matmul %739, %560, %cst_214 {dimension_numbers = #tpu.dot_dimension_numbers<[1], [0], [0], [1], [0, 0, 1, 1], [], []>} : vector<2x32xf32>, vector<32x32xf32>, vector<2x32xf32> -> vector<2x32xf32>
    %747 = vector.shape_cast %746 : vector<2x32xf32> to vector<2x1x32xf32>
    %748 = vector.broadcast %747 : vector<2x1x32xf32> to vector<2x16x32xf32>
    %749 = arith.addf %748, %557 : vector<2x16x32xf32>
    %750 = math.tanh %749 : vector<2x16x32xf32>
    %751 = vector.broadcast %559 : vector<1x1x32xf32> to vector<2x16x32xf32>
    %752 = arith.mulf %750, %751 : vector<2x16x32xf32>
    %cst_215 = arith.constant dense<0.000000e+00> : vector<2x16xf32>
    %753 = vector.multi_reduction <add>, %752, %cst_215 [2] : vector<2x16x32xf32> to vector<2x16xf32>
    %cst_216 = arith.constant dense<0xFF800000> : vector<2xf32>
    %754 = vector.multi_reduction <maximumf>, %753, %cst_216 [1] : vector<2x16xf32> to vector<2xf32>
    %755 = vector.shape_cast %754 : vector<2xf32> to vector<2x1xf32>
    %756 = vector.broadcast %755 : vector<2x1xf32> to vector<2x16xf32>
    %757 = arith.subf %753, %756 : vector<2x16xf32>
    %758 = math.exp %757 : vector<2x16xf32>
    %cst_217 = arith.constant dense<0.000000e+00> : vector<2xf32>
    %759 = vector.multi_reduction <add>, %758, %cst_217 [1] : vector<2x16xf32> to vector<2xf32>
    %760 = vector.shape_cast %759 : vector<2xf32> to vector<2x1xf32>
    %761 = tpu.reciprocal %760 {approx = true} : vector<2x1xf32> -> vector<2x1xf32>
    %762 = vector.broadcast %761 : vector<2x1xf32> to vector<2x16xf32>
    %763 = arith.mulf %758, %762 : vector<2x16xf32>
    %764 = vector.shape_cast %763 : vector<2x16xf32> to vector<2x16x1xf32>
    %765 = vector.broadcast %764 : vector<2x16x1xf32> to vector<2x16x32xf32>
    %766 = arith.mulf %765, %549 : vector<2x16x32xf32>
    %cst_218 = arith.constant dense<0.000000e+00> : vector<2x32xf32>
    %767 = vector.multi_reduction <add>, %766, %cst_218 [1] : vector<2x16x32xf32> to vector<2x32xf32>
    %c0_219 = arith.constant 0 : index
    %768 = arith.index_cast %c3_i32_213 : i32 to index
    %c0_220 = arith.constant 0 : index
    %769 = vector.load %arg16[%c0_219, %768, %c0_220] : memref<2x8x256xf32, #tpu.memory_space<vmem>>, vector<2x1x256xf32>
    %770 = vector.shape_cast %769 : vector<2x1x256xf32> to vector<2x256xf32>
    %771 = vector.extract_strided_slice %770 {offsets = [0, 0], sizes = [2, 128], strides = [1, 1]} : vector<2x256xf32> to vector<2x128xf32>
    %772 = vector.extract_strided_slice %770 {offsets = [0, 128], sizes = [2, 128], strides = [1, 1]} : vector<2x256xf32> to vector<2x128xf32>
    %773 = tpu.concatenate %767, %739 in 1 : vector<2x32xf32>, vector<2x32xf32> -> vector<2x64xf32>
    %cst_221 = arith.constant dense<0.000000e+00> : vector<2x128xf32>
    %774 = tpu.matmul %773, %561, %cst_221 {dimension_numbers = #tpu.dot_dimension_numbers<[1], [0], [0], [1], [0, 0, 1, 1], [], []>} : vector<2x64xf32>, vector<64x128xf32>, vector<2x128xf32> -> vector<2x128xf32>
    %775 = arith.addf %771, %774 : vector<2x128xf32>
    %776 = vector.extract_strided_slice %775 {offsets = [0, 0], sizes = [2, 32], strides = [1, 1]} : vector<2x128xf32> to vector<2x32xf32>
    %777 = arith.negf %776 : vector<2x32xf32>
    %778 = math.exp %777 : vector<2x32xf32>
    %cst_222 = arith.constant 1.000000e+00 : f32
    %779 = vector.broadcast %cst_222 : f32 to vector<2x32xf32>
    %780 = arith.addf %779, %778 : vector<2x32xf32>
    %781 = arith.divf %779, %780 : vector<2x32xf32>
    %782 = vector.extract_strided_slice %775 {offsets = [0, 32], sizes = [2, 32], strides = [1, 1]} : vector<2x128xf32> to vector<2x32xf32>
    %783 = arith.negf %782 : vector<2x32xf32>
    %784 = math.exp %783 : vector<2x32xf32>
    %cst_223 = arith.constant 1.000000e+00 : f32
    %785 = vector.broadcast %cst_223 : f32 to vector<2x32xf32>
    %786 = arith.addf %785, %784 : vector<2x32xf32>
    %787 = arith.divf %785, %786 : vector<2x32xf32>
    %788 = vector.extract_strided_slice %775 {offsets = [0, 64], sizes = [2, 32], strides = [1, 1]} : vector<2x128xf32> to vector<2x32xf32>
    %789 = math.tanh %788 : vector<2x32xf32>
    %790 = vector.extract_strided_slice %775 {offsets = [0, 96], sizes = [2, 32], strides = [1, 1]} : vector<2x128xf32> to vector<2x32xf32>
    %791 = arith.negf %790 : vector<2x32xf32>
    %792 = math.exp %791 : vector<2x32xf32>
    %cst_224 = arith.constant 1.000000e+00 : f32
    %793 = vector.broadcast %cst_224 : f32 to vector<2x32xf32>
    %794 = arith.addf %793, %792 : vector<2x32xf32>
    %795 = arith.divf %793, %794 : vector<2x32xf32>
    %796 = arith.mulf %787, %737 : vector<2x32xf32>
    %797 = arith.mulf %781, %789 : vector<2x32xf32>
    %798 = arith.addf %796, %797 : vector<2x32xf32>
    %799 = math.tanh %798 : vector<2x32xf32>
    %800 = arith.mulf %795, %799 : vector<2x32xf32>
    %801 = tpu.concatenate %800, %767 in 1 : vector<2x32xf32>, vector<2x32xf32> -> vector<2x64xf32>
    %cst_225 = arith.constant dense<0.000000e+00> : vector<2x128xf32>
    %802 = tpu.matmul %801, %562, %cst_225 {dimension_numbers = #tpu.dot_dimension_numbers<[1], [0], [0], [1], [0, 0, 1, 1], [], []>} : vector<2x64xf32>, vector<64x128xf32>, vector<2x128xf32> -> vector<2x128xf32>
    %803 = arith.addf %772, %802 : vector<2x128xf32>
    %804 = vector.shape_cast %803 : vector<2x128xf32> to vector<2x1x128xf32>
    %c0_226 = arith.constant 0 : index
    %805 = arith.index_cast %c3_i32_213 : i32 to index
    %c0_227 = arith.constant 0 : index
    %806 = vector.load %arg13[%c0_226, %805, %c0_227] : memref<2x8x128xf32, #tpu.memory_space<vmem>>, vector<2x1x128xf32>
    tpu.vector_store %arg13[%c0_226, %805, %c0_227], %804 {strides = array<i32>} : memref<2x8x128xf32, #tpu.memory_space<vmem>>, vector<2x1x128xf32>,
    %c4_i32_228 = arith.constant 4 : i32
    %cst_229 = arith.constant dense<0.000000e+00> : vector<2x32xf32>
    %807 = tpu.matmul %800, %560, %cst_229 {dimension_numbers = #tpu.dot_dimension_numbers<[1], [0], [0], [1], [0, 0, 1, 1], [], []>} : vector<2x32xf32>, vector<32x32xf32>, vector<2x32xf32> -> vector<2x32xf32>
    %808 = vector.shape_cast %807 : vector<2x32xf32> to vector<2x1x32xf32>
    %809 = vector.broadcast %808 : vector<2x1x32xf32> to vector<2x16x32xf32>
    %810 = arith.addf %809, %557 : vector<2x16x32xf32>
    %811 = math.tanh %810 : vector<2x16x32xf32>
    %812 = vector.broadcast %559 : vector<1x1x32xf32> to vector<2x16x32xf32>
    %813 = arith.mulf %811, %812 : vector<2x16x32xf32>
    %cst_230 = arith.constant dense<0.000000e+00> : vector<2x16xf32>
    %814 = vector.multi_reduction <add>, %813, %cst_230 [2] : vector<2x16x32xf32> to vector<2x16xf32>
    %cst_231 = arith.constant dense<0xFF800000> : vector<2xf32>
    %815 = vector.multi_reduction <maximumf>, %814, %cst_231 [1] : vector<2x16xf32> to vector<2xf32>
    %816 = vector.shape_cast %815 : vector<2xf32> to vector<2x1xf32>
    %817 = vector.broadcast %816 : vector<2x1xf32> to vector<2x16xf32>
    %818 = arith.subf %814, %817 : vector<2x16xf32>
    %819 = math.exp %818 : vector<2x16xf32>
    %cst_232 = arith.constant dense<0.000000e+00> : vector<2xf32>
    %820 = vector.multi_reduction <add>, %819, %cst_232 [1] : vector<2x16xf32> to vector<2xf32>
    %821 = vector.shape_cast %820 : vector<2xf32> to vector<2x1xf32>
    %822 = tpu.reciprocal %821 {approx = true} : vector<2x1xf32> -> vector<2x1xf32>
    %823 = vector.broadcast %822 : vector<2x1xf32> to vector<2x16xf32>
    %824 = arith.mulf %819, %823 : vector<2x16xf32>
    %825 = vector.shape_cast %824 : vector<2x16xf32> to vector<2x16x1xf32>
    %826 = vector.broadcast %825 : vector<2x16x1xf32> to vector<2x16x32xf32>
    %827 = arith.mulf %826, %549 : vector<2x16x32xf32>
    %cst_233 = arith.constant dense<0.000000e+00> : vector<2x32xf32>
    %828 = vector.multi_reduction <add>, %827, %cst_233 [1] : vector<2x16x32xf32> to vector<2x32xf32>
    %c0_234 = arith.constant 0 : index
    %829 = arith.index_cast %c4_i32_228 : i32 to index
    %c0_235 = arith.constant 0 : index
    %830 = vector.load %arg16[%c0_234, %829, %c0_235] : memref<2x8x256xf32, #tpu.memory_space<vmem>>, vector<2x1x256xf32>
    %831 = vector.shape_cast %830 : vector<2x1x256xf32> to vector<2x256xf32>
    %832 = vector.extract_strided_slice %831 {offsets = [0, 0], sizes = [2, 128], strides = [1, 1]} : vector<2x256xf32> to vector<2x128xf32>
    %833 = vector.extract_strided_slice %831 {offsets = [0, 128], sizes = [2, 128], strides = [1, 1]} : vector<2x256xf32> to vector<2x128xf32>
    %834 = tpu.concatenate %828, %800 in 1 : vector<2x32xf32>, vector<2x32xf32> -> vector<2x64xf32>
    %cst_236 = arith.constant dense<0.000000e+00> : vector<2x128xf32>
    %835 = tpu.matmul %834, %561, %cst_236 {dimension_numbers = #tpu.dot_dimension_numbers<[1], [0], [0], [1], [0, 0, 1, 1], [], []>} : vector<2x64xf32>, vector<64x128xf32>, vector<2x128xf32> -> vector<2x128xf32>
    %836 = arith.addf %832, %835 : vector<2x128xf32>
    %837 = vector.extract_strided_slice %836 {offsets = [0, 0], sizes = [2, 32], strides = [1, 1]} : vector<2x128xf32> to vector<2x32xf32>
    %838 = arith.negf %837 : vector<2x32xf32>
    %839 = math.exp %838 : vector<2x32xf32>
    %cst_237 = arith.constant 1.000000e+00 : f32
    %840 = vector.broadcast %cst_237 : f32 to vector<2x32xf32>
    %841 = arith.addf %840, %839 : vector<2x32xf32>
    %842 = arith.divf %840, %841 : vector<2x32xf32>
    %843 = vector.extract_strided_slice %836 {offsets = [0, 32], sizes = [2, 32], strides = [1, 1]} : vector<2x128xf32> to vector<2x32xf32>
    %844 = arith.negf %843 : vector<2x32xf32>
    %845 = math.exp %844 : vector<2x32xf32>
    %cst_238 = arith.constant 1.000000e+00 : f32
    %846 = vector.broadcast %cst_238 : f32 to vector<2x32xf32>
    %847 = arith.addf %846, %845 : vector<2x32xf32>
    %848 = arith.divf %846, %847 : vector<2x32xf32>
    %849 = vector.extract_strided_slice %836 {offsets = [0, 64], sizes = [2, 32], strides = [1, 1]} : vector<2x128xf32> to vector<2x32xf32>
    %850 = math.tanh %849 : vector<2x32xf32>
    %851 = vector.extract_strided_slice %836 {offsets = [0, 96], sizes = [2, 32], strides = [1, 1]} : vector<2x128xf32> to vector<2x32xf32>
    %852 = arith.negf %851 : vector<2x32xf32>
    %853 = math.exp %852 : vector<2x32xf32>
    %cst_239 = arith.constant 1.000000e+00 : f32
    %854 = vector.broadcast %cst_239 : f32 to vector<2x32xf32>
    %855 = arith.addf %854, %853 : vector<2x32xf32>
    %856 = arith.divf %854, %855 : vector<2x32xf32>
    %857 = arith.mulf %848, %798 : vector<2x32xf32>
    %858 = arith.mulf %842, %850 : vector<2x32xf32>
    %859 = arith.addf %857, %858 : vector<2x32xf32>
    %860 = math.tanh %859 : vector<2x32xf32>
    %861 = arith.mulf %856, %860 : vector<2x32xf32>
    %862 = tpu.concatenate %861, %828 in 1 : vector<2x32xf32>, vector<2x32xf32> -> vector<2x64xf32>
    %cst_240 = arith.constant dense<0.000000e+00> : vector<2x128xf32>
    %863 = tpu.matmul %862, %562, %cst_240 {dimension_numbers = #tpu.dot_dimension_numbers<[1], [0], [0], [1], [0, 0, 1, 1], [], []>} : vector<2x64xf32>, vector<64x128xf32>, vector<2x128xf32> -> vector<2x128xf32>
    %864 = arith.addf %833, %863 : vector<2x128xf32>
    %865 = vector.shape_cast %864 : vector<2x128xf32> to vector<2x1x128xf32>
    %c0_241 = arith.constant 0 : index
    %866 = arith.index_cast %c4_i32_228 : i32 to index
    %c0_242 = arith.constant 0 : index
    %867 = vector.load %arg13[%c0_241, %866, %c0_242] : memref<2x8x128xf32, #tpu.memory_space<vmem>>, vector<2x1x128xf32>
    tpu.vector_store %arg13[%c0_241, %866, %c0_242], %865 {strides = array<i32>} : memref<2x8x128xf32, #tpu.memory_space<vmem>>, vector<2x1x128xf32>,
    %c5_i32_243 = arith.constant 5 : i32
    %cst_244 = arith.constant dense<0.000000e+00> : vector<2x32xf32>
    %868 = tpu.matmul %861, %560, %cst_244 {dimension_numbers = #tpu.dot_dimension_numbers<[1], [0], [0], [1], [0, 0, 1, 1], [], []>} : vector<2x32xf32>, vector<32x32xf32>, vector<2x32xf32> -> vector<2x32xf32>
    %869 = vector.shape_cast %868 : vector<2x32xf32> to vector<2x1x32xf32>
    %870 = vector.broadcast %869 : vector<2x1x32xf32> to vector<2x16x32xf32>
    %871 = arith.addf %870, %557 : vector<2x16x32xf32>
    %872 = math.tanh %871 : vector<2x16x32xf32>
    %873 = vector.broadcast %559 : vector<1x1x32xf32> to vector<2x16x32xf32>
    %874 = arith.mulf %872, %873 : vector<2x16x32xf32>
    %cst_245 = arith.constant dense<0.000000e+00> : vector<2x16xf32>
    %875 = vector.multi_reduction <add>, %874, %cst_245 [2] : vector<2x16x32xf32> to vector<2x16xf32>
    %cst_246 = arith.constant dense<0xFF800000> : vector<2xf32>
    %876 = vector.multi_reduction <maximumf>, %875, %cst_246 [1] : vector<2x16xf32> to vector<2xf32>
    %877 = vector.shape_cast %876 : vector<2xf32> to vector<2x1xf32>
    %878 = vector.broadcast %877 : vector<2x1xf32> to vector<2x16xf32>
    %879 = arith.subf %875, %878 : vector<2x16xf32>
    %880 = math.exp %879 : vector<2x16xf32>
    %cst_247 = arith.constant dense<0.000000e+00> : vector<2xf32>
    %881 = vector.multi_reduction <add>, %880, %cst_247 [1] : vector<2x16xf32> to vector<2xf32>
    %882 = vector.shape_cast %881 : vector<2xf32> to vector<2x1xf32>
    %883 = tpu.reciprocal %882 {approx = true} : vector<2x1xf32> -> vector<2x1xf32>
    %884 = vector.broadcast %883 : vector<2x1xf32> to vector<2x16xf32>
    %885 = arith.mulf %880, %884 : vector<2x16xf32>
    %886 = vector.shape_cast %885 : vector<2x16xf32> to vector<2x16x1xf32>
    %887 = vector.broadcast %886 : vector<2x16x1xf32> to vector<2x16x32xf32>
    %888 = arith.mulf %887, %549 : vector<2x16x32xf32>
    %cst_248 = arith.constant dense<0.000000e+00> : vector<2x32xf32>
    %889 = vector.multi_reduction <add>, %888, %cst_248 [1] : vector<2x16x32xf32> to vector<2x32xf32>
    %c0_249 = arith.constant 0 : index
    %890 = arith.index_cast %c5_i32_243 : i32 to index
    %c0_250 = arith.constant 0 : index
    %891 = vector.load %arg16[%c0_249, %890, %c0_250] : memref<2x8x256xf32, #tpu.memory_space<vmem>>, vector<2x1x256xf32>
    %892 = vector.shape_cast %891 : vector<2x1x256xf32> to vector<2x256xf32>
    %893 = vector.extract_strided_slice %892 {offsets = [0, 0], sizes = [2, 128], strides = [1, 1]} : vector<2x256xf32> to vector<2x128xf32>
    %894 = vector.extract_strided_slice %892 {offsets = [0, 128], sizes = [2, 128], strides = [1, 1]} : vector<2x256xf32> to vector<2x128xf32>
    %895 = tpu.concatenate %889, %861 in 1 : vector<2x32xf32>, vector<2x32xf32> -> vector<2x64xf32>
    %cst_251 = arith.constant dense<0.000000e+00> : vector<2x128xf32>
    %896 = tpu.matmul %895, %561, %cst_251 {dimension_numbers = #tpu.dot_dimension_numbers<[1], [0], [0], [1], [0, 0, 1, 1], [], []>} : vector<2x64xf32>, vector<64x128xf32>, vector<2x128xf32> -> vector<2x128xf32>
    %897 = arith.addf %893, %896 : vector<2x128xf32>
    %898 = vector.extract_strided_slice %897 {offsets = [0, 0], sizes = [2, 32], strides = [1, 1]} : vector<2x128xf32> to vector<2x32xf32>
    %899 = arith.negf %898 : vector<2x32xf32>
    %900 = math.exp %899 : vector<2x32xf32>
    %cst_252 = arith.constant 1.000000e+00 : f32
    %901 = vector.broadcast %cst_252 : f32 to vector<2x32xf32>
    %902 = arith.addf %901, %900 : vector<2x32xf32>
    %903 = arith.divf %901, %902 : vector<2x32xf32>
    %904 = vector.extract_strided_slice %897 {offsets = [0, 32], sizes = [2, 32], strides = [1, 1]} : vector<2x128xf32> to vector<2x32xf32>
    %905 = arith.negf %904 : vector<2x32xf32>
    %906 = math.exp %905 : vector<2x32xf32>
    %cst_253 = arith.constant 1.000000e+00 : f32
    %907 = vector.broadcast %cst_253 : f32 to vector<2x32xf32>
    %908 = arith.addf %907, %906 : vector<2x32xf32>
    %909 = arith.divf %907, %908 : vector<2x32xf32>
    %910 = vector.extract_strided_slice %897 {offsets = [0, 64], sizes = [2, 32], strides = [1, 1]} : vector<2x128xf32> to vector<2x32xf32>
    %911 = math.tanh %910 : vector<2x32xf32>
    %912 = vector.extract_strided_slice %897 {offsets = [0, 96], sizes = [2, 32], strides = [1, 1]} : vector<2x128xf32> to vector<2x32xf32>
    %913 = arith.negf %912 : vector<2x32xf32>
    %914 = math.exp %913 : vector<2x32xf32>
    %cst_254 = arith.constant 1.000000e+00 : f32
    %915 = vector.broadcast %cst_254 : f32 to vector<2x32xf32>
    %916 = arith.addf %915, %914 : vector<2x32xf32>
    %917 = arith.divf %915, %916 : vector<2x32xf32>
    %918 = arith.mulf %909, %859 : vector<2x32xf32>
    %919 = arith.mulf %903, %911 : vector<2x32xf32>
    %920 = arith.addf %918, %919 : vector<2x32xf32>
    %921 = math.tanh %920 : vector<2x32xf32>
    %922 = arith.mulf %917, %921 : vector<2x32xf32>
    %923 = tpu.concatenate %922, %889 in 1 : vector<2x32xf32>, vector<2x32xf32> -> vector<2x64xf32>
    %cst_255 = arith.constant dense<0.000000e+00> : vector<2x128xf32>
    %924 = tpu.matmul %923, %562, %cst_255 {dimension_numbers = #tpu.dot_dimension_numbers<[1], [0], [0], [1], [0, 0, 1, 1], [], []>} : vector<2x64xf32>, vector<64x128xf32>, vector<2x128xf32> -> vector<2x128xf32>
    %925 = arith.addf %894, %924 : vector<2x128xf32>
    %926 = vector.shape_cast %925 : vector<2x128xf32> to vector<2x1x128xf32>
    %c0_256 = arith.constant 0 : index
    %927 = arith.index_cast %c5_i32_243 : i32 to index
    %c0_257 = arith.constant 0 : index
    %928 = vector.load %arg13[%c0_256, %927, %c0_257] : memref<2x8x128xf32, #tpu.memory_space<vmem>>, vector<2x1x128xf32>
    tpu.vector_store %arg13[%c0_256, %927, %c0_257], %926 {strides = array<i32>} : memref<2x8x128xf32, #tpu.memory_space<vmem>>, vector<2x1x128xf32>,
    %c6_i32_258 = arith.constant 6 : i32
    %cst_259 = arith.constant dense<0.000000e+00> : vector<2x32xf32>
    %929 = tpu.matmul %922, %560, %cst_259 {dimension_numbers = #tpu.dot_dimension_numbers<[1], [0], [0], [1], [0, 0, 1, 1], [], []>} : vector<2x32xf32>, vector<32x32xf32>, vector<2x32xf32> -> vector<2x32xf32>
    %930 = vector.shape_cast %929 : vector<2x32xf32> to vector<2x1x32xf32>
    %931 = vector.broadcast %930 : vector<2x1x32xf32> to vector<2x16x32xf32>
    %932 = arith.addf %931, %557 : vector<2x16x32xf32>
    %933 = math.tanh %932 : vector<2x16x32xf32>
    %934 = vector.broadcast %559 : vector<1x1x32xf32> to vector<2x16x32xf32>
    %935 = arith.mulf %933, %934 : vector<2x16x32xf32>
    %cst_260 = arith.constant dense<0.000000e+00> : vector<2x16xf32>
    %936 = vector.multi_reduction <add>, %935, %cst_260 [2] : vector<2x16x32xf32> to vector<2x16xf32>
    %cst_261 = arith.constant dense<0xFF800000> : vector<2xf32>
    %937 = vector.multi_reduction <maximumf>, %936, %cst_261 [1] : vector<2x16xf32> to vector<2xf32>
    %938 = vector.shape_cast %937 : vector<2xf32> to vector<2x1xf32>
    %939 = vector.broadcast %938 : vector<2x1xf32> to vector<2x16xf32>
    %940 = arith.subf %936, %939 : vector<2x16xf32>
    %941 = math.exp %940 : vector<2x16xf32>
    %cst_262 = arith.constant dense<0.000000e+00> : vector<2xf32>
    %942 = vector.multi_reduction <add>, %941, %cst_262 [1] : vector<2x16xf32> to vector<2xf32>
    %943 = vector.shape_cast %942 : vector<2xf32> to vector<2x1xf32>
    %944 = tpu.reciprocal %943 {approx = true} : vector<2x1xf32> -> vector<2x1xf32>
    %945 = vector.broadcast %944 : vector<2x1xf32> to vector<2x16xf32>
    %946 = arith.mulf %941, %945 : vector<2x16xf32>
    %947 = vector.shape_cast %946 : vector<2x16xf32> to vector<2x16x1xf32>
    %948 = vector.broadcast %947 : vector<2x16x1xf32> to vector<2x16x32xf32>
    %949 = arith.mulf %948, %549 : vector<2x16x32xf32>
    %cst_263 = arith.constant dense<0.000000e+00> : vector<2x32xf32>
    %950 = vector.multi_reduction <add>, %949, %cst_263 [1] : vector<2x16x32xf32> to vector<2x32xf32>
    %c0_264 = arith.constant 0 : index
    %951 = arith.index_cast %c6_i32_258 : i32 to index
    %c0_265 = arith.constant 0 : index
    %952 = vector.load %arg16[%c0_264, %951, %c0_265] : memref<2x8x256xf32, #tpu.memory_space<vmem>>, vector<2x1x256xf32>
    %953 = vector.shape_cast %952 : vector<2x1x256xf32> to vector<2x256xf32>
    %954 = vector.extract_strided_slice %953 {offsets = [0, 0], sizes = [2, 128], strides = [1, 1]} : vector<2x256xf32> to vector<2x128xf32>
    %955 = vector.extract_strided_slice %953 {offsets = [0, 128], sizes = [2, 128], strides = [1, 1]} : vector<2x256xf32> to vector<2x128xf32>
    %956 = tpu.concatenate %950, %922 in 1 : vector<2x32xf32>, vector<2x32xf32> -> vector<2x64xf32>
    %cst_266 = arith.constant dense<0.000000e+00> : vector<2x128xf32>
    %957 = tpu.matmul %956, %561, %cst_266 {dimension_numbers = #tpu.dot_dimension_numbers<[1], [0], [0], [1], [0, 0, 1, 1], [], []>} : vector<2x64xf32>, vector<64x128xf32>, vector<2x128xf32> -> vector<2x128xf32>
    %958 = arith.addf %954, %957 : vector<2x128xf32>
    %959 = vector.extract_strided_slice %958 {offsets = [0, 0], sizes = [2, 32], strides = [1, 1]} : vector<2x128xf32> to vector<2x32xf32>
    %960 = arith.negf %959 : vector<2x32xf32>
    %961 = math.exp %960 : vector<2x32xf32>
    %cst_267 = arith.constant 1.000000e+00 : f32
    %962 = vector.broadcast %cst_267 : f32 to vector<2x32xf32>
    %963 = arith.addf %962, %961 : vector<2x32xf32>
    %964 = arith.divf %962, %963 : vector<2x32xf32>
    %965 = vector.extract_strided_slice %958 {offsets = [0, 32], sizes = [2, 32], strides = [1, 1]} : vector<2x128xf32> to vector<2x32xf32>
    %966 = arith.negf %965 : vector<2x32xf32>
    %967 = math.exp %966 : vector<2x32xf32>
    %cst_268 = arith.constant 1.000000e+00 : f32
    %968 = vector.broadcast %cst_268 : f32 to vector<2x32xf32>
    %969 = arith.addf %968, %967 : vector<2x32xf32>
    %970 = arith.divf %968, %969 : vector<2x32xf32>
    %971 = vector.extract_strided_slice %958 {offsets = [0, 64], sizes = [2, 32], strides = [1, 1]} : vector<2x128xf32> to vector<2x32xf32>
    %972 = math.tanh %971 : vector<2x32xf32>
    %973 = vector.extract_strided_slice %958 {offsets = [0, 96], sizes = [2, 32], strides = [1, 1]} : vector<2x128xf32> to vector<2x32xf32>
    %974 = arith.negf %973 : vector<2x32xf32>
    %975 = math.exp %974 : vector<2x32xf32>
    %cst_269 = arith.constant 1.000000e+00 : f32
    %976 = vector.broadcast %cst_269 : f32 to vector<2x32xf32>
    %977 = arith.addf %976, %975 : vector<2x32xf32>
    %978 = arith.divf %976, %977 : vector<2x32xf32>
    %979 = arith.mulf %970, %920 : vector<2x32xf32>
    %980 = arith.mulf %964, %972 : vector<2x32xf32>
    %981 = arith.addf %979, %980 : vector<2x32xf32>
    %982 = math.tanh %981 : vector<2x32xf32>
    %983 = arith.mulf %978, %982 : vector<2x32xf32>
    %984 = tpu.concatenate %983, %950 in 1 : vector<2x32xf32>, vector<2x32xf32> -> vector<2x64xf32>
    %cst_270 = arith.constant dense<0.000000e+00> : vector<2x128xf32>
    %985 = tpu.matmul %984, %562, %cst_270 {dimension_numbers = #tpu.dot_dimension_numbers<[1], [0], [0], [1], [0, 0, 1, 1], [], []>} : vector<2x64xf32>, vector<64x128xf32>, vector<2x128xf32> -> vector<2x128xf32>
    %986 = arith.addf %955, %985 : vector<2x128xf32>
    %987 = vector.shape_cast %986 : vector<2x128xf32> to vector<2x1x128xf32>
    %c0_271 = arith.constant 0 : index
    %988 = arith.index_cast %c6_i32_258 : i32 to index
    %c0_272 = arith.constant 0 : index
    %989 = vector.load %arg13[%c0_271, %988, %c0_272] : memref<2x8x128xf32, #tpu.memory_space<vmem>>, vector<2x1x128xf32>
    tpu.vector_store %arg13[%c0_271, %988, %c0_272], %987 {strides = array<i32>} : memref<2x8x128xf32, #tpu.memory_space<vmem>>, vector<2x1x128xf32>,
    %c7_i32_273 = arith.constant 7 : i32
    %cst_274 = arith.constant dense<0.000000e+00> : vector<2x32xf32>
    %990 = tpu.matmul %983, %560, %cst_274 {dimension_numbers = #tpu.dot_dimension_numbers<[1], [0], [0], [1], [0, 0, 1, 1], [], []>} : vector<2x32xf32>, vector<32x32xf32>, vector<2x32xf32> -> vector<2x32xf32>
    %991 = vector.shape_cast %990 : vector<2x32xf32> to vector<2x1x32xf32>
    %992 = vector.broadcast %991 : vector<2x1x32xf32> to vector<2x16x32xf32>
    %993 = arith.addf %992, %557 : vector<2x16x32xf32>
    %994 = math.tanh %993 : vector<2x16x32xf32>
    %995 = vector.broadcast %559 : vector<1x1x32xf32> to vector<2x16x32xf32>
    %996 = arith.mulf %994, %995 : vector<2x16x32xf32>
    %cst_275 = arith.constant dense<0.000000e+00> : vector<2x16xf32>
    %997 = vector.multi_reduction <add>, %996, %cst_275 [2] : vector<2x16x32xf32> to vector<2x16xf32>
    %cst_276 = arith.constant dense<0xFF800000> : vector<2xf32>
    %998 = vector.multi_reduction <maximumf>, %997, %cst_276 [1] : vector<2x16xf32> to vector<2xf32>
    %999 = vector.shape_cast %998 : vector<2xf32> to vector<2x1xf32>
    %1000 = vector.broadcast %999 : vector<2x1xf32> to vector<2x16xf32>
    %1001 = arith.subf %997, %1000 : vector<2x16xf32>
    %1002 = math.exp %1001 : vector<2x16xf32>
    %cst_277 = arith.constant dense<0.000000e+00> : vector<2xf32>
    %1003 = vector.multi_reduction <add>, %1002, %cst_277 [1] : vector<2x16xf32> to vector<2xf32>
    %1004 = vector.shape_cast %1003 : vector<2xf32> to vector<2x1xf32>
    %1005 = tpu.reciprocal %1004 {approx = true} : vector<2x1xf32> -> vector<2x1xf32>
    %1006 = vector.broadcast %1005 : vector<2x1xf32> to vector<2x16xf32>
    %1007 = arith.mulf %1002, %1006 : vector<2x16xf32>
    %1008 = vector.shape_cast %1007 : vector<2x16xf32> to vector<2x16x1xf32>
    %1009 = vector.broadcast %1008 : vector<2x16x1xf32> to vector<2x16x32xf32>
    %1010 = arith.mulf %1009, %549 : vector<2x16x32xf32>
    %cst_278 = arith.constant dense<0.000000e+00> : vector<2x32xf32>
    %1011 = vector.multi_reduction <add>, %1010, %cst_278 [1] : vector<2x16x32xf32> to vector<2x32xf32>
    %c0_279 = arith.constant 0 : index
    %1012 = arith.index_cast %c7_i32_273 : i32 to index
    %c0_280 = arith.constant 0 : index
    %1013 = vector.load %arg16[%c0_279, %1012, %c0_280] : memref<2x8x256xf32, #tpu.memory_space<vmem>>, vector<2x1x256xf32>
    %1014 = vector.shape_cast %1013 : vector<2x1x256xf32> to vector<2x256xf32>
    %1015 = vector.extract_strided_slice %1014 {offsets = [0, 0], sizes = [2, 128], strides = [1, 1]} : vector<2x256xf32> to vector<2x128xf32>
    %1016 = vector.extract_strided_slice %1014 {offsets = [0, 128], sizes = [2, 128], strides = [1, 1]} : vector<2x256xf32> to vector<2x128xf32>
    %1017 = tpu.concatenate %1011, %983 in 1 : vector<2x32xf32>, vector<2x32xf32> -> vector<2x64xf32>
    %cst_281 = arith.constant dense<0.000000e+00> : vector<2x128xf32>
    %1018 = tpu.matmul %1017, %561, %cst_281 {dimension_numbers = #tpu.dot_dimension_numbers<[1], [0], [0], [1], [0, 0, 1, 1], [], []>} : vector<2x64xf32>, vector<64x128xf32>, vector<2x128xf32> -> vector<2x128xf32>
    %1019 = arith.addf %1015, %1018 : vector<2x128xf32>
    %1020 = vector.extract_strided_slice %1019 {offsets = [0, 0], sizes = [2, 32], strides = [1, 1]} : vector<2x128xf32> to vector<2x32xf32>
    %1021 = arith.negf %1020 : vector<2x32xf32>
    %1022 = math.exp %1021 : vector<2x32xf32>
    %cst_282 = arith.constant 1.000000e+00 : f32
    %1023 = vector.broadcast %cst_282 : f32 to vector<2x32xf32>
    %1024 = arith.addf %1023, %1022 : vector<2x32xf32>
    %1025 = arith.divf %1023, %1024 : vector<2x32xf32>
    %1026 = vector.extract_strided_slice %1019 {offsets = [0, 32], sizes = [2, 32], strides = [1, 1]} : vector<2x128xf32> to vector<2x32xf32>
    %1027 = arith.negf %1026 : vector<2x32xf32>
    %1028 = math.exp %1027 : vector<2x32xf32>
    %cst_283 = arith.constant 1.000000e+00 : f32
    %1029 = vector.broadcast %cst_283 : f32 to vector<2x32xf32>
    %1030 = arith.addf %1029, %1028 : vector<2x32xf32>
    %1031 = arith.divf %1029, %1030 : vector<2x32xf32>
    %1032 = vector.extract_strided_slice %1019 {offsets = [0, 64], sizes = [2, 32], strides = [1, 1]} : vector<2x128xf32> to vector<2x32xf32>
    %1033 = math.tanh %1032 : vector<2x32xf32>
    %1034 = vector.extract_strided_slice %1019 {offsets = [0, 96], sizes = [2, 32], strides = [1, 1]} : vector<2x128xf32> to vector<2x32xf32>
    %1035 = arith.negf %1034 : vector<2x32xf32>
    %1036 = math.exp %1035 : vector<2x32xf32>
    %cst_284 = arith.constant 1.000000e+00 : f32
    %1037 = vector.broadcast %cst_284 : f32 to vector<2x32xf32>
    %1038 = arith.addf %1037, %1036 : vector<2x32xf32>
    %1039 = arith.divf %1037, %1038 : vector<2x32xf32>
    %1040 = arith.mulf %1031, %981 : vector<2x32xf32>
    %1041 = arith.mulf %1025, %1033 : vector<2x32xf32>
    %1042 = arith.addf %1040, %1041 : vector<2x32xf32>
    %1043 = math.tanh %1042 : vector<2x32xf32>
    %1044 = arith.mulf %1039, %1043 : vector<2x32xf32>
    %1045 = tpu.concatenate %1044, %1011 in 1 : vector<2x32xf32>, vector<2x32xf32> -> vector<2x64xf32>
    %cst_285 = arith.constant dense<0.000000e+00> : vector<2x128xf32>
    %1046 = tpu.matmul %1045, %562, %cst_285 {dimension_numbers = #tpu.dot_dimension_numbers<[1], [0], [0], [1], [0, 0, 1, 1], [], []>} : vector<2x64xf32>, vector<64x128xf32>, vector<2x128xf32> -> vector<2x128xf32>
    %1047 = arith.addf %1016, %1046 : vector<2x128xf32>
    %1048 = vector.shape_cast %1047 : vector<2x128xf32> to vector<2x1x128xf32>
    %c0_286 = arith.constant 0 : index
    %1049 = arith.index_cast %c7_i32_273 : i32 to index
    %c0_287 = arith.constant 0 : index
    %1050 = vector.load %arg13[%c0_286, %1049, %c0_287] : memref<2x8x128xf32, #tpu.memory_space<vmem>>, vector<2x1x128xf32>
    tpu.vector_store %arg13[%c0_286, %1049, %c0_287], %1048 {strides = array<i32>} : memref<2x8x128xf32, #tpu.memory_space<vmem>>, vector<2x1x128xf32>,
    %c8_i32_288 = arith.constant 8 : i32
    return
  }
}

</mosaic_0001>

<llo_original>
// kernel: tpu_custom_call.1
$region0: #{tpu_custom_call.1}
  #allocation0 [shape = 'u32[]', space=smem, size = 0x4, offset = 0x4, fixed_abs, tag = 'smem constant byte address 0x4 - core index']
  #allocation1 [shape = 'u32[144,128]{1,0:T(1,128)}', space=vmem, size = 0x12000, scoped, tag = 'internal scratch']
  #allocation2 [shape = 'f32[2,16,32]{2,1,0:T(8,128)}', space=vmem, size = 0x4000, scoped, tag = 'scratch operand']
  #allocation3 [shape = 'f32[2,16,128]{2,1,0:T(8,128)}', space=vmem, size = 0x4000, scoped, tag = 'scratch operand']
  #allocation4 [shape = 'f32[2,8,256]{2,1,0:T(8,128)}', space=vmem, size = 0x4000, scoped, tag = 'scratch operand']
  %s0 = inlined_call_operand.vmem [shape: f32[2,16,8], index: 0, kind: input, shape index: {}]
  %s1 = inlined_call_operand.vmem [shape: f32[2,8,16], index: 1, kind: input, shape index: {}]
  %s2 = inlined_call_operand.vmem [shape: f32[8,128], index: 2, kind: input, shape index: {}]
  %s3 = inlined_call_operand.hbm [shape: f32[32,128], index: 3, kind: input, shape index: {}]
  %s4 = inlined_call_operand.vmem [shape: f32[1,128], index: 4, kind: input, shape index: {}]
  %s5 = inlined_call_operand.hbm [shape: f32[32,32], index: 5, kind: input, shape index: {}]
  %s6 = inlined_call_operand.hbm [shape: f32[32,32], index: 6, kind: input, shape index: {}]
  %s7 = inlined_call_operand.hbm [shape: f32[1,32], index: 7, kind: input, shape index: {}]
  %s8 = inlined_call_operand.hbm [shape: f32[1,32], index: 8, kind: input, shape index: {}]
  %s9 = inlined_call_operand.hbm [shape: f32[16,256], index: 9, kind: input, shape index: {}]
  %s10 = inlined_call_operand.hbm [shape: f32[1,256], index: 10, kind: input, shape index: {}]
  %s11 = inlined_call_operand.vmem [shape: f32[64,128], index: 11, kind: input, shape index: {}]
  %s12 = inlined_call_operand.hbm [shape: f32[64,128], index: 12, kind: input, shape index: {}]
  %s13 = inlined_call_operand.hbm [shape: f32[2,8,128], index: 13, kind: output, shape index: {}]
  %s14 = sld [smem:[#allocation0]]
  $region94: #{tpu_custom_call.1} parent=0
    _
  %s16 = ssub.s32 1, %s14
  %s17 = scalar_select 0, %s16, %s14
  $region1: #{tpu_custom_call.1} parent=0
    #allocation5 [shape = 'u8[16384]{0}', space=vmem, size = 0x4000, scoped, tag = 'input window, operand 3, single buffered']
    #allocation6 [shape = 's32[1]{0}', space=sflag, size = 0x4, scoped, tag = 'scoped memory for tpu_custom_call.1']
    #allocation7 [shape = 's32[1]{0}', space=sflag, size = 0x4, scoped, tag = 'scoped memory for tpu_custom_call.1']
    #allocation8 [shape = 'u8[16384]{0}', space=vmem, size = 0x4000, scoped, tag = 'input window, operand 5, single buffered']
    #allocation9 [shape = 's32[1]{0}', space=sflag, size = 0x4, scoped, tag = 'scoped memory for tpu_custom_call.1']
    #allocation10 [shape = 'u8[16384]{0}', space=vmem, size = 0x4000, scoped, tag = 'input window, operand 6, single buffered']
    #allocation11 [shape = 'u8[512]{0}', space=vmem, size = 0x400, scoped, tag = 'input window, operand 7, single buffered']
    #allocation12 [shape = 's32[1]{0}', space=sflag, size = 0x4, scoped, tag = 'scoped memory for tpu_custom_call.1']
    #allocation13 [shape = 'u8[512]{0}', space=vmem, size = 0x400, scoped, tag = 'input window, operand 8, single buffered']
    #allocation14 [shape = 'u8[16384]{0}', space=vmem, size = 0x4000, scoped, tag = 'input window, operand 9, single buffered']
    #allocation15 [shape = 's32[1]{0}', space=sflag, size = 0x4, scoped, tag = 'scoped memory for tpu_custom_call.1']
    #allocation16 [shape = 'u8[1024]{0}', space=vmem, size = 0x400, scoped, tag = 'input window, operand 10, single buffered']
    #allocation17 [shape = 'u8[32768]{0}', space=vmem, size = 0x8000, scoped, tag = 'input window, operand 12, single buffered']
    #allocation18 [shape = 's32[1]{0}', space=sflag, size = 0x4, scoped, tag = 'scoped memory for tpu_custom_call.1']
    #allocation19 [shape = 'u8[8192]{0}', space=vmem, size = 0x2000, scoped, tag = 'output window, operand 0, single buffered']
    %18 = vsyncpa [#allocation6], 0
    %19 = vsyncpa [#allocation9], 0
    %20 = vsyncpa [#allocation12], 0
    %21 = vsyncpa [#allocation15], 0
    %22 = vsyncpa [#allocation18], 0
    %23 = vsyncpa [#allocation7], 0
    // Predicated region
    $region2: #{tpu_custom_call.1} parent=1 // pred_check
      _
    $region3: #{tpu_custom_call.1} parent=1 // pred_check_branch
      %25 = sbr.rel (0) target = $region5
    $region4: #{tpu_custom_call.1} parent=1 // pred_region
      _
    $region5: #{tpu_custom_call.1} parent=1 // pred_fallthru
      _
    // Predicated region
    $region6: #{tpu_custom_call.1} parent=1 // pred_check
      _
    $region7: #{tpu_custom_call.1} parent=1 // pred_check_branch
      %27 = sbr.rel (0) target = $region9
    $region8: #{tpu_custom_call.1} parent=1 // pred_region
      _
    $region9: #{tpu_custom_call.1} parent=1 // pred_fallthru
      _
    // Predicated region
    $region10: #{tpu_custom_call.1} parent=1 // pred_check
      _
    $region11: #{tpu_custom_call.1} parent=1 // pred_check_branch
      %29 = sbr.rel (0) target = $region13
    $region12: #{tpu_custom_call.1} parent=1 // pred_region
      _
    $region13: #{tpu_custom_call.1} parent=1 // pred_fallthru
      _
    // Predicated region
    $region14: #{tpu_custom_call.1} parent=1 // pred_check
      _
    $region15: #{tpu_custom_call.1} parent=1 // pred_check_branch
      %31 = sbr.rel (0) target = $region17
    $region16: #{tpu_custom_call.1} parent=1 // pred_region
      %s33 = ssub.s32 512, 512
      %34 = vsyncadd [#allocation6], %s33
      %s35 = sshll.u32 [#allocation5], 4
      %s36 = int_to_ptr.vmem [resolvable:$true] %s35
      %41 = dma.hbm_to_vmem [thread:$0]  %s3, 512, %s36, [#allocation6], 128, 128, 8
    $region17: #{tpu_custom_call.1} parent=1 // pred_fallthru
      _
    // Predicated region
    $region18: #{tpu_custom_call.1} parent=1 // pred_check
      _
    $region19: #{tpu_custom_call.1} parent=1 // pred_check_branch
      %43 = sbr.rel (0) target = $region21
    $region20: #{tpu_custom_call.1} parent=1 // pred_region
      _
    $region21: #{tpu_custom_call.1} parent=1 // pred_fallthru
      _
    // Predicated region
    $region22: #{tpu_custom_call.1} parent=1 // pred_check
      _
    $region23: #{tpu_custom_call.1} parent=1 // pred_check_branch
      %45 = sbr.rel (0) target = $region25
    $region24: #{tpu_custom_call.1} parent=1 // pred_region
      %s47 = ssub.s32 512, 512
      %48 = vsyncadd [#allocation9], %s47
      %s49 = sshll.u32 [#allocation8], 4
      %s50 = int_to_ptr.vmem [resolvable:$true] %s49
      %55 = dma.hbm_to_vmem [thread:$0]  %s5, 512, %s50, [#allocation9], 128, 128, 8
    $region25: #{tpu_custom_call.1} parent=1 // pred_fallthru
      _
    // Predicated region
    $region26: #{tpu_custom_call.1} parent=1 // pred_check
      _
    $region27: #{tpu_custom_call.1} parent=1 // pred_check_branch
      %57 = sbr.rel (0) target = $region29
    $region28: #{tpu_custom_call.1} parent=1 // pred_region
      %s59 = ssub.s32 512, 512
      %60 = vsyncadd [#allocation9], %s59
      %s61 = sshll.u32 [#allocation10], 4
      %s62 = int_to_ptr.vmem [resolvable:$true] %s61
      %67 = dma.hbm_to_vmem [thread:$0]  %s6, 512, %s62, [#allocation9], 128, 128, 8
    $region29: #{tpu_custom_call.1} parent=1 // pred_fallthru
      _
    // Predicated region
    $region30: #{tpu_custom_call.1} parent=1 // pred_check
      _
    $region31: #{tpu_custom_call.1} parent=1 // pred_check_branch
      %69 = sbr.rel (0) target = $region33
    $region32: #{tpu_custom_call.1} parent=1 // pred_region
      %s71 = ssub.s32 16, 16
      %72 = vsyncadd [#allocation12], %s71
      %s74 = sshll.u32 [#allocation11], 4
      %s75 = int_to_ptr.vmem [resolvable:$true] %s74
      %77 = dma.hbm_to_vmem [thread:$0]  %s7, 16, %s75, [#allocation12]
    $region33: #{tpu_custom_call.1} parent=1 // pred_fallthru
      _
    // Predicated region
    $region34: #{tpu_custom_call.1} parent=1 // pred_check
      _
    $region35: #{tpu_custom_call.1} parent=1 // pred_check_branch
      %79 = sbr.rel (0) target = $region37
    $region36: #{tpu_custom_call.1} parent=1 // pred_region
      %s81 = ssub.s32 16, 16
      %82 = vsyncadd [#allocation12], %s81
      %s84 = sshll.u32 [#allocation13], 4
      %s85 = int_to_ptr.vmem [resolvable:$true] %s84
      %87 = dma.hbm_to_vmem [thread:$0]  %s8, 16, %s85, [#allocation12]
    $region37: #{tpu_custom_call.1} parent=1 // pred_fallthru
      _
    // Predicated region
    $region38: #{tpu_custom_call.1} parent=1 // pred_check
      _
    $region39: #{tpu_custom_call.1} parent=1 // pred_check_branch
      %89 = sbr.rel (0) target = $region41
    $region40: #{tpu_custom_call.1} parent=1 // pred_region
      %s91 = ssub.s32 512, 512
      %92 = vsyncadd [#allocation15], %s91
      %s93 = sshll.u32 [#allocation14], 4
      %s94 = int_to_ptr.vmem [resolvable:$true] %s93
      %99 = dma.hbm_to_vmem [thread:$0]  %s9, 512, %s94, [#allocation15], 256, 256, 16
    $region41: #{tpu_custom_call.1} parent=1 // pred_fallthru
      _
    // Predicated region
    $region42: #{tpu_custom_call.1} parent=1 // pred_check
      _
    $region43: #{tpu_custom_call.1} parent=1 // pred_check_branch
      %101 = sbr.rel (0) target = $region45
    $region44: #{tpu_custom_call.1} parent=1 // pred_region
      %s103 = ssub.s32 32, 32
      %104 = vsyncadd [#allocation15], %s103
      %s106 = sshll.u32 [#allocation16], 4
      %s107 = int_to_ptr.vmem [resolvable:$true] %s106
      %109 = dma.hbm_to_vmem [thread:$0]  %s10, 32, %s107, [#allocation15]
    $region45: #{tpu_custom_call.1} parent=1 // pred_fallthru
      _
    // Predicated region
    $region46: #{tpu_custom_call.1} parent=1 // pred_check
      _
    $region47: #{tpu_custom_call.1} parent=1 // pred_check_branch
      %111 = sbr.rel (0) target = $region49
    $region48: #{tpu_custom_call.1} parent=1 // pred_region
      _
    $region49: #{tpu_custom_call.1} parent=1 // pred_fallthru
      _
    // Predicated region
    $region50: #{tpu_custom_call.1} parent=1 // pred_check
      _
    $region51: #{tpu_custom_call.1} parent=1 // pred_check_branch
      %113 = sbr.rel (0) target = $region53
    $region52: #{tpu_custom_call.1} parent=1 // pred_region
      %s115 = ssub.s32 1024, 1024
      %116 = vsyncadd [#allocation18], %s115
      %s117 = sshll.u32 [#allocation17], 4
      %s118 = int_to_ptr.vmem [resolvable:$true] %s117
      %123 = dma.hbm_to_vmem [thread:$0]  %s12, 1024, %s118, [#allocation18], 128, 128, 8
    $region53: #{tpu_custom_call.1} parent=1 // pred_fallthru
      _
    // Predicated region
    $region54: #{tpu_custom_call.1} parent=1 // pred_check
      _
    $region55: #{tpu_custom_call.1} parent=1 // pred_check_branch
      %125 = sbr.rel (0) target = $region57
    $region56: #{tpu_custom_call.1} parent=1 // pred_region
      %126 = dma.done [#allocation6], 512
    $region57: #{tpu_custom_call.1} parent=1 // pred_fallthru
      _
    // Predicated region
    $region58: #{tpu_custom_call.1} parent=1 // pred_check
      _
    $region59: #{tpu_custom_call.1} parent=1 // pred_check_branch
      %128 = sbr.rel (0) target = $region61
    $region60: #{tpu_custom_call.1} parent=1 // pred_region
      %129 = dma.done [#allocation9], 512
    $region61: #{tpu_custom_call.1} parent=1 // pred_fallthru
      _
    // Predicated region
    $region62: #{tpu_custom_call.1} parent=1 // pred_check
      _
    $region63: #{tpu_custom_call.1} parent=1 // pred_check_branch
      %131 = sbr.rel (0) target = $region65
    $region64: #{tpu_custom_call.1} parent=1 // pred_region
      %132 = dma.done [#allocation9], 512
    $region65: #{tpu_custom_call.1} parent=1 // pred_fallthru
      _
    // Predicated region
    $region66: #{tpu_custom_call.1} parent=1 // pred_check
      _
    $region67: #{tpu_custom_call.1} parent=1 // pred_check_branch
      %134 = sbr.rel (0) target = $region69
    $region68: #{tpu_custom_call.1} parent=1 // pred_region
      %135 = dma.done [#allocation12], 16
    $region69: #{tpu_custom_call.1} parent=1 // pred_fallthru
      _
    // Predicated region
    $region70: #{tpu_custom_call.1} parent=1 // pred_check
      _
    $region71: #{tpu_custom_call.1} parent=1 // pred_check_branch
      %137 = sbr.rel (0) target = $region73
    $region72: #{tpu_custom_call.1} parent=1 // pred_region
      %138 = dma.done [#allocation12], 16
    $region73: #{tpu_custom_call.1} parent=1 // pred_fallthru
      _
    // Predicated region
    $region74: #{tpu_custom_call.1} parent=1 // pred_check
      _
    $region75: #{tpu_custom_call.1} parent=1 // pred_check_branch
      %140 = sbr.rel (0) target = $region77
    $region76: #{tpu_custom_call.1} parent=1 // pred_region
      %141 = dma.done [#allocation15], 512
    $region77: #{tpu_custom_call.1} parent=1 // pred_fallthru
      _
    // Predicated region
    $region78: #{tpu_custom_call.1} parent=1 // pred_check
      _
    $region79: #{tpu_custom_call.1} parent=1 // pred_check_branch
      %143 = sbr.rel (0) target = $region81
    $region80: #{tpu_custom_call.1} parent=1 // pred_region
      %144 = dma.done [#allocation15], 32
    $region81: #{tpu_custom_call.1} parent=1 // pred_fallthru
      _
    // Predicated region
    $region82: #{tpu_custom_call.1} parent=1 // pred_check
      _
    $region83: #{tpu_custom_call.1} parent=1 // pred_check_branch
      %146 = sbr.rel (0) target = $region85
    $region84: #{tpu_custom_call.1} parent=1 // pred_region
      %147 = dma.done [#allocation18], 1024
    $region85: #{tpu_custom_call.1} parent=1 // pred_fallthru
      _
    %v148 = vld [vmem:[%s0] sm:$0xff]
    %v149 = vld [vmem:[%s0 + $0x8] sm:$0xff]
    %v150 = vld [vmem:[%s0 + $0x10] sm:$0xff]
    %v151 = vld [vmem:[%s0 + $0x18] sm:$0xff]
    %v152 = vld [vmem:[%s2] sm:$0xff]
    %v153 = vld [vmem:[%s4] sm:$0x1]
    %v155 = vlaneseq
    %v156 = vshrl.u32 %v155, 7
    %v157 = vsub.s32 0, %v156
    %v158 = vrot.slane %v153, %v157
    %vm160 = vcmask 64512
    %v162 = vsel %vm160, %v148, 0
    %v165 = vsel %vm160, %v149, 0
    %v168 = vsel %vm160, %v150, 0
    %v171 = vsel %vm160, %v151, 0
    %173 = vmatprep.subr.mxu0 0.0
    %174 = vmatpush1.msra.mxu0 %v152
    %175 = vmatprep.subr.mxu0 0.0
    %176 = vmatpush1.msra.mxu0 0.0
    %177 = vmatprep.subr.mxu0 0.0
    %178 = vmatpush1.msra.mxu0 0.0
    %179 = vmatprep.subr.mxu0 0.0
    %180 = vmatpush1.msra.mxu0 0.0
    %181 = vmatprep.subr.mxu0 0.0
    %182 = vmatpush1.msra.mxu0 0.0
    %183 = vmatprep.subr.mxu0 0.0
    %184 = vmatpush1.msra.mxu0 0.0
    %185 = vmatprep.subr.mxu0 0.0
    %186 = vmatpush1.msra.mxu0 0.0
    %187 = vmatprep.subr.mxu0 0.0
    %188 = vmatpush1.msra.mxu0 0.0
    %189 = vmatprep.subr.mxu0 0.0
    %190 = vmatpush1.msra.mxu0 0.0
    %191 = vmatprep.subr.mxu0 0.0
    %192 = vmatpush1.msra.mxu0 0.0
    %193 = vmatprep.subr.mxu0 0.0
    %194 = vmatpush1.msra.mxu0 0.0
    %195 = vmatprep.subr.mxu0 0.0
    %196 = vmatpush1.msra.mxu0 0.0
    %197 = vmatprep.subr.mxu0 0.0
    %198 = vmatpush1.msra.mxu0 0.0
    %199 = vmatprep.subr.mxu0 0.0
    %200 = vmatpush1.msra.mxu0 0.0
    %201 = vmatprep.subr.mxu0 0.0
    %202 = vmatpush1.msra.mxu0 0.0
    %203 = vmatprep.subr.mxu0 0.0
    %204 = vmatpush1.msra.mxu0 0.0
    %205 = vmatprep.subr.mxu0 0.0
    %206 = vmatpush1.msra.mxu0 0.0
    %207 = vmatprep.subr.mxu0 0.0
    %208 = vmatpush1.msra.mxu0 0.0
    %209 = vmatprep.subr.mxu0 0.0
    %210 = vmatpush1.msra.mxu0 0.0
    %211 = vmatprep.subr.mxu0 0.0
    %212 = vmatpush1.msra.mxu0 0.0
    %213 = vmatprep.subr.mxu0 0.0
    %214 = vmatpush1.msra.mxu0 0.0
    %215 = vmatprep.subr.mxu0 0.0
    %216 = vmatpush1.msra.mxu0 0.0
    %217 = vmatprep.subr.mxu0 0.0
    %218 = vmatpush1.msra.mxu0 0.0
    %219 = vmatprep.subr.mxu0 0.0
    %220 = vmatpush1.msra.mxu0 0.0
    %221 = vmatprep.subr.mxu0 0.0
    %222 = vmatpush1.msra.mxu0 0.0
    %223 = vmatprep.subr.mxu0 0.0
    %224 = vmatpush1.msra.mxu0 0.0
    %225 = vmatprep.subr.mxu0 0.0
    %226 = vmatpush1.msra.mxu0 0.0
    %227 = vmatprep.subr.mxu0 0.0
    %228 = vmatpush1.msra.mxu0 0.0
    %229 = vmatprep.subr.mxu0 0.0
    %230 = vmatpush1.msra.mxu0 0.0
    %231 = vmatprep.subr.mxu0 0.0
    %232 = vmatpush1.msra.mxu0 0.0
    %233 = vmatprep.subr.mxu0 0.0
    %234 = vmatpush1.msra.mxu0 0.0
    %235 = vmatprep.subr.mxu0 0.0
    %236 = vmatpush1.msra.mxu0 0.0
    %237 = vmatprep.mubr.f32.mxu0 0.0
    %238 = vmatmul.mubr.f32.gmra.mrb[0].mxu0 %v162
    %v239 = vpop.f32.mrb[0].mxu0
    %v240 = vadd.f32 %v158, %v239
    %v241 = vpop.f32.mrb[0].mxu0
    %242 = vmatprep.mubr.f32.mxu0 0.0
    %243 = vmatmul.mubr.f32.gmra.mrb[0].mxu0 %v165
    %v244 = vpop.f32.mrb[0].mxu0
    %v245 = vadd.f32 %v158, %v244
    %v246 = vpop.f32.mrb[0].mxu0
    %247 = vmatprep.mubr.f32.mxu0 0.0
    %248 = vmatmul.mubr.f32.gmra.mrb[0].mxu0 %v168
    %v249 = vpop.f32.mrb[0].mxu0
    %v250 = vadd.f32 %v158, %v249
    %v251 = vpop.f32.mrb[0].mxu0
    %252 = vmatprep.mubr.f32.mxu0 0.0
    %253 = vmatmul.mubr.f32.gmra.mrb[0].mxu0 %v171
    %v254 = vpop.f32.mrb[0].mxu0
    %v255 = vadd.f32 %v158, %v254
    %v256 = vpop.f32.mrb[0].mxu0
    %257 = vdwg.mxu0
    %258 = vst [vmem:[#allocation3] sm:$0xff] %v240
    %259 = vst [vmem:[#allocation3 + $0x8] sm:$0xff] %v245
    %260 = vst [vmem:[#allocation3 + $0x10] sm:$0xff] %v250
    %261 = vst [vmem:[#allocation3 + $0x18] sm:$0xff] %v255
    %v262 = vld [vmem:[#allocation5] sm:$0xff]
    %v263 = vld [vmem:[#allocation5 + $0x8] sm:$0xff]
    %v264 = vld [vmem:[#allocation5 + $0x10] sm:$0xff]
    %v265 = vld [vmem:[#allocation5 + $0x18] sm:$0xff]
    %v266 = vld [vmem:[#allocation3] sm:$0x1]
    %v267 = vld [vmem:[#allocation3 + $0x10] sm:$0x1]
    %vm268 = vcmask 261120
    %v270 = vsel %vm268, 0.0, 0
    %272 = vmatprep.subr.mxu0 0.0
    %273 = vmatpush1.msra.mxu0 %v262
    %274 = vmatprep.subr.mxu0 0.0
    %275 = vmatpush1.msra.mxu0 %v263
    %276 = vmatprep.subr.mxu0 0.0
    %277 = vmatpush1.msra.mxu0 %v264
    %278 = vmatprep.subr.mxu0 0.0
    %279 = vmatpush1.msra.mxu0 %v265
    %280 = vmatprep.subr.mxu0 0.0
    %281 = vmatpush1.msra.mxu0 0.0
    %282 = vmatprep.subr.mxu0 0.0
    %283 = vmatpush1.msra.mxu0 0.0
    %284 = vmatprep.subr.mxu0 0.0
    %285 = vmatpush1.msra.mxu0 0.0
    %286 = vmatprep.subr.mxu0 0.0
    %287 = vmatpush1.msra.mxu0 0.0
    %288 = vmatprep.subr.mxu0 0.0
    %289 = vmatpush1.msra.mxu0 0.0
    %290 = vmatprep.subr.mxu0 0.0
    %291 = vmatpush1.msra.mxu0 0.0
    %292 = vmatprep.subr.mxu0 0.0
    %293 = vmatpush1.msra.mxu0 0.0
    %294 = vmatprep.subr.mxu0 0.0
    %295 = vmatpush1.msra.mxu0 0.0
    %296 = vmatprep.subr.mxu0 0.0
    %297 = vmatpush1.msra.mxu0 0.0
    %298 = vmatprep.subr.mxu0 0.0
    %299 = vmatpush1.msra.mxu0 0.0
    %300 = vmatprep.subr.mxu0 0.0
    %301 = vmatpush1.msra.mxu0 0.0
    %302 = vmatprep.subr.mxu0 0.0
    %303 = vmatpush1.msra.mxu0 0.0
    %304 = vmatprep.subr.mxu0 0.0
    %305 = vmatpush1.msra.mxu0 0.0
    %306 = vmatprep.subr.mxu0 0.0
    %307 = vmatpush1.msra.mxu0 0.0
    %308 = vmatprep.subr.mxu0 0.0
    %309 = vmatpush1.msra.mxu0 0.0
    %310 = vmatprep.subr.mxu0 0.0
    %311 = vmatpush1.msra.mxu0 0.0
    %312 = vmatprep.subr.mxu0 0.0
    %313 = vmatpush1.msra.mxu0 0.0
    %314 = vmatprep.subr.mxu0 0.0
    %315 = vmatpush1.msra.mxu0 0.0
    %316 = vmatprep.subr.mxu0 0.0
    %317 = vmatpush1.msra.mxu0 0.0
    %318 = vmatprep.subr.mxu0 0.0
    %319 = vmatpush1.msra.mxu0 0.0
    %320 = vmatprep.subr.mxu0 0.0
    %321 = vmatpush1.msra.mxu0 0.0
    %322 = vmatprep.subr.mxu0 0.0
    %323 = vmatpush1.msra.mxu0 0.0
    %324 = vmatprep.subr.mxu0 0.0
    %325 = vmatpush1.msra.mxu0 0.0
    %326 = vmatprep.subr.mxu0 0.0
    %327 = vmatpush1.msra.mxu0 0.0
    %328 = vmatprep.subr.mxu0 0.0
    %329 = vmatpush1.msra.mxu0 0.0
    %330 = vmatprep.subr.mxu0 0.0
    %331 = vmatpush1.msra.mxu0 0.0
    %332 = vmatprep.subr.mxu0 0.0
    %333 = vmatpush1.msra.mxu0 0.0
    %334 = vmatprep.subr.mxu0 0.0
    %335 = vmatpush1.msra.mxu0 0.0
    %336 = vmatprep.mubr.f32.mxu0 0.0
    %337 = vmatmul.mubr.f32.gmra.mrb[0].mxu0 %v270
    %v338 = vpop.f32.mrb[0].mxu0
    %v339 = vadd.f32 0.0, %v338
    %v340 = vpop.f32.mrb[0].mxu0
    %341 = vdwg.mxu0
    %v343 = vrot.slane %v339, 1
    %v346 = vadd.f32 %v266, %v339
    %v347 = vadd.f32 %v267, %v343
    %v348 = vxor.u32 %v346, 2147483648
    %v349 = vxor.u32 %v347, 2147483648
    %v350 = vmul.f32 %v348, 1.442695
    %v351 = vpow.pop %v350
    %v352 = vmul.f32 %v349, 1.442695
    %v353 = vpow.pop %v352
    %v354 = vadd.f32 %v351, 1.0
    %v355 = vadd.f32 %v353, 1.0
    %v356 = vrcp.pop %v354
    %v357 = vmul.f32 1.0, %v356
    %v358 = vrcp.pop %v355
    %v359 = vmul.f32 1.0, %v358
    %v360 = vtanh.pop %v346
    %v361 = vtanh.pop %v347
    %v362 = vmul.f32 %v357, 0.0
    %v363 = vmul.f32 %v359, 0.0
    %366 = vrot.lane.b32.xlu0 %v360, 64
    %v367 = vpop.permute.xlu0 %366
    %368 = vrot.lane.b32.xlu0 %v361, 64
    %v369 = vpop.permute.xlu0 %368
    %v372 = vmul.f32 %v357, %v367
    %v373 = vmul.f32 %v359, %v369
    %376 = vrot.lane.b32.xlu0 %v372, 32
    %v377 = vpop.permute.xlu0 %376
    %378 = vrot.lane.b32.xlu0 %v373, 32
    %v379 = vpop.permute.xlu0 %378
    %v382 = vadd.f32 %v362, %v377
    %v383 = vadd.f32 %v363, %v379
    %v384 = vtanh.pop %v382
    %v385 = vtanh.pop %v383
    %388 = vrot.lane.b32.xlu0 %v384, 64
    %v389 = vpop.permute.xlu0 %388
    %390 = vrot.lane.b32.xlu0 %v385, 64
    %v391 = vpop.permute.xlu0 %390
    %v394 = vmul.f32 %v357, %v389
    %v395 = vmul.f32 %v359, %v391
    %398 = vrot.lane.b32.xlu0 %v394, 32
    %v399 = vpop.permute.xlu0 %398
    %400 = vrot.lane.b32.xlu0 %v395, 32
    %v401 = vpop.permute.xlu0 %400
    %vm404 = vcmask 253952
    %405 = vst.msk [vmem:[#allocation2] sm:$0x1] %vm404, %v399
    %406 = vst.msk [vmem:[#allocation2 + $0x10] sm:$0x1] %vm404, %v401
    %v407 = vld [vmem:[#allocation3 + $0x1] sm:$0x1]
    %v408 = vld [vmem:[#allocation3 + $0x11] sm:$0x1]
    %v409 = vrot.slane %v395, 7
    %vm410 = vcmask 1041409
    %v411 = vsel %vm410, %v409, %v394
    %412 = vrot.lane.b32.xlu0 %v411, 32
    %v413 = vpop.permute.xlu0 %412
    %v414 = vsel %vm268, %v413, 0
    %416 = vmatprep.subr.mxu0 0.0
    %417 = vmatpush1.msra.mxu0 %v262
    %418 = vmatprep.subr.mxu0 0.0
    %419 = vmatpush1.msra.mxu0 %v263
    %420 = vmatprep.subr.mxu0 0.0
    %421 = vmatpush1.msra.mxu0 %v264
    %422 = vmatprep.subr.mxu0 0.0
    %423 = vmatpush1.msra.mxu0 %v265
    %424 = vmatprep.subr.mxu0 0.0
    %425 = vmatpush1.msra.mxu0 0.0
    %426 = vmatprep.subr.mxu0 0.0
    %427 = vmatpush1.msra.mxu0 0.0
    %428 = vmatprep.subr.mxu0 0.0
    %429 = vmatpush1.msra.mxu0 0.0
    %430 = vmatprep.subr.mxu0 0.0
    %431 = vmatpush1.msra.mxu0 0.0
    %432 = vmatprep.subr.mxu0 0.0
    %433 = vmatpush1.msra.mxu0 0.0
    %434 = vmatprep.subr.mxu0 0.0
    %435 = vmatpush1.msra.mxu0 0.0
    %436 = vmatprep.subr.mxu0 0.0
    %437 = vmatpush1.msra.mxu0 0.0
    %438 = vmatprep.subr.mxu0 0.0
    %439 = vmatpush1.msra.mxu0 0.0
    %440 = vmatprep.subr.mxu0 0.0
    %441 = vmatpush1.msra.mxu0 0.0
    %442 = vmatprep.subr.mxu0 0.0
    %443 = vmatpush1.msra.mxu0 0.0
    %444 = vmatprep.subr.mxu0 0.0
    %445 = vmatpush1.msra.mxu0 0.0
    %446 = vmatprep.subr.mxu0 0.0
    %447 = vmatpush1.msra.mxu0 0.0
    %448 = vmatprep.subr.mxu0 0.0
    %449 = vmatpush1.msra.mxu0 0.0
    %450 = vmatprep.subr.mxu0 0.0
    %451 = vmatpush1.msra.mxu0 0.0
    %452 = vmatprep.subr.mxu0 0.0
    %453 = vmatpush1.msra.mxu0 0.0
    %454 = vmatprep.subr.mxu0 0.0
    %455 = vmatpush1.msra.mxu0 0.0
    %456 = vmatprep.subr.mxu0 0.0
    %457 = vmatpush1.msra.mxu0 0.0
    %458 = vmatprep.subr.mxu0 0.0
    %459 = vmatpush1.msra.mxu0 0.0
    %460 = vmatprep.subr.mxu0 0.0
    %461 = vmatpush1.msra.mxu0 0.0
    %462 = vmatprep.subr.mxu0 0.0
    %463 = vmatpush1.msra.mxu0 0.0
    %464 = vmatprep.subr.mxu0 0.0
    %465 = vmatpush1.msra.mxu0 0.0
    %466 = vmatprep.subr.mxu0 0.0
    %467 = vmatpush1.msra.mxu0 0.0
    %468 = vmatprep.subr.mxu0 0.0
    %469 = vmatpush1.msra.mxu0 0.0
    %470 = vmatprep.subr.mxu0 0.0
    %471 = vmatpush1.msra.mxu0 0.0
    %472 = vmatprep.subr.mxu0 0.0
    %473 = vmatpush1.msra.mxu0 0.0
    %474 = vmatprep.subr.mxu0 0.0
    %475 = vmatpush1.msra.mxu0 0.0
    %476 = vmatprep.subr.mxu0 0.0
    %477 = vmatpush1.msra.mxu0 0.0
    %478 = vmatprep.subr.mxu0 0.0
    %479 = vmatpush1.msra.mxu0 0.0
    %480 = vmatprep.mubr.f32.mxu0 0.0
    %481 = vmatmul.mubr.f32.gmra.mrb[0].mxu0 %v414
    %v482 = vpop.f32.mrb[0].mxu0
    %v483 = vadd.f32 0.0, %v482
    %v484 = vpop.f32.mrb[0].mxu0
    %485 = vdwg.mxu0
    %v487 = vrot.slane %v483, 1
    %v490 = vadd.f32 %v407, %v483
    %v491 = vadd.f32 %v408, %v487
    %v492 = vxor.u32 %v490, 2147483648
    %v493 = vxor.u32 %v491, 2147483648
    %v494 = vmul.f32 %v492, 1.442695
    %v495 = vpow.pop %v494
    %v496 = vmul.f32 %v493, 1.442695
    %v497 = vpow.pop %v496
    %v498 = vadd.f32 %v495, 1.0
    %v499 = vadd.f32 %v497, 1.0
    %v500 = vrcp.pop %v498
    %v501 = vmul.f32 1.0, %v500
    %v502 = vrcp.pop %v499
    %v503 = vmul.f32 1.0, %v502
    %v504 = vtanh.pop %v490
    %v505 = vtanh.pop %v491
    %v506 = vmul.f32 %v501, %v382
    %v507 = vmul.f32 %v503, %v383
    %510 = vrot.lane.b32.xlu0 %v504, 64
    %v511 = vpop.permute.xlu0 %510
    %512 = vrot.lane.b32.xlu0 %v505, 64
    %v513 = vpop.permute.xlu0 %512
    %v516 = vmul.f32 %v501, %v511
    %v517 = vmul.f32 %v503, %v513
    %520 = vrot.lane.b32.xlu0 %v516, 32
    %v521 = vpop.permute.xlu0 %520
    %522 = vrot.lane.b32.xlu0 %v517, 32
    %v523 = vpop.permute.xlu0 %522
    %v526 = vadd.f32 %v506, %v521
    %v527 = vadd.f32 %v507, %v523
    %v528 = vtanh.pop %v526
    %v529 = vtanh.pop %v527
    %532 = vrot.lane.b32.xlu0 %v528, 64
    %v533 = vpop.permute.xlu0 %532
    %534 = vrot.lane.b32.xlu0 %v529, 64
    %v535 = vpop.permute.xlu0 %534
    %v538 = vmul.f32 %v501, %v533
    %v539 = vmul.f32 %v503, %v535
    %542 = vrot.lane.b32.xlu0 %v538, 32
    %v543 = vpop.permute.xlu0 %542
    %544 = vrot.lane.b32.xlu0 %v539, 32
    %v545 = vpop.permute.xlu0 %544
    %548 = vst.msk [vmem:[#allocation2 + $0x1] sm:$0x1] %vm404, %v543
    %549 = vst.msk [vmem:[#allocation2 + $0x11] sm:$0x1] %vm404, %v545
    %v550 = vld [vmem:[#allocation3 + $0x2] sm:$0x1]
    %v551 = vld [vmem:[#allocation3 + $0x12] sm:$0x1]
    %v552 = vrot.slane %v539, 7
    %v553 = vsel %vm410, %v552, %v538
    %554 = vrot.lane.b32.xlu0 %v553, 32
    %v555 = vpop.permute.xlu0 %554
    %v556 = vsel %vm268, %v555, 0
    %558 = vmatprep.subr.mxu0 0.0
    %559 = vmatpush1.msra.mxu0 %v262
    %560 = vmatprep.subr.mxu0 0.0
    %561 = vmatpush1.msra.mxu0 %v263
    %562 = vmatprep.subr.mxu0 0.0
    %563 = vmatpush1.msra.mxu0 %v264
    %564 = vmatprep.subr.mxu0 0.0
    %565 = vmatpush1.msra.mxu0 %v265
    %566 = vmatprep.subr.mxu0 0.0
    %567 = vmatpush1.msra.mxu0 0.0
    %568 = vmatprep.subr.mxu0 0.0
    %569 = vmatpush1.msra.mxu0 0.0
    %570 = vmatprep.subr.mxu0 0.0
    %571 = vmatpush1.msra.mxu0 0.0
    %572 = vmatprep.subr.mxu0 0.0
    %573 = vmatpush1.msra.mxu0 0.0
    %574 = vmatprep.subr.mxu0 0.0
    %575 = vmatpush1.msra.mxu0 0.0
    %576 = vmatprep.subr.mxu0 0.0
    %577 = vmatpush1.msra.mxu0 0.0
    %578 = vmatprep.subr.mxu0 0.0
    %579 = vmatpush1.msra.mxu0 0.0
    %580 = vmatprep.subr.mxu0 0.0
    %581 = vmatpush1.msra.mxu0 0.0
    %582 = vmatprep.subr.mxu0 0.0
    %583 = vmatpush1.msra.mxu0 0.0
    %584 = vmatprep.subr.mxu0 0.0
    %585 = vmatpush1.msra.mxu0 0.0
    %586 = vmatprep.subr.mxu0 0.0
    %587 = vmatpush1.msra.mxu0 0.0
    %588 = vmatprep.subr.mxu0 0.0
    %589 = vmatpush1.msra.mxu0 0.0
    %590 = vmatprep.subr.mxu0 0.0
    %591 = vmatpush1.msra.mxu0 0.0
    %592 = vmatprep.subr.mxu0 0.0
    %593 = vmatpush1.msra.mxu0 0.0
    %594 = vmatprep.subr.mxu0 0.0
    %595 = vmatpush1.msra.mxu0 0.0
    %596 = vmatprep.subr.mxu0 0.0
    %597 = vmatpush1.msra.mxu0 0.0
    %598 = vmatprep.subr.mxu0 0.0
    %599 = vmatpush1.msra.mxu0 0.0
    %600 = vmatprep.subr.mxu0 0.0
    %601 = vmatpush1.msra.mxu0 0.0
    %602 = vmatprep.subr.mxu0 0.0
    %603 = vmatpush1.msra.mxu0 0.0
    %604 = vmatprep.subr.mxu0 0.0
    %605 = vmatpush1.msra.mxu0 0.0
    %606 = vmatprep.subr.mxu0 0.0
    %607 = vmatpush1.msra.mxu0 0.0
    %608 = vmatprep.subr.mxu0 0.0
    %609 = vmatpush1.msra.mxu0 0.0
    %610 = vmatprep.subr.mxu0 0.0
    %611 = vmatpush1.msra.mxu0 0.0
    %612 = vmatprep.subr.mxu0 0.0
    %613 = vmatpush1.msra.mxu0 0.0
    %614 = vmatprep.subr.mxu0 0.0
    %615 = vmatpush1.msra.mxu0 0.0
    %616 = vmatprep.subr.mxu0 0.0
    %617 = vmatpush1.msra.mxu0 0.0
    %618 = vmatprep.subr.mxu0 0.0
    %619 = vmatpush1.msra.mxu0 0.0
    %620 = vmatprep.subr.mxu0 0.0
    %621 = vmatpush1.msra.mxu0 0.0
    %622 = vmatprep.mubr.f32.mxu0 0.0
    %623 = vmatmul.mubr.f32.gmra.mrb[0].mxu0 %v556
    %v624 = vpop.f32.mrb[0].mxu0
    %v625 = vadd.f32 0.0, %v624
    %v626 = vpop.f32.mrb[0].mxu0
    %627 = vdwg.mxu0
    %v629 = vrot.slane %v625, 1
    %v632 = vadd.f32 %v550, %v625
    %v633 = vadd.f32 %v551, %v629
    %v634 = vxor.u32 %v632, 2147483648
    %v635 = vxor.u32 %v633, 2147483648
    %v636 = vmul.f32 %v634, 1.442695
    %v637 = vpow.pop %v636
    %v638 = vmul.f32 %v635, 1.442695
    %v639 = vpow.pop %v638
    %v640 = vadd.f32 %v637, 1.0
    %v641 = vadd.f32 %v639, 1.0
    %v642 = vrcp.pop %v640
    %v643 = vmul.f32 1.0, %v642
    %v644 = vrcp.pop %v641
    %v645 = vmul.f32 1.0, %v644
    %v646 = vtanh.pop %v632
    %v647 = vtanh.pop %v633
    %v648 = vmul.f32 %v643, %v526
    %v649 = vmul.f32 %v645, %v527
    %652 = vrot.lane.b32.xlu0 %v646, 64
    %v653 = vpop.permute.xlu0 %652
    %654 = vrot.lane.b32.xlu0 %v647, 64
    %v655 = vpop.permute.xlu0 %654
    %v658 = vmul.f32 %v643, %v653
    %v659 = vmul.f32 %v645, %v655
    %662 = vrot.lane.b32.xlu0 %v658, 32
    %v663 = vpop.permute.xlu0 %662
    %664 = vrot.lane.b32.xlu0 %v659, 32
    %v665 = vpop.permute.xlu0 %664
    %v668 = vadd.f32 %v648, %v663
    %v669 = vadd.f32 %v649, %v665
    %v670 = vtanh.pop %v668
    %v671 = vtanh.pop %v669
    %674 = vrot.lane.b32.xlu0 %v670, 64
    %v675 = vpop.permute.xlu0 %674
    %676 = vrot.lane.b32.xlu0 %v671, 64
    %v677 = vpop.permute.xlu0 %676
    %v680 = vmul.f32 %v643, %v675
    %v681 = vmul.f32 %v645, %v677
    %684 = vrot.lane.b32.xlu0 %v680, 32
    %v685 = vpop.permute.xlu0 %684
    %686 = vrot.lane.b32.xlu0 %v681, 32
    %v687 = vpop.permute.xlu0 %686
    %690 = vst.msk [vmem:[#allocation2 + $0x2] sm:$0x1] %vm404, %v685
    %691 = vst.msk [vmem:[#allocation2 + $0x12] sm:$0x1] %vm404, %v687
    %v692 = vld [vmem:[#allocation3 + $0x3] sm:$0x1]
    %v693 = vld [vmem:[#allocation3 + $0x13] sm:$0x1]
    %v694 = vrot.slane %v681, 7
    %v695 = vsel %vm410, %v694, %v680
    %696 = vrot.lane.b32.xlu0 %v695, 32
    %v697 = vpop.permute.xlu0 %696
    %v698 = vsel %vm268, %v697, 0
    %700 = vmatprep.subr.mxu0 0.0
    %701 = vmatpush1.msra.mxu0 %v262
    %702 = vmatprep.subr.mxu0 0.0
    %703 = vmatpush1.msra.mxu0 %v263
    %704 = vmatprep.subr.mxu0 0.0
    %705 = vmatpush1.msra.mxu0 %v264
    %706 = vmatprep.subr.mxu0 0.0
    %707 = vmatpush1.msra.mxu0 %v265
    %708 = vmatprep.subr.mxu0 0.0
    %709 = vmatpush1.msra.mxu0 0.0
    %710 = vmatprep.subr.mxu0 0.0
    %711 = vmatpush1.msra.mxu0 0.0
    %712 = vmatprep.subr.mxu0 0.0
    %713 = vmatpush1.msra.mxu0 0.0
    %714 = vmatprep.subr.mxu0 0.0
    %715 = vmatpush1.msra.mxu0 0.0
    %716 = vmatprep.subr.mxu0 0.0
    %717 = vmatpush1.msra.mxu0 0.0
    %718 = vmatprep.subr.mxu0 0.0
    %719 = vmatpush1.msra.mxu0 0.0
    %720 = vmatprep.subr.mxu0 0.0
    %721 = vmatpush1.msra.mxu0 0.0
    %722 = vmatprep.subr.mxu0 0.0
    %723 = vmatpush1.msra.mxu0 0.0
    %724 = vmatprep.subr.mxu0 0.0
    %725 = vmatpush1.msra.mxu0 0.0
    %726 = vmatprep.subr.mxu0 0.0
    %727 = vmatpush1.msra.mxu0 0.0
    %728 = vmatprep.subr.mxu0 0.0
    %729 = vmatpush1.msra.mxu0 0.0
    %730 = vmatprep.subr.mxu0 0.0
    %731 = vmatpush1.msra.mxu0 0.0
    %732 = vmatprep.subr.mxu0 0.0
    %733 = vmatpush1.msra.mxu0 0.0
    %734 = vmatprep.subr.mxu0 0.0
    %735 = vmatpush1.msra.mxu0 0.0
    %736 = vmatprep.subr.mxu0 0.0
    %737 = vmatpush1.msra.mxu0 0.0
    %738 = vmatprep.subr.mxu0 0.0
    %739 = vmatpush1.msra.mxu0 0.0
    %740 = vmatprep.subr.mxu0 0.0
    %741 = vmatpush1.msra.mxu0 0.0
    %742 = vmatprep.subr.mxu0 0.0
    %743 = vmatpush1.msra.mxu0 0.0
    %744 = vmatprep.subr.mxu0 0.0
    %745 = vmatpush1.msra.mxu0 0.0
    %746 = vmatprep.subr.mxu0 0.0
    %747 = vmatpush1.msra.mxu0 0.0
    %748 = vmatprep.subr.mxu0 0.0
    %749 = vmatpush1.msra.mxu0 0.0
    %750 = vmatprep.subr.mxu0 0.0
    %751 = vmatpush1.msra.mxu0 0.0
    %752 = vmatprep.subr.mxu0 0.0
    %753 = vmatpush1.msra.mxu0 0.0
    %754 = vmatprep.subr.mxu0 0.0
    %755 = vmatpush1.msra.mxu0 0.0
    %756 = vmatprep.subr.mxu0 0.0
    %757 = vmatpush1.msra.mxu0 0.0
    %758 = vmatprep.subr.mxu0 0.0
    %759 = vmatpush1.msra.mxu0 0.0
    %760 = vmatprep.subr.mxu0 0.0
    %761 = vmatpush1.msra.mxu0 0.0
    %762 = vmatprep.subr.mxu0 0.0
    %763 = vmatpush1.msra.mxu0 0.0
    %764 = vmatprep.mubr.f32.mxu0 0.0
    %765 = vmatmul.mubr.f32.gmra.mrb[0].mxu0 %v698
    %v766 = vpop.f32.mrb[0].mxu0
    %v767 = vadd.f32 0.0, %v766
    %v768 = vpop.f32.mrb[0].mxu0
    %769 = vdwg.mxu0
    %v771 = vrot.slane %v767, 1
    %v774 = vadd.f32 %v692, %v767
    %v775 = vadd.f32 %v693, %v771
    %v776 = vxor.u32 %v774, 2147483648
    %v777 = vxor.u32 %v775, 2147483648
    %v778 = vmul.f32 %v776, 1.442695
    %v779 = vpow.pop %v778
    %v780 = vmul.f32 %v777, 1.442695
    %v781 = vpow.pop %v780
    %v782 = vadd.f32 %v779, 1.0
    %v783 = vadd.f32 %v781, 1.0
    %v784 = vrcp.pop %v782
    %v785 = vmul.f32 1.0, %v784
    %v786 = vrcp.pop %v783
    %v787 = vmul.f32 1.0, %v786
    %v788 = vtanh.pop %v774
    %v789 = vtanh.pop %v775
    %v790 = vmul.f32 %v785, %v668
    %v791 = vmul.f32 %v787, %v669
    %794 = vrot.lane.b32.xlu0 %v788, 64
    %v795 = vpop.permute.xlu0 %794
    %796 = vrot.lane.b32.xlu0 %v789, 64
    %v797 = vpop.permute.xlu0 %796
    %v800 = vmul.f32 %v785, %v795
    %v801 = vmul.f32 %v787, %v797
    %804 = vrot.lane.b32.xlu0 %v800, 32
    %v805 = vpop.permute.xlu0 %804
    %806 = vrot.lane.b32.xlu0 %v801, 32
    %v807 = vpop.permute.xlu0 %806
    %v810 = vadd.f32 %v790, %v805
    %v811 = vadd.f32 %v791, %v807
    %v812 = vtanh.pop %v810
    %v813 = vtanh.pop %v811
    %816 = vrot.lane.b32.xlu0 %v812, 64
    %v817 = vpop.permute.xlu0 %816
    %818 = vrot.lane.b32.xlu0 %v813, 64
    %v819 = vpop.permute.xlu0 %818
    %v822 = vmul.f32 %v785, %v817
    %v823 = vmul.f32 %v787, %v819
    %826 = vrot.lane.b32.xlu0 %v822, 32
    %v827 = vpop.permute.xlu0 %826
    %828 = vrot.lane.b32.xlu0 %v823, 32
    %v829 = vpop.permute.xlu0 %828
    %832 = vst.msk [vmem:[#allocation2 + $0x3] sm:$0x1] %vm404, %v827
    %833 = vst.msk [vmem:[#allocation2 + $0x13] sm:$0x1] %vm404, %v829
    %v834 = vld [vmem:[#allocation3 + $0x4] sm:$0x1]
    %v835 = vld [vmem:[#allocation3 + $0x14] sm:$0x1]
    %v836 = vrot.slane %v823, 7
    %v837 = vsel %vm410, %v836, %v822
    %838 = vrot.lane.b32.xlu0 %v837, 32
    %v839 = vpop.permute.xlu0 %838
    %v840 = vsel %vm268, %v839, 0
    %842 = vmatprep.subr.mxu0 0.0
    %843 = vmatpush1.msra.mxu0 %v262
    %844 = vmatprep.subr.mxu0 0.0
    %845 = vmatpush1.msra.mxu0 %v263
    %846 = vmatprep.subr.mxu0 0.0
    %847 = vmatpush1.msra.mxu0 %v264
    %848 = vmatprep.subr.mxu0 0.0
    %849 = vmatpush1.msra.mxu0 %v265
    %850 = vmatprep.subr.mxu0 0.0
    %851 = vmatpush1.msra.mxu0 0.0
    %852 = vmatprep.subr.mxu0 0.0
    %853 = vmatpush1.msra.mxu0 0.0
    %854 = vmatprep.subr.mxu0 0.0
    %855 = vmatpush1.msra.mxu0 0.0
    %856 = vmatprep.subr.mxu0 0.0
    %857 = vmatpush1.msra.mxu0 0.0
    %858 = vmatprep.subr.mxu0 0.0
    %859 = vmatpush1.msra.mxu0 0.0
    %860 = vmatprep.subr.mxu0 0.0
    %861 = vmatpush1.msra.mxu0 0.0
    %862 = vmatprep.subr.mxu0 0.0
    %863 = vmatpush1.msra.mxu0 0.0
    %864 = vmatprep.subr.mxu0 0.0
    %865 = vmatpush1.msra.mxu0 0.0
    %866 = vmatprep.subr.mxu0 0.0
    %867 = vmatpush1.msra.mxu0 0.0
    %868 = vmatprep.subr.mxu0 0.0
    %869 = vmatpush1.msra.mxu0 0.0
    %870 = vmatprep.subr.mxu0 0.0
    %871 = vmatpush1.msra.mxu0 0.0
    %872 = vmatprep.subr.mxu0 0.0
    %873 = vmatpush1.msra.mxu0 0.0
    %874 = vmatprep.subr.mxu0 0.0
    %875 = vmatpush1.msra.mxu0 0.0
    %876 = vmatprep.subr.mxu0 0.0
    %877 = vmatpush1.msra.mxu0 0.0
    %878 = vmatprep.subr.mxu0 0.0
    %879 = vmatpush1.msra.mxu0 0.0
    %880 = vmatprep.subr.mxu0 0.0
    %881 = vmatpush1.msra.mxu0 0.0
    %882 = vmatprep.subr.mxu0 0.0
    %883 = vmatpush1.msra.mxu0 0.0
    %884 = vmatprep.subr.mxu0 0.0
    %885 = vmatpush1.msra.mxu0 0.0
    %886 = vmatprep.subr.mxu0 0.0
    %887 = vmatpush1.msra.mxu0 0.0
    %888 = vmatprep.subr.mxu0 0.0
    %889 = vmatpush1.msra.mxu0 0.0
    %890 = vmatprep.subr.mxu0 0.0
    %891 = vmatpush1.msra.mxu0 0.0
    %892 = vmatprep.subr.mxu0 0.0
    %893 = vmatpush1.msra.mxu0 0.0
    %894 = vmatprep.subr.mxu0 0.0
    %895 = vmatpush1.msra.mxu0 0.0
    %896 = vmatprep.subr.mxu0 0.0
    %897 = vmatpush1.msra.mxu0 0.0
    %898 = vmatprep.subr.mxu0 0.0
    %899 = vmatpush1.msra.mxu0 0.0
    %900 = vmatprep.subr.mxu0 0.0
    %901 = vmatpush1.msra.mxu0 0.0
    %902 = vmatprep.subr.mxu0 0.0
    %903 = vmatpush1.msra.mxu0 0.0
    %904 = vmatprep.subr.mxu0 0.0
    %905 = vmatpush1.msra.mxu0 0.0
    %906 = vmatprep.mubr.f32.mxu0 0.0
    %907 = vmatmul.mubr.f32.gmra.mrb[0].mxu0 %v840
    %v908 = vpop.f32.mrb[0].mxu0
    %v909 = vadd.f32 0.0, %v908
    %v910 = vpop.f32.mrb[0].mxu0
    %911 = vdwg.mxu0
    %v913 = vrot.slane %v909, 1
    %v916 = vadd.f32 %v834, %v909
    %v917 = vadd.f32 %v835, %v913
    %v918 = vxor.u32 %v916, 2147483648
    %v919 = vxor.u32 %v917, 2147483648
    %v920 = vmul.f32 %v918, 1.442695
    %v921 = vpow.pop %v920
    %v922 = vmul.f32 %v919, 1.442695
    %v923 = vpow.pop %v922
    %v924 = vadd.f32 %v921, 1.0
    %v925 = vadd.f32 %v923, 1.0
    %v926 = vrcp.pop %v924
    %v927 = vmul.f32 1.0, %v926
    %v928 = vrcp.pop %v925
    %v929 = vmul.f32 1.0, %v928
    %v930 = vtanh.pop %v916
    %v931 = vtanh.pop %v917
    %v932 = vmul.f32 %v927, %v810
    %v933 = vmul.f32 %v929, %v811
    %936 = vrot.lane.b32.xlu0 %v930, 64
    %v937 = vpop.permute.xlu0 %936
    %938 = vrot.lane.b32.xlu0 %v931, 64
    %v939 = vpop.permute.xlu0 %938
    %v942 = vmul.f32 %v927, %v937
    %v943 = vmul.f32 %v929, %v939
    %946 = vrot.lane.b32.xlu0 %v942, 32
    %v947 = vpop.permute.xlu0 %946
    %948 = vrot.lane.b32.xlu0 %v943, 32
    %v949 = vpop.permute.xlu0 %948
    %v952 = vadd.f32 %v932, %v947
    %v953 = vadd.f32 %v933, %v949
    %v954 = vtanh.pop %v952
    %v955 = vtanh.pop %v953
    %958 = vrot.lane.b32.xlu0 %v954, 64
    %v959 = vpop.permute.xlu0 %958
    %960 = vrot.lane.b32.xlu0 %v955, 64
    %v961 = vpop.permute.xlu0 %960
    %v964 = vmul.f32 %v927, %v959
    %v965 = vmul.f32 %v929, %v961
    %968 = vrot.lane.b32.xlu0 %v964, 32
    %v969 = vpop.permute.xlu0 %968
    %970 = vrot.lane.b32.xlu0 %v965, 32
    %v971 = vpop.permute.xlu0 %970
    %974 = vst.msk [vmem:[#allocation2 + $0x4] sm:$0x1] %vm404, %v969
    %975 = vst.msk [vmem:[#allocation2 + $0x14] sm:$0x1] %vm404, %v971
    %v976 = vld [vmem:[#allocation3 + $0x5] sm:$0x1]
    %v977 = vld [vmem:[#allocation3 + $0x15] sm:$0x1]
    %v978 = vrot.slane %v965, 7
    %v979 = vsel %vm410, %v978, %v964
    %980 = vrot.lane.b32.xlu0 %v979, 32
    %v981 = vpop.permute.xlu0 %980
    %v982 = vsel %vm268, %v981, 0
    %984 = vmatprep.subr.mxu0 0.0
    %985 = vmatpush1.msra.mxu0 %v262
    %986 = vmatprep.subr.mxu0 0.0
    %987 = vmatpush1.msra.mxu0 %v263
    %988 = vmatprep.subr.mxu0 0.0
    %989 = vmatpush1.msra.mxu0 %v264
    %990 = vmatprep.subr.mxu0 0.0
    %991 = vmatpush1.msra.mxu0 %v265
    %992 = vmatprep.subr.mxu0 0.0
    %993 = vmatpush1.msra.mxu0 0.0
    %994 = vmatprep.subr.mxu0 0.0
    %995 = vmatpush1.msra.mxu0 0.0
    %996 = vmatprep.subr.mxu0 0.0
    %997 = vmatpush1.msra.mxu0 0.0
    %998 = vmatprep.subr.mxu0 0.0
    %999 = vmatpush1.msra.mxu0 0.0
    %1000 = vmatprep.subr.mxu0 0.0
    %1001 = vmatpush1.msra.mxu0 0.0
    %1002 = vmatprep.subr.mxu0 0.0
    %1003 = vmatpush1.msra.mxu0 0.0
    %1004 = vmatprep.subr.mxu0 0.0
    %1005 = vmatpush1.msra.mxu0 0.0
    %1006 = vmatprep.subr.mxu0 0.0
    %1007 = vmatpush1.msra.mxu0 0.0
    %1008 = vmatprep.subr.mxu0 0.0
    %1009 = vmatpush1.msra.mxu0 0.0
    %1010 = vmatprep.subr.mxu0 0.0
    %1011 = vmatpush1.msra.mxu0 0.0
    %1012 = vmatprep.subr.mxu0 0.0
    %1013 = vmatpush1.msra.mxu0 0.0
    %1014 = vmatprep.subr.mxu0 0.0
    %1015 = vmatpush1.msra.mxu0 0.0
    %1016 = vmatprep.subr.mxu0 0.0
    %1017 = vmatpush1.msra.mxu0 0.0
    %1018 = vmatprep.subr.mxu0 0.0
    %1019 = vmatpush1.msra.mxu0 0.0
    %1020 = vmatprep.subr.mxu0 0.0
    %1021 = vmatpush1.msra.mxu0 0.0
    %1022 = vmatprep.subr.mxu0 0.0
    %1023 = vmatpush1.msra.mxu0 0.0
    %1024 = vmatprep.subr.mxu0 0.0
    %1025 = vmatpush1.msra.mxu0 0.0
    %1026 = vmatprep.subr.mxu0 0.0
    %1027 = vmatpush1.msra.mxu0 0.0
    %1028 = vmatprep.subr.mxu0 0.0
    %1029 = vmatpush1.msra.mxu0 0.0
    %1030 = vmatprep.subr.mxu0 0.0
    %1031 = vmatpush1.msra.mxu0 0.0
    %1032 = vmatprep.subr.mxu0 0.0
    %1033 = vmatpush1.msra.mxu0 0.0
    %1034 = vmatprep.subr.mxu0 0.0
    %1035 = vmatpush1.msra.mxu0 0.0
    %1036 = vmatprep.subr.mxu0 0.0
    %1037 = vmatpush1.msra.mxu0 0.0
    %1038 = vmatprep.subr.mxu0 0.0
    %1039 = vmatpush1.msra.mxu0 0.0
    %1040 = vmatprep.subr.mxu0 0.0
    %1041 = vmatpush1.msra.mxu0 0.0
    %1042 = vmatprep.subr.mxu0 0.0
    %1043 = vmatpush1.msra.mxu0 0.0
    %1044 = vmatprep.subr.mxu0 0.0
    %1045 = vmatpush1.msra.mxu0 0.0
    %1046 = vmatprep.subr.mxu0 0.0
    %1047 = vmatpush1.msra.mxu0 0.0
    %1048 = vmatprep.mubr.f32.mxu0 0.0
    %1049 = vmatmul.mubr.f32.gmra.mrb[0].mxu0 %v982
    %v1050 = vpop.f32.mrb[0].mxu0
    %v1051 = vadd.f32 0.0, %v1050
    %v1052 = vpop.f32.mrb[0].mxu0
    %1053 = vdwg.mxu0
    %v1055 = vrot.slane %v1051, 1
    %v1058 = vadd.f32 %v976, %v1051
    %v1059 = vadd.f32 %v977, %v1055
    %v1060 = vxor.u32 %v1058, 2147483648
    %v1061 = vxor.u32 %v1059, 2147483648
    %v1062 = vmul.f32 %v1060, 1.442695
    %v1063 = vpow.pop %v1062
    %v1064 = vmul.f32 %v1061, 1.442695
    %v1065 = vpow.pop %v1064
    %v1066 = vadd.f32 %v1063, 1.0
    %v1067 = vadd.f32 %v1065, 1.0
    %v1068 = vrcp.pop %v1066
    %v1069 = vmul.f32 1.0, %v1068
    %v1070 = vrcp.pop %v1067
    %v1071 = vmul.f32 1.0, %v1070
    %v1072 = vtanh.pop %v1058
    %v1073 = vtanh.pop %v1059
    %v1074 = vmul.f32 %v1069, %v952
    %v1075 = vmul.f32 %v1071, %v953
    %1078 = vrot.lane.b32.xlu0 %v1072, 64
    %v1079 = vpop.permute.xlu0 %1078
    %1080 = vrot.lane.b32.xlu0 %v1073, 64
    %v1081 = vpop.permute.xlu0 %1080
    %v1084 = vmul.f32 %v1069, %v1079
    %v1085 = vmul.f32 %v1071, %v1081
    %1088 = vrot.lane.b32.xlu0 %v1084, 32
    %v1089 = vpop.permute.xlu0 %1088
    %1090 = vrot.lane.b32.xlu0 %v1085, 32
    %v1091 = vpop.permute.xlu0 %1090
    %v1094 = vadd.f32 %v1074, %v1089
    %v1095 = vadd.f32 %v1075, %v1091
    %v1096 = vtanh.pop %v1094
    %v1097 = vtanh.pop %v1095
    %1100 = vrot.lane.b32.xlu0 %v1096, 64
    %v1101 = vpop.permute.xlu0 %1100
    %1102 = vrot.lane.b32.xlu0 %v1097, 64
    %v1103 = vpop.permute.xlu0 %1102
    %v1106 = vmul.f32 %v1069, %v1101
    %v1107 = vmul.f32 %v1071, %v1103
    %1110 = vrot.lane.b32.xlu0 %v1106, 32
    %v1111 = vpop.permute.xlu0 %1110
    %1112 = vrot.lane.b32.xlu0 %v1107, 32
    %v1113 = vpop.permute.xlu0 %1112
    %1116 = vst.msk [vmem:[#allocation2 + $0x5] sm:$0x1] %vm404, %v1111
    %1117 = vst.msk [vmem:[#allocation2 + $0x15] sm:$0x1] %vm404, %v1113
    %v1118 = vld [vmem:[#allocation3 + $0x6] sm:$0x1]
    %v1119 = vld [vmem:[#allocation3 + $0x16] sm:$0x1]
    %v1120 = vrot.slane %v1107, 7
    %v1121 = vsel %vm410, %v1120, %v1106
    %1122 = vrot.lane.b32.xlu0 %v1121, 32
    %v1123 = vpop.permute.xlu0 %1122
    %v1124 = vsel %vm268, %v1123, 0
    %1126 = vmatprep.subr.mxu0 0.0
    %1127 = vmatpush1.msra.mxu0 %v262
    %1128 = vmatprep.subr.mxu0 0.0
    %1129 = vmatpush1.msra.mxu0 %v263
    %1130 = vmatprep.subr.mxu0 0.0
    %1131 = vmatpush1.msra.mxu0 %v264
    %1132 = vmatprep.subr.mxu0 0.0
    %1133 = vmatpush1.msra.mxu0 %v265
    %1134 = vmatprep.subr.mxu0 0.0
    %1135 = vmatpush1.msra.mxu0 0.0
    %1136 = vmatprep.subr.mxu0 0.0
    %1137 = vmatpush1.msra.mxu0 0.0
    %1138 = vmatprep.subr.mxu0 0.0
    %1139 = vmatpush1.msra.mxu0 0.0
    %1140 = vmatprep.subr.mxu0 0.0
    %1141 = vmatpush1.msra.mxu0 0.0
    %1142 = vmatprep.subr.mxu0 0.0
    %1143 = vmatpush1.msra.mxu0 0.0
    %1144 = vmatprep.subr.mxu0 0.0
    %1145 = vmatpush1.msra.mxu0 0.0
    %1146 = vmatprep.subr.mxu0 0.0
    %1147 = vmatpush1.msra.mxu0 0.0
    %1148 = vmatprep.subr.mxu0 0.0
    %1149 = vmatpush1.msra.mxu0 0.0
    %1150 = vmatprep.subr.mxu0 0.0
    %1151 = vmatpush1.msra.mxu0 0.0
    %1152 = vmatprep.subr.mxu0 0.0
    %1153 = vmatpush1.msra.mxu0 0.0
    %1154 = vmatprep.subr.mxu0 0.0
    %1155 = vmatpush1.msra.mxu0 0.0
    %1156 = vmatprep.subr.mxu0 0.0
    %1157 = vmatpush1.msra.mxu0 0.0
    %1158 = vmatprep.subr.mxu0 0.0
    %1159 = vmatpush1.msra.mxu0 0.0
    %1160 = vmatprep.subr.mxu0 0.0
    %1161 = vmatpush1.msra.mxu0 0.0
    %1162 = vmatprep.subr.mxu0 0.0
    %1163 = vmatpush1.msra.mxu0 0.0
    %1164 = vmatprep.subr.mxu0 0.0
    %1165 = vmatpush1.msra.mxu0 0.0
    %1166 = vmatprep.subr.mxu0 0.0
    %1167 = vmatpush1.msra.mxu0 0.0
    %1168 = vmatprep.subr.mxu0 0.0
    %1169 = vmatpush1.msra.mxu0 0.0
    %1170 = vmatprep.subr.mxu0 0.0
    %1171 = vmatpush1.msra.mxu0 0.0
    %1172 = vmatprep.subr.mxu0 0.0
    %1173 = vmatpush1.msra.mxu0 0.0
    %1174 = vmatprep.subr.mxu0 0.0
    %1175 = vmatpush1.msra.mxu0 0.0
    %1176 = vmatprep.subr.mxu0 0.0
    %1177 = vmatpush1.msra.mxu0 0.0
    %1178 = vmatprep.subr.mxu0 0.0
    %1179 = vmatpush1.msra.mxu0 0.0
    %1180 = vmatprep.subr.mxu0 0.0
    %1181 = vmatpush1.msra.mxu0 0.0
    %1182 = vmatprep.subr.mxu0 0.0
    %1183 = vmatpush1.msra.mxu0 0.0
    %1184 = vmatprep.subr.mxu0 0.0
    %1185 = vmatpush1.msra.mxu0 0.0
    %1186 = vmatprep.subr.mxu0 0.0
    %1187 = vmatpush1.msra.mxu0 0.0
    %1188 = vmatprep.subr.mxu0 0.0
    %1189 = vmatpush1.msra.mxu0 0.0
    %1190 = vmatprep.mubr.f32.mxu0 0.0
    %1191 = vmatmul.mubr.f32.gmra.mrb[0].mxu0 %v1124
    %v1192 = vpop.f32.mrb[0].mxu0
    %v1193 = vadd.f32 0.0, %v1192
    %v1194 = vpop.f32.mrb[0].mxu0
    %1195 = vdwg.mxu0
    %v1197 = vrot.slane %v1193, 1
    %v1200 = vadd.f32 %v1118, %v1193
    %v1201 = vadd.f32 %v1119, %v1197
    %v1202 = vxor.u32 %v1200, 2147483648
    %v1203 = vxor.u32 %v1201, 2147483648
    %v1204 = vmul.f32 %v1202, 1.442695
    %v1205 = vpow.pop %v1204
    %v1206 = vmul.f32 %v1203, 1.442695
    %v1207 = vpow.pop %v1206
    %v1208 = vadd.f32 %v1205, 1.0
    %v1209 = vadd.f32 %v1207, 1.0
    %v1210 = vrcp.pop %v1208
    %v1211 = vmul.f32 1.0, %v1210
    %v1212 = vrcp.pop %v1209
    %v1213 = vmul.f32 1.0, %v1212
    %v1214 = vtanh.pop %v1200
    %v1215 = vtanh.pop %v1201
    %v1216 = vmul.f32 %v1211, %v1094
    %v1217 = vmul.f32 %v1213, %v1095
    %1220 = vrot.lane.b32.xlu0 %v1214, 64
    %v1221 = vpop.permute.xlu0 %1220
    %1222 = vrot.lane.b32.xlu0 %v1215, 64
    %v1223 = vpop.permute.xlu0 %1222
    %v1226 = vmul.f32 %v1211, %v1221
    %v1227 = vmul.f32 %v1213, %v1223
    %1230 = vrot.lane.b32.xlu0 %v1226, 32
    %v1231 = vpop.permute.xlu0 %1230
    %1232 = vrot.lane.b32.xlu0 %v1227, 32
    %v1233 = vpop.permute.xlu0 %1232
    %v1236 = vadd.f32 %v1216, %v1231
    %v1237 = vadd.f32 %v1217, %v1233
    %v1238 = vtanh.pop %v1236
    %v1239 = vtanh.pop %v1237
    %1242 = vrot.lane.b32.xlu0 %v1238, 64
    %v1243 = vpop.permute.xlu0 %1242
    %1244 = vrot.lane.b32.xlu0 %v1239, 64
    %v1245 = vpop.permute.xlu0 %1244
    %v1248 = vmul.f32 %v1211, %v1243
    %v1249 = vmul.f32 %v1213, %v1245
    %1252 = vrot.lane.b32.xlu0 %v1248, 32
    %v1253 = vpop.permute.xlu0 %1252
    %1254 = vrot.lane.b32.xlu0 %v1249, 32
    %v1255 = vpop.permute.xlu0 %1254
    %1258 = vst.msk [vmem:[#allocation2 + $0x6] sm:$0x1] %vm404, %v1253
    %1259 = vst.msk [vmem:[#allocation2 + $0x16] sm:$0x1] %vm404, %v1255
    %v1260 = vld [vmem:[#allocation3 + $0x7] sm:$0x1]
    %v1261 = vld [vmem:[#allocation3 + $0x17] sm:$0x1]
    %v1262 = vrot.slane %v1249, 7
    %v1263 = vsel %vm410, %v1262, %v1248
    %1264 = vrot.lane.b32.xlu0 %v1263, 32
    %v1265 = vpop.permute.xlu0 %1264
    %v1266 = vsel %vm268, %v1265, 0
    %1268 = vmatprep.subr.mxu0 0.0
    %1269 = vmatpush1.msra.mxu0 %v262
    %1270 = vmatprep.subr.mxu0 0.0
    %1271 = vmatpush1.msra.mxu0 %v263
    %1272 = vmatprep.subr.mxu0 0.0
    %1273 = vmatpush1.msra.mxu0 %v264
    %1274 = vmatprep.subr.mxu0 0.0
    %1275 = vmatpush1.msra.mxu0 %v265
    %1276 = vmatprep.subr.mxu0 0.0
    %1277 = vmatpush1.msra.mxu0 0.0
    %1278 = vmatprep.subr.mxu0 0.0
    %1279 = vmatpush1.msra.mxu0 0.0
    %1280 = vmatprep.subr.mxu0 0.0
    %1281 = vmatpush1.msra.mxu0 0.0
    %1282 = vmatprep.subr.mxu0 0.0
    %1283 = vmatpush1.msra.mxu0 0.0
    %1284 = vmatprep.subr.mxu0 0.0
    %1285 = vmatpush1.msra.mxu0 0.0
    %1286 = vmatprep.subr.mxu0 0.0
    %1287 = vmatpush1.msra.mxu0 0.0
    %1288 = vmatprep.subr.mxu0 0.0
    %1289 = vmatpush1.msra.mxu0 0.0
    %1290 = vmatprep.subr.mxu0 0.0
    %1291 = vmatpush1.msra.mxu0 0.0
    %1292 = vmatprep.subr.mxu0 0.0
    %1293 = vmatpush1.msra.mxu0 0.0
    %1294 = vmatprep.subr.mxu0 0.0
    %1295 = vmatpush1.msra.mxu0 0.0
    %1296 = vmatprep.subr.mxu0 0.0
    %1297 = vmatpush1.msra.mxu0 0.0
    %1298 = vmatprep.subr.mxu0 0.0
    %1299 = vmatpush1.msra.mxu0 0.0
    %1300 = vmatprep.subr.mxu0 0.0
    %1301 = vmatpush1.msra.mxu0 0.0
    %1302 = vmatprep.subr.mxu0 0.0
    %1303 = vmatpush1.msra.mxu0 0.0
    %1304 = vmatprep.subr.mxu0 0.0
    %1305 = vmatpush1.msra.mxu0 0.0
    %1306 = vmatprep.subr.mxu0 0.0
    %1307 = vmatpush1.msra.mxu0 0.0
    %1308 = vmatprep.subr.mxu0 0.0
    %1309 = vmatpush1.msra.mxu0 0.0
    %1310 = vmatprep.subr.mxu0 0.0
    %1311 = vmatpush1.msra.mxu0 0.0
    %1312 = vmatprep.subr.mxu0 0.0
    %1313 = vmatpush1.msra.mxu0 0.0
    %1314 = vmatprep.subr.mxu0 0.0
    %1315 = vmatpush1.msra.mxu0 0.0
    %1316 = vmatprep.subr.mxu0 0.0
    %1317 = vmatpush1.msra.mxu0 0.0
    %1318 = vmatprep.subr.mxu0 0.0
    %1319 = vmatpush1.msra.mxu0 0.0
    %1320 = vmatprep.subr.mxu0 0.0
    %1321 = vmatpush1.msra.mxu0 0.0
    %1322 = vmatprep.subr.mxu0 0.0
    %1323 = vmatpush1.msra.mxu0 0.0
    %1324 = vmatprep.subr.mxu0 0.0
    %1325 = vmatpush1.msra.mxu0 0.0
    %1326 = vmatprep.subr.mxu0 0.0
    %1327 = vmatpush1.msra.mxu0 0.0
    %1328 = vmatprep.subr.mxu0 0.0
    %1329 = vmatpush1.msra.mxu0 0.0
    %1330 = vmatprep.subr.mxu0 0.0
    %1331 = vmatpush1.msra.mxu0 0.0
    %1332 = vmatprep.mubr.f32.mxu0 0.0
    %1333 = vmatmul.mubr.f32.gmra.mrb[0].mxu0 %v1266
    %v1334 = vpop.f32.mrb[0].mxu0
    %v1335 = vadd.f32 0.0, %v1334
    %v1336 = vpop.f32.mrb[0].mxu0
    %1337 = vdwg.mxu0
    %v1339 = vrot.slane %v1335, 1
    %v1342 = vadd.f32 %v1260, %v1335
    %v1343 = vadd.f32 %v1261, %v1339
    %v1344 = vxor.u32 %v1342, 2147483648
    %v1345 = vxor.u32 %v1343, 2147483648
    %v1346 = vmul.f32 %v1344, 1.442695
    %v1347 = vpow.pop %v1346
    %v1348 = vmul.f32 %v1345, 1.442695
    %v1349 = vpow.pop %v1348
    %v1350 = vadd.f32 %v1347, 1.0
    %v1351 = vadd.f32 %v1349, 1.0
    %v1352 = vrcp.pop %v1350
    %v1353 = vmul.f32 1.0, %v1352
    %v1354 = vrcp.pop %v1351
    %v1355 = vmul.f32 1.0, %v1354
    %v1356 = vtanh.pop %v1342
    %v1357 = vtanh.pop %v1343
    %v1358 = vmul.f32 %v1353, %v1236
    %v1359 = vmul.f32 %v1355, %v1237
    %1362 = vrot.lane.b32.xlu0 %v1356, 64
    %v1363 = vpop.permute.xlu0 %1362
    %1364 = vrot.lane.b32.xlu0 %v1357, 64
    %v1365 = vpop.permute.xlu0 %1364
    %v1368 = vmul.f32 %v1353, %v1363
    %v1369 = vmul.f32 %v1355, %v1365
    %1372 = vrot.lane.b32.xlu0 %v1368, 32
    %v1373 = vpop.permute.xlu0 %1372
    %1374 = vrot.lane.b32.xlu0 %v1369, 32
    %v1375 = vpop.permute.xlu0 %1374
    %v1378 = vadd.f32 %v1358, %v1373
    %v1379 = vadd.f32 %v1359, %v1375
    %v1380 = vtanh.pop %v1378
    %v1381 = vtanh.pop %v1379
    %1384 = vrot.lane.b32.xlu0 %v1380, 64
    %v1385 = vpop.permute.xlu0 %1384
    %1386 = vrot.lane.b32.xlu0 %v1381, 64
    %v1387 = vpop.permute.xlu0 %1386
    %v1390 = vmul.f32 %v1353, %v1385
    %v1391 = vmul.f32 %v1355, %v1387
    %1394 = vrot.lane.b32.xlu0 %v1390, 32
    %v1395 = vpop.permute.xlu0 %1394
    %1396 = vrot.lane.b32.xlu0 %v1391, 32
    %v1397 = vpop.permute.xlu0 %1396
    %1400 = vst.msk [vmem:[#allocation2 + $0x7] sm:$0x1] %vm404, %v1395
    %1401 = vst.msk [vmem:[#allocation2 + $0x17] sm:$0x1] %vm404, %v1397
    %v1402 = vld [vmem:[#allocation3 + $0x8] sm:$0x1]
    %v1403 = vld [vmem:[#allocation3 + $0x18] sm:$0x1]
    %v1404 = vrot.slane %v1391, 7
    %v1405 = vsel %vm410, %v1404, %v1390
    %1406 = vrot.lane.b32.xlu0 %v1405, 32
    %v1407 = vpop.permute.xlu0 %1406
    %v1408 = vsel %vm268, %v1407, 0
    %1410 = vmatprep.subr.mxu0 0.0
    %1411 = vmatpush1.msra.mxu0 %v262
    %1412 = vmatprep.subr.mxu0 0.0
    %1413 = vmatpush1.msra.mxu0 %v263
    %1414 = vmatprep.subr.mxu0 0.0
    %1415 = vmatpush1.msra.mxu0 %v264
    %1416 = vmatprep.subr.mxu0 0.0
    %1417 = vmatpush1.msra.mxu0 %v265
    %1418 = vmatprep.subr.mxu0 0.0
    %1419 = vmatpush1.msra.mxu0 0.0
    %1420 = vmatprep.subr.mxu0 0.0
    %1421 = vmatpush1.msra.mxu0 0.0
    %1422 = vmatprep.subr.mxu0 0.0
    %1423 = vmatpush1.msra.mxu0 0.0
    %1424 = vmatprep.subr.mxu0 0.0
    %1425 = vmatpush1.msra.mxu0 0.0
    %1426 = vmatprep.subr.mxu0 0.0
    %1427 = vmatpush1.msra.mxu0 0.0
    %1428 = vmatprep.subr.mxu0 0.0
    %1429 = vmatpush1.msra.mxu0 0.0
    %1430 = vmatprep.subr.mxu0 0.0
    %1431 = vmatpush1.msra.mxu0 0.0
    %1432 = vmatprep.subr.mxu0 0.0
    %1433 = vmatpush1.msra.mxu0 0.0
    %1434 = vmatprep.subr.mxu0 0.0
    %1435 = vmatpush1.msra.mxu0 0.0
    %1436 = vmatprep.subr.mxu0 0.0
    %1437 = vmatpush1.msra.mxu0 0.0
    %1438 = vmatprep.subr.mxu0 0.0
    %1439 = vmatpush1.msra.mxu0 0.0
    %1440 = vmatprep.subr.mxu0 0.0
    %1441 = vmatpush1.msra.mxu0 0.0
    %1442 = vmatprep.subr.mxu0 0.0
    %1443 = vmatpush1.msra.mxu0 0.0
    %1444 = vmatprep.subr.mxu0 0.0
    %1445 = vmatpush1.msra.mxu0 0.0
    %1446 = vmatprep.subr.mxu0 0.0
    %1447 = vmatpush1.msra.mxu0 0.0
    %1448 = vmatprep.subr.mxu0 0.0
    %1449 = vmatpush1.msra.mxu0 0.0
    %1450 = vmatprep.subr.mxu0 0.0
    %1451 = vmatpush1.msra.mxu0 0.0
    %1452 = vmatprep.subr.mxu0 0.0
    %1453 = vmatpush1.msra.mxu0 0.0
    %1454 = vmatprep.subr.mxu0 0.0
    %1455 = vmatpush1.msra.mxu0 0.0
    %1456 = vmatprep.subr.mxu0 0.0
    %1457 = vmatpush1.msra.mxu0 0.0
    %1458 = vmatprep.subr.mxu0 0.0
    %1459 = vmatpush1.msra.mxu0 0.0
    %1460 = vmatprep.subr.mxu0 0.0
    %1461 = vmatpush1.msra.mxu0 0.0
    %1462 = vmatprep.subr.mxu0 0.0
    %1463 = vmatpush1.msra.mxu0 0.0
    %1464 = vmatprep.subr.mxu0 0.0
    %1465 = vmatpush1.msra.mxu0 0.0
    %1466 = vmatprep.subr.mxu0 0.0
    %1467 = vmatpush1.msra.mxu0 0.0
    %1468 = vmatprep.subr.mxu0 0.0
    %1469 = vmatpush1.msra.mxu0 0.0
    %1470 = vmatprep.subr.mxu0 0.0
    %1471 = vmatpush1.msra.mxu0 0.0
    %1472 = vmatprep.subr.mxu0 0.0
    %1473 = vmatpush1.msra.mxu0 0.0
    %1474 = vmatprep.mubr.f32.mxu0 0.0
    %1475 = vmatmul.mubr.f32.gmra.mrb[0].mxu0 %v1408
    %v1476 = vpop.f32.mrb[0].mxu0
    %v1477 = vadd.f32 0.0, %v1476
    %v1478 = vpop.f32.mrb[0].mxu0
    %1479 = vdwg.mxu0
    %v1481 = vrot.slane %v1477, 1
    %v1484 = vadd.f32 %v1402, %v1477
    %v1485 = vadd.f32 %v1403, %v1481
    %v1486 = vxor.u32 %v1484, 2147483648
    %v1487 = vxor.u32 %v1485, 2147483648
    %v1488 = vmul.f32 %v1486, 1.442695
    %v1489 = vpow.pop %v1488
    %v1490 = vmul.f32 %v1487, 1.442695
    %v1491 = vpow.pop %v1490
    %v1492 = vadd.f32 %v1489, 1.0
    %v1493 = vadd.f32 %v1491, 1.0
    %v1494 = vrcp.pop %v1492
    %v1495 = vmul.f32 1.0, %v1494
    %v1496 = vrcp.pop %v1493
    %v1497 = vmul.f32 1.0, %v1496
    %v1498 = vtanh.pop %v1484
    %v1499 = vtanh.pop %v1485
    %v1500 = vmul.f32 %v1495, %v1378
    %v1501 = vmul.f32 %v1497, %v1379
    %1504 = vrot.lane.b32.xlu0 %v1498, 64
    %v1505 = vpop.permute.xlu0 %1504
    %1506 = vrot.lane.b32.xlu0 %v1499, 64
    %v1507 = vpop.permute.xlu0 %1506
    %v1510 = vmul.f32 %v1495, %v1505
    %v1511 = vmul.f32 %v1497, %v1507
    %1514 = vrot.lane.b32.xlu0 %v1510, 32
    %v1515 = vpop.permute.xlu0 %1514
    %1516 = vrot.lane.b32.xlu0 %v1511, 32
    %v1517 = vpop.permute.xlu0 %1516
    %v1520 = vadd.f32 %v1500, %v1515
    %v1521 = vadd.f32 %v1501, %v1517
    %v1522 = vtanh.pop %v1520
    %v1523 = vtanh.pop %v1521
    %1526 = vrot.lane.b32.xlu0 %v1522, 64
    %v1527 = vpop.permute.xlu0 %1526
    %1528 = vrot.lane.b32.xlu0 %v1523, 64
    %v1529 = vpop.permute.xlu0 %1528
    %v1532 = vmul.f32 %v1495, %v1527
    %v1533 = vmul.f32 %v1497, %v1529
    %1536 = vrot.lane.b32.xlu0 %v1532, 32
    %v1537 = vpop.permute.xlu0 %1536
    %1538 = vrot.lane.b32.xlu0 %v1533, 32
    %v1539 = vpop.permute.xlu0 %1538
    %1542 = vst.msk [vmem:[#allocation2 + $0x8] sm:$0x1] %vm404, %v1537
    %1543 = vst.msk [vmem:[#allocation2 + $0x18] sm:$0x1] %vm404, %v1539
    %v1544 = vld [vmem:[#allocation3 + $0x9] sm:$0x1]
    %v1545 = vld [vmem:[#allocation3 + $0x19] sm:$0x1]
    %v1546 = vrot.slane %v1533, 7
    %v1547 = vsel %vm410, %v1546, %v1532
    %1548 = vrot.lane.b32.xlu0 %v1547, 32
    %v1549 = vpop.permute.xlu0 %1548
    %v1550 = vsel %vm268, %v1549, 0
    %1552 = vmatprep.subr.mxu0 0.0
    %1553 = vmatpush1.msra.mxu0 %v262
    %1554 = vmatprep.subr.mxu0 0.0
    %1555 = vmatpush1.msra.mxu0 %v263
    %1556 = vmatprep.subr.mxu0 0.0
    %1557 = vmatpush1.msra.mxu0 %v264
    %1558 = vmatprep.subr.mxu0 0.0
    %1559 = vmatpush1.msra.mxu0 %v265
    %1560 = vmatprep.subr.mxu0 0.0
    %1561 = vmatpush1.msra.mxu0 0.0
    %1562 = vmatprep.subr.mxu0 0.0
    %1563 = vmatpush1.msra.mxu0 0.0
    %1564 = vmatprep.subr.mxu0 0.0
    %1565 = vmatpush1.msra.mxu0 0.0
    %1566 = vmatprep.subr.mxu0 0.0
    %1567 = vmatpush1.msra.mxu0 0.0
    %1568 = vmatprep.subr.mxu0 0.0
    %1569 = vmatpush1.msra.mxu0 0.0
    %1570 = vmatprep.subr.mxu0 0.0
    %1571 = vmatpush1.msra.mxu0 0.0
    %1572 = vmatprep.subr.mxu0 0.0
    %1573 = vmatpush1.msra.mxu0 0.0
    %1574 = vmatprep.subr.mxu0 0.0
    %1575 = vmatpush1.msra.mxu0 0.0
    %1576 = vmatprep.subr.mxu0 0.0
    %1577 = vmatpush1.msra.mxu0 0.0
    %1578 = vmatprep.subr.mxu0 0.0
    %1579 = vmatpush1.msra.mxu0 0.0
    %1580 = vmatprep.subr.mxu0 0.0
    %1581 = vmatpush1.msra.mxu0 0.0
    %1582 = vmatprep.subr.mxu0 0.0
    %1583 = vmatpush1.msra.mxu0 0.0
    %1584 = vmatprep.subr.mxu0 0.0
    %1585 = vmatpush1.msra.mxu0 0.0
    %1586 = vmatprep.subr.mxu0 0.0
    %1587 = vmatpush1.msra.mxu0 0.0
    %1588 = vmatprep.subr.mxu0 0.0
    %1589 = vmatpush1.msra.mxu0 0.0
    %1590 = vmatprep.subr.mxu0 0.0
    %1591 = vmatpush1.msra.mxu0 0.0
    %1592 = vmatprep.subr.mxu0 0.0
    %1593 = vmatpush1.msra.mxu0 0.0
    %1594 = vmatprep.subr.mxu0 0.0
    %1595 = vmatpush1.msra.mxu0 0.0
    %1596 = vmatprep.subr.mxu0 0.0
    %1597 = vmatpush1.msra.mxu0 0.0
    %1598 = vmatprep.subr.mxu0 0.0
    %1599 = vmatpush1.msra.mxu0 0.0
    %1600 = vmatprep.subr.mxu0 0.0
    %1601 = vmatpush1.msra.mxu0 0.0
    %1602 = vmatprep.subr.mxu0 0.0
    %1603 = vmatpush1.msra.mxu0 0.0
    %1604 = vmatprep.subr.mxu0 0.0
    %1605 = vmatpush1.msra.mxu0 0.0
    %1606 = vmatprep.subr.mxu0 0.0
    %1607 = vmatpush1.msra.mxu0 0.0
    %1608 = vmatprep.subr.mxu0 0.0
    %1609 = vmatpush1.msra.mxu0 0.0
    %1610 = vmatprep.subr.mxu0 0.0
    %1611 = vmatpush1.msra.mxu0 0.0
    %1612 = vmatprep.subr.mxu0 0.0
    %1613 = vmatpush1.msra.mxu0 0.0
    %1614 = vmatprep.subr.mxu0 0.0
    %1615 = vmatpush1.msra.mxu0 0.0
    %1616 = vmatprep.mubr.f32.mxu0 0.0
    %1617 = vmatmul.mubr.f32.gmra.mrb[0].mxu0 %v1550
    %v1618 = vpop.f32.mrb[0].mxu0
    %v1619 = vadd.f32 0.0, %v1618
    %v1620 = vpop.f32.mrb[0].mxu0
    %1621 = vdwg.mxu0
    %v1623 = vrot.slane %v1619, 1
    %v1626 = vadd.f32 %v1544, %v1619
    %v1627 = vadd.f32 %v1545, %v1623
    %v1628 = vxor.u32 %v1626, 2147483648
    %v1629 = vxor.u32 %v1627, 2147483648
    %v1630 = vmul.f32 %v1628, 1.442695
    %v1631 = vpow.pop %v1630
    %v1632 = vmul.f32 %v1629, 1.442695
    %v1633 = vpow.pop %v1632
    %v1634 = vadd.f32 %v1631, 1.0
    %v1635 = vadd.f32 %v1633, 1.0
    %v1636 = vrcp.pop %v1634
    %v1637 = vmul.f32 1.0, %v1636
    %v1638 = vrcp.pop %v1635
    %v1639 = vmul.f32 1.0, %v1638
    %v1640 = vtanh.pop %v1626
    %v1641 = vtanh.pop %v1627
    %v1642 = vmul.f32 %v1637, %v1520
    %v1643 = vmul.f32 %v1639, %v1521
    %1646 = vrot.lane.b32.xlu0 %v1640, 64
    %v1647 = vpop.permute.xlu0 %1646
    %1648 = vrot.lane.b32.xlu0 %v1641, 64
    %v1649 = vpop.permute.xlu0 %1648
    %v1652 = vmul.f32 %v1637, %v1647
    %v1653 = vmul.f32 %v1639, %v1649
    %1656 = vrot.lane.b32.xlu0 %v1652, 32
    %v1657 = vpop.permute.xlu0 %1656
    %1658 = vrot.lane.b32.xlu0 %v1653, 32
    %v1659 = vpop.permute.xlu0 %1658
    %v1662 = vadd.f32 %v1642, %v1657
    %v1663 = vadd.f32 %v1643, %v1659
    %v1664 = vtanh.pop %v1662
    %v1665 = vtanh.pop %v1663
    %1668 = vrot.lane.b32.xlu0 %v1664, 64
    %v1669 = vpop.permute.xlu0 %1668
    %1670 = vrot.lane.b32.xlu0 %v1665, 64
    %v1671 = vpop.permute.xlu0 %1670
    %v1674 = vmul.f32 %v1637, %v1669
    %v1675 = vmul.f32 %v1639, %v1671
    %1678 = vrot.lane.b32.xlu0 %v1674, 32
    %v1679 = vpop.permute.xlu0 %1678
    %1680 = vrot.lane.b32.xlu0 %v1675, 32
    %v1681 = vpop.permute.xlu0 %1680
    %1684 = vst.msk [vmem:[#allocation2 + $0x9] sm:$0x1] %vm404, %v1679
    %1685 = vst.msk [vmem:[#allocation2 + $0x19] sm:$0x1] %vm404, %v1681
    %v1686 = vld [vmem:[#allocation3 + $0xa] sm:$0x1]
    %v1687 = vld [vmem:[#allocation3 + $0x1a] sm:$0x1]
    %v1688 = vrot.slane %v1675, 7
    %v1689 = vsel %vm410, %v1688, %v1674
    %1690 = vrot.lane.b32.xlu0 %v1689, 32
    %v1691 = vpop.permute.xlu0 %1690
    %v1692 = vsel %vm268, %v1691, 0
    %1694 = vmatprep.subr.mxu0 0.0
    %1695 = vmatpush1.msra.mxu0 %v262
    %1696 = vmatprep.subr.mxu0 0.0
    %1697 = vmatpush1.msra.mxu0 %v263
    %1698 = vmatprep.subr.mxu0 0.0
    %1699 = vmatpush1.msra.mxu0 %v264
    %1700 = vmatprep.subr.mxu0 0.0
    %1701 = vmatpush1.msra.mxu0 %v265
    %1702 = vmatprep.subr.mxu0 0.0
    %1703 = vmatpush1.msra.mxu0 0.0
    %1704 = vmatprep.subr.mxu0 0.0
    %1705 = vmatpush1.msra.mxu0 0.0
    %1706 = vmatprep.subr.mxu0 0.0
    %1707 = vmatpush1.msra.mxu0 0.0
    %1708 = vmatprep.subr.mxu0 0.0
    %1709 = vmatpush1.msra.mxu0 0.0
    %1710 = vmatprep.subr.mxu0 0.0
    %1711 = vmatpush1.msra.mxu0 0.0
    %1712 = vmatprep.subr.mxu0 0.0
    %1713 = vmatpush1.msra.mxu0 0.0
    %1714 = vmatprep.subr.mxu0 0.0
    %1715 = vmatpush1.msra.mxu0 0.0
    %1716 = vmatprep.subr.mxu0 0.0
    %1717 = vmatpush1.msra.mxu0 0.0
    %1718 = vmatprep.subr.mxu0 0.0
    %1719 = vmatpush1.msra.mxu0 0.0
    %1720 = vmatprep.subr.mxu0 0.0
    %1721 = vmatpush1.msra.mxu0 0.0
    %1722 = vmatprep.subr.mxu0 0.0
    %1723 = vmatpush1.msra.mxu0 0.0
    %1724 = vmatprep.subr.mxu0 0.0
    %1725 = vmatpush1.msra.mxu0 0.0
    %1726 = vmatprep.subr.mxu0 0.0
    %1727 = vmatpush1.msra.mxu0 0.0
    %1728 = vmatprep.subr.mxu0 0.0
    %1729 = vmatpush1.msra.mxu0 0.0
    %1730 = vmatprep.subr.mxu0 0.0
    %1731 = vmatpush1.msra.mxu0 0.0
    %1732 = vmatprep.subr.mxu0 0.0
    %1733 = vmatpush1.msra.mxu0 0.0
    %1734 = vmatprep.subr.mxu0 0.0
    %1735 = vmatpush1.msra.mxu0 0.0
    %1736 = vmatprep.subr.mxu0 0.0
    %1737 = vmatpush1.msra.mxu0 0.0
    %1738 = vmatprep.subr.mxu0 0.0
    %1739 = vmatpush1.msra.mxu0 0.0
    %1740 = vmatprep.subr.mxu0 0.0
    %1741 = vmatpush1.msra.mxu0 0.0
    %1742 = vmatprep.subr.mxu0 0.0
    %1743 = vmatpush1.msra.mxu0 0.0
    %1744 = vmatprep.subr.mxu0 0.0
    %1745 = vmatpush1.msra.mxu0 0.0
    %1746 = vmatprep.subr.mxu0 0.0
    %1747 = vmatpush1.msra.mxu0 0.0
    %1748 = vmatprep.subr.mxu0 0.0
    %1749 = vmatpush1.msra.mxu0 0.0
    %1750 = vmatprep.subr.mxu0 0.0
    %1751 = vmatpush1.msra.mxu0 0.0
    %1752 = vmatprep.subr.mxu0 0.0
    %1753 = vmatpush1.msra.mxu0 0.0
    %1754 = vmatprep.subr.mxu0 0.0
    %1755 = vmatpush1.msra.mxu0 0.0
    %1756 = vmatprep.subr.mxu0 0.0
    %1757 = vmatpush1.msra.mxu0 0.0
    %1758 = vmatprep.mubr.f32.mxu0 0.0
    %1759 = vmatmul.mubr.f32.gmra.mrb[0].mxu0 %v1692
    %v1760 = vpop.f32.mrb[0].mxu0
    %v1761 = vadd.f32 0.0, %v1760
    %v1762 = vpop.f32.mrb[0].mxu0
    %1763 = vdwg.mxu0
    %v1765 = vrot.slane %v1761, 1
    %v1768 = vadd.f32 %v1686, %v1761
    %v1769 = vadd.f32 %v1687, %v1765
    %v1770 = vxor.u32 %v1768, 2147483648
    %v1771 = vxor.u32 %v1769, 2147483648
    %v1772 = vmul.f32 %v1770, 1.442695
    %v1773 = vpow.pop %v1772
    %v1774 = vmul.f32 %v1771, 1.442695
    %v1775 = vpow.pop %v1774
    %v1776 = vadd.f32 %v1773, 1.0
    %v1777 = vadd.f32 %v1775, 1.0
    %v1778 = vrcp.pop %v1776
    %v1779 = vmul.f32 1.0, %v1778
    %v1780 = vrcp.pop %v1777
    %v1781 = vmul.f32 1.0, %v1780
    %v1782 = vtanh.pop %v1768
    %v1783 = vtanh.pop %v1769
    %v1784 = vmul.f32 %v1779, %v1662
    %v1785 = vmul.f32 %v1781, %v1663
    %1788 = vrot.lane.b32.xlu0 %v1782, 64
    %v1789 = vpop.permute.xlu0 %1788
    %1790 = vrot.lane.b32.xlu0 %v1783, 64
    %v1791 = vpop.permute.xlu0 %1790
    %v1794 = vmul.f32 %v1779, %v1789
    %v1795 = vmul.f32 %v1781, %v1791
    %1798 = vrot.lane.b32.xlu0 %v1794, 32
    %v1799 = vpop.permute.xlu0 %1798
    %1800 = vrot.lane.b32.xlu0 %v1795, 32
    %v1801 = vpop.permute.xlu0 %1800
    %v1804 = vadd.f32 %v1784, %v1799
    %v1805 = vadd.f32 %v1785, %v1801
    %v1806 = vtanh.pop %v1804
    %v1807 = vtanh.pop %v1805
    %1810 = vrot.lane.b32.xlu0 %v1806, 64
    %v1811 = vpop.permute.xlu0 %1810
    %1812 = vrot.lane.b32.xlu0 %v1807, 64
    %v1813 = vpop.permute.xlu0 %1812
    %v1816 = vmul.f32 %v1779, %v1811
    %v1817 = vmul.f32 %v1781, %v1813
    %1820 = vrot.lane.b32.xlu0 %v1816, 32
    %v1821 = vpop.permute.xlu0 %1820
    %1822 = vrot.lane.b32.xlu0 %v1817, 32
    %v1823 = vpop.permute.xlu0 %1822
    %1826 = vst.msk [vmem:[#allocation2 + $0xa] sm:$0x1] %vm404, %v1821
    %1827 = vst.msk [vmem:[#allocation2 + $0x1a] sm:$0x1] %vm404, %v1823
    %v1828 = vld [vmem:[#allocation3 + $0xb] sm:$0x1]
    %v1829 = vld [vmem:[#allocation3 + $0x1b] sm:$0x1]
    %v1830 = vrot.slane %v1817, 7
    %v1831 = vsel %vm410, %v1830, %v1816
    %1832 = vrot.lane.b32.xlu0 %v1831, 32
    %v1833 = vpop.permute.xlu0 %1832
    %v1834 = vsel %vm268, %v1833, 0
    %1836 = vmatprep.subr.mxu0 0.0
    %1837 = vmatpush1.msra.mxu0 %v262
    %1838 = vmatprep.subr.mxu0 0.0
    %1839 = vmatpush1.msra.mxu0 %v263
    %1840 = vmatprep.subr.mxu0 0.0
    %1841 = vmatpush1.msra.mxu0 %v264
    %1842 = vmatprep.subr.mxu0 0.0
    %1843 = vmatpush1.msra.mxu0 %v265
    %1844 = vmatprep.subr.mxu0 0.0
    %1845 = vmatpush1.msra.mxu0 0.0
    %1846 = vmatprep.subr.mxu0 0.0
    %1847 = vmatpush1.msra.mxu0 0.0
    %1848 = vmatprep.subr.mxu0 0.0
    %1849 = vmatpush1.msra.mxu0 0.0
    %1850 = vmatprep.subr.mxu0 0.0
    %1851 = vmatpush1.msra.mxu0 0.0
    %1852 = vmatprep.subr.mxu0 0.0
    %1853 = vmatpush1.msra.mxu0 0.0
    %1854 = vmatprep.subr.mxu0 0.0
    %1855 = vmatpush1.msra.mxu0 0.0
    %1856 = vmatprep.subr.mxu0 0.0
    %1857 = vmatpush1.msra.mxu0 0.0
    %1858 = vmatprep.subr.mxu0 0.0
    %1859 = vmatpush1.msra.mxu0 0.0
    %1860 = vmatprep.subr.mxu0 0.0
    %1861 = vmatpush1.msra.mxu0 0.0
    %1862 = vmatprep.subr.mxu0 0.0
    %1863 = vmatpush1.msra.mxu0 0.0
    %1864 = vmatprep.subr.mxu0 0.0
    %1865 = vmatpush1.msra.mxu0 0.0
    %1866 = vmatprep.subr.mxu0 0.0
    %1867 = vmatpush1.msra.mxu0 0.0
    %1868 = vmatprep.subr.mxu0 0.0
    %1869 = vmatpush1.msra.mxu0 0.0
    %1870 = vmatprep.subr.mxu0 0.0
    %1871 = vmatpush1.msra.mxu0 0.0
    %1872 = vmatprep.subr.mxu0 0.0
    %1873 = vmatpush1.msra.mxu0 0.0
    %1874 = vmatprep.subr.mxu0 0.0
    %1875 = vmatpush1.msra.mxu0 0.0
    %1876 = vmatprep.subr.mxu0 0.0
    %1877 = vmatpush1.msra.mxu0 0.0
    %1878 = vmatprep.subr.mxu0 0.0
    %1879 = vmatpush1.msra.mxu0 0.0
    %1880 = vmatprep.subr.mxu0 0.0
    %1881 = vmatpush1.msra.mxu0 0.0
    %1882 = vmatprep.subr.mxu0 0.0
    %1883 = vmatpush1.msra.mxu0 0.0
    %1884 = vmatprep.subr.mxu0 0.0
    %1885 = vmatpush1.msra.mxu0 0.0
    %1886 = vmatprep.subr.mxu0 0.0
    %1887 = vmatpush1.msra.mxu0 0.0
    %1888 = vmatprep.subr.mxu0 0.0
    %1889 = vmatpush1.msra.mxu0 0.0
    %1890 = vmatprep.subr.mxu0 0.0
    %1891 = vmatpush1.msra.mxu0 0.0
    %1892 = vmatprep.subr.mxu0 0.0
    %1893 = vmatpush1.msra.mxu0 0.0
    %1894 = vmatprep.subr.mxu0 0.0
    %1895 = vmatpush1.msra.mxu0 0.0
    %1896 = vmatprep.subr.mxu0 0.0
    %1897 = vmatpush1.msra.mxu0 0.0
    %1898 = vmatprep.subr.mxu0 0.0
    %1899 = vmatpush1.msra.mxu0 0.0
    %1900 = vmatprep.mubr.f32.mxu0 0.0
    %1901 = vmatmul.mubr.f32.gmra.mrb[0].mxu0 %v1834
    %v1902 = vpop.f32.mrb[0].mxu0
    %v1903 = vadd.f32 0.0, %v1902
    %v1904 = vpop.f32.mrb[0].mxu0
    %1905 = vdwg.mxu0
    %v1907 = vrot.slane %v1903, 1
    %v1910 = vadd.f32 %v1828, %v1903
    %v1911 = vadd.f32 %v1829, %v1907
    %v1912 = vxor.u32 %v1910, 2147483648
    %v1913 = vxor.u32 %v1911, 2147483648
    %v1914 = vmul.f32 %v1912, 1.442695
    %v1915 = vpow.pop %v1914
    %v1916 = vmul.f32 %v1913, 1.442695
    %v1917 = vpow.pop %v1916
    %v1918 = vadd.f32 %v1915, 1.0
    %v1919 = vadd.f32 %v1917, 1.0
    %v1920 = vrcp.pop %v1918
    %v1921 = vmul.f32 1.0, %v1920
    %v1922 = vrcp.pop %v1919
    %v1923 = vmul.f32 1.0, %v1922
    %v1924 = vtanh.pop %v1910
    %v1925 = vtanh.pop %v1911
    %v1926 = vmul.f32 %v1921, %v1804
    %v1927 = vmul.f32 %v1923, %v1805
    %1930 = vrot.lane.b32.xlu0 %v1924, 64
    %v1931 = vpop.permute.xlu0 %1930
    %1932 = vrot.lane.b32.xlu0 %v1925, 64
    %v1933 = vpop.permute.xlu0 %1932
    %v1936 = vmul.f32 %v1921, %v1931
    %v1937 = vmul.f32 %v1923, %v1933
    %1940 = vrot.lane.b32.xlu0 %v1936, 32
    %v1941 = vpop.permute.xlu0 %1940
    %1942 = vrot.lane.b32.xlu0 %v1937, 32
    %v1943 = vpop.permute.xlu0 %1942
    %v1946 = vadd.f32 %v1926, %v1941
    %v1947 = vadd.f32 %v1927, %v1943
    %v1948 = vtanh.pop %v1946
    %v1949 = vtanh.pop %v1947
    %1952 = vrot.lane.b32.xlu0 %v1948, 64
    %v1953 = vpop.permute.xlu0 %1952
    %1954 = vrot.lane.b32.xlu0 %v1949, 64
    %v1955 = vpop.permute.xlu0 %1954
    %v1958 = vmul.f32 %v1921, %v1953
    %v1959 = vmul.f32 %v1923, %v1955
    %1962 = vrot.lane.b32.xlu0 %v1958, 32
    %v1963 = vpop.permute.xlu0 %1962
    %1964 = vrot.lane.b32.xlu0 %v1959, 32
    %v1965 = vpop.permute.xlu0 %1964
    %1968 = vst.msk [vmem:[#allocation2 + $0xb] sm:$0x1] %vm404, %v1963
    %1969 = vst.msk [vmem:[#allocation2 + $0x1b] sm:$0x1] %vm404, %v1965
    %v1970 = vld [vmem:[#allocation3 + $0xc] sm:$0x1]
    %v1971 = vld [vmem:[#allocation3 + $0x1c] sm:$0x1]
    %v1972 = vrot.slane %v1959, 7
    %v1973 = vsel %vm410, %v1972, %v1958
    %1974 = vrot.lane.b32.xlu0 %v1973, 32
    %v1975 = vpop.permute.xlu0 %1974
    %v1976 = vsel %vm268, %v1975, 0
    %1978 = vmatprep.subr.mxu0 0.0
    %1979 = vmatpush1.msra.mxu0 %v262
    %1980 = vmatprep.subr.mxu0 0.0
    %1981 = vmatpush1.msra.mxu0 %v263
    %1982 = vmatprep.subr.mxu0 0.0
    %1983 = vmatpush1.msra.mxu0 %v264
    %1984 = vmatprep.subr.mxu0 0.0
    %1985 = vmatpush1.msra.mxu0 %v265
    %1986 = vmatprep.subr.mxu0 0.0
    %1987 = vmatpush1.msra.mxu0 0.0
    %1988 = vmatprep.subr.mxu0 0.0
    %1989 = vmatpush1.msra.mxu0 0.0
    %1990 = vmatprep.subr.mxu0 0.0
    %1991 = vmatpush1.msra.mxu0 0.0
    %1992 = vmatprep.subr.mxu0 0.0
    %1993 = vmatpush1.msra.mxu0 0.0
    %1994 = vmatprep.subr.mxu0 0.0
    %1995 = vmatpush1.msra.mxu0 0.0
    %1996 = vmatprep.subr.mxu0 0.0
    %1997 = vmatpush1.msra.mxu0 0.0
    %1998 = vmatprep.subr.mxu0 0.0
    %1999 = vmatpush1.msra.mxu0 0.0
    %2000 = vmatprep.subr.mxu0 0.0
    %2001 = vmatpush1.msra.mxu0 0.0
    %2002 = vmatprep.subr.mxu0 0.0
    %2003 = vmatpush1.msra.mxu0 0.0
    %2004 = vmatprep.subr.mxu0 0.0
    %2005 = vmatpush1.msra.mxu0 0.0
    %2006 = vmatprep.subr.mxu0 0.0
    %2007 = vmatpush1.msra.mxu0 0.0
    %2008 = vmatprep.subr.mxu0 0.0
    %2009 = vmatpush1.msra.mxu0 0.0
    %2010 = vmatprep.subr.mxu0 0.0
    %2011 = vmatpush1.msra.mxu0 0.0
    %2012 = vmatprep.subr.mxu0 0.0
    %2013 = vmatpush1.msra.mxu0 0.0
    %2014 = vmatprep.subr.mxu0 0.0
    %2015 = vmatpush1.msra.mxu0 0.0
    %2016 = vmatprep.subr.mxu0 0.0
    %2017 = vmatpush1.msra.mxu0 0.0
    %2018 = vmatprep.subr.mxu0 0.0
    %2019 = vmatpush1.msra.mxu0 0.0
    %2020 = vmatprep.subr.mxu0 0.0
    %2021 = vmatpush1.msra.mxu0 0.0
    %2022 = vmatprep.subr.mxu0 0.0
    %2023 = vmatpush1.msra.mxu0 0.0
    %2024 = vmatprep.subr.mxu0 0.0
    %2025 = vmatpush1.msra.mxu0 0.0
    %2026 = vmatprep.subr.mxu0 0.0
    %2027 = vmatpush1.msra.mxu0 0.0
    %2028 = vmatprep.subr.mxu0 0.0
    %2029 = vmatpush1.msra.mxu0 0.0
    %2030 = vmatprep.subr.mxu0 0.0
    %2031 = vmatpush1.msra.mxu0 0.0
    %2032 = vmatprep.subr.mxu0 0.0
    %2033 = vmatpush1.msra.mxu0 0.0
    %2034 = vmatprep.subr.mxu0 0.0
    %2035 = vmatpush1.msra.mxu0 0.0
    %2036 = vmatprep.subr.mxu0 0.0
    %2037 = vmatpush1.msra.mxu0 0.0
    %2038 = vmatprep.subr.mxu0 0.0
    %2039 = vmatpush1.msra.mxu0 0.0
    %2040 = vmatprep.subr.mxu0 0.0
    %2041 = vmatpush1.msra.mxu0 0.0
    %2042 = vmatprep.mubr.f32.mxu0 0.0
    %2043 = vmatmul.mubr.f32.gmra.mrb[0].mxu0 %v1976
    %v2044 = vpop.f32.mrb[0].mxu0
    %v2045 = vadd.f32 0.0, %v2044
    %v2046 = vpop.f32.mrb[0].mxu0
    %2047 = vdwg.mxu0
    %v2049 = vrot.slane %v2045, 1
    %v2052 = vadd.f32 %v1970, %v2045
    %v2053 = vadd.f32 %v1971, %v2049
    %v2054 = vxor.u32 %v2052, 2147483648
    %v2055 = vxor.u32 %v2053, 2147483648
    %v2056 = vmul.f32 %v2054, 1.442695
    %v2057 = vpow.pop %v2056
    %v2058 = vmul.f32 %v2055, 1.442695
    %v2059 = vpow.pop %v2058
    %v2060 = vadd.f32 %v2057, 1.0
    %v2061 = vadd.f32 %v2059, 1.0
    %v2062 = vrcp.pop %v2060
    %v2063 = vmul.f32 1.0, %v2062
    %v2064 = vrcp.pop %v2061
    %v2065 = vmul.f32 1.0, %v2064
    %v2066 = vtanh.pop %v2052
    %v2067 = vtanh.pop %v2053
    %v2068 = vmul.f32 %v2063, %v1946
    %v2069 = vmul.f32 %v2065, %v1947
    %2072 = vrot.lane.b32.xlu0 %v2066, 64
    %v2073 = vpop.permute.xlu0 %2072
    %2074 = vrot.lane.b32.xlu0 %v2067, 64
    %v2075 = vpop.permute.xlu0 %2074
    %v2078 = vmul.f32 %v2063, %v2073
    %v2079 = vmul.f32 %v2065, %v2075
    %2082 = vrot.lane.b32.xlu0 %v2078, 32
    %v2083 = vpop.permute.xlu0 %2082
    %2084 = vrot.lane.b32.xlu0 %v2079, 32
    %v2085 = vpop.permute.xlu0 %2084
    %v2088 = vadd.f32 %v2068, %v2083
    %v2089 = vadd.f32 %v2069, %v2085
    %v2090 = vtanh.pop %v2088
    %v2091 = vtanh.pop %v2089
    %2094 = vrot.lane.b32.xlu0 %v2090, 64
    %v2095 = vpop.permute.xlu0 %2094
    %2096 = vrot.lane.b32.xlu0 %v2091, 64
    %v2097 = vpop.permute.xlu0 %2096
    %v2100 = vmul.f32 %v2063, %v2095
    %v2101 = vmul.f32 %v2065, %v2097
    %2104 = vrot.lane.b32.xlu0 %v2100, 32
    %v2105 = vpop.permute.xlu0 %2104
    %2106 = vrot.lane.b32.xlu0 %v2101, 32
    %v2107 = vpop.permute.xlu0 %2106
    %2110 = vst.msk [vmem:[#allocation2 + $0xc] sm:$0x1] %vm404, %v2105
    %2111 = vst.msk [vmem:[#allocation2 + $0x1c] sm:$0x1] %vm404, %v2107
    %v2112 = vld [vmem:[#allocation3 + $0xd] sm:$0x1]
    %v2113 = vld [vmem:[#allocation3 + $0x1d] sm:$0x1]
    %v2114 = vrot.slane %v2101, 7
    %v2115 = vsel %vm410, %v2114, %v2100
    %2116 = vrot.lane.b32.xlu0 %v2115, 32
    %v2117 = vpop.permute.xlu0 %2116
    %v2118 = vsel %vm268, %v2117, 0
    %2120 = vmatprep.subr.mxu0 0.0
    %2121 = vmatpush1.msra.mxu0 %v262
    %2122 = vmatprep.subr.mxu0 0.0
    %2123 = vmatpush1.msra.mxu0 %v263
    %2124 = vmatprep.subr.mxu0 0.0
    %2125 = vmatpush1.msra.mxu0 %v264
    %2126 = vmatprep.subr.mxu0 0.0
    %2127 = vmatpush1.msra.mxu0 %v265
    %2128 = vmatprep.subr.mxu0 0.0
    %2129 = vmatpush1.msra.mxu0 0.0
    %2130 = vmatprep.subr.mxu0 0.0
    %2131 = vmatpush1.msra.mxu0 0.0
    %2132 = vmatprep.subr.mxu0 0.0
    %2133 = vmatpush1.msra.mxu0 0.0
    %2134 = vmatprep.subr.mxu0 0.0
    %2135 = vmatpush1.msra.mxu0 0.0
    %2136 = vmatprep.subr.mxu0 0.0
    %2137 = vmatpush1.msra.mxu0 0.0
    %2138 = vmatprep.subr.mxu0 0.0
    %2139 = vmatpush1.msra.mxu0 0.0
    %2140 = vmatprep.subr.mxu0 0.0
    %2141 = vmatpush1.msra.mxu0 0.0
    %2142 = vmatprep.subr.mxu0 0.0
    %2143 = vmatpush1.msra.mxu0 0.0
    %2144 = vmatprep.subr.mxu0 0.0
    %2145 = vmatpush1.msra.mxu0 0.0
    %2146 = vmatprep.subr.mxu0 0.0
    %2147 = vmatpush1.msra.mxu0 0.0
    %2148 = vmatprep.subr.mxu0 0.0
    %2149 = vmatpush1.msra.mxu0 0.0
    %2150 = vmatprep.subr.mxu0 0.0
    %2151 = vmatpush1.msra.mxu0 0.0
    %2152 = vmatprep.subr.mxu0 0.0
    %2153 = vmatpush1.msra.mxu0 0.0
    %2154 = vmatprep.subr.mxu0 0.0
    %2155 = vmatpush1.msra.mxu0 0.0
    %2156 = vmatprep.subr.mxu0 0.0
    %2157 = vmatpush1.msra.mxu0 0.0
    %2158 = vmatprep.subr.mxu0 0.0
    %2159 = vmatpush1.msra.mxu0 0.0
    %2160 = vmatprep.subr.mxu0 0.0
    %2161 = vmatpush1.msra.mxu0 0.0
    %2162 = vmatprep.subr.mxu0 0.0
    %2163 = vmatpush1.msra.mxu0 0.0
    %2164 = vmatprep.subr.mxu0 0.0
    %2165 = vmatpush1.msra.mxu0 0.0
    %2166 = vmatprep.subr.mxu0 0.0
    %2167 = vmatpush1.msra.mxu0 0.0
    %2168 = vmatprep.subr.mxu0 0.0
    %2169 = vmatpush1.msra.mxu0 0.0
    %2170 = vmatprep.subr.mxu0 0.0
    %2171 = vmatpush1.msra.mxu0 0.0
    %2172 = vmatprep.subr.mxu0 0.0
    %2173 = vmatpush1.msra.mxu0 0.0
    %2174 = vmatprep.subr.mxu0 0.0
    %2175 = vmatpush1.msra.mxu0 0.0
    %2176 = vmatprep.subr.mxu0 0.0
    %2177 = vmatpush1.msra.mxu0 0.0
    %2178 = vmatprep.subr.mxu0 0.0
    %2179 = vmatpush1.msra.mxu0 0.0
    %2180 = vmatprep.subr.mxu0 0.0
    %2181 = vmatpush1.msra.mxu0 0.0
    %2182 = vmatprep.subr.mxu0 0.0
    %2183 = vmatpush1.msra.mxu0 0.0
    %2184 = vmatprep.mubr.f32.mxu0 0.0
    %2185 = vmatmul.mubr.f32.gmra.mrb[0].mxu0 %v2118
    %v2186 = vpop.f32.mrb[0].mxu0
    %v2187 = vadd.f32 0.0, %v2186
    %v2188 = vpop.f32.mrb[0].mxu0
    %2189 = vdwg.mxu0
    %v2191 = vrot.slane %v2187, 1
    %v2194 = vadd.f32 %v2112, %v2187
    %v2195 = vadd.f32 %v2113, %v2191
    %v2196 = vxor.u32 %v2194, 2147483648
    %v2197 = vxor.u32 %v2195, 2147483648
    %v2198 = vmul.f32 %v2196, 1.442695
    %v2199 = vpow.pop %v2198
    %v2200 = vmul.f32 %v2197, 1.442695
    %v2201 = vpow.pop %v2200
    %v2202 = vadd.f32 %v2199, 1.0
    %v2203 = vadd.f32 %v2201, 1.0
    %v2204 = vrcp.pop %v2202
    %v2205 = vmul.f32 1.0, %v2204
    %v2206 = vrcp.pop %v2203
    %v2207 = vmul.f32 1.0, %v2206
    %v2208 = vtanh.pop %v2194
    %v2209 = vtanh.pop %v2195
    %v2210 = vmul.f32 %v2205, %v2088
    %v2211 = vmul.f32 %v2207, %v2089
    %2214 = vrot.lane.b32.xlu0 %v2208, 64
    %v2215 = vpop.permute.xlu0 %2214
    %2216 = vrot.lane.b32.xlu0 %v2209, 64
    %v2217 = vpop.permute.xlu0 %2216
    %v2220 = vmul.f32 %v2205, %v2215
    %v2221 = vmul.f32 %v2207, %v2217
    %2224 = vrot.lane.b32.xlu0 %v2220, 32
    %v2225 = vpop.permute.xlu0 %2224
    %2226 = vrot.lane.b32.xlu0 %v2221, 32
    %v2227 = vpop.permute.xlu0 %2226
    %v2230 = vadd.f32 %v2210, %v2225
    %v2231 = vadd.f32 %v2211, %v2227
    %v2232 = vtanh.pop %v2230
    %v2233 = vtanh.pop %v2231
    %2236 = vrot.lane.b32.xlu0 %v2232, 64
    %v2237 = vpop.permute.xlu0 %2236
    %2238 = vrot.lane.b32.xlu0 %v2233, 64
    %v2239 = vpop.permute.xlu0 %2238
    %v2242 = vmul.f32 %v2205, %v2237
    %v2243 = vmul.f32 %v2207, %v2239
    %2246 = vrot.lane.b32.xlu0 %v2242, 32
    %v2247 = vpop.permute.xlu0 %2246
    %2248 = vrot.lane.b32.xlu0 %v2243, 32
    %v2249 = vpop.permute.xlu0 %2248
    %2252 = vst.msk [vmem:[#allocation2 + $0xd] sm:$0x1] %vm404, %v2247
    %2253 = vst.msk [vmem:[#allocation2 + $0x1d] sm:$0x1] %vm404, %v2249
    %v2254 = vld [vmem:[#allocation3 + $0xe] sm:$0x1]
    %v2255 = vld [vmem:[#allocation3 + $0x1e] sm:$0x1]
    %v2256 = vrot.slane %v2243, 7
    %v2257 = vsel %vm410, %v2256, %v2242
    %2258 = vrot.lane.b32.xlu0 %v2257, 32
    %v2259 = vpop.permute.xlu0 %2258
    %v2260 = vsel %vm268, %v2259, 0
    %2262 = vmatprep.subr.mxu0 0.0
    %2263 = vmatpush1.msra.mxu0 %v262
    %2264 = vmatprep.subr.mxu0 0.0
    %2265 = vmatpush1.msra.mxu0 %v263
    %2266 = vmatprep.subr.mxu0 0.0
    %2267 = vmatpush1.msra.mxu0 %v264
    %2268 = vmatprep.subr.mxu0 0.0
    %2269 = vmatpush1.msra.mxu0 %v265
    %2270 = vmatprep.subr.mxu0 0.0
    %2271 = vmatpush1.msra.mxu0 0.0
    %2272 = vmatprep.subr.mxu0 0.0
    %2273 = vmatpush1.msra.mxu0 0.0
    %2274 = vmatprep.subr.mxu0 0.0
    %2275 = vmatpush1.msra.mxu0 0.0
    %2276 = vmatprep.subr.mxu0 0.0
    %2277 = vmatpush1.msra.mxu0 0.0
    %2278 = vmatprep.subr.mxu0 0.0
    %2279 = vmatpush1.msra.mxu0 0.0
    %2280 = vmatprep.subr.mxu0 0.0
    %2281 = vmatpush1.msra.mxu0 0.0
    %2282 = vmatprep.subr.mxu0 0.0
    %2283 = vmatpush1.msra.mxu0 0.0
    %2284 = vmatprep.subr.mxu0 0.0
    %2285 = vmatpush1.msra.mxu0 0.0
    %2286 = vmatprep.subr.mxu0 0.0
    %2287 = vmatpush1.msra.mxu0 0.0
    %2288 = vmatprep.subr.mxu0 0.0
    %2289 = vmatpush1.msra.mxu0 0.0
    %2290 = vmatprep.subr.mxu0 0.0
    %2291 = vmatpush1.msra.mxu0 0.0
    %2292 = vmatprep.subr.mxu0 0.0
    %2293 = vmatpush1.msra.mxu0 0.0
    %2294 = vmatprep.subr.mxu0 0.0
    %2295 = vmatpush1.msra.mxu0 0.0
    %2296 = vmatprep.subr.mxu0 0.0
    %2297 = vmatpush1.msra.mxu0 0.0
    %2298 = vmatprep.subr.mxu0 0.0
    %2299 = vmatpush1.msra.mxu0 0.0
    %2300 = vmatprep.subr.mxu0 0.0
    %2301 = vmatpush1.msra.mxu0 0.0
    %2302 = vmatprep.subr.mxu0 0.0
    %2303 = vmatpush1.msra.mxu0 0.0
    %2304 = vmatprep.subr.mxu0 0.0
    %2305 = vmatpush1.msra.mxu0 0.0
    %2306 = vmatprep.subr.mxu0 0.0
    %2307 = vmatpush1.msra.mxu0 0.0
    %2308 = vmatprep.subr.mxu0 0.0
    %2309 = vmatpush1.msra.mxu0 0.0
    %2310 = vmatprep.subr.mxu0 0.0
    %2311 = vmatpush1.msra.mxu0 0.0
    %2312 = vmatprep.subr.mxu0 0.0
    %2313 = vmatpush1.msra.mxu0 0.0
    %2314 = vmatprep.subr.mxu0 0.0
    %2315 = vmatpush1.msra.mxu0 0.0
    %2316 = vmatprep.subr.mxu0 0.0
    %2317 = vmatpush1.msra.mxu0 0.0
    %2318 = vmatprep.subr.mxu0 0.0
    %2319 = vmatpush1.msra.mxu0 0.0
    %2320 = vmatprep.subr.mxu0 0.0
    %2321 = vmatpush1.msra.mxu0 0.0
    %2322 = vmatprep.subr.mxu0 0.0
    %2323 = vmatpush1.msra.mxu0 0.0
    %2324 = vmatprep.subr.mxu0 0.0
    %2325 = vmatpush1.msra.mxu0 0.0
    %2326 = vmatprep.mubr.f32.mxu0 0.0
    %2327 = vmatmul.mubr.f32.gmra.mrb[0].mxu0 %v2260
    %v2328 = vpop.f32.mrb[0].mxu0
    %v2329 = vadd.f32 0.0, %v2328
    %v2330 = vpop.f32.mrb[0].mxu0
    %2331 = vdwg.mxu0
    %v2333 = vrot.slane %v2329, 1
    %v2336 = vadd.f32 %v2254, %v2329
    %v2337 = vadd.f32 %v2255, %v2333
    %v2338 = vxor.u32 %v2336, 2147483648
    %v2339 = vxor.u32 %v2337, 2147483648
    %v2340 = vmul.f32 %v2338, 1.442695
    %v2341 = vpow.pop %v2340
    %v2342 = vmul.f32 %v2339, 1.442695
    %v2343 = vpow.pop %v2342
    %v2344 = vadd.f32 %v2341, 1.0
    %v2345 = vadd.f32 %v2343, 1.0
    %v2346 = vrcp.pop %v2344
    %v2347 = vmul.f32 1.0, %v2346
    %v2348 = vrcp.pop %v2345
    %v2349 = vmul.f32 1.0, %v2348
    %v2350 = vtanh.pop %v2336
    %v2351 = vtanh.pop %v2337
    %v2352 = vmul.f32 %v2347, %v2230
    %v2353 = vmul.f32 %v2349, %v2231
    %2356 = vrot.lane.b32.xlu0 %v2350, 64
    %v2357 = vpop.permute.xlu0 %2356
    %2358 = vrot.lane.b32.xlu0 %v2351, 64
    %v2359 = vpop.permute.xlu0 %2358
    %v2362 = vmul.f32 %v2347, %v2357
    %v2363 = vmul.f32 %v2349, %v2359
    %2366 = vrot.lane.b32.xlu0 %v2362, 32
    %v2367 = vpop.permute.xlu0 %2366
    %2368 = vrot.lane.b32.xlu0 %v2363, 32
    %v2369 = vpop.permute.xlu0 %2368
    %v2372 = vadd.f32 %v2352, %v2367
    %v2373 = vadd.f32 %v2353, %v2369
    %v2374 = vtanh.pop %v2372
    %v2375 = vtanh.pop %v2373
    %2378 = vrot.lane.b32.xlu0 %v2374, 64
    %v2379 = vpop.permute.xlu0 %2378
    %2380 = vrot.lane.b32.xlu0 %v2375, 64
    %v2381 = vpop.permute.xlu0 %2380
    %v2384 = vmul.f32 %v2347, %v2379
    %v2385 = vmul.f32 %v2349, %v2381
    %2388 = vrot.lane.b32.xlu0 %v2384, 32
    %v2389 = vpop.permute.xlu0 %2388
    %2390 = vrot.lane.b32.xlu0 %v2385, 32
    %v2391 = vpop.permute.xlu0 %2390
    %2394 = vst.msk [vmem:[#allocation2 + $0xe] sm:$0x1] %vm404, %v2389
    %2395 = vst.msk [vmem:[#allocation2 + $0x1e] sm:$0x1] %vm404, %v2391
    %v2396 = vld [vmem:[#allocation3 + $0xf] sm:$0x1]
    %v2397 = vld [vmem:[#allocation3 + $0x1f] sm:$0x1]
    %v2398 = vrot.slane %v2385, 7
    %v2399 = vsel %vm410, %v2398, %v2384
    %2400 = vrot.lane.b32.xlu0 %v2399, 32
    %v2401 = vpop.permute.xlu0 %2400
    %v2402 = vsel %vm268, %v2401, 0
    %2404 = vmatprep.subr.mxu0 0.0
    %2405 = vmatpush1.msra.mxu0 %v262
    %2406 = vmatprep.subr.mxu0 0.0
    %2407 = vmatpush1.msra.mxu0 %v263
    %2408 = vmatprep.subr.mxu0 0.0
    %2409 = vmatpush1.msra.mxu0 %v264
    %2410 = vmatprep.subr.mxu0 0.0
    %2411 = vmatpush1.msra.mxu0 %v265
    %2412 = vmatprep.subr.mxu0 0.0
    %2413 = vmatpush1.msra.mxu0 0.0
    %2414 = vmatprep.subr.mxu0 0.0
    %2415 = vmatpush1.msra.mxu0 0.0
    %2416 = vmatprep.subr.mxu0 0.0
    %2417 = vmatpush1.msra.mxu0 0.0
    %2418 = vmatprep.subr.mxu0 0.0
    %2419 = vmatpush1.msra.mxu0 0.0
    %2420 = vmatprep.subr.mxu0 0.0
    %2421 = vmatpush1.msra.mxu0 0.0
    %2422 = vmatprep.subr.mxu0 0.0
    %2423 = vmatpush1.msra.mxu0 0.0
    %2424 = vmatprep.subr.mxu0 0.0
    %2425 = vmatpush1.msra.mxu0 0.0
    %2426 = vmatprep.subr.mxu0 0.0
    %2427 = vmatpush1.msra.mxu0 0.0
    %2428 = vmatprep.subr.mxu0 0.0
    %2429 = vmatpush1.msra.mxu0 0.0
    %2430 = vmatprep.subr.mxu0 0.0
    %2431 = vmatpush1.msra.mxu0 0.0
    %2432 = vmatprep.subr.mxu0 0.0
    %2433 = vmatpush1.msra.mxu0 0.0
    %2434 = vmatprep.subr.mxu0 0.0
    %2435 = vmatpush1.msra.mxu0 0.0
    %2436 = vmatprep.subr.mxu0 0.0
    %2437 = vmatpush1.msra.mxu0 0.0
    %2438 = vmatprep.subr.mxu0 0.0
    %2439 = vmatpush1.msra.mxu0 0.0
    %2440 = vmatprep.subr.mxu0 0.0
    %2441 = vmatpush1.msra.mxu0 0.0
    %2442 = vmatprep.subr.mxu0 0.0
    %2443 = vmatpush1.msra.mxu0 0.0
    %2444 = vmatprep.subr.mxu0 0.0
    %2445 = vmatpush1.msra.mxu0 0.0
    %2446 = vmatprep.subr.mxu0 0.0
    %2447 = vmatpush1.msra.mxu0 0.0
    %2448 = vmatprep.subr.mxu0 0.0
    %2449 = vmatpush1.msra.mxu0 0.0
    %2450 = vmatprep.subr.mxu0 0.0
    %2451 = vmatpush1.msra.mxu0 0.0
    %2452 = vmatprep.subr.mxu0 0.0
    %2453 = vmatpush1.msra.mxu0 0.0
    %2454 = vmatprep.subr.mxu0 0.0
    %2455 = vmatpush1.msra.mxu0 0.0
    %2456 = vmatprep.subr.mxu0 0.0
    %2457 = vmatpush1.msra.mxu0 0.0
    %2458 = vmatprep.subr.mxu0 0.0
    %2459 = vmatpush1.msra.mxu0 0.0
    %2460 = vmatprep.subr.mxu0 0.0
    %2461 = vmatpush1.msra.mxu0 0.0
    %2462 = vmatprep.subr.mxu0 0.0
    %2463 = vmatpush1.msra.mxu0 0.0
    %2464 = vmatprep.subr.mxu0 0.0
    %2465 = vmatpush1.msra.mxu0 0.0
    %2466 = vmatprep.subr.mxu0 0.0
    %2467 = vmatpush1.msra.mxu0 0.0
    %2468 = vmatprep.mubr.f32.mxu0 0.0
    %2469 = vmatmul.mubr.f32.gmra.mrb[0].mxu0 %v2402
    %v2470 = vpop.f32.mrb[0].mxu0
    %v2471 = vadd.f32 0.0, %v2470
    %v2472 = vpop.f32.mrb[0].mxu0
    %2473 = vdwg.mxu0
    %v2475 = vrot.slane %v2471, 1
    %v2478 = vadd.f32 %v2396, %v2471
    %v2479 = vadd.f32 %v2397, %v2475
    %v2480 = vxor.u32 %v2478, 2147483648
    %v2481 = vxor.u32 %v2479, 2147483648
    %v2482 = vmul.f32 %v2480, 1.442695
    %v2483 = vpow.pop %v2482
    %v2484 = vmul.f32 %v2481, 1.442695
    %v2485 = vpow.pop %v2484
    %v2486 = vadd.f32 %v2483, 1.0
    %v2487 = vadd.f32 %v2485, 1.0
    %v2488 = vrcp.pop %v2486
    %v2489 = vmul.f32 1.0, %v2488
    %v2490 = vrcp.pop %v2487
    %v2491 = vmul.f32 1.0, %v2490
    %v2492 = vtanh.pop %v2478
    %v2493 = vtanh.pop %v2479
    %v2494 = vmul.f32 %v2489, %v2372
    %v2495 = vmul.f32 %v2491, %v2373
    %2498 = vrot.lane.b32.xlu0 %v2492, 64
    %v2499 = vpop.permute.xlu0 %2498
    %2500 = vrot.lane.b32.xlu0 %v2493, 64
    %v2501 = vpop.permute.xlu0 %2500
    %v2504 = vmul.f32 %v2489, %v2499
    %v2505 = vmul.f32 %v2491, %v2501
    %2508 = vrot.lane.b32.xlu0 %v2504, 32
    %v2509 = vpop.permute.xlu0 %2508
    %2510 = vrot.lane.b32.xlu0 %v2505, 32
    %v2511 = vpop.permute.xlu0 %2510
    %v2514 = vadd.f32 %v2494, %v2509
    %v2515 = vadd.f32 %v2495, %v2511
    %v2516 = vtanh.pop %v2514
    %v2517 = vtanh.pop %v2515
    %2520 = vrot.lane.b32.xlu0 %v2516, 64
    %v2521 = vpop.permute.xlu0 %2520
    %2522 = vrot.lane.b32.xlu0 %v2517, 64
    %v2523 = vpop.permute.xlu0 %2522
    %v2526 = vmul.f32 %v2489, %v2521
    %v2527 = vmul.f32 %v2491, %v2523
    %2530 = vrot.lane.b32.xlu0 %v2526, 32
    %v2531 = vpop.permute.xlu0 %2530
    %2532 = vrot.lane.b32.xlu0 %v2527, 32
    %v2533 = vpop.permute.xlu0 %2532
    %2536 = vst.msk [vmem:[#allocation2 + $0xf] sm:$0x1] %vm404, %v2531
    %2537 = vst.msk [vmem:[#allocation2 + $0x1f] sm:$0x1] %vm404, %v2533
    %v2538 = vld [vmem:[%s1] sm:$0xff]
    %v2539 = vld [vmem:[%s1 + $0x8] sm:$0xff]
    %v2540 = vld [vmem:[#allocation14] sm:$0xff]
    %v2541 = vld [vmem:[#allocation14 + $0x8] sm:$0xff]
    %v2542 = vld [vmem:[#allocation14 + $0x10] sm:$0xff]
    %v2543 = vld [vmem:[#allocation14 + $0x18] sm:$0xff]
    %v2544 = vld [vmem:[#allocation16] sm:$0x3]
    %v2546 = vlaneseq
    %v2547 = vshrl.u32 %v2546, 7
    %v2548 = vsub.s32 0, %v2547
    %v2549 = vrot.slane %v2544, %v2548
    %v2550 = vlaneseq
    %v2551 = vshrl.u32 %v2550, 7
    %v2552 = vsub.s32 1, %v2551
    %v2553 = vrot.slane %v2544, %v2552
    %vm2556 = vcmask 130048
    %v2558 = vsel %vm2556, %v2538, 0
    %v2561 = vsel %vm2556, %v2539, 0
    %2563 = vmatprep.subr.mxu0 %v2541
    %2564 = vmatpush1.msra.mxu0 %v2540
    %2565 = vmatprep.subr.mxu0 %v2543
    %2566 = vmatpush1.msra.mxu0 %v2542
    %2567 = vmatprep.subr.mxu0 0.0
    %2568 = vmatpush1.msra.mxu0 0.0
    %2569 = vmatprep.subr.mxu0 0.0
    %2570 = vmatpush1.msra.mxu0 0.0
    %2571 = vmatprep.subr.mxu0 0.0
    %2572 = vmatpush1.msra.mxu0 0.0
    %2573 = vmatprep.subr.mxu0 0.0
    %2574 = vmatpush1.msra.mxu0 0.0
    %2575 = vmatprep.subr.mxu0 0.0
    %2576 = vmatpush1.msra.mxu0 0.0
    %2577 = vmatprep.subr.mxu0 0.0
    %2578 = vmatpush1.msra.mxu0 0.0
    %2579 = vmatprep.subr.mxu0 0.0
    %2580 = vmatpush1.msra.mxu0 0.0
    %2581 = vmatprep.subr.mxu0 0.0
    %2582 = vmatpush1.msra.mxu0 0.0
    %2583 = vmatprep.subr.mxu0 0.0
    %2584 = vmatpush1.msra.mxu0 0.0
    %2585 = vmatprep.subr.mxu0 0.0
    %2586 = vmatpush1.msra.mxu0 0.0
    %2587 = vmatprep.subr.mxu0 0.0
    %2588 = vmatpush1.msra.mxu0 0.0
    %2589 = vmatprep.subr.mxu0 0.0
    %2590 = vmatpush1.msra.mxu0 0.0
    %2591 = vmatprep.subr.mxu0 0.0
    %2592 = vmatpush1.msra.mxu0 0.0
    %2593 = vmatprep.subr.mxu0 0.0
    %2594 = vmatpush1.msra.mxu0 0.0
    %2595 = vmatprep.subr.mxu0 0.0
    %2596 = vmatpush1.msra.mxu0 0.0
    %2597 = vmatprep.subr.mxu0 0.0
    %2598 = vmatpush1.msra.mxu0 0.0
    %2599 = vmatprep.subr.mxu0 0.0
    %2600 = vmatpush1.msra.mxu0 0.0
    %2601 = vmatprep.subr.mxu0 0.0
    %2602 = vmatpush1.msra.mxu0 0.0
    %2603 = vmatprep.subr.mxu0 0.0
    %2604 = vmatpush1.msra.mxu0 0.0
    %2605 = vmatprep.subr.mxu0 0.0
    %2606 = vmatpush1.msra.mxu0 0.0
    %2607 = vmatprep.subr.mxu0 0.0
    %2608 = vmatpush1.msra.mxu0 0.0
    %2609 = vmatprep.subr.mxu0 0.0
    %2610 = vmatpush1.msra.mxu0 0.0
    %2611 = vmatprep.subr.mxu0 0.0
    %2612 = vmatpush1.msra.mxu0 0.0
    %2613 = vmatprep.subr.mxu0 0.0
    %2614 = vmatpush1.msra.mxu0 0.0
    %2615 = vmatprep.subr.mxu0 0.0
    %2616 = vmatpush1.msra.mxu0 0.0
    %2617 = vmatprep.subr.mxu0 0.0
    %2618 = vmatpush1.msra.mxu0 0.0
    %2619 = vmatprep.subr.mxu0 0.0
    %2620 = vmatpush1.msra.mxu0 0.0
    %2621 = vmatprep.subr.mxu0 0.0
    %2622 = vmatpush1.msra.mxu0 0.0
    %2623 = vmatprep.subr.mxu0 0.0
    %2624 = vmatpush1.msra.mxu0 0.0
    %2625 = vmatprep.subr.mxu0 0.0
    %2626 = vmatpush1.msra.mxu0 0.0
    %2627 = vmatprep.mubr.f32.mxu0 0.0
    %2628 = vmatmul.mubr.f32.gmra.mrb[0].mxu0 %v2558
    %v2629 = vpop.f32.mrb[0].mxu0
    %v2630 = vadd.f32 %v2549, %v2629
    %v2631 = vpop.f32.mrb[0].mxu0
    %v2632 = vadd.f32 %v2553, %v2631
    %2633 = vmatprep.mubr.f32.mxu0 0.0
    %2634 = vmatmul.mubr.f32.gmra.mrb[0].mxu0 %v2561
    %v2635 = vpop.f32.mrb[0].mxu0
    %v2636 = vadd.f32 %v2549, %v2635
    %v2637 = vpop.f32.mrb[0].mxu0
    %v2638 = vadd.f32 %v2553, %v2637
    %2639 = vdwg.mxu0
    %2640 = vst [vmem:[#allocation4] sm:$0xff] %v2630
    %2641 = vst [vmem:[#allocation4 + $0x8] sm:$0xff] %v2632
    %2642 = vst [vmem:[#allocation4 + $0x10] sm:$0xff] %v2636
    %2643 = vst [vmem:[#allocation4 + $0x18] sm:$0xff] %v2638
    %v2644 = vld [vmem:[#allocation2] sm:$0xff]
    %v2645 = vld [vmem:[#allocation2 + $0x8] sm:$0xff]
    %v2646 = vld [vmem:[#allocation2 + $0x10] sm:$0xff]
    %v2647 = vld [vmem:[#allocation2 + $0x18] sm:$0xff]
    %v2648 = vld [vmem:[#allocation10] sm:$0xff]
    %v2649 = vld [vmem:[#allocation10 + $0x8] sm:$0xff]
    %v2650 = vld [vmem:[#allocation10 + $0x10] sm:$0xff]
    %v2651 = vld [vmem:[#allocation10 + $0x18] sm:$0xff]
    %v2653 = vsel %vm268, %v2644, 0
    %v2656 = vsel %vm268, %v2645, 0
    %v2659 = vsel %vm268, %v2646, 0
    %v2662 = vsel %vm268, %v2647, 0
    %2664 = vmatprep.subr.mxu0 0.0
    %2665 = vmatpush1.msra.mxu0 %v2648
    %2666 = vmatprep.subr.mxu0 0.0
    %2667 = vmatpush1.msra.mxu0 %v2649
    %2668 = vmatprep.subr.mxu0 0.0
    %2669 = vmatpush1.msra.mxu0 %v2650
    %2670 = vmatprep.subr.mxu0 0.0
    %2671 = vmatpush1.msra.mxu0 %v2651
    %2672 = vmatprep.subr.mxu0 0.0
    %2673 = vmatpush1.msra.mxu0 0.0
    %2674 = vmatprep.subr.mxu0 0.0
    %2675 = vmatpush1.msra.mxu0 0.0
    %2676 = vmatprep.subr.mxu0 0.0
    %2677 = vmatpush1.msra.mxu0 0.0
    %2678 = vmatprep.subr.mxu0 0.0
    %2679 = vmatpush1.msra.mxu0 0.0
    %2680 = vmatprep.subr.mxu0 0.0
    %2681 = vmatpush1.msra.mxu0 0.0
    %2682 = vmatprep.subr.mxu0 0.0
    %2683 = vmatpush1.msra.mxu0 0.0
    %2684 = vmatprep.subr.mxu0 0.0
    %2685 = vmatpush1.msra.mxu0 0.0
    %2686 = vmatprep.subr.mxu0 0.0
    %2687 = vmatpush1.msra.mxu0 0.0
    %2688 = vmatprep.subr.mxu0 0.0
    %2689 = vmatpush1.msra.mxu0 0.0
    %2690 = vmatprep.subr.mxu0 0.0
    %2691 = vmatpush1.msra.mxu0 0.0
    %2692 = vmatprep.subr.mxu0 0.0
    %2693 = vmatpush1.msra.mxu0 0.0
    %2694 = vmatprep.subr.mxu0 0.0
    %2695 = vmatpush1.msra.mxu0 0.0
    %2696 = vmatprep.subr.mxu0 0.0
    %2697 = vmatpush1.msra.mxu0 0.0
    %2698 = vmatprep.subr.mxu0 0.0
    %2699 = vmatpush1.msra.mxu0 0.0
    %2700 = vmatprep.subr.mxu0 0.0
    %2701 = vmatpush1.msra.mxu0 0.0
    %2702 = vmatprep.subr.mxu0 0.0
    %2703 = vmatpush1.msra.mxu0 0.0
    %2704 = vmatprep.subr.mxu0 0.0
    %2705 = vmatpush1.msra.mxu0 0.0
    %2706 = vmatprep.subr.mxu0 0.0
    %2707 = vmatpush1.msra.mxu0 0.0
    %2708 = vmatprep.subr.mxu0 0.0
    %2709 = vmatpush1.msra.mxu0 0.0
    %2710 = vmatprep.subr.mxu0 0.0
    %2711 = vmatpush1.msra.mxu0 0.0
    %2712 = vmatprep.subr.mxu0 0.0
    %2713 = vmatpush1.msra.mxu0 0.0
    %2714 = vmatprep.subr.mxu0 0.0
    %2715 = vmatpush1.msra.mxu0 0.0
    %2716 = vmatprep.subr.mxu0 0.0
    %2717 = vmatpush1.msra.mxu0 0.0
    %2718 = vmatprep.subr.mxu0 0.0
    %2719 = vmatpush1.msra.mxu0 0.0
    %2720 = vmatprep.subr.mxu0 0.0
    %2721 = vmatpush1.msra.mxu0 0.0
    %2722 = vmatprep.subr.mxu0 0.0
    %2723 = vmatpush1.msra.mxu0 0.0
    %2724 = vmatprep.subr.mxu0 0.0
    %2725 = vmatpush1.msra.mxu0 0.0
    %2726 = vmatprep.subr.mxu0 0.0
    %2727 = vmatpush1.msra.mxu0 0.0
    %2728 = vmatprep.mubr.f32.mxu0 0.0
    %2729 = vmatmul.mubr.f32.gmra.mrb[0].mxu0 %v2653
    %v2730 = vpop.f32.mrb[0].mxu0
    %v2731 = vadd.f32 0.0, %v2730
    %v2732 = vpop.f32.mrb[0].mxu0
    %2733 = vmatprep.mubr.f32.mxu0 0.0
    %2734 = vmatmul.mubr.f32.gmra.mrb[0].mxu0 %v2656
    %v2735 = vpop.f32.mrb[0].mxu0
    %v2736 = vadd.f32 0.0, %v2735
    %v2737 = vpop.f32.mrb[0].mxu0
    %2738 = vmatprep.mubr.f32.mxu0 0.0
    %2739 = vmatmul.mubr.f32.gmra.mrb[0].mxu0 %v2659
    %v2740 = vpop.f32.mrb[0].mxu0
    %v2741 = vadd.f32 0.0, %v2740
    %v2742 = vpop.f32.mrb[0].mxu0
    %2743 = vmatprep.mubr.f32.mxu0 0.0
    %2744 = vmatmul.mubr.f32.gmra.mrb[0].mxu0 %v2662
    %v2745 = vpop.f32.mrb[0].mxu0
    %v2746 = vadd.f32 0.0, %v2745
    %v2747 = vpop.f32.mrb[0].mxu0
    %2748 = vdwg.mxu0
    %v2749 = vld [vmem:[#allocation11] sm:$0x1]
    %v2751 = vlaneseq
    %v2752 = vshrl.u32 %v2751, 7
    %v2753 = vsub.s32 0, %v2752
    %v2754 = vrot.slane %v2749, %v2753
    %v2756 = vadd.f32 %v2731, %v2754
    %v2757 = vadd.f32 %v2736, %v2754
    %v2758 = vadd.f32 %v2741, %v2754
    %v2759 = vadd.f32 %v2746, %v2754
    %v2760 = vld [vmem:[#allocation13] sm:$0x1]
    %v2761 = vld [vmem:[#allocation8] sm:$0xff]
    %v2762 = vld [vmem:[#allocation8 + $0x8] sm:$0xff]
    %v2763 = vld [vmem:[#allocation8 + $0x10] sm:$0xff]
    %v2764 = vld [vmem:[#allocation8 + $0x18] sm:$0xff]
    %v2765 = vld [vmem:[%s11] sm:$0xff]
    %v2766 = vld [vmem:[%s11 + $0x8] sm:$0xff]
    %v2767 = vld [vmem:[%s11 + $0x10] sm:$0xff]
    %v2768 = vld [vmem:[%s11 + $0x18] sm:$0xff]
    %v2769 = vld [vmem:[%s11 + $0x20] sm:$0xff]
    %v2770 = vld [vmem:[%s11 + $0x28] sm:$0xff]
    %v2771 = vld [vmem:[%s11 + $0x30] sm:$0xff]
    %v2772 = vld [vmem:[%s11 + $0x38] sm:$0xff]
    %v2773 = vld [vmem:[#allocation17] sm:$0xff]
    %v2774 = vld [vmem:[#allocation17 + $0x8] sm:$0xff]
    %v2775 = vld [vmem:[#allocation17 + $0x10] sm:$0xff]
    %v2776 = vld [vmem:[#allocation17 + $0x18] sm:$0xff]
    %v2777 = vld [vmem:[#allocation17 + $0x20] sm:$0xff]
    %v2778 = vld [vmem:[#allocation17 + $0x28] sm:$0xff]
    %v2779 = vld [vmem:[#allocation17 + $0x30] sm:$0xff]
    %v2780 = vld [vmem:[#allocation17 + $0x38] sm:$0xff]
    %v2781 = vrot.slane %v2527, 7
    %v2782 = vsel %vm410, %v2781, %v2526
    %2783 = vrot.lane.b32.xlu0 %v2782, 32
    %v2784 = vpop.permute.xlu0 %2783
    %v2785 = vsel %vm268, %v2784, 0
    %2787 = vmatprep.subr.mxu0 0.0
    %2788 = vmatpush1.msra.mxu0 %v2761
    %2789 = vmatprep.subr.mxu0 0.0
    %2790 = vmatpush1.msra.mxu0 %v2762
    %2791 = vmatprep.subr.mxu0 0.0
    %2792 = vmatpush1.msra.mxu0 %v2763
    %2793 = vmatprep.subr.mxu0 0.0
    %2794 = vmatpush1.msra.mxu0 %v2764
    %2795 = vmatprep.subr.mxu0 0.0
    %2796 = vmatpush1.msra.mxu0 0.0
    %2797 = vmatprep.subr.mxu0 0.0
    %2798 = vmatpush1.msra.mxu0 0.0
    %2799 = vmatprep.subr.mxu0 0.0
    %2800 = vmatpush1.msra.mxu0 0.0
    %2801 = vmatprep.subr.mxu0 0.0
    %2802 = vmatpush1.msra.mxu0 0.0
    %2803 = vmatprep.subr.mxu0 0.0
    %2804 = vmatpush1.msra.mxu0 0.0
    %2805 = vmatprep.subr.mxu0 0.0
    %2806 = vmatpush1.msra.mxu0 0.0
    %2807 = vmatprep.subr.mxu0 0.0
    %2808 = vmatpush1.msra.mxu0 0.0
    %2809 = vmatprep.subr.mxu0 0.0
    %2810 = vmatpush1.msra.mxu0 0.0
    %2811 = vmatprep.subr.mxu0 0.0
    %2812 = vmatpush1.msra.mxu0 0.0
    %2813 = vmatprep.subr.mxu0 0.0
    %2814 = vmatpush1.msra.mxu0 0.0
    %2815 = vmatprep.subr.mxu0 0.0
    %2816 = vmatpush1.msra.mxu0 0.0
    %2817 = vmatprep.subr.mxu0 0.0
    %2818 = vmatpush1.msra.mxu0 0.0
    %2819 = vmatprep.subr.mxu0 0.0
    %2820 = vmatpush1.msra.mxu0 0.0
    %2821 = vmatprep.subr.mxu0 0.0
    %2822 = vmatpush1.msra.mxu0 0.0
    %2823 = vmatprep.subr.mxu0 0.0
    %2824 = vmatpush1.msra.mxu0 0.0
    %2825 = vmatprep.subr.mxu0 0.0
    %2826 = vmatpush1.msra.mxu0 0.0
    %2827 = vmatprep.subr.mxu0 0.0
    %2828 = vmatpush1.msra.mxu0 0.0
    %2829 = vmatprep.subr.mxu0 0.0
    %2830 = vmatpush1.msra.mxu0 0.0
    %2831 = vmatprep.subr.mxu0 0.0
    %2832 = vmatpush1.msra.mxu0 0.0
    %2833 = vmatprep.subr.mxu0 0.0
    %2834 = vmatpush1.msra.mxu0 0.0
    %2835 = vmatprep.subr.mxu0 0.0
    %2836 = vmatpush1.msra.mxu0 0.0
    %2837 = vmatprep.subr.mxu0 0.0
    %2838 = vmatpush1.msra.mxu0 0.0
    %2839 = vmatprep.subr.mxu0 0.0
    %2840 = vmatpush1.msra.mxu0 0.0
    %2841 = vmatprep.subr.mxu0 0.0
    %2842 = vmatpush1.msra.mxu0 0.0
    %2843 = vmatprep.subr.mxu0 0.0
    %2844 = vmatpush1.msra.mxu0 0.0
    %2845 = vmatprep.subr.mxu0 0.0
    %2846 = vmatpush1.msra.mxu0 0.0
    %2847 = vmatprep.subr.mxu0 0.0
    %2848 = vmatpush1.msra.mxu0 0.0
    %2849 = vmatprep.subr.mxu0 0.0
    %2850 = vmatpush1.msra.mxu0 0.0
    %2851 = vmatprep.mubr.f32.mxu0 0.0
    %2852 = vmatmul.mubr.f32.gmra.mrb[0].mxu0 %v2785
    %v2853 = vpop.f32.mrb[0].mxu0
    %v2854 = vadd.f32 0.0, %v2853
    %v2855 = vpop.f32.mrb[0].mxu0
    %2856 = vdwg.mxu0
    %v2859 = vunpack.c.l.s4 1966171168
    %v2860 = vunpack.c.0.s8 %v2859
    %v2861 = vlaneseq
    %v2862 = vshrl.u32 %v2861, 7
    %v2863 = vsub.s32 %v2860, %v2862
    %v2864 = vrot.slane %v2854, %v2863
    %v2865 = vcombine.high %v2864, %v2864
    %v2867 = vunpack.c.l.s4 1966171168
    %v2868 = vunpack.c.0.s8 %v2867
    %v2869 = vlaneseq
    %v2870 = vshrl.u32 %v2869, 7
    %v2871 = vsub.s32 %v2868, %v2870
    %v2872 = vrot.slane %v2864, %v2871
    %v2874 = vunpack.c.l.s4 1966171168
    %v2875 = vunpack.c.0.s8 %v2874
    %v2876 = vlaneseq
    %v2877 = vshrl.u32 %v2876, 7
    %v2878 = vsub.s32 %v2875, %v2877
    %v2879 = vrot.slane %v2865, %v2878
    %v2880 = vlaneseq
    %v2881 = vshrl.u32 %v2880, 7
    %v2882 = vsub.s32 0, %v2881
    %v2883 = vrot.slane %v2872, %v2882
    %v2884 = vlaneseq
    %v2885 = vshrl.u32 %v2884, 7
    %v2886 = vsub.s32 0, %v2885
    %v2887 = vrot.slane %v2879, %v2886
    %v2890 = vadd.f32 %v2883, %v2756
    %v2891 = vadd.f32 %v2883, %v2757
    %v2892 = vadd.f32 %v2887, %v2758
    %v2893 = vadd.f32 %v2887, %v2759
    %v2894 = vtanh.pop %v2890
    %v2895 = vtanh.pop %v2891
    %v2896 = vtanh.pop %v2892
    %v2897 = vtanh.pop %v2893
    %v2899 = vlaneseq
    %v2900 = vshrl.u32 %v2899, 7
    %v2901 = vsub.s32 0, %v2900
    %v2902 = vrot.slane %v2760, %v2901
    %v2904 = vmul.f32 %v2894, %v2902
    %v2905 = vmul.f32 %v2895, %v2902
    %v2906 = vmul.f32 %v2896, %v2902
    %v2907 = vmul.f32 %v2897, %v2902
    %v2908 = vsel %vm268, %v2904, 0.0
    %2909 = vadd.xlane.f32.xlu0 %v2908
    %v2910 = vpop.xlane.xlu0 %2909
    %v2911 = vsel %vm268, %v2905, 0.0
    %2912 = vadd.xlane.f32.xlu0 %v2911
    %v2913 = vpop.xlane.xlu0 %2912
    %v2914 = vsel %vm268, %v2906, 0.0
    %2915 = vadd.xlane.f32.xlu0 %v2914
    %v2916 = vpop.xlane.xlu0 %2915
    %v2917 = vsel %vm268, %v2907, 0.0
    %2918 = vadd.xlane.f32.xlu0 %v2917
    %v2919 = vpop.xlane.xlu0 %2918
    %v2924 = vlaneseq
    %v2925 = vand.u32 %v2924, 127
    %v2926 = vlaneseq
    %v2927 = vshrl.u32 %v2926, 7
    %v2928 = vsub.s32 %v2925, %v2927
    %v2929 = vrot.slane %v2910, %v2928
    %v2930 = vadd.s32 %v2925, 4294967288
    %v2931 = vlaneseq
    %v2932 = vshrl.u32 %v2931, 7
    %v2933 = vsub.s32 %v2930, %v2932
    %v2934 = vrot.slane %v2913, %v2933
    %vm2935 = vcmask 130112
    %v2936 = vsel %vm2935, %v2934, %v2929
    %v2937 = vlaneseq
    %v2938 = vshrl.u32 %v2937, 7
    %v2939 = vsub.s32 %v2925, %v2938
    %v2940 = vrot.slane %v2916, %v2939
    %v2941 = vlaneseq
    %v2942 = vshrl.u32 %v2941, 7
    %v2943 = vsub.s32 %v2930, %v2942
    %v2944 = vrot.slane %v2919, %v2943
    %v2945 = vsel %vm2935, %v2944, %v2940
    %v2946 = vsel %vm410, %v2945, %v2936
    %vm2948 = vcmask 123904
    %v2949 = vsel %vm2948, %v2946, -inf
    %2950 = vmax.xlane.f32.xlu0 %v2949
    %v2951 = vpop.xlane.xlu0 %2950
    %v2953 = vlaneseq
    %v2954 = vshrl.u32 %v2953, 7
    %v2955 = vsub.s32 0, %v2954
    %v2956 = vrot.slane %v2951, %v2955
    %v2957 = vlaneseq
    %v2958 = vshrl.u32 %v2957, 7
    %v2959 = vsub.s32 1, %v2958
    %v2960 = vrot.slane %v2951, %v2959
    %v2963 = vsub.f32 %v2910, %v2956
    %v2964 = vsub.f32 %v2913, %v2956
    %v2965 = vsub.f32 %v2916, %v2960
    %v2966 = vsub.f32 %v2919, %v2960
    %v2967 = vmul.f32 %v2963, 1.442695
    %v2968 = vpow.pop %v2967
    %v2969 = vmul.f32 %v2964, 1.442695
    %v2970 = vpow.pop %v2969
    %v2971 = vmul.f32 %v2965, 1.442695
    %v2972 = vpow.pop %v2971
    %v2973 = vmul.f32 %v2966, 1.442695
    %v2974 = vpow.pop %v2973
    %2979 = vset.pattern.permute.xlu0 0
    %2980 = vperm.xlu0 %2979, %v2968
    %v2981 = vpop.permute.xlu0 %2980
    %2982 = vset.pattern.permute.xlu0 0
    %2983 = vperm.xlu0 %2982, %v2970
    %v2984 = vpop.permute.xlu0 %2983
    %2985 = vset.pattern.permute.xlu0 0
    %2986 = vperm.xlu0 %2985, %v2972
    %v2987 = vpop.permute.xlu0 %2986
    %2988 = vset.pattern.permute.xlu0 0
    %2989 = vperm.xlu0 %2988, %v2974
    %v2990 = vpop.permute.xlu0 %2989
    %v2991 = vlaneseq
    %v2992 = vshrl.u32 %v2991, 7
    %v2993 = vsub.s32 %v2925, %v2992
    %v2994 = vrot.slane %v2981, %v2993
    %v2995 = vlaneseq
    %v2996 = vshrl.u32 %v2995, 7
    %v2997 = vsub.s32 %v2930, %v2996
    %v2998 = vrot.slane %v2984, %v2997
    %v2999 = vsel %vm2935, %v2998, %v2994
    %v3000 = vlaneseq
    %v3001 = vshrl.u32 %v3000, 7
    %v3002 = vsub.s32 %v2925, %v3001
    %v3003 = vrot.slane %v2987, %v3002
    %v3004 = vlaneseq
    %v3005 = vshrl.u32 %v3004, 7
    %v3006 = vsub.s32 %v2930, %v3005
    %v3007 = vrot.slane %v2990, %v3006
    %v3008 = vsel %vm2935, %v3007, %v3003
    %v3009 = vsel %vm410, %v3008, %v2999
    %v3011 = vsel %vm2948, %v3009, 0.0
    %3012 = vadd.xlane.f32.xlu0 %v3011
    %v3013 = vpop.xlane.xlu0 %3012
    %v3014 = vrcp.pop %v3013
    %v3016 = vlaneseq
    %v3017 = vshrl.u32 %v3016, 7
    %v3018 = vsub.s32 0, %v3017
    %v3019 = vrot.slane %v3014, %v3018
    %v3020 = vlaneseq
    %v3021 = vshrl.u32 %v3020, 7
    %v3022 = vsub.s32 1, %v3021
    %v3023 = vrot.slane %v3014, %v3022
    %v3026 = vmul.f32 %v2968, %v3019
    %v3027 = vmul.f32 %v2970, %v3019
    %v3028 = vmul.f32 %v2972, %v3023
    %v3029 = vmul.f32 %v2974, %v3023
    %3031 = vset.pattern.permute.xlu0 0
    %3032 = vperm.xlu0 %3031, %v3026
    %v3033 = vpop.permute.xlu0 %3032
    %3036 = vset.pattern.permute.xlu0 0
    %3037 = vperm.xlu0 %3036, %v3027
    %v3038 = vpop.permute.xlu0 %3037
    %3041 = vset.pattern.permute.xlu0 0
    %3042 = vperm.xlu0 %3041, %v3028
    %v3043 = vpop.permute.xlu0 %3042
    %3046 = vset.pattern.permute.xlu0 0
    %3047 = vperm.xlu0 %3046, %v3029
    %v3048 = vpop.permute.xlu0 %3047
    %v3050 = vmul.f32 %v3033, %v2644
    %v3051 = vmul.f32 %v3038, %v2645
    %v3052 = vmul.f32 %v3043, %v2646
    %v3053 = vmul.f32 %v3048, %v2647
    %v3054 = vsel %vm268, %v3050, 0.0
    %v3055 = vsel %vm268, %v3051, 0.0
    %v3056 = vadd.f32 %v3054, %v3055
    %v3057 = vrot.slane %v3056, 4
    %v3058 = vadd.f32 %v3056, %v3057
    %v3059 = vrot.slane %v3058, 2
    %v3060 = vadd.f32 %v3058, %v3059
    %v3061 = vrot.slane %v3060, 1
    %v3062 = vadd.f32 %v3060, %v3061
    %v3063 = vsel %vm268, %v3052, 0.0
    %v3064 = vsel %vm268, %v3053, 0.0
    %v3065 = vadd.f32 %v3063, %v3064
    %v3066 = vrot.slane %v3065, 4
    %v3067 = vadd.f32 %v3065, %v3066
    %v3068 = vrot.slane %v3067, 2
    %v3069 = vadd.f32 %v3067, %v3068
    %v3070 = vrot.slane %v3069, 1
    %v3071 = vadd.f32 %v3069, %v3070
    %v3072 = vld [vmem:[#allocation4] ss:$8 sm:$0x3]
    %s3073 = scalar_lea.vmem [#allocation4], 16
    %v3074 = vld [vmem:[%s3073] ss:$8 sm:$0x3]
    %v3077 = vsel %vm410, %v3071, %v3062
    %3079 = vrot.lane.b32.xlu0 %v2782, 64
    %v3080 = vpop.permute.xlu0 %3079
    %v3082 = vsel %vm268, %v3077, %v3080
    %vm3083 = vcmask 523264
    %v3085 = vsel %vm3083, %v3082, 0
    %3087 = vmatprep.subr.mxu0 0.0
    %3088 = vmatpush1.msra.mxu0 %v2765
    %3089 = vmatprep.subr.mxu0 0.0
    %3090 = vmatpush1.msra.mxu0 %v2766
    %3091 = vmatprep.subr.mxu0 0.0
    %3092 = vmatpush1.msra.mxu0 %v2767
    %3093 = vmatprep.subr.mxu0 0.0
    %3094 = vmatpush1.msra.mxu0 %v2768
    %3095 = vmatprep.subr.mxu0 0.0
    %3096 = vmatpush1.msra.mxu0 %v2769
    %3097 = vmatprep.subr.mxu0 0.0
    %3098 = vmatpush1.msra.mxu0 %v2770
    %3099 = vmatprep.subr.mxu0 0.0
    %3100 = vmatpush1.msra.mxu0 %v2771
    %3101 = vmatprep.subr.mxu0 0.0
    %3102 = vmatpush1.msra.mxu0 %v2772
    %3103 = vmatprep.subr.mxu0 0.0
    %3104 = vmatpush1.msra.mxu0 0.0
    %3105 = vmatprep.subr.mxu0 0.0
    %3106 = vmatpush1.msra.mxu0 0.0
    %3107 = vmatprep.subr.mxu0 0.0
    %3108 = vmatpush1.msra.mxu0 0.0
    %3109 = vmatprep.subr.mxu0 0.0
    %3110 = vmatpush1.msra.mxu0 0.0
    %3111 = vmatprep.subr.mxu0 0.0
    %3112 = vmatpush1.msra.mxu0 0.0
    %3113 = vmatprep.subr.mxu0 0.0
    %3114 = vmatpush1.msra.mxu0 0.0
    %3115 = vmatprep.subr.mxu0 0.0
    %3116 = vmatpush1.msra.mxu0 0.0
    %3117 = vmatprep.subr.mxu0 0.0
    %3118 = vmatpush1.msra.mxu0 0.0
    %3119 = vmatprep.subr.mxu0 0.0
    %3120 = vmatpush1.msra.mxu0 0.0
    %3121 = vmatprep.subr.mxu0 0.0
    %3122 = vmatpush1.msra.mxu0 0.0
    %3123 = vmatprep.subr.mxu0 0.0
    %3124 = vmatpush1.msra.mxu0 0.0
    %3125 = vmatprep.subr.mxu0 0.0
    %3126 = vmatpush1.msra.mxu0 0.0
    %3127 = vmatprep.subr.mxu0 0.0
    %3128 = vmatpush1.msra.mxu0 0.0
    %3129 = vmatprep.subr.mxu0 0.0
    %3130 = vmatpush1.msra.mxu0 0.0
    %3131 = vmatprep.subr.mxu0 0.0
    %3132 = vmatpush1.msra.mxu0 0.0
    %3133 = vmatprep.subr.mxu0 0.0
    %3134 = vmatpush1.msra.mxu0 0.0
    %3135 = vmatprep.subr.mxu0 0.0
    %3136 = vmatpush1.msra.mxu0 0.0
    %3137 = vmatprep.subr.mxu0 0.0
    %3138 = vmatpush1.msra.mxu0 0.0
    %3139 = vmatprep.subr.mxu0 0.0
    %3140 = vmatpush1.msra.mxu0 0.0
    %3141 = vmatprep.subr.mxu0 0.0
    %3142 = vmatpush1.msra.mxu0 0.0
    %3143 = vmatprep.subr.mxu0 0.0
    %3144 = vmatpush1.msra.mxu0 0.0
    %3145 = vmatprep.subr.mxu0 0.0
    %3146 = vmatpush1.msra.mxu0 0.0
    %3147 = vmatprep.subr.mxu0 0.0
    %3148 = vmatpush1.msra.mxu0 0.0
    %3149 = vmatprep.subr.mxu0 0.0
    %3150 = vmatpush1.msra.mxu0 0.0
    %3151 = vmatprep.mubr.f32.mxu0 0.0
    %3152 = vmatmul.mubr.f32.gmra.mrb[0].mxu0 %v3085
    %v3153 = vpop.f32.mrb[0].mxu0
    %v3154 = vadd.f32 0.0, %v3153
    %v3155 = vpop.f32.mrb[0].mxu0
    %3156 = vdwg.mxu0
    %v3159 = vunpack.c.l.s4 1966171168
    %v3160 = vunpack.c.0.s8 %v3159
    %v3161 = vlaneseq
    %v3162 = vshrl.u32 %v3161, 7
    %v3163 = vsub.s32 %v3160, %v3162
    %v3164 = vrot.slane %v3154, %v3163
    %v3165 = vcombine.high %v3164, %v3164
    %v3167 = vunpack.c.l.s4 1966171168
    %v3168 = vunpack.c.0.s8 %v3167
    %v3169 = vlaneseq
    %v3170 = vshrl.u32 %v3169, 7
    %v3171 = vsub.s32 %v3168, %v3170
    %v3172 = vrot.slane %v3164, %v3171
    %v3174 = vunpack.c.l.s4 1966171168
    %v3175 = vunpack.c.0.s8 %v3174
    %v3176 = vlaneseq
    %v3177 = vshrl.u32 %v3176, 7
    %v3178 = vsub.s32 %v3175, %v3177
    %v3179 = vrot.slane %v3165, %v3178
    %v3182 = vadd.f32 %v3072, %v3172
    %v3183 = vadd.f32 %v3074, %v3179
    %v3184 = vxor.u32 %v3182, 2147483648
    %v3185 = vxor.u32 %v3183, 2147483648
    %v3186 = vmul.f32 %v3184, 1.442695
    %v3187 = vpow.pop %v3186
    %v3188 = vmul.f32 %v3185, 1.442695
    %v3189 = vpow.pop %v3188
    %v3190 = vadd.f32 %v3187, 1.0
    %v3191 = vadd.f32 %v3189, 1.0
    %v3192 = vrcp.pop %v3190
    %v3193 = vmul.f32 1.0, %v3192
    %v3194 = vrcp.pop %v3191
    %v3195 = vmul.f32 1.0, %v3194
    %v3196 = vtanh.pop %v3182
    %v3197 = vtanh.pop %v3183
    %v3198 = vmul.f32 %v3193, %v2514
    %v3199 = vmul.f32 %v3195, %v2515
    %3202 = vrot.lane.b32.xlu0 %v3196, 64
    %v3203 = vpop.permute.xlu0 %3202
    %3204 = vrot.lane.b32.xlu0 %v3197, 64
    %v3205 = vpop.permute.xlu0 %3204
    %v3208 = vmul.f32 %v3193, %v3203
    %v3209 = vmul.f32 %v3195, %v3205
    %3212 = vrot.lane.b32.xlu0 %v3208, 32
    %v3213 = vpop.permute.xlu0 %3212
    %3214 = vrot.lane.b32.xlu0 %v3209, 32
    %v3215 = vpop.permute.xlu0 %3214
    %v3218 = vadd.f32 %v3198, %v3213
    %v3219 = vadd.f32 %v3199, %v3215
    %v3220 = vtanh.pop %v3218
    %v3221 = vtanh.pop %v3219
    %3224 = vrot.lane.b32.xlu0 %v3220, 64
    %v3225 = vpop.permute.xlu0 %3224
    %3226 = vrot.lane.b32.xlu0 %v3221, 64
    %v3227 = vpop.permute.xlu0 %3226
    %v3230 = vmul.f32 %v3193, %v3225
    %v3231 = vmul.f32 %v3195, %v3227
    %v3234 = vcombine.low %v3230, %v3231
    %v3236 = vunpack.c.l.s4 1966171168
    %v3237 = vunpack.c.0.s8 %v3236
    %v3238 = vlaneseq
    %v3239 = vshrl.u32 %v3238, 7
    %v3240 = vsub.s32 %v3237, %v3239
    %v3241 = vrot.slane %v3234, %v3240
    %v3243 = vunpack.c.l.s4 1966171168
    %v3244 = vunpack.c.0.s8 %v3243
    %v3245 = vlaneseq
    %v3246 = vshrl.u32 %v3245, 7
    %v3247 = vsub.s32 %v3244, %v3246
    %v3248 = vrot.slane %v3241, %v3247
    %3249 = vrot.lane.b32.xlu0 %v3248, 32
    %v3250 = vpop.permute.xlu0 %3249
    %3252 = vrot.lane.b32.xlu0 %v3077, 32
    %v3253 = vpop.permute.xlu0 %3252
    %v3255 = vsel %vm268, %v3250, %v3253
    %v3257 = vsel %vm3083, %v3255, 0
    %3259 = vmatprep.subr.mxu0 0.0
    %3260 = vmatpush1.msra.mxu0 %v2773
    %3261 = vmatprep.subr.mxu0 0.0
    %3262 = vmatpush1.msra.mxu0 %v2774
    %3263 = vmatprep.subr.mxu0 0.0
    %3264 = vmatpush1.msra.mxu0 %v2775
    %3265 = vmatprep.subr.mxu0 0.0
    %3266 = vmatpush1.msra.mxu0 %v2776
    %3267 = vmatprep.subr.mxu0 0.0
    %3268 = vmatpush1.msra.mxu0 %v2777
    %3269 = vmatprep.subr.mxu0 0.0
    %3270 = vmatpush1.msra.mxu0 %v2778
    %3271 = vmatprep.subr.mxu0 0.0
    %3272 = vmatpush1.msra.mxu0 %v2779
    %3273 = vmatprep.subr.mxu0 0.0
    %3274 = vmatpush1.msra.mxu0 %v2780
    %3275 = vmatprep.subr.mxu0 0.0
    %3276 = vmatpush1.msra.mxu0 0.0
    %3277 = vmatprep.subr.mxu0 0.0
    %3278 = vmatpush1.msra.mxu0 0.0
    %3279 = vmatprep.subr.mxu0 0.0
    %3280 = vmatpush1.msra.mxu0 0.0
    %3281 = vmatprep.subr.mxu0 0.0
    %3282 = vmatpush1.msra.mxu0 0.0
    %3283 = vmatprep.subr.mxu0 0.0
    %3284 = vmatpush1.msra.mxu0 0.0
    %3285 = vmatprep.subr.mxu0 0.0
    %3286 = vmatpush1.msra.mxu0 0.0
    %3287 = vmatprep.subr.mxu0 0.0
    %3288 = vmatpush1.msra.mxu0 0.0
    %3289 = vmatprep.subr.mxu0 0.0
    %3290 = vmatpush1.msra.mxu0 0.0
    %3291 = vmatprep.subr.mxu0 0.0
    %3292 = vmatpush1.msra.mxu0 0.0
    %3293 = vmatprep.subr.mxu0 0.0
    %3294 = vmatpush1.msra.mxu0 0.0
    %3295 = vmatprep.subr.mxu0 0.0
    %3296 = vmatpush1.msra.mxu0 0.0
    %3297 = vmatprep.subr.mxu0 0.0
    %3298 = vmatpush1.msra.mxu0 0.0
    %3299 = vmatprep.subr.mxu0 0.0
    %3300 = vmatpush1.msra.mxu0 0.0
    %3301 = vmatprep.subr.mxu0 0.0
    %3302 = vmatpush1.msra.mxu0 0.0
    %3303 = vmatprep.subr.mxu0 0.0
    %3304 = vmatpush1.msra.mxu0 0.0
    %3305 = vmatprep.subr.mxu0 0.0
    %3306 = vmatpush1.msra.mxu0 0.0
    %3307 = vmatprep.subr.mxu0 0.0
    %3308 = vmatpush1.msra.mxu0 0.0
    %3309 = vmatprep.subr.mxu0 0.0
    %3310 = vmatpush1.msra.mxu0 0.0
    %3311 = vmatprep.subr.mxu0 0.0
    %3312 = vmatpush1.msra.mxu0 0.0
    %3313 = vmatprep.subr.mxu0 0.0
    %3314 = vmatpush1.msra.mxu0 0.0
    %3315 = vmatprep.subr.mxu0 0.0
    %3316 = vmatpush1.msra.mxu0 0.0
    %3317 = vmatprep.subr.mxu0 0.0
    %3318 = vmatpush1.msra.mxu0 0.0
    %3319 = vmatprep.subr.mxu0 0.0
    %3320 = vmatpush1.msra.mxu0 0.0
    %3321 = vmatprep.subr.mxu0 0.0
    %3322 = vmatpush1.msra.mxu0 0.0
    %3323 = vmatprep.mubr.f32.mxu0 0.0
    %3324 = vmatmul.mubr.f32.gmra.mrb[0].mxu0 %v3257
    %v3325 = vpop.f32.mrb[0].mxu0
    %v3326 = vadd.f32 0.0, %v3325
    %v3327 = vpop.f32.mrb[0].mxu0
    %3328 = vdwg.mxu0
    %v3331 = vrot.slane %v3072, 1
    %v3332 = vrot.slane %v3074, 1
    %v3337 = vunpack.c.l.s4 1966171168
    %v3338 = vunpack.c.0.s8 %v3337
    %v3339 = vlaneseq
    %v3340 = vshrl.u32 %v3339, 7
    %v3341 = vsub.s32 %v3338, %v3340
    %v3342 = vrot.slane %v3326, %v3341
    %v3343 = vcombine.high %v3342, %v3342
    %v3345 = vunpack.c.l.s4 1966171168
    %v3346 = vunpack.c.0.s8 %v3345
    %v3347 = vlaneseq
    %v3348 = vshrl.u32 %v3347, 7
    %v3349 = vsub.s32 %v3346, %v3348
    %v3350 = vrot.slane %v3342, %v3349
    %v3352 = vunpack.c.l.s4 1966171168
    %v3353 = vunpack.c.0.s8 %v3352
    %v3354 = vlaneseq
    %v3355 = vshrl.u32 %v3354, 7
    %v3356 = vsub.s32 %v3353, %v3355
    %v3357 = vrot.slane %v3343, %v3356
    %v3360 = vadd.f32 %v3331, %v3350
    %v3361 = vadd.f32 %v3332, %v3357
    %3362 = vst [vmem:[#allocation19] sm:$0x1] %v3360
    %3363 = vst [vmem:[#allocation19 + $0x8] sm:$0x1] %v3361
    %v3364 = vsel %vm268, %v3250, 0
    %3366 = vmatprep.subr.mxu0 0.0
    %3367 = vmatpush1.msra.mxu0 %v2761
    %3368 = vmatprep.subr.mxu0 0.0
    %3369 = vmatpush1.msra.mxu0 %v2762
    %3370 = vmatprep.subr.mxu0 0.0
    %3371 = vmatpush1.msra.mxu0 %v2763
    %3372 = vmatprep.subr.mxu0 0.0
    %3373 = vmatpush1.msra.mxu0 %v2764
    %3374 = vmatprep.subr.mxu0 0.0
    %3375 = vmatpush1.msra.mxu0 0.0
    %3376 = vmatprep.subr.mxu0 0.0
    %3377 = vmatpush1.msra.mxu0 0.0
    %3378 = vmatprep.subr.mxu0 0.0
    %3379 = vmatpush1.msra.mxu0 0.0
    %3380 = vmatprep.subr.mxu0 0.0
    %3381 = vmatpush1.msra.mxu0 0.0
    %3382 = vmatprep.subr.mxu0 0.0
    %3383 = vmatpush1.msra.mxu0 0.0
    %3384 = vmatprep.subr.mxu0 0.0
    %3385 = vmatpush1.msra.mxu0 0.0
    %3386 = vmatprep.subr.mxu0 0.0
    %3387 = vmatpush1.msra.mxu0 0.0
    %3388 = vmatprep.subr.mxu0 0.0
    %3389 = vmatpush1.msra.mxu0 0.0
    %3390 = vmatprep.subr.mxu0 0.0
    %3391 = vmatpush1.msra.mxu0 0.0
    %3392 = vmatprep.subr.mxu0 0.0
    %3393 = vmatpush1.msra.mxu0 0.0
    %3394 = vmatprep.subr.mxu0 0.0
    %3395 = vmatpush1.msra.mxu0 0.0
    %3396 = vmatprep.subr.mxu0 0.0
    %3397 = vmatpush1.msra.mxu0 0.0
    %3398 = vmatprep.subr.mxu0 0.0
    %3399 = vmatpush1.msra.mxu0 0.0
    %3400 = vmatprep.subr.mxu0 0.0
    %3401 = vmatpush1.msra.mxu0 0.0
    %3402 = vmatprep.subr.mxu0 0.0
    %3403 = vmatpush1.msra.mxu0 0.0
    %3404 = vmatprep.subr.mxu0 0.0
    %3405 = vmatpush1.msra.mxu0 0.0
    %3406 = vmatprep.subr.mxu0 0.0
    %3407 = vmatpush1.msra.mxu0 0.0
    %3408 = vmatprep.subr.mxu0 0.0
    %3409 = vmatpush1.msra.mxu0 0.0
    %3410 = vmatprep.subr.mxu0 0.0
    %3411 = vmatpush1.msra.mxu0 0.0
    %3412 = vmatprep.subr.mxu0 0.0
    %3413 = vmatpush1.msra.mxu0 0.0
    %3414 = vmatprep.subr.mxu0 0.0
    %3415 = vmatpush1.msra.mxu0 0.0
    %3416 = vmatprep.subr.mxu0 0.0
    %3417 = vmatpush1.msra.mxu0 0.0
    %3418 = vmatprep.subr.mxu0 0.0
    %3419 = vmatpush1.msra.mxu0 0.0
    %3420 = vmatprep.subr.mxu0 0.0
    %3421 = vmatpush1.msra.mxu0 0.0
    %3422 = vmatprep.subr.mxu0 0.0
    %3423 = vmatpush1.msra.mxu0 0.0
    %3424 = vmatprep.subr.mxu0 0.0
    %3425 = vmatpush1.msra.mxu0 0.0
    %3426 = vmatprep.subr.mxu0 0.0
    %3427 = vmatpush1.msra.mxu0 0.0
    %3428 = vmatprep.subr.mxu0 0.0
    %3429 = vmatpush1.msra.mxu0 0.0
    %3430 = vmatprep.mubr.f32.mxu0 0.0
    %3431 = vmatmul.mubr.f32.gmra.mrb[0].mxu0 %v3364
    %v3432 = vpop.f32.mrb[0].mxu0
    %v3433 = vadd.f32 0.0, %v3432
    %v3434 = vpop.f32.mrb[0].mxu0
    %3435 = vdwg.mxu0
    %v3438 = vunpack.c.l.s4 1966171168
    %v3439 = vunpack.c.0.s8 %v3438
    %v3440 = vlaneseq
    %v3441 = vshrl.u32 %v3440, 7
    %v3442 = vsub.s32 %v3439, %v3441
    %v3443 = vrot.slane %v3433, %v3442
    %v3444 = vcombine.high %v3443, %v3443
    %v3446 = vunpack.c.l.s4 1966171168
    %v3447 = vunpack.c.0.s8 %v3446
    %v3448 = vlaneseq
    %v3449 = vshrl.u32 %v3448, 7
    %v3450 = vsub.s32 %v3447, %v3449
    %v3451 = vrot.slane %v3443, %v3450
    %v3453 = vunpack.c.l.s4 1966171168
    %v3454 = vunpack.c.0.s8 %v3453
    %v3455 = vlaneseq
    %v3456 = vshrl.u32 %v3455, 7
    %v3457 = vsub.s32 %v3454, %v3456
    %v3458 = vrot.slane %v3444, %v3457
    %v3459 = vlaneseq
    %v3460 = vshrl.u32 %v3459, 7
    %v3461 = vsub.s32 0, %v3460
    %v3462 = vrot.slane %v3451, %v3461
    %v3463 = vlaneseq
    %v3464 = vshrl.u32 %v3463, 7
    %v3465 = vsub.s32 0, %v3464
    %v3466 = vrot.slane %v3458, %v3465
    %v3469 = vadd.f32 %v3462, %v2756
    %v3470 = vadd.f32 %v3462, %v2757
    %v3471 = vadd.f32 %v3466, %v2758
    %v3472 = vadd.f32 %v3466, %v2759
    %v3473 = vtanh.pop %v3469
    %v3474 = vtanh.pop %v3470
    %v3475 = vtanh.pop %v3471
    %v3476 = vtanh.pop %v3472
    %v3477 = vmul.f32 %v3473, %v2902
    %v3478 = vmul.f32 %v3474, %v2902
    %v3479 = vmul.f32 %v3475, %v2902
    %v3480 = vmul.f32 %v3476, %v2902
    %v3481 = vsel %vm268, %v3477, 0.0
    %3482 = vadd.xlane.f32.xlu0 %v3481
    %v3483 = vpop.xlane.xlu0 %3482
    %v3484 = vsel %vm268, %v3478, 0.0
    %3485 = vadd.xlane.f32.xlu0 %v3484
    %v3486 = vpop.xlane.xlu0 %3485
    %v3487 = vsel %vm268, %v3479, 0.0
    %3488 = vadd.xlane.f32.xlu0 %v3487
    %v3489 = vpop.xlane.xlu0 %3488
    %v3490 = vsel %vm268, %v3480, 0.0
    %3491 = vadd.xlane.f32.xlu0 %v3490
    %v3492 = vpop.xlane.xlu0 %3491
    %v3497 = vlaneseq
    %v3498 = vshrl.u32 %v3497, 7
    %v3499 = vsub.s32 %v2925, %v3498
    %v3500 = vrot.slane %v3483, %v3499
    %v3501 = vlaneseq
    %v3502 = vshrl.u32 %v3501, 7
    %v3503 = vsub.s32 %v2930, %v3502
    %v3504 = vrot.slane %v3486, %v3503
    %v3505 = vsel %vm2935, %v3504, %v3500
    %v3506 = vlaneseq
    %v3507 = vshrl.u32 %v3506, 7
    %v3508 = vsub.s32 %v2925, %v3507
    %v3509 = vrot.slane %v3489, %v3508
    %v3510 = vlaneseq
    %v3511 = vshrl.u32 %v3510, 7
    %v3512 = vsub.s32 %v2930, %v3511
    %v3513 = vrot.slane %v3492, %v3512
    %v3514 = vsel %vm2935, %v3513, %v3509
    %v3515 = vsel %vm410, %v3514, %v3505
    %v3517 = vsel %vm2948, %v3515, -inf
    %3518 = vmax.xlane.f32.xlu0 %v3517
    %v3519 = vpop.xlane.xlu0 %3518
    %v3521 = vlaneseq
    %v3522 = vshrl.u32 %v3521, 7
    %v3523 = vsub.s32 0, %v3522
    %v3524 = vrot.slane %v3519, %v3523
    %v3525 = vlaneseq
    %v3526 = vshrl.u32 %v3525, 7
    %v3527 = vsub.s32 1, %v3526
    %v3528 = vrot.slane %v3519, %v3527
    %v3531 = vsub.f32 %v3483, %v3524
    %v3532 = vsub.f32 %v3486, %v3524
    %v3533 = vsub.f32 %v3489, %v3528
    %v3534 = vsub.f32 %v3492, %v3528
    %v3535 = vmul.f32 %v3531, 1.442695
    %v3536 = vpow.pop %v3535
    %v3537 = vmul.f32 %v3532, 1.442695
    %v3538 = vpow.pop %v3537
    %v3539 = vmul.f32 %v3533, 1.442695
    %v3540 = vpow.pop %v3539
    %v3541 = vmul.f32 %v3534, 1.442695
    %v3542 = vpow.pop %v3541
    %3547 = vset.pattern.permute.xlu0 0
    %3548 = vperm.xlu0 %3547, %v3536
    %v3549 = vpop.permute.xlu0 %3548
    %3550 = vset.pattern.permute.xlu0 0
    %3551 = vperm.xlu0 %3550, %v3538
    %v3552 = vpop.permute.xlu0 %3551
    %3553 = vset.pattern.permute.xlu0 0
    %3554 = vperm.xlu0 %3553, %v3540
    %v3555 = vpop.permute.xlu0 %3554
    %3556 = vset.pattern.permute.xlu0 0
    %3557 = vperm.xlu0 %3556, %v3542
    %v3558 = vpop.permute.xlu0 %3557
    %v3559 = vlaneseq
    %v3560 = vshrl.u32 %v3559, 7
    %v3561 = vsub.s32 %v2925, %v3560
    %v3562 = vrot.slane %v3549, %v3561
    %v3563 = vlaneseq
    %v3564 = vshrl.u32 %v3563, 7
    %v3565 = vsub.s32 %v2930, %v3564
    %v3566 = vrot.slane %v3552, %v3565
    %v3567 = vsel %vm2935, %v3566, %v3562
    %v3568 = vlaneseq
    %v3569 = vshrl.u32 %v3568, 7
    %v3570 = vsub.s32 %v2925, %v3569
    %v3571 = vrot.slane %v3555, %v3570
    %v3572 = vlaneseq
    %v3573 = vshrl.u32 %v3572, 7
    %v3574 = vsub.s32 %v2930, %v3573
    %v3575 = vrot.slane %v3558, %v3574
    %v3576 = vsel %vm2935, %v3575, %v3571
    %v3577 = vsel %vm410, %v3576, %v3567
    %v3579 = vsel %vm2948, %v3577, 0.0
    %3580 = vadd.xlane.f32.xlu0 %v3579
    %v3581 = vpop.xlane.xlu0 %3580
    %v3582 = vrcp.pop %v3581
    %v3584 = vlaneseq
    %v3585 = vshrl.u32 %v3584, 7
    %v3586 = vsub.s32 0, %v3585
    %v3587 = vrot.slane %v3582, %v3586
    %v3588 = vlaneseq
    %v3589 = vshrl.u32 %v3588, 7
    %v3590 = vsub.s32 1, %v3589
    %v3591 = vrot.slane %v3582, %v3590
    %v3594 = vmul.f32 %v3536, %v3587
    %v3595 = vmul.f32 %v3538, %v3587
    %v3596 = vmul.f32 %v3540, %v3591
    %v3597 = vmul.f32 %v3542, %v3591
    %3599 = vset.pattern.permute.xlu0 0
    %3600 = vperm.xlu0 %3599, %v3594
    %v3601 = vpop.permute.xlu0 %3600
    %3604 = vset.pattern.permute.xlu0 0
    %3605 = vperm.xlu0 %3604, %v3595
    %v3606 = vpop.permute.xlu0 %3605
    %3609 = vset.pattern.permute.xlu0 0
    %3610 = vperm.xlu0 %3609, %v3596
    %v3611 = vpop.permute.xlu0 %3610
    %3614 = vset.pattern.permute.xlu0 0
    %3615 = vperm.xlu0 %3614, %v3597
    %v3616 = vpop.permute.xlu0 %3615
    %v3618 = vmul.f32 %v3601, %v2644
    %v3619 = vmul.f32 %v3606, %v2645
    %v3620 = vmul.f32 %v3611, %v2646
    %v3621 = vmul.f32 %v3616, %v2647
    %v3622 = vsel %vm268, %v3618, 0.0
    %v3623 = vsel %vm268, %v3619, 0.0
    %v3624 = vadd.f32 %v3622, %v3623
    %v3625 = vrot.slane %v3624, 4
    %v3626 = vadd.f32 %v3624, %v3625
    %v3627 = vrot.slane %v3626, 2
    %v3628 = vadd.f32 %v3626, %v3627
    %v3629 = vrot.slane %v3628, 1
    %v3630 = vadd.f32 %v3628, %v3629
    %v3631 = vsel %vm268, %v3620, 0.0
    %v3632 = vsel %vm268, %v3621, 0.0
    %v3633 = vadd.f32 %v3631, %v3632
    %v3634 = vrot.slane %v3633, 4
    %v3635 = vadd.f32 %v3633, %v3634
    %v3636 = vrot.slane %v3635, 2
    %v3637 = vadd.f32 %v3635, %v3636
    %v3638 = vrot.slane %v3637, 1
    %v3639 = vadd.f32 %v3637, %v3638
    %s3640 = scalar_lea.vmem [#allocation4], 1
    %v3641 = vld [vmem:[%s3640] ss:$8 sm:$0x3]
    %s3642 = scalar_lea.vmem [#allocation4], 17
    %v3643 = vld [vmem:[%s3642] ss:$8 sm:$0x3]
    %v3646 = vsel %vm410, %v3639, %v3630
    %3648 = vrot.lane.b32.xlu0 %v3248, 64
    %v3649 = vpop.permute.xlu0 %3648
    %v3651 = vsel %vm268, %v3646, %v3649
    %v3653 = vsel %vm3083, %v3651, 0
    %3655 = vmatprep.subr.mxu0 0.0
    %3656 = vmatpush1.msra.mxu0 %v2765
    %3657 = vmatprep.subr.mxu0 0.0
    %3658 = vmatpush1.msra.mxu0 %v2766
    %3659 = vmatprep.subr.mxu0 0.0
    %3660 = vmatpush1.msra.mxu0 %v2767
    %3661 = vmatprep.subr.mxu0 0.0
    %3662 = vmatpush1.msra.mxu0 %v2768
    %3663 = vmatprep.subr.mxu0 0.0
    %3664 = vmatpush1.msra.mxu0 %v2769
    %3665 = vmatprep.subr.mxu0 0.0
    %3666 = vmatpush1.msra.mxu0 %v2770
    %3667 = vmatprep.subr.mxu0 0.0
    %3668 = vmatpush1.msra.mxu0 %v2771
    %3669 = vmatprep.subr.mxu0 0.0
    %3670 = vmatpush1.msra.mxu0 %v2772
    %3671 = vmatprep.subr.mxu0 0.0
    %3672 = vmatpush1.msra.mxu0 0.0
    %3673 = vmatprep.subr.mxu0 0.0
    %3674 = vmatpush1.msra.mxu0 0.0
    %3675 = vmatprep.subr.mxu0 0.0
    %3676 = vmatpush1.msra.mxu0 0.0
    %3677 = vmatprep.subr.mxu0 0.0
    %3678 = vmatpush1.msra.mxu0 0.0
    %3679 = vmatprep.subr.mxu0 0.0
    %3680 = vmatpush1.msra.mxu0 0.0
    %3681 = vmatprep.subr.mxu0 0.0
    %3682 = vmatpush1.msra.mxu0 0.0
    %3683 = vmatprep.subr.mxu0 0.0
    %3684 = vmatpush1.msra.mxu0 0.0
    %3685 = vmatprep.subr.mxu0 0.0
    %3686 = vmatpush1.msra.mxu0 0.0
    %3687 = vmatprep.subr.mxu0 0.0
    %3688 = vmatpush1.msra.mxu0 0.0
    %3689 = vmatprep.subr.mxu0 0.0
    %3690 = vmatpush1.msra.mxu0 0.0
    %3691 = vmatprep.subr.mxu0 0.0
    %3692 = vmatpush1.msra.mxu0 0.0
    %3693 = vmatprep.subr.mxu0 0.0
    %3694 = vmatpush1.msra.mxu0 0.0
    %3695 = vmatprep.subr.mxu0 0.0
    %3696 = vmatpush1.msra.mxu0 0.0
    %3697 = vmatprep.subr.mxu0 0.0
    %3698 = vmatpush1.msra.mxu0 0.0
    %3699 = vmatprep.subr.mxu0 0.0
    %3700 = vmatpush1.msra.mxu0 0.0
    %3701 = vmatprep.subr.mxu0 0.0
    %3702 = vmatpush1.msra.mxu0 0.0
    %3703 = vmatprep.subr.mxu0 0.0
    %3704 = vmatpush1.msra.mxu0 0.0
    %3705 = vmatprep.subr.mxu0 0.0
    %3706 = vmatpush1.msra.mxu0 0.0
    %3707 = vmatprep.subr.mxu0 0.0
    %3708 = vmatpush1.msra.mxu0 0.0
    %3709 = vmatprep.subr.mxu0 0.0
    %3710 = vmatpush1.msra.mxu0 0.0
    %3711 = vmatprep.subr.mxu0 0.0
    %3712 = vmatpush1.msra.mxu0 0.0
    %3713 = vmatprep.subr.mxu0 0.0
    %3714 = vmatpush1.msra.mxu0 0.0
    %3715 = vmatprep.subr.mxu0 0.0
    %3716 = vmatpush1.msra.mxu0 0.0
    %3717 = vmatprep.subr.mxu0 0.0
    %3718 = vmatpush1.msra.mxu0 0.0
    %3719 = vmatprep.mubr.f32.mxu0 0.0
    %3720 = vmatmul.mubr.f32.gmra.mrb[0].mxu0 %v3653
    %v3721 = vpop.f32.mrb[0].mxu0
    %v3722 = vadd.f32 0.0, %v3721
    %v3723 = vpop.f32.mrb[0].mxu0
    %3724 = vdwg.mxu0
    %v3727 = vunpack.c.l.s4 1966171168
    %v3728 = vunpack.c.0.s8 %v3727
    %v3729 = vlaneseq
    %v3730 = vshrl.u32 %v3729, 7
    %v3731 = vsub.s32 %v3728, %v3730
    %v3732 = vrot.slane %v3722, %v3731
    %v3733 = vcombine.high %v3732, %v3732
    %v3735 = vunpack.c.l.s4 1966171168
    %v3736 = vunpack.c.0.s8 %v3735
    %v3737 = vlaneseq
    %v3738 = vshrl.u32 %v3737, 7
    %v3739 = vsub.s32 %v3736, %v3738
    %v3740 = vrot.slane %v3732, %v3739
    %v3742 = vunpack.c.l.s4 1966171168
    %v3743 = vunpack.c.0.s8 %v3742
    %v3744 = vlaneseq
    %v3745 = vshrl.u32 %v3744, 7
    %v3746 = vsub.s32 %v3743, %v3745
    %v3747 = vrot.slane %v3733, %v3746
    %v3750 = vadd.f32 %v3641, %v3740
    %v3751 = vadd.f32 %v3643, %v3747
    %v3752 = vxor.u32 %v3750, 2147483648
    %v3753 = vxor.u32 %v3751, 2147483648
    %v3754 = vmul.f32 %v3752, 1.442695
    %v3755 = vpow.pop %v3754
    %v3756 = vmul.f32 %v3753, 1.442695
    %v3757 = vpow.pop %v3756
    %v3758 = vadd.f32 %v3755, 1.0
    %v3759 = vadd.f32 %v3757, 1.0
    %v3760 = vrcp.pop %v3758
    %v3761 = vmul.f32 1.0, %v3760
    %v3762 = vrcp.pop %v3759
    %v3763 = vmul.f32 1.0, %v3762
    %v3764 = vtanh.pop %v3750
    %v3765 = vtanh.pop %v3751
    %v3766 = vmul.f32 %v3761, %v3218
    %v3767 = vmul.f32 %v3763, %v3219
    %3770 = vrot.lane.b32.xlu0 %v3764, 64
    %v3771 = vpop.permute.xlu0 %3770
    %3772 = vrot.lane.b32.xlu0 %v3765, 64
    %v3773 = vpop.permute.xlu0 %3772
    %v3776 = vmul.f32 %v3761, %v3771
    %v3777 = vmul.f32 %v3763, %v3773
    %3780 = vrot.lane.b32.xlu0 %v3776, 32
    %v3781 = vpop.permute.xlu0 %3780
    %3782 = vrot.lane.b32.xlu0 %v3777, 32
    %v3783 = vpop.permute.xlu0 %3782
    %v3786 = vadd.f32 %v3766, %v3781
    %v3787 = vadd.f32 %v3767, %v3783
    %v3788 = vtanh.pop %v3786
    %v3789 = vtanh.pop %v3787
    %3792 = vrot.lane.b32.xlu0 %v3788, 64
    %v3793 = vpop.permute.xlu0 %3792
    %3794 = vrot.lane.b32.xlu0 %v3789, 64
    %v3795 = vpop.permute.xlu0 %3794
    %v3798 = vmul.f32 %v3761, %v3793
    %v3799 = vmul.f32 %v3763, %v3795
    %v3802 = vcombine.low %v3798, %v3799
    %v3804 = vunpack.c.l.s4 1966171168
    %v3805 = vunpack.c.0.s8 %v3804
    %v3806 = vlaneseq
    %v3807 = vshrl.u32 %v3806, 7
    %v3808 = vsub.s32 %v3805, %v3807
    %v3809 = vrot.slane %v3802, %v3808
    %v3811 = vunpack.c.l.s4 1966171168
    %v3812 = vunpack.c.0.s8 %v3811
    %v3813 = vlaneseq
    %v3814 = vshrl.u32 %v3813, 7
    %v3815 = vsub.s32 %v3812, %v3814
    %v3816 = vrot.slane %v3809, %v3815
    %3817 = vrot.lane.b32.xlu0 %v3816, 32
    %v3818 = vpop.permute.xlu0 %3817
    %3820 = vrot.lane.b32.xlu0 %v3646, 32
    %v3821 = vpop.permute.xlu0 %3820
    %v3823 = vsel %vm268, %v3818, %v3821
    %v3825 = vsel %vm3083, %v3823, 0
    %3827 = vmatprep.subr.mxu0 0.0
    %3828 = vmatpush1.msra.mxu0 %v2773
    %3829 = vmatprep.subr.mxu0 0.0
    %3830 = vmatpush1.msra.mxu0 %v2774
    %3831 = vmatprep.subr.mxu0 0.0
    %3832 = vmatpush1.msra.mxu0 %v2775
    %3833 = vmatprep.subr.mxu0 0.0
    %3834 = vmatpush1.msra.mxu0 %v2776
    %3835 = vmatprep.subr.mxu0 0.0
    %3836 = vmatpush1.msra.mxu0 %v2777
    %3837 = vmatprep.subr.mxu0 0.0
    %3838 = vmatpush1.msra.mxu0 %v2778
    %3839 = vmatprep.subr.mxu0 0.0
    %3840 = vmatpush1.msra.mxu0 %v2779
    %3841 = vmatprep.subr.mxu0 0.0
    %3842 = vmatpush1.msra.mxu0 %v2780
    %3843 = vmatprep.subr.mxu0 0.0
    %3844 = vmatpush1.msra.mxu0 0.0
    %3845 = vmatprep.subr.mxu0 0.0
    %3846 = vmatpush1.msra.mxu0 0.0
    %3847 = vmatprep.subr.mxu0 0.0
    %3848 = vmatpush1.msra.mxu0 0.0
    %3849 = vmatprep.subr.mxu0 0.0
    %3850 = vmatpush1.msra.mxu0 0.0
    %3851 = vmatprep.subr.mxu0 0.0
    %3852 = vmatpush1.msra.mxu0 0.0
    %3853 = vmatprep.subr.mxu0 0.0
    %3854 = vmatpush1.msra.mxu0 0.0
    %3855 = vmatprep.subr.mxu0 0.0
    %3856 = vmatpush1.msra.mxu0 0.0
    %3857 = vmatprep.subr.mxu0 0.0
    %3858 = vmatpush1.msra.mxu0 0.0
    %3859 = vmatprep.subr.mxu0 0.0
    %3860 = vmatpush1.msra.mxu0 0.0
    %3861 = vmatprep.subr.mxu0 0.0
    %3862 = vmatpush1.msra.mxu0 0.0
    %3863 = vmatprep.subr.mxu0 0.0
    %3864 = vmatpush1.msra.mxu0 0.0
    %3865 = vmatprep.subr.mxu0 0.0
    %3866 = vmatpush1.msra.mxu0 0.0
    %3867 = vmatprep.subr.mxu0 0.0
    %3868 = vmatpush1.msra.mxu0 0.0
    %3869 = vmatprep.subr.mxu0 0.0
    %3870 = vmatpush1.msra.mxu0 0.0
    %3871 = vmatprep.subr.mxu0 0.0
    %3872 = vmatpush1.msra.mxu0 0.0
    %3873 = vmatprep.subr.mxu0 0.0
    %3874 = vmatpush1.msra.mxu0 0.0
    %3875 = vmatprep.subr.mxu0 0.0
    %3876 = vmatpush1.msra.mxu0 0.0
    %3877 = vmatprep.subr.mxu0 0.0
    %3878 = vmatpush1.msra.mxu0 0.0
    %3879 = vmatprep.subr.mxu0 0.0
    %3880 = vmatpush1.msra.mxu0 0.0
    %3881 = vmatprep.subr.mxu0 0.0
    %3882 = vmatpush1.msra.mxu0 0.0
    %3883 = vmatprep.subr.mxu0 0.0
    %3884 = vmatpush1.msra.mxu0 0.0
    %3885 = vmatprep.subr.mxu0 0.0
    %3886 = vmatpush1.msra.mxu0 0.0
    %3887 = vmatprep.subr.mxu0 0.0
    %3888 = vmatpush1.msra.mxu0 0.0
    %3889 = vmatprep.subr.mxu0 0.0
    %3890 = vmatpush1.msra.mxu0 0.0
    %3891 = vmatprep.mubr.f32.mxu0 0.0
    %3892 = vmatmul.mubr.f32.gmra.mrb[0].mxu0 %v3825
    %v3893 = vpop.f32.mrb[0].mxu0
    %v3894 = vadd.f32 0.0, %v3893
    %v3895 = vpop.f32.mrb[0].mxu0
    %3896 = vdwg.mxu0
    %v3899 = vrot.slane %v3641, 1
    %v3900 = vrot.slane %v3643, 1
    %v3905 = vunpack.c.l.s4 1966171168
    %v3906 = vunpack.c.0.s8 %v3905
    %v3907 = vlaneseq
    %v3908 = vshrl.u32 %v3907, 7
    %v3909 = vsub.s32 %v3906, %v3908
    %v3910 = vrot.slane %v3894, %v3909
    %v3911 = vcombine.high %v3910, %v3910
    %v3913 = vunpack.c.l.s4 1966171168
    %v3914 = vunpack.c.0.s8 %v3913
    %v3915 = vlaneseq
    %v3916 = vshrl.u32 %v3915, 7
    %v3917 = vsub.s32 %v3914, %v3916
    %v3918 = vrot.slane %v3910, %v3917
    %v3920 = vunpack.c.l.s4 1966171168
    %v3921 = vunpack.c.0.s8 %v3920
    %v3922 = vlaneseq
    %v3923 = vshrl.u32 %v3922, 7
    %v3924 = vsub.s32 %v3921, %v3923
    %v3925 = vrot.slane %v3911, %v3924
    %v3928 = vadd.f32 %v3899, %v3918
    %v3929 = vadd.f32 %v3900, %v3925
    %3930 = vst [vmem:[#allocation19 + $0x1] sm:$0x1] %v3928
    %3931 = vst [vmem:[#allocation19 + $0x9] sm:$0x1] %v3929
    %v3932 = vsel %vm268, %v3818, 0
    %3934 = vmatprep.subr.mxu0 0.0
    %3935 = vmatpush1.msra.mxu0 %v2761
    %3936 = vmatprep.subr.mxu0 0.0
    %3937 = vmatpush1.msra.mxu0 %v2762
    %3938 = vmatprep.subr.mxu0 0.0
    %3939 = vmatpush1.msra.mxu0 %v2763
    %3940 = vmatprep.subr.mxu0 0.0
    %3941 = vmatpush1.msra.mxu0 %v2764
    %3942 = vmatprep.subr.mxu0 0.0
    %3943 = vmatpush1.msra.mxu0 0.0
    %3944 = vmatprep.subr.mxu0 0.0
    %3945 = vmatpush1.msra.mxu0 0.0
    %3946 = vmatprep.subr.mxu0 0.0
    %3947 = vmatpush1.msra.mxu0 0.0
    %3948 = vmatprep.subr.mxu0 0.0
    %3949 = vmatpush1.msra.mxu0 0.0
    %3950 = vmatprep.subr.mxu0 0.0
    %3951 = vmatpush1.msra.mxu0 0.0
    %3952 = vmatprep.subr.mxu0 0.0
    %3953 = vmatpush1.msra.mxu0 0.0
    %3954 = vmatprep.subr.mxu0 0.0
    %3955 = vmatpush1.msra.mxu0 0.0
    %3956 = vmatprep.subr.mxu0 0.0
    %3957 = vmatpush1.msra.mxu0 0.0
    %3958 = vmatprep.subr.mxu0 0.0
    %3959 = vmatpush1.msra.mxu0 0.0
    %3960 = vmatprep.subr.mxu0 0.0
    %3961 = vmatpush1.msra.mxu0 0.0
    %3962 = vmatprep.subr.mxu0 0.0
    %3963 = vmatpush1.msra.mxu0 0.0
    %3964 = vmatprep.subr.mxu0 0.0
    %3965 = vmatpush1.msra.mxu0 0.0
    %3966 = vmatprep.subr.mxu0 0.0
    %3967 = vmatpush1.msra.mxu0 0.0
    %3968 = vmatprep.subr.mxu0 0.0
    %3969 = vmatpush1.msra.mxu0 0.0
    %3970 = vmatprep.subr.mxu0 0.0
    %3971 = vmatpush1.msra.mxu0 0.0
    %3972 = vmatprep.subr.mxu0 0.0
    %3973 = vmatpush1.msra.mxu0 0.0
    %3974 = vmatprep.subr.mxu0 0.0
    %3975 = vmatpush1.msra.mxu0 0.0
    %3976 = vmatprep.subr.mxu0 0.0
    %3977 = vmatpush1.msra.mxu0 0.0
    %3978 = vmatprep.subr.mxu0 0.0
    %3979 = vmatpush1.msra.mxu0 0.0
    %3980 = vmatprep.subr.mxu0 0.0
    %3981 = vmatpush1.msra.mxu0 0.0
    %3982 = vmatprep.subr.mxu0 0.0
    %3983 = vmatpush1.msra.mxu0 0.0
    %3984 = vmatprep.subr.mxu0 0.0
    %3985 = vmatpush1.msra.mxu0 0.0
    %3986 = vmatprep.subr.mxu0 0.0
    %3987 = vmatpush1.msra.mxu0 0.0
    %3988 = vmatprep.subr.mxu0 0.0
    %3989 = vmatpush1.msra.mxu0 0.0
    %3990 = vmatprep.subr.mxu0 0.0
    %3991 = vmatpush1.msra.mxu0 0.0
    %3992 = vmatprep.subr.mxu0 0.0
    %3993 = vmatpush1.msra.mxu0 0.0
    %3994 = vmatprep.subr.mxu0 0.0
    %3995 = vmatpush1.msra.mxu0 0.0
    %3996 = vmatprep.subr.mxu0 0.0
    %3997 = vmatpush1.msra.mxu0 0.0
    %3998 = vmatprep.mubr.f32.mxu0 0.0
    %3999 = vmatmul.mubr.f32.gmra.mrb[0].mxu0 %v3932
    %v4000 = vpop.f32.mrb[0].mxu0
    %v4001 = vadd.f32 0.0, %v4000
    %v4002 = vpop.f32.mrb[0].mxu0
    %4003 = vdwg.mxu0
    %v4006 = vunpack.c.l.s4 1966171168
    %v4007 = vunpack.c.0.s8 %v4006
    %v4008 = vlaneseq
    %v4009 = vshrl.u32 %v4008, 7
    %v4010 = vsub.s32 %v4007, %v4009
    %v4011 = vrot.slane %v4001, %v4010
    %v4012 = vcombine.high %v4011, %v4011
    %v4014 = vunpack.c.l.s4 1966171168
    %v4015 = vunpack.c.0.s8 %v4014
    %v4016 = vlaneseq
    %v4017 = vshrl.u32 %v4016, 7
    %v4018 = vsub.s32 %v4015, %v4017
    %v4019 = vrot.slane %v4011, %v4018
    %v4021 = vunpack.c.l.s4 1966171168
    %v4022 = vunpack.c.0.s8 %v4021
    %v4023 = vlaneseq
    %v4024 = vshrl.u32 %v4023, 7
    %v4025 = vsub.s32 %v4022, %v4024
    %v4026 = vrot.slane %v4012, %v4025
    %v4027 = vlaneseq
    %v4028 = vshrl.u32 %v4027, 7
    %v4029 = vsub.s32 0, %v4028
    %v4030 = vrot.slane %v4019, %v4029
    %v4031 = vlaneseq
    %v4032 = vshrl.u32 %v4031, 7
    %v4033 = vsub.s32 0, %v4032
    %v4034 = vrot.slane %v4026, %v4033
    %v4037 = vadd.f32 %v4030, %v2756
    %v4038 = vadd.f32 %v4030, %v2757
    %v4039 = vadd.f32 %v4034, %v2758
    %v4040 = vadd.f32 %v4034, %v2759
    %v4041 = vtanh.pop %v4037
    %v4042 = vtanh.pop %v4038
    %v4043 = vtanh.pop %v4039
    %v4044 = vtanh.pop %v4040
    %v4045 = vmul.f32 %v4041, %v2902
    %v4046 = vmul.f32 %v4042, %v2902
    %v4047 = vmul.f32 %v4043, %v2902
    %v4048 = vmul.f32 %v4044, %v2902
    %v4049 = vsel %vm268, %v4045, 0.0
    %4050 = vadd.xlane.f32.xlu0 %v4049
    %v4051 = vpop.xlane.xlu0 %4050
    %v4052 = vsel %vm268, %v4046, 0.0
    %4053 = vadd.xlane.f32.xlu0 %v4052
    %v4054 = vpop.xlane.xlu0 %4053
    %v4055 = vsel %vm268, %v4047, 0.0
    %4056 = vadd.xlane.f32.xlu0 %v4055
    %v4057 = vpop.xlane.xlu0 %4056
    %v4058 = vsel %vm268, %v4048, 0.0
    %4059 = vadd.xlane.f32.xlu0 %v4058
    %v4060 = vpop.xlane.xlu0 %4059
    %v4065 = vlaneseq
    %v4066 = vshrl.u32 %v4065, 7
    %v4067 = vsub.s32 %v2925, %v4066
    %v4068 = vrot.slane %v4051, %v4067
    %v4069 = vlaneseq
    %v4070 = vshrl.u32 %v4069, 7
    %v4071 = vsub.s32 %v2930, %v4070
    %v4072 = vrot.slane %v4054, %v4071
    %v4073 = vsel %vm2935, %v4072, %v4068
    %v4074 = vlaneseq
    %v4075 = vshrl.u32 %v4074, 7
    %v4076 = vsub.s32 %v2925, %v4075
    %v4077 = vrot.slane %v4057, %v4076
    %v4078 = vlaneseq
    %v4079 = vshrl.u32 %v4078, 7
    %v4080 = vsub.s32 %v2930, %v4079
    %v4081 = vrot.slane %v4060, %v4080
    %v4082 = vsel %vm2935, %v4081, %v4077
    %v4083 = vsel %vm410, %v4082, %v4073
    %v4085 = vsel %vm2948, %v4083, -inf
    %4086 = vmax.xlane.f32.xlu0 %v4085
    %v4087 = vpop.xlane.xlu0 %4086
    %v4089 = vlaneseq
    %v4090 = vshrl.u32 %v4089, 7
    %v4091 = vsub.s32 0, %v4090
    %v4092 = vrot.slane %v4087, %v4091
    %v4093 = vlaneseq
    %v4094 = vshrl.u32 %v4093, 7
    %v4095 = vsub.s32 1, %v4094
    %v4096 = vrot.slane %v4087, %v4095
    %v4099 = vsub.f32 %v4051, %v4092
    %v4100 = vsub.f32 %v4054, %v4092
    %v4101 = vsub.f32 %v4057, %v4096
    %v4102 = vsub.f32 %v4060, %v4096
    %v4103 = vmul.f32 %v4099, 1.442695
    %v4104 = vpow.pop %v4103
    %v4105 = vmul.f32 %v4100, 1.442695
    %v4106 = vpow.pop %v4105
    %v4107 = vmul.f32 %v4101, 1.442695
    %v4108 = vpow.pop %v4107
    %v4109 = vmul.f32 %v4102, 1.442695
    %v4110 = vpow.pop %v4109
    %4115 = vset.pattern.permute.xlu0 0
    %4116 = vperm.xlu0 %4115, %v4104
    %v4117 = vpop.permute.xlu0 %4116
    %4118 = vset.pattern.permute.xlu0 0
    %4119 = vperm.xlu0 %4118, %v4106
    %v4120 = vpop.permute.xlu0 %4119
    %4121 = vset.pattern.permute.xlu0 0
    %4122 = vperm.xlu0 %4121, %v4108
    %v4123 = vpop.permute.xlu0 %4122
    %4124 = vset.pattern.permute.xlu0 0
    %4125 = vperm.xlu0 %4124, %v4110
    %v4126 = vpop.permute.xlu0 %4125
    %v4127 = vlaneseq
    %v4128 = vshrl.u32 %v4127, 7
    %v4129 = vsub.s32 %v2925, %v4128
    %v4130 = vrot.slane %v4117, %v4129
    %v4131 = vlaneseq
    %v4132 = vshrl.u32 %v4131, 7
    %v4133 = vsub.s32 %v2930, %v4132
    %v4134 = vrot.slane %v4120, %v4133
    %v4135 = vsel %vm2935, %v4134, %v4130
    %v4136 = vlaneseq
    %v4137 = vshrl.u32 %v4136, 7
    %v4138 = vsub.s32 %v2925, %v4137
    %v4139 = vrot.slane %v4123, %v4138
    %v4140 = vlaneseq
    %v4141 = vshrl.u32 %v4140, 7
    %v4142 = vsub.s32 %v2930, %v4141
    %v4143 = vrot.slane %v4126, %v4142
    %v4144 = vsel %vm2935, %v4143, %v4139
    %v4145 = vsel %vm410, %v4144, %v4135
    %v4147 = vsel %vm2948, %v4145, 0.0
    %4148 = vadd.xlane.f32.xlu0 %v4147
    %v4149 = vpop.xlane.xlu0 %4148
    %v4150 = vrcp.pop %v4149
    %v4152 = vlaneseq
    %v4153 = vshrl.u32 %v4152, 7
    %v4154 = vsub.s32 0, %v4153
    %v4155 = vrot.slane %v4150, %v4154
    %v4156 = vlaneseq
    %v4157 = vshrl.u32 %v4156, 7
    %v4158 = vsub.s32 1, %v4157
    %v4159 = vrot.slane %v4150, %v4158
    %v4162 = vmul.f32 %v4104, %v4155
    %v4163 = vmul.f32 %v4106, %v4155
    %v4164 = vmul.f32 %v4108, %v4159
    %v4165 = vmul.f32 %v4110, %v4159
    %4167 = vset.pattern.permute.xlu0 0
    %4168 = vperm.xlu0 %4167, %v4162
    %v4169 = vpop.permute.xlu0 %4168
    %4172 = vset.pattern.permute.xlu0 0
    %4173 = vperm.xlu0 %4172, %v4163
    %v4174 = vpop.permute.xlu0 %4173
    %4177 = vset.pattern.permute.xlu0 0
    %4178 = vperm.xlu0 %4177, %v4164
    %v4179 = vpop.permute.xlu0 %4178
    %4182 = vset.pattern.permute.xlu0 0
    %4183 = vperm.xlu0 %4182, %v4165
    %v4184 = vpop.permute.xlu0 %4183
    %v4186 = vmul.f32 %v4169, %v2644
    %v4187 = vmul.f32 %v4174, %v2645
    %v4188 = vmul.f32 %v4179, %v2646
    %v4189 = vmul.f32 %v4184, %v2647
    %v4190 = vsel %vm268, %v4186, 0.0
    %v4191 = vsel %vm268, %v4187, 0.0
    %v4192 = vadd.f32 %v4190, %v4191
    %v4193 = vrot.slane %v4192, 4
    %v4194 = vadd.f32 %v4192, %v4193
    %v4195 = vrot.slane %v4194, 2
    %v4196 = vadd.f32 %v4194, %v4195
    %v4197 = vrot.slane %v4196, 1
    %v4198 = vadd.f32 %v4196, %v4197
    %v4199 = vsel %vm268, %v4188, 0.0
    %v4200 = vsel %vm268, %v4189, 0.0
    %v4201 = vadd.f32 %v4199, %v4200
    %v4202 = vrot.slane %v4201, 4
    %v4203 = vadd.f32 %v4201, %v4202
    %v4204 = vrot.slane %v4203, 2
    %v4205 = vadd.f32 %v4203, %v4204
    %v4206 = vrot.slane %v4205, 1
    %v4207 = vadd.f32 %v4205, %v4206
    %s4208 = scalar_lea.vmem [#allocation4], 2
    %v4209 = vld [vmem:[%s4208] ss:$8 sm:$0x3]
    %s4210 = scalar_lea.vmem [#allocation4], 18
    %v4211 = vld [vmem:[%s4210] ss:$8 sm:$0x3]
    %v4214 = vsel %vm410, %v4207, %v4198
    %4216 = vrot.lane.b32.xlu0 %v3816, 64
    %v4217 = vpop.permute.xlu0 %4216
    %v4219 = vsel %vm268, %v4214, %v4217
    %v4221 = vsel %vm3083, %v4219, 0
    %4223 = vmatprep.subr.mxu0 0.0
    %4224 = vmatpush1.msra.mxu0 %v2765
    %4225 = vmatprep.subr.mxu0 0.0
    %4226 = vmatpush1.msra.mxu0 %v2766
    %4227 = vmatprep.subr.mxu0 0.0
    %4228 = vmatpush1.msra.mxu0 %v2767
    %4229 = vmatprep.subr.mxu0 0.0
    %4230 = vmatpush1.msra.mxu0 %v2768
    %4231 = vmatprep.subr.mxu0 0.0
    %4232 = vmatpush1.msra.mxu0 %v2769
    %4233 = vmatprep.subr.mxu0 0.0
    %4234 = vmatpush1.msra.mxu0 %v2770
    %4235 = vmatprep.subr.mxu0 0.0
    %4236 = vmatpush1.msra.mxu0 %v2771
    %4237 = vmatprep.subr.mxu0 0.0
    %4238 = vmatpush1.msra.mxu0 %v2772
    %4239 = vmatprep.subr.mxu0 0.0
    %4240 = vmatpush1.msra.mxu0 0.0
    %4241 = vmatprep.subr.mxu0 0.0
    %4242 = vmatpush1.msra.mxu0 0.0
    %4243 = vmatprep.subr.mxu0 0.0
    %4244 = vmatpush1.msra.mxu0 0.0
    %4245 = vmatprep.subr.mxu0 0.0
    %4246 = vmatpush1.msra.mxu0 0.0
    %4247 = vmatprep.subr.mxu0 0.0
    %4248 = vmatpush1.msra.mxu0 0.0
    %4249 = vmatprep.subr.mxu0 0.0
    %4250 = vmatpush1.msra.mxu0 0.0
    %4251 = vmatprep.subr.mxu0 0.0
    %4252 = vmatpush1.msra.mxu0 0.0
    %4253 = vmatprep.subr.mxu0 0.0
    %4254 = vmatpush1.msra.mxu0 0.0
    %4255 = vmatprep.subr.mxu0 0.0
    %4256 = vmatpush1.msra.mxu0 0.0
    %4257 = vmatprep.subr.mxu0 0.0
    %4258 = vmatpush1.msra.mxu0 0.0
    %4259 = vmatprep.subr.mxu0 0.0
    %4260 = vmatpush1.msra.mxu0 0.0
    %4261 = vmatprep.subr.mxu0 0.0
    %4262 = vmatpush1.msra.mxu0 0.0
    %4263 = vmatprep.subr.mxu0 0.0
    %4264 = vmatpush1.msra.mxu0 0.0
    %4265 = vmatprep.subr.mxu0 0.0
    %4266 = vmatpush1.msra.mxu0 0.0
    %4267 = vmatprep.subr.mxu0 0.0
    %4268 = vmatpush1.msra.mxu0 0.0
    %4269 = vmatprep.subr.mxu0 0.0
    %4270 = vmatpush1.msra.mxu0 0.0
    %4271 = vmatprep.subr.mxu0 0.0
    %4272 = vmatpush1.msra.mxu0 0.0
    %4273 = vmatprep.subr.mxu0 0.0
    %4274 = vmatpush1.msra.mxu0 0.0
    %4275 = vmatprep.subr.mxu0 0.0
    %4276 = vmatpush1.msra.mxu0 0.0
    %4277 = vmatprep.subr.mxu0 0.0
    %4278 = vmatpush1.msra.mxu0 0.0
    %4279 = vmatprep.subr.mxu0 0.0
    %4280 = vmatpush1.msra.mxu0 0.0
    %4281 = vmatprep.subr.mxu0 0.0
    %4282 = vmatpush1.msra.mxu0 0.0
    %4283 = vmatprep.subr.mxu0 0.0
    %4284 = vmatpush1.msra.mxu0 0.0
    %4285 = vmatprep.subr.mxu0 0.0
    %4286 = vmatpush1.msra.mxu0 0.0
    %4287 = vmatprep.mubr.f32.mxu0 0.0
    %4288 = vmatmul.mubr.f32.gmra.mrb[0].mxu0 %v4221
    %v4289 = vpop.f32.mrb[0].mxu0
    %v4290 = vadd.f32 0.0, %v4289
    %v4291 = vpop.f32.mrb[0].mxu0
    %4292 = vdwg.mxu0
    %v4295 = vunpack.c.l.s4 1966171168
    %v4296 = vunpack.c.0.s8 %v4295
    %v4297 = vlaneseq
    %v4298 = vshrl.u32 %v4297, 7
    %v4299 = vsub.s32 %v4296, %v4298
    %v4300 = vrot.slane %v4290, %v4299
    %v4301 = vcombine.high %v4300, %v4300
    %v4303 = vunpack.c.l.s4 1966171168
    %v4304 = vunpack.c.0.s8 %v4303
    %v4305 = vlaneseq
    %v4306 = vshrl.u32 %v4305, 7
    %v4307 = vsub.s32 %v4304, %v4306
    %v4308 = vrot.slane %v4300, %v4307
    %v4310 = vunpack.c.l.s4 1966171168
    %v4311 = vunpack.c.0.s8 %v4310
    %v4312 = vlaneseq
    %v4313 = vshrl.u32 %v4312, 7
    %v4314 = vsub.s32 %v4311, %v4313
    %v4315 = vrot.slane %v4301, %v4314
    %v4318 = vadd.f32 %v4209, %v4308
    %v4319 = vadd.f32 %v4211, %v4315
    %v4320 = vxor.u32 %v4318, 2147483648
    %v4321 = vxor.u32 %v4319, 2147483648
    %v4322 = vmul.f32 %v4320, 1.442695
    %v4323 = vpow.pop %v4322
    %v4324 = vmul.f32 %v4321, 1.442695
    %v4325 = vpow.pop %v4324
    %v4326 = vadd.f32 %v4323, 1.0
    %v4327 = vadd.f32 %v4325, 1.0
    %v4328 = vrcp.pop %v4326
    %v4329 = vmul.f32 1.0, %v4328
    %v4330 = vrcp.pop %v4327
    %v4331 = vmul.f32 1.0, %v4330
    %v4332 = vtanh.pop %v4318
    %v4333 = vtanh.pop %v4319
    %v4334 = vmul.f32 %v4329, %v3786
    %v4335 = vmul.f32 %v4331, %v3787
    %4338 = vrot.lane.b32.xlu0 %v4332, 64
    %v4339 = vpop.permute.xlu0 %4338
    %4340 = vrot.lane.b32.xlu0 %v4333, 64
    %v4341 = vpop.permute.xlu0 %4340
    %v4344 = vmul.f32 %v4329, %v4339
    %v4345 = vmul.f32 %v4331, %v4341
    %4348 = vrot.lane.b32.xlu0 %v4344, 32
    %v4349 = vpop.permute.xlu0 %4348
    %4350 = vrot.lane.b32.xlu0 %v4345, 32
    %v4351 = vpop.permute.xlu0 %4350
    %v4354 = vadd.f32 %v4334, %v4349
    %v4355 = vadd.f32 %v4335, %v4351
    %v4356 = vtanh.pop %v4354
    %v4357 = vtanh.pop %v4355
    %4360 = vrot.lane.b32.xlu0 %v4356, 64
    %v4361 = vpop.permute.xlu0 %4360
    %4362 = vrot.lane.b32.xlu0 %v4357, 64
    %v4363 = vpop.permute.xlu0 %4362
    %v4366 = vmul.f32 %v4329, %v4361
    %v4367 = vmul.f32 %v4331, %v4363
    %v4370 = vcombine.low %v4366, %v4367
    %v4372 = vunpack.c.l.s4 1966171168
    %v4373 = vunpack.c.0.s8 %v4372
    %v4374 = vlaneseq
    %v4375 = vshrl.u32 %v4374, 7
    %v4376 = vsub.s32 %v4373, %v4375
    %v4377 = vrot.slane %v4370, %v4376
    %v4379 = vunpack.c.l.s4 1966171168
    %v4380 = vunpack.c.0.s8 %v4379
    %v4381 = vlaneseq
    %v4382 = vshrl.u32 %v4381, 7
    %v4383 = vsub.s32 %v4380, %v4382
    %v4384 = vrot.slane %v4377, %v4383
    %4385 = vrot.lane.b32.xlu0 %v4384, 32
    %v4386 = vpop.permute.xlu0 %4385
    %4388 = vrot.lane.b32.xlu0 %v4214, 32
    %v4389 = vpop.permute.xlu0 %4388
    %v4391 = vsel %vm268, %v4386, %v4389
    %v4393 = vsel %vm3083, %v4391, 0
    %4395 = vmatprep.subr.mxu0 0.0
    %4396 = vmatpush1.msra.mxu0 %v2773
    %4397 = vmatprep.subr.mxu0 0.0
    %4398 = vmatpush1.msra.mxu0 %v2774
    %4399 = vmatprep.subr.mxu0 0.0
    %4400 = vmatpush1.msra.mxu0 %v2775
    %4401 = vmatprep.subr.mxu0 0.0
    %4402 = vmatpush1.msra.mxu0 %v2776
    %4403 = vmatprep.subr.mxu0 0.0
    %4404 = vmatpush1.msra.mxu0 %v2777
    %4405 = vmatprep.subr.mxu0 0.0
    %4406 = vmatpush1.msra.mxu0 %v2778
    %4407 = vmatprep.subr.mxu0 0.0
    %4408 = vmatpush1.msra.mxu0 %v2779
    %4409 = vmatprep.subr.mxu0 0.0
    %4410 = vmatpush1.msra.mxu0 %v2780
    %4411 = vmatprep.subr.mxu0 0.0
    %4412 = vmatpush1.msra.mxu0 0.0
    %4413 = vmatprep.subr.mxu0 0.0
    %4414 = vmatpush1.msra.mxu0 0.0
    %4415 = vmatprep.subr.mxu0 0.0
    %4416 = vmatpush1.msra.mxu0 0.0
    %4417 = vmatprep.subr.mxu0 0.0
    %4418 = vmatpush1.msra.mxu0 0.0
    %4419 = vmatprep.subr.mxu0 0.0
    %4420 = vmatpush1.msra.mxu0 0.0
    %4421 = vmatprep.subr.mxu0 0.0
    %4422 = vmatpush1.msra.mxu0 0.0
    %4423 = vmatprep.subr.mxu0 0.0
    %4424 = vmatpush1.msra.mxu0 0.0
    %4425 = vmatprep.subr.mxu0 0.0
    %4426 = vmatpush1.msra.mxu0 0.0
    %4427 = vmatprep.subr.mxu0 0.0
    %4428 = vmatpush1.msra.mxu0 0.0
    %4429 = vmatprep.subr.mxu0 0.0
    %4430 = vmatpush1.msra.mxu0 0.0
    %4431 = vmatprep.subr.mxu0 0.0
    %4432 = vmatpush1.msra.mxu0 0.0
    %4433 = vmatprep.subr.mxu0 0.0
    %4434 = vmatpush1.msra.mxu0 0.0
    %4435 = vmatprep.subr.mxu0 0.0
    %4436 = vmatpush1.msra.mxu0 0.0
    %4437 = vmatprep.subr.mxu0 0.0
    %4438 = vmatpush1.msra.mxu0 0.0
    %4439 = vmatprep.subr.mxu0 0.0
    %4440 = vmatpush1.msra.mxu0 0.0
    %4441 = vmatprep.subr.mxu0 0.0
    %4442 = vmatpush1.msra.mxu0 0.0
    %4443 = vmatprep.subr.mxu0 0.0
    %4444 = vmatpush1.msra.mxu0 0.0
    %4445 = vmatprep.subr.mxu0 0.0
    %4446 = vmatpush1.msra.mxu0 0.0
    %4447 = vmatprep.subr.mxu0 0.0
    %4448 = vmatpush1.msra.mxu0 0.0
    %4449 = vmatprep.subr.mxu0 0.0
    %4450 = vmatpush1.msra.mxu0 0.0
    %4451 = vmatprep.subr.mxu0 0.0
    %4452 = vmatpush1.msra.mxu0 0.0
    %4453 = vmatprep.subr.mxu0 0.0
    %4454 = vmatpush1.msra.mxu0 0.0
    %4455 = vmatprep.subr.mxu0 0.0
    %4456 = vmatpush1.msra.mxu0 0.0
    %4457 = vmatprep.subr.mxu0 0.0
    %4458 = vmatpush1.msra.mxu0 0.0
    %4459 = vmatprep.mubr.f32.mxu0 0.0
    %4460 = vmatmul.mubr.f32.gmra.mrb[0].mxu0 %v4393
    %v4461 = vpop.f32.mrb[0].mxu0
    %v4462 = vadd.f32 0.0, %v4461
    %v4463 = vpop.f32.mrb[0].mxu0
    %4464 = vdwg.mxu0
    %v4467 = vrot.slane %v4209, 1
    %v4468 = vrot.slane %v4211, 1
    %v4473 = vunpack.c.l.s4 1966171168
    %v4474 = vunpack.c.0.s8 %v4473
    %v4475 = vlaneseq
    %v4476 = vshrl.u32 %v4475, 7
    %v4477 = vsub.s32 %v4474, %v4476
    %v4478 = vrot.slane %v4462, %v4477
    %v4479 = vcombine.high %v4478, %v4478
    %v4481 = vunpack.c.l.s4 1966171168
    %v4482 = vunpack.c.0.s8 %v4481
    %v4483 = vlaneseq
    %v4484 = vshrl.u32 %v4483, 7
    %v4485 = vsub.s32 %v4482, %v4484
    %v4486 = vrot.slane %v4478, %v4485
    %v4488 = vunpack.c.l.s4 1966171168
    %v4489 = vunpack.c.0.s8 %v4488
    %v4490 = vlaneseq
    %v4491 = vshrl.u32 %v4490, 7
    %v4492 = vsub.s32 %v4489, %v4491
    %v4493 = vrot.slane %v4479, %v4492
    %v4496 = vadd.f32 %v4467, %v4486
    %v4497 = vadd.f32 %v4468, %v4493
    %4498 = vst [vmem:[#allocation19 + $0x2] sm:$0x1] %v4496
    %4499 = vst [vmem:[#allocation19 + $0xa] sm:$0x1] %v4497
    %v4500 = vsel %vm268, %v4386, 0
    %4502 = vmatprep.subr.mxu0 0.0
    %4503 = vmatpush1.msra.mxu0 %v2761
    %4504 = vmatprep.subr.mxu0 0.0
    %4505 = vmatpush1.msra.mxu0 %v2762
    %4506 = vmatprep.subr.mxu0 0.0
    %4507 = vmatpush1.msra.mxu0 %v2763
    %4508 = vmatprep.subr.mxu0 0.0
    %4509 = vmatpush1.msra.mxu0 %v2764
    %4510 = vmatprep.subr.mxu0 0.0
    %4511 = vmatpush1.msra.mxu0 0.0
    %4512 = vmatprep.subr.mxu0 0.0
    %4513 = vmatpush1.msra.mxu0 0.0
    %4514 = vmatprep.subr.mxu0 0.0
    %4515 = vmatpush1.msra.mxu0 0.0
    %4516 = vmatprep.subr.mxu0 0.0
    %4517 = vmatpush1.msra.mxu0 0.0
    %4518 = vmatprep.subr.mxu0 0.0
    %4519 = vmatpush1.msra.mxu0 0.0
    %4520 = vmatprep.subr.mxu0 0.0
    %4521 = vmatpush1.msra.mxu0 0.0
    %4522 = vmatprep.subr.mxu0 0.0
    %4523 = vmatpush1.msra.mxu0 0.0
    %4524 = vmatprep.subr.mxu0 0.0
    %4525 = vmatpush1.msra.mxu0 0.0
    %4526 = vmatprep.subr.mxu0 0.0
    %4527 = vmatpush1.msra.mxu0 0.0
    %4528 = vmatprep.subr.mxu0 0.0
    %4529 = vmatpush1.msra.mxu0 0.0
    %4530 = vmatprep.subr.mxu0 0.0
    %4531 = vmatpush1.msra.mxu0 0.0
    %4532 = vmatprep.subr.mxu0 0.0
    %4533 = vmatpush1.msra.mxu0 0.0
    %4534 = vmatprep.subr.mxu0 0.0
    %4535 = vmatpush1.msra.mxu0 0.0
    %4536 = vmatprep.subr.mxu0 0.0
    %4537 = vmatpush1.msra.mxu0 0.0
    %4538 = vmatprep.subr.mxu0 0.0
    %4539 = vmatpush1.msra.mxu0 0.0
    %4540 = vmatprep.subr.mxu0 0.0
    %4541 = vmatpush1.msra.mxu0 0.0
    %4542 = vmatprep.subr.mxu0 0.0
    %4543 = vmatpush1.msra.mxu0 0.0
    %4544 = vmatprep.subr.mxu0 0.0
    %4545 = vmatpush1.msra.mxu0 0.0
    %4546 = vmatprep.subr.mxu0 0.0
    %4547 = vmatpush1.msra.mxu0 0.0
    %4548 = vmatprep.subr.mxu0 0.0
    %4549 = vmatpush1.msra.mxu0 0.0
    %4550 = vmatprep.subr.mxu0 0.0
    %4551 = vmatpush1.msra.mxu0 0.0
    %4552 = vmatprep.subr.mxu0 0.0
    %4553 = vmatpush1.msra.mxu0 0.0
    %4554 = vmatprep.subr.mxu0 0.0
    %4555 = vmatpush1.msra.mxu0 0.0
    %4556 = vmatprep.subr.mxu0 0.0
    %4557 = vmatpush1.msra.mxu0 0.0
    %4558 = vmatprep.subr.mxu0 0.0
    %4559 = vmatpush1.msra.mxu0 0.0
    %4560 = vmatprep.subr.mxu0 0.0
    %4561 = vmatpush1.msra.mxu0 0.0
    %4562 = vmatprep.subr.mxu0 0.0
    %4563 = vmatpush1.msra.mxu0 0.0
    %4564 = vmatprep.subr.mxu0 0.0
    %4565 = vmatpush1.msra.mxu0 0.0
    %4566 = vmatprep.mubr.f32.mxu0 0.0
    %4567 = vmatmul.mubr.f32.gmra.mrb[0].mxu0 %v4500
    %v4568 = vpop.f32.mrb[0].mxu0
    %v4569 = vadd.f32 0.0, %v4568
    %v4570 = vpop.f32.mrb[0].mxu0
    %4571 = vdwg.mxu0
    %v4574 = vunpack.c.l.s4 1966171168
    %v4575 = vunpack.c.0.s8 %v4574
    %v4576 = vlaneseq
    %v4577 = vshrl.u32 %v4576, 7
    %v4578 = vsub.s32 %v4575, %v4577
    %v4579 = vrot.slane %v4569, %v4578
    %v4580 = vcombine.high %v4579, %v4579
    %v4582 = vunpack.c.l.s4 1966171168
    %v4583 = vunpack.c.0.s8 %v4582
    %v4584 = vlaneseq
    %v4585 = vshrl.u32 %v4584, 7
    %v4586 = vsub.s32 %v4583, %v4585
    %v4587 = vrot.slane %v4579, %v4586
    %v4589 = vunpack.c.l.s4 1966171168
    %v4590 = vunpack.c.0.s8 %v4589
    %v4591 = vlaneseq
    %v4592 = vshrl.u32 %v4591, 7
    %v4593 = vsub.s32 %v4590, %v4592
    %v4594 = vrot.slane %v4580, %v4593
    %v4595 = vlaneseq
    %v4596 = vshrl.u32 %v4595, 7
    %v4597 = vsub.s32 0, %v4596
    %v4598 = vrot.slane %v4587, %v4597
    %v4599 = vlaneseq
    %v4600 = vshrl.u32 %v4599, 7
    %v4601 = vsub.s32 0, %v4600
    %v4602 = vrot.slane %v4594, %v4601
    %v4605 = vadd.f32 %v4598, %v2756
    %v4606 = vadd.f32 %v4598, %v2757
    %v4607 = vadd.f32 %v4602, %v2758
    %v4608 = vadd.f32 %v4602, %v2759
    %v4609 = vtanh.pop %v4605
    %v4610 = vtanh.pop %v4606
    %v4611 = vtanh.pop %v4607
    %v4612 = vtanh.pop %v4608
    %v4613 = vmul.f32 %v4609, %v2902
    %v4614 = vmul.f32 %v4610, %v2902
    %v4615 = vmul.f32 %v4611, %v2902
    %v4616 = vmul.f32 %v4612, %v2902
    %v4617 = vsel %vm268, %v4613, 0.0
    %4618 = vadd.xlane.f32.xlu0 %v4617
    %v4619 = vpop.xlane.xlu0 %4618
    %v4620 = vsel %vm268, %v4614, 0.0
    %4621 = vadd.xlane.f32.xlu0 %v4620
    %v4622 = vpop.xlane.xlu0 %4621
    %v4623 = vsel %vm268, %v4615, 0.0
    %4624 = vadd.xlane.f32.xlu0 %v4623
    %v4625 = vpop.xlane.xlu0 %4624
    %v4626 = vsel %vm268, %v4616, 0.0
    %4627 = vadd.xlane.f32.xlu0 %v4626
    %v4628 = vpop.xlane.xlu0 %4627
    %v4633 = vlaneseq
    %v4634 = vshrl.u32 %v4633, 7
    %v4635 = vsub.s32 %v2925, %v4634
    %v4636 = vrot.slane %v4619, %v4635
    %v4637 = vlaneseq
    %v4638 = vshrl.u32 %v4637, 7
    %v4639 = vsub.s32 %v2930, %v4638
    %v4640 = vrot.slane %v4622, %v4639
    %v4641 = vsel %vm2935, %v4640, %v4636
    %v4642 = vlaneseq
    %v4643 = vshrl.u32 %v4642, 7
    %v4644 = vsub.s32 %v2925, %v4643
    %v4645 = vrot.slane %v4625, %v4644
    %v4646 = vlaneseq
    %v4647 = vshrl.u32 %v4646, 7
    %v4648 = vsub.s32 %v2930, %v4647
    %v4649 = vrot.slane %v4628, %v4648
    %v4650 = vsel %vm2935, %v4649, %v4645
    %v4651 = vsel %vm410, %v4650, %v4641
    %v4653 = vsel %vm2948, %v4651, -inf
    %4654 = vmax.xlane.f32.xlu0 %v4653
    %v4655 = vpop.xlane.xlu0 %4654
    %v4657 = vlaneseq
    %v4658 = vshrl.u32 %v4657, 7
    %v4659 = vsub.s32 0, %v4658
    %v4660 = vrot.slane %v4655, %v4659
    %v4661 = vlaneseq
    %v4662 = vshrl.u32 %v4661, 7
    %v4663 = vsub.s32 1, %v4662
    %v4664 = vrot.slane %v4655, %v4663
    %v4667 = vsub.f32 %v4619, %v4660
    %v4668 = vsub.f32 %v4622, %v4660
    %v4669 = vsub.f32 %v4625, %v4664
    %v4670 = vsub.f32 %v4628, %v4664
    %v4671 = vmul.f32 %v4667, 1.442695
    %v4672 = vpow.pop %v4671
    %v4673 = vmul.f32 %v4668, 1.442695
    %v4674 = vpow.pop %v4673
    %v4675 = vmul.f32 %v4669, 1.442695
    %v4676 = vpow.pop %v4675
    %v4677 = vmul.f32 %v4670, 1.442695
    %v4678 = vpow.pop %v4677
    %4683 = vset.pattern.permute.xlu0 0
    %4684 = vperm.xlu0 %4683, %v4672
    %v4685 = vpop.permute.xlu0 %4684
    %4686 = vset.pattern.permute.xlu0 0
    %4687 = vperm.xlu0 %4686, %v4674
    %v4688 = vpop.permute.xlu0 %4687
    %4689 = vset.pattern.permute.xlu0 0
    %4690 = vperm.xlu0 %4689, %v4676
    %v4691 = vpop.permute.xlu0 %4690
    %4692 = vset.pattern.permute.xlu0 0
    %4693 = vperm.xlu0 %4692, %v4678
    %v4694 = vpop.permute.xlu0 %4693
    %v4695 = vlaneseq
    %v4696 = vshrl.u32 %v4695, 7
    %v4697 = vsub.s32 %v2925, %v4696
    %v4698 = vrot.slane %v4685, %v4697
    %v4699 = vlaneseq
    %v4700 = vshrl.u32 %v4699, 7
    %v4701 = vsub.s32 %v2930, %v4700
    %v4702 = vrot.slane %v4688, %v4701
    %v4703 = vsel %vm2935, %v4702, %v4698
    %v4704 = vlaneseq
    %v4705 = vshrl.u32 %v4704, 7
    %v4706 = vsub.s32 %v2925, %v4705
    %v4707 = vrot.slane %v4691, %v4706
    %v4708 = vlaneseq
    %v4709 = vshrl.u32 %v4708, 7
    %v4710 = vsub.s32 %v2930, %v4709
    %v4711 = vrot.slane %v4694, %v4710
    %v4712 = vsel %vm2935, %v4711, %v4707
    %v4713 = vsel %vm410, %v4712, %v4703
    %v4715 = vsel %vm2948, %v4713, 0.0
    %4716 = vadd.xlane.f32.xlu0 %v4715
    %v4717 = vpop.xlane.xlu0 %4716
    %v4718 = vrcp.pop %v4717
    %v4720 = vlaneseq
    %v4721 = vshrl.u32 %v4720, 7
    %v4722 = vsub.s32 0, %v4721
    %v4723 = vrot.slane %v4718, %v4722
    %v4724 = vlaneseq
    %v4725 = vshrl.u32 %v4724, 7
    %v4726 = vsub.s32 1, %v4725
    %v4727 = vrot.slane %v4718, %v4726
    %v4730 = vmul.f32 %v4672, %v4723
    %v4731 = vmul.f32 %v4674, %v4723
    %v4732 = vmul.f32 %v4676, %v4727
    %v4733 = vmul.f32 %v4678, %v4727
    %4735 = vset.pattern.permute.xlu0 0
    %4736 = vperm.xlu0 %4735, %v4730
    %v4737 = vpop.permute.xlu0 %4736
    %4740 = vset.pattern.permute.xlu0 0
    %4741 = vperm.xlu0 %4740, %v4731
    %v4742 = vpop.permute.xlu0 %4741
    %4745 = vset.pattern.permute.xlu0 0
    %4746 = vperm.xlu0 %4745, %v4732
    %v4747 = vpop.permute.xlu0 %4746
    %4750 = vset.pattern.permute.xlu0 0
    %4751 = vperm.xlu0 %4750, %v4733
    %v4752 = vpop.permute.xlu0 %4751
    %v4754 = vmul.f32 %v4737, %v2644
    %v4755 = vmul.f32 %v4742, %v2645
    %v4756 = vmul.f32 %v4747, %v2646
    %v4757 = vmul.f32 %v4752, %v2647
    %v4758 = vsel %vm268, %v4754, 0.0
    %v4759 = vsel %vm268, %v4755, 0.0
    %v4760 = vadd.f32 %v4758, %v4759
    %v4761 = vrot.slane %v4760, 4
    %v4762 = vadd.f32 %v4760, %v4761
    %v4763 = vrot.slane %v4762, 2
    %v4764 = vadd.f32 %v4762, %v4763
    %v4765 = vrot.slane %v4764, 1
    %v4766 = vadd.f32 %v4764, %v4765
    %v4767 = vsel %vm268, %v4756, 0.0
    %v4768 = vsel %vm268, %v4757, 0.0
    %v4769 = vadd.f32 %v4767, %v4768
    %v4770 = vrot.slane %v4769, 4
    %v4771 = vadd.f32 %v4769, %v4770
    %v4772 = vrot.slane %v4771, 2
    %v4773 = vadd.f32 %v4771, %v4772
    %v4774 = vrot.slane %v4773, 1
    %v4775 = vadd.f32 %v4773, %v4774
    %s4776 = scalar_lea.vmem [#allocation4], 3
    %v4777 = vld [vmem:[%s4776] ss:$8 sm:$0x3]
    %s4778 = scalar_lea.vmem [#allocation4], 19
    %v4779 = vld [vmem:[%s4778] ss:$8 sm:$0x3]
    %v4782 = vsel %vm410, %v4775, %v4766
    %4784 = vrot.lane.b32.xlu0 %v4384, 64
    %v4785 = vpop.permute.xlu0 %4784
    %v4787 = vsel %vm268, %v4782, %v4785
    %v4789 = vsel %vm3083, %v4787, 0
    %4791 = vmatprep.subr.mxu0 0.0
    %4792 = vmatpush1.msra.mxu0 %v2765
    %4793 = vmatprep.subr.mxu0 0.0
    %4794 = vmatpush1.msra.mxu0 %v2766
    %4795 = vmatprep.subr.mxu0 0.0
    %4796 = vmatpush1.msra.mxu0 %v2767
    %4797 = vmatprep.subr.mxu0 0.0
    %4798 = vmatpush1.msra.mxu0 %v2768
    %4799 = vmatprep.subr.mxu0 0.0
    %4800 = vmatpush1.msra.mxu0 %v2769
    %4801 = vmatprep.subr.mxu0 0.0
    %4802 = vmatpush1.msra.mxu0 %v2770
    %4803 = vmatprep.subr.mxu0 0.0
    %4804 = vmatpush1.msra.mxu0 %v2771
    %4805 = vmatprep.subr.mxu0 0.0
    %4806 = vmatpush1.msra.mxu0 %v2772
    %4807 = vmatprep.subr.mxu0 0.0
    %4808 = vmatpush1.msra.mxu0 0.0
    %4809 = vmatprep.subr.mxu0 0.0
    %4810 = vmatpush1.msra.mxu0 0.0
    %4811 = vmatprep.subr.mxu0 0.0
    %4812 = vmatpush1.msra.mxu0 0.0
    %4813 = vmatprep.subr.mxu0 0.0
    %4814 = vmatpush1.msra.mxu0 0.0
    %4815 = vmatprep.subr.mxu0 0.0
    %4816 = vmatpush1.msra.mxu0 0.0
    %4817 = vmatprep.subr.mxu0 0.0
    %4818 = vmatpush1.msra.mxu0 0.0
    %4819 = vmatprep.subr.mxu0 0.0
    %4820 = vmatpush1.msra.mxu0 0.0
    %4821 = vmatprep.subr.mxu0 0.0
    %4822 = vmatpush1.msra.mxu0 0.0
    %4823 = vmatprep.subr.mxu0 0.0
    %4824 = vmatpush1.msra.mxu0 0.0
    %4825 = vmatprep.subr.mxu0 0.0
    %4826 = vmatpush1.msra.mxu0 0.0
    %4827 = vmatprep.subr.mxu0 0.0
    %4828 = vmatpush1.msra.mxu0 0.0
    %4829 = vmatprep.subr.mxu0 0.0
    %4830 = vmatpush1.msra.mxu0 0.0
    %4831 = vmatprep.subr.mxu0 0.0
    %4832 = vmatpush1.msra.mxu0 0.0
    %4833 = vmatprep.subr.mxu0 0.0
    %4834 = vmatpush1.msra.mxu0 0.0
    %4835 = vmatprep.subr.mxu0 0.0
    %4836 = vmatpush1.msra.mxu0 0.0
    %4837 = vmatprep.subr.mxu0 0.0
    %4838 = vmatpush1.msra.mxu0 0.0
    %4839 = vmatprep.subr.mxu0 0.0
    %4840 = vmatpush1.msra.mxu0 0.0
    %4841 = vmatprep.subr.mxu0 0.0
    %4842 = vmatpush1.msra.mxu0 0.0
    %4843 = vmatprep.subr.mxu0 0.0
    %4844 = vmatpush1.msra.mxu0 0.0
    %4845 = vmatprep.subr.mxu0 0.0
    %4846 = vmatpush1.msra.mxu0 0.0
    %4847 = vmatprep.subr.mxu0 0.0
    %4848 = vmatpush1.msra.mxu0 0.0
    %4849 = vmatprep.subr.mxu0 0.0
    %4850 = vmatpush1.msra.mxu0 0.0
    %4851 = vmatprep.subr.mxu0 0.0
    %4852 = vmatpush1.msra.mxu0 0.0
    %4853 = vmatprep.subr.mxu0 0.0
    %4854 = vmatpush1.msra.mxu0 0.0
    %4855 = vmatprep.mubr.f32.mxu0 0.0
    %4856 = vmatmul.mubr.f32.gmra.mrb[0].mxu0 %v4789
    %v4857 = vpop.f32.mrb[0].mxu0
    %v4858 = vadd.f32 0.0, %v4857
    %v4859 = vpop.f32.mrb[0].mxu0
    %4860 = vdwg.mxu0
    %v4863 = vunpack.c.l.s4 1966171168
    %v4864 = vunpack.c.0.s8 %v4863
    %v4865 = vlaneseq
    %v4866 = vshrl.u32 %v4865, 7
    %v4867 = vsub.s32 %v4864, %v4866
    %v4868 = vrot.slane %v4858, %v4867
    %v4869 = vcombine.high %v4868, %v4868
    %v4871 = vunpack.c.l.s4 1966171168
    %v4872 = vunpack.c.0.s8 %v4871
    %v4873 = vlaneseq
    %v4874 = vshrl.u32 %v4873, 7
    %v4875 = vsub.s32 %v4872, %v4874
    %v4876 = vrot.slane %v4868, %v4875
    %v4878 = vunpack.c.l.s4 1966171168
    %v4879 = vunpack.c.0.s8 %v4878
    %v4880 = vlaneseq
    %v4881 = vshrl.u32 %v4880, 7
    %v4882 = vsub.s32 %v4879, %v4881
    %v4883 = vrot.slane %v4869, %v4882
    %v4886 = vadd.f32 %v4777, %v4876
    %v4887 = vadd.f32 %v4779, %v4883
    %v4888 = vxor.u32 %v4886, 2147483648
    %v4889 = vxor.u32 %v4887, 2147483648
    %v4890 = vmul.f32 %v4888, 1.442695
    %v4891 = vpow.pop %v4890
    %v4892 = vmul.f32 %v4889, 1.442695
    %v4893 = vpow.pop %v4892
    %v4894 = vadd.f32 %v4891, 1.0
    %v4895 = vadd.f32 %v4893, 1.0
    %v4896 = vrcp.pop %v4894
    %v4897 = vmul.f32 1.0, %v4896
    %v4898 = vrcp.pop %v4895
    %v4899 = vmul.f32 1.0, %v4898
    %v4900 = vtanh.pop %v4886
    %v4901 = vtanh.pop %v4887
    %v4902 = vmul.f32 %v4897, %v4354
    %v4903 = vmul.f32 %v4899, %v4355
    %4906 = vrot.lane.b32.xlu0 %v4900, 64
    %v4907 = vpop.permute.xlu0 %4906
    %4908 = vrot.lane.b32.xlu0 %v4901, 64
    %v4909 = vpop.permute.xlu0 %4908
    %v4912 = vmul.f32 %v4897, %v4907
    %v4913 = vmul.f32 %v4899, %v4909
    %4916 = vrot.lane.b32.xlu0 %v4912, 32
    %v4917 = vpop.permute.xlu0 %4916
    %4918 = vrot.lane.b32.xlu0 %v4913, 32
    %v4919 = vpop.permute.xlu0 %4918
    %v4922 = vadd.f32 %v4902, %v4917
    %v4923 = vadd.f32 %v4903, %v4919
    %v4924 = vtanh.pop %v4922
    %v4925 = vtanh.pop %v4923
    %4928 = vrot.lane.b32.xlu0 %v4924, 64
    %v4929 = vpop.permute.xlu0 %4928
    %4930 = vrot.lane.b32.xlu0 %v4925, 64
    %v4931 = vpop.permute.xlu0 %4930
    %v4934 = vmul.f32 %v4897, %v4929
    %v4935 = vmul.f32 %v4899, %v4931
    %v4938 = vcombine.low %v4934, %v4935
    %v4940 = vunpack.c.l.s4 1966171168
    %v4941 = vunpack.c.0.s8 %v4940
    %v4942 = vlaneseq
    %v4943 = vshrl.u32 %v4942, 7
    %v4944 = vsub.s32 %v4941, %v4943
    %v4945 = vrot.slane %v4938, %v4944
    %v4947 = vunpack.c.l.s4 1966171168
    %v4948 = vunpack.c.0.s8 %v4947
    %v4949 = vlaneseq
    %v4950 = vshrl.u32 %v4949, 7
    %v4951 = vsub.s32 %v4948, %v4950
    %v4952 = vrot.slane %v4945, %v4951
    %4953 = vrot.lane.b32.xlu0 %v4952, 32
    %v4954 = vpop.permute.xlu0 %4953
    %4956 = vrot.lane.b32.xlu0 %v4782, 32
    %v4957 = vpop.permute.xlu0 %4956
    %v4959 = vsel %vm268, %v4954, %v4957
    %v4961 = vsel %vm3083, %v4959, 0
    %4963 = vmatprep.subr.mxu0 0.0
    %4964 = vmatpush1.msra.mxu0 %v2773
    %4965 = vmatprep.subr.mxu0 0.0
    %4966 = vmatpush1.msra.mxu0 %v2774
    %4967 = vmatprep.subr.mxu0 0.0
    %4968 = vmatpush1.msra.mxu0 %v2775
    %4969 = vmatprep.subr.mxu0 0.0
    %4970 = vmatpush1.msra.mxu0 %v2776
    %4971 = vmatprep.subr.mxu0 0.0
    %4972 = vmatpush1.msra.mxu0 %v2777
    %4973 = vmatprep.subr.mxu0 0.0
    %4974 = vmatpush1.msra.mxu0 %v2778
    %4975 = vmatprep.subr.mxu0 0.0
    %4976 = vmatpush1.msra.mxu0 %v2779
    %4977 = vmatprep.subr.mxu0 0.0
    %4978 = vmatpush1.msra.mxu0 %v2780
    %4979 = vmatprep.subr.mxu0 0.0
    %4980 = vmatpush1.msra.mxu0 0.0
    %4981 = vmatprep.subr.mxu0 0.0
    %4982 = vmatpush1.msra.mxu0 0.0
    %4983 = vmatprep.subr.mxu0 0.0
    %4984 = vmatpush1.msra.mxu0 0.0
    %4985 = vmatprep.subr.mxu0 0.0
    %4986 = vmatpush1.msra.mxu0 0.0
    %4987 = vmatprep.subr.mxu0 0.0
    %4988 = vmatpush1.msra.mxu0 0.0
    %4989 = vmatprep.subr.mxu0 0.0
    %4990 = vmatpush1.msra.mxu0 0.0
    %4991 = vmatprep.subr.mxu0 0.0
    %4992 = vmatpush1.msra.mxu0 0.0
    %4993 = vmatprep.subr.mxu0 0.0
    %4994 = vmatpush1.msra.mxu0 0.0
    %4995 = vmatprep.subr.mxu0 0.0
    %4996 = vmatpush1.msra.mxu0 0.0
    %4997 = vmatprep.subr.mxu0 0.0
    %4998 = vmatpush1.msra.mxu0 0.0
    %4999 = vmatprep.subr.mxu0 0.0
    %5000 = vmatpush1.msra.mxu0 0.0
    %5001 = vmatprep.subr.mxu0 0.0
    %5002 = vmatpush1.msra.mxu0 0.0
    %5003 = vmatprep.subr.mxu0 0.0
    %5004 = vmatpush1.msra.mxu0 0.0
    %5005 = vmatprep.subr.mxu0 0.0
    %5006 = vmatpush1.msra.mxu0 0.0
    %5007 = vmatprep.subr.mxu0 0.0
    %5008 = vmatpush1.msra.mxu0 0.0
    %5009 = vmatprep.subr.mxu0 0.0
    %5010 = vmatpush1.msra.mxu0 0.0
    %5011 = vmatprep.subr.mxu0 0.0
    %5012 = vmatpush1.msra.mxu0 0.0
    %5013 = vmatprep.subr.mxu0 0.0
    %5014 = vmatpush1.msra.mxu0 0.0
    %5015 = vmatprep.subr.mxu0 0.0
    %5016 = vmatpush1.msra.mxu0 0.0
    %5017 = vmatprep.subr.mxu0 0.0
    %5018 = vmatpush1.msra.mxu0 0.0
    %5019 = vmatprep.subr.mxu0 0.0
    %5020 = vmatpush1.msra.mxu0 0.0
    %5021 = vmatprep.subr.mxu0 0.0
    %5022 = vmatpush1.msra.mxu0 0.0
    %5023 = vmatprep.subr.mxu0 0.0
    %5024 = vmatpush1.msra.mxu0 0.0
    %5025 = vmatprep.subr.mxu0 0.0
    %5026 = vmatpush1.msra.mxu0 0.0
    %5027 = vmatprep.mubr.f32.mxu0 0.0
    %5028 = vmatmul.mubr.f32.gmra.mrb[0].mxu0 %v4961
    %v5029 = vpop.f32.mrb[0].mxu0
    %v5030 = vadd.f32 0.0, %v5029
    %v5031 = vpop.f32.mrb[0].mxu0
    %5032 = vdwg.mxu0
    %v5035 = vrot.slane %v4777, 1
    %v5036 = vrot.slane %v4779, 1
    %v5041 = vunpack.c.l.s4 1966171168
    %v5042 = vunpack.c.0.s8 %v5041
    %v5043 = vlaneseq
    %v5044 = vshrl.u32 %v5043, 7
    %v5045 = vsub.s32 %v5042, %v5044
    %v5046 = vrot.slane %v5030, %v5045
    %v5047 = vcombine.high %v5046, %v5046
    %v5049 = vunpack.c.l.s4 1966171168
    %v5050 = vunpack.c.0.s8 %v5049
    %v5051 = vlaneseq
    %v5052 = vshrl.u32 %v5051, 7
    %v5053 = vsub.s32 %v5050, %v5052
    %v5054 = vrot.slane %v5046, %v5053
    %v5056 = vunpack.c.l.s4 1966171168
    %v5057 = vunpack.c.0.s8 %v5056
    %v5058 = vlaneseq
    %v5059 = vshrl.u32 %v5058, 7
    %v5060 = vsub.s32 %v5057, %v5059
    %v5061 = vrot.slane %v5047, %v5060
    %v5064 = vadd.f32 %v5035, %v5054
    %v5065 = vadd.f32 %v5036, %v5061
    %5066 = vst [vmem:[#allocation19 + $0x3] sm:$0x1] %v5064
    %5067 = vst [vmem:[#allocation19 + $0xb] sm:$0x1] %v5065
    %v5068 = vsel %vm268, %v4954, 0
    %5070 = vmatprep.subr.mxu0 0.0
    %5071 = vmatpush1.msra.mxu0 %v2761
    %5072 = vmatprep.subr.mxu0 0.0
    %5073 = vmatpush1.msra.mxu0 %v2762
    %5074 = vmatprep.subr.mxu0 0.0
    %5075 = vmatpush1.msra.mxu0 %v2763
    %5076 = vmatprep.subr.mxu0 0.0
    %5077 = vmatpush1.msra.mxu0 %v2764
    %5078 = vmatprep.subr.mxu0 0.0
    %5079 = vmatpush1.msra.mxu0 0.0
    %5080 = vmatprep.subr.mxu0 0.0
    %5081 = vmatpush1.msra.mxu0 0.0
    %5082 = vmatprep.subr.mxu0 0.0
    %5083 = vmatpush1.msra.mxu0 0.0
    %5084 = vmatprep.subr.mxu0 0.0
    %5085 = vmatpush1.msra.mxu0 0.0
    %5086 = vmatprep.subr.mxu0 0.0
    %5087 = vmatpush1.msra.mxu0 0.0
    %5088 = vmatprep.subr.mxu0 0.0
    %5089 = vmatpush1.msra.mxu0 0.0
    %5090 = vmatprep.subr.mxu0 0.0
    %5091 = vmatpush1.msra.mxu0 0.0
    %5092 = vmatprep.subr.mxu0 0.0
    %5093 = vmatpush1.msra.mxu0 0.0
    %5094 = vmatprep.subr.mxu0 0.0
    %5095 = vmatpush1.msra.mxu0 0.0
    %5096 = vmatprep.subr.mxu0 0.0
    %5097 = vmatpush1.msra.mxu0 0.0
    %5098 = vmatprep.subr.mxu0 0.0
    %5099 = vmatpush1.msra.mxu0 0.0
    %5100 = vmatprep.subr.mxu0 0.0
    %5101 = vmatpush1.msra.mxu0 0.0
    %5102 = vmatprep.subr.mxu0 0.0
    %5103 = vmatpush1.msra.mxu0 0.0
    %5104 = vmatprep.subr.mxu0 0.0
    %5105 = vmatpush1.msra.mxu0 0.0
    %5106 = vmatprep.subr.mxu0 0.0
    %5107 = vmatpush1.msra.mxu0 0.0
    %5108 = vmatprep.subr.mxu0 0.0
    %5109 = vmatpush1.msra.mxu0 0.0
    %5110 = vmatprep.subr.mxu0 0.0
    %5111 = vmatpush1.msra.mxu0 0.0
    %5112 = vmatprep.subr.mxu0 0.0
    %5113 = vmatpush1.msra.mxu0 0.0
    %5114 = vmatprep.subr.mxu0 0.0
    %5115 = vmatpush1.msra.mxu0 0.0
    %5116 = vmatprep.subr.mxu0 0.0
    %5117 = vmatpush1.msra.mxu0 0.0
    %5118 = vmatprep.subr.mxu0 0.0
    %5119 = vmatpush1.msra.mxu0 0.0
    %5120 = vmatprep.subr.mxu0 0.0
    %5121 = vmatpush1.msra.mxu0 0.0
    %5122 = vmatprep.subr.mxu0 0.0
    %5123 = vmatpush1.msra.mxu0 0.0
    %5124 = vmatprep.subr.mxu0 0.0
    %5125 = vmatpush1.msra.mxu0 0.0
    %5126 = vmatprep.subr.mxu0 0.0
    %5127 = vmatpush1.msra.mxu0 0.0
    %5128 = vmatprep.subr.mxu0 0.0
    %5129 = vmatpush1.msra.mxu0 0.0
    %5130 = vmatprep.subr.mxu0 0.0
    %5131 = vmatpush1.msra.mxu0 0.0
    %5132 = vmatprep.subr.mxu0 0.0
    %5133 = vmatpush1.msra.mxu0 0.0
    %5134 = vmatprep.mubr.f32.mxu0 0.0
    %5135 = vmatmul.mubr.f32.gmra.mrb[0].mxu0 %v5068
    %v5136 = vpop.f32.mrb[0].mxu0
    %v5137 = vadd.f32 0.0, %v5136
    %v5138 = vpop.f32.mrb[0].mxu0
    %5139 = vdwg.mxu0
    %v5142 = vunpack.c.l.s4 1966171168
    %v5143 = vunpack.c.0.s8 %v5142
    %v5144 = vlaneseq
    %v5145 = vshrl.u32 %v5144, 7
    %v5146 = vsub.s32 %v5143, %v5145
    %v5147 = vrot.slane %v5137, %v5146
    %v5148 = vcombine.high %v5147, %v5147
    %v5150 = vunpack.c.l.s4 1966171168
    %v5151 = vunpack.c.0.s8 %v5150
    %v5152 = vlaneseq
    %v5153 = vshrl.u32 %v5152, 7
    %v5154 = vsub.s32 %v5151, %v5153
    %v5155 = vrot.slane %v5147, %v5154
    %v5157 = vunpack.c.l.s4 1966171168
    %v5158 = vunpack.c.0.s8 %v5157
    %v5159 = vlaneseq
    %v5160 = vshrl.u32 %v5159, 7
    %v5161 = vsub.s32 %v5158, %v5160
    %v5162 = vrot.slane %v5148, %v5161
    %v5163 = vlaneseq
    %v5164 = vshrl.u32 %v5163, 7
    %v5165 = vsub.s32 0, %v5164
    %v5166 = vrot.slane %v5155, %v5165
    %v5167 = vlaneseq
    %v5168 = vshrl.u32 %v5167, 7
    %v5169 = vsub.s32 0, %v5168
    %v5170 = vrot.slane %v5162, %v5169
    %v5173 = vadd.f32 %v5166, %v2756
    %v5174 = vadd.f32 %v5166, %v2757
    %v5175 = vadd.f32 %v5170, %v2758
    %v5176 = vadd.f32 %v5170, %v2759
    %v5177 = vtanh.pop %v5173
    %v5178 = vtanh.pop %v5174
    %v5179 = vtanh.pop %v5175
    %v5180 = vtanh.pop %v5176
    %v5181 = vmul.f32 %v5177, %v2902
    %v5182 = vmul.f32 %v5178, %v2902
    %v5183 = vmul.f32 %v5179, %v2902
    %v5184 = vmul.f32 %v5180, %v2902
    %v5185 = vsel %vm268, %v5181, 0.0
    %5186 = vadd.xlane.f32.xlu0 %v5185
    %v5187 = vpop.xlane.xlu0 %5186
    %v5188 = vsel %vm268, %v5182, 0.0
    %5189 = vadd.xlane.f32.xlu0 %v5188
    %v5190 = vpop.xlane.xlu0 %5189
    %v5191 = vsel %vm268, %v5183, 0.0
    %5192 = vadd.xlane.f32.xlu0 %v5191
    %v5193 = vpop.xlane.xlu0 %5192
    %v5194 = vsel %vm268, %v5184, 0.0
    %5195 = vadd.xlane.f32.xlu0 %v5194
    %v5196 = vpop.xlane.xlu0 %5195
    %v5201 = vlaneseq
    %v5202 = vshrl.u32 %v5201, 7
    %v5203 = vsub.s32 %v2925, %v5202
    %v5204 = vrot.slane %v5187, %v5203
    %v5205 = vlaneseq
    %v5206 = vshrl.u32 %v5205, 7
    %v5207 = vsub.s32 %v2930, %v5206
    %v5208 = vrot.slane %v5190, %v5207
    %v5209 = vsel %vm2935, %v5208, %v5204
    %v5210 = vlaneseq
    %v5211 = vshrl.u32 %v5210, 7
    %v5212 = vsub.s32 %v2925, %v5211
    %v5213 = vrot.slane %v5193, %v5212
    %v5214 = vlaneseq
    %v5215 = vshrl.u32 %v5214, 7
    %v5216 = vsub.s32 %v2930, %v5215
    %v5217 = vrot.slane %v5196, %v5216
    %v5218 = vsel %vm2935, %v5217, %v5213
    %v5219 = vsel %vm410, %v5218, %v5209
    %v5221 = vsel %vm2948, %v5219, -inf
    %5222 = vmax.xlane.f32.xlu0 %v5221
    %v5223 = vpop.xlane.xlu0 %5222
    %v5225 = vlaneseq
    %v5226 = vshrl.u32 %v5225, 7
    %v5227 = vsub.s32 0, %v5226
    %v5228 = vrot.slane %v5223, %v5227
    %v5229 = vlaneseq
    %v5230 = vshrl.u32 %v5229, 7
    %v5231 = vsub.s32 1, %v5230
    %v5232 = vrot.slane %v5223, %v5231
    %v5235 = vsub.f32 %v5187, %v5228
    %v5236 = vsub.f32 %v5190, %v5228
    %v5237 = vsub.f32 %v5193, %v5232
    %v5238 = vsub.f32 %v5196, %v5232
    %v5239 = vmul.f32 %v5235, 1.442695
    %v5240 = vpow.pop %v5239
    %v5241 = vmul.f32 %v5236, 1.442695
    %v5242 = vpow.pop %v5241
    %v5243 = vmul.f32 %v5237, 1.442695
    %v5244 = vpow.pop %v5243
    %v5245 = vmul.f32 %v5238, 1.442695
    %v5246 = vpow.pop %v5245
    %5251 = vset.pattern.permute.xlu0 0
    %5252 = vperm.xlu0 %5251, %v5240
    %v5253 = vpop.permute.xlu0 %5252
    %5254 = vset.pattern.permute.xlu0 0
    %5255 = vperm.xlu0 %5254, %v5242
    %v5256 = vpop.permute.xlu0 %5255
    %5257 = vset.pattern.permute.xlu0 0
    %5258 = vperm.xlu0 %5257, %v5244
    %v5259 = vpop.permute.xlu0 %5258
    %5260 = vset.pattern.permute.xlu0 0
    %5261 = vperm.xlu0 %5260, %v5246
    %v5262 = vpop.permute.xlu0 %5261
    %v5263 = vlaneseq
    %v5264 = vshrl.u32 %v5263, 7
    %v5265 = vsub.s32 %v2925, %v5264
    %v5266 = vrot.slane %v5253, %v5265
    %v5267 = vlaneseq
    %v5268 = vshrl.u32 %v5267, 7
    %v5269 = vsub.s32 %v2930, %v5268
    %v5270 = vrot.slane %v5256, %v5269
    %v5271 = vsel %vm2935, %v5270, %v5266
    %v5272 = vlaneseq
    %v5273 = vshrl.u32 %v5272, 7
    %v5274 = vsub.s32 %v2925, %v5273
    %v5275 = vrot.slane %v5259, %v5274
    %v5276 = vlaneseq
    %v5277 = vshrl.u32 %v5276, 7
    %v5278 = vsub.s32 %v2930, %v5277
    %v5279 = vrot.slane %v5262, %v5278
    %v5280 = vsel %vm2935, %v5279, %v5275
    %v5281 = vsel %vm410, %v5280, %v5271
    %v5283 = vsel %vm2948, %v5281, 0.0
    %5284 = vadd.xlane.f32.xlu0 %v5283
    %v5285 = vpop.xlane.xlu0 %5284
    %v5286 = vrcp.pop %v5285
    %v5288 = vlaneseq
    %v5289 = vshrl.u32 %v5288, 7
    %v5290 = vsub.s32 0, %v5289
    %v5291 = vrot.slane %v5286, %v5290
    %v5292 = vlaneseq
    %v5293 = vshrl.u32 %v5292, 7
    %v5294 = vsub.s32 1, %v5293
    %v5295 = vrot.slane %v5286, %v5294
    %v5298 = vmul.f32 %v5240, %v5291
    %v5299 = vmul.f32 %v5242, %v5291
    %v5300 = vmul.f32 %v5244, %v5295
    %v5301 = vmul.f32 %v5246, %v5295
    %5303 = vset.pattern.permute.xlu0 0
    %5304 = vperm.xlu0 %5303, %v5298
    %v5305 = vpop.permute.xlu0 %5304
    %5308 = vset.pattern.permute.xlu0 0
    %5309 = vperm.xlu0 %5308, %v5299
    %v5310 = vpop.permute.xlu0 %5309
    %5313 = vset.pattern.permute.xlu0 0
    %5314 = vperm.xlu0 %5313, %v5300
    %v5315 = vpop.permute.xlu0 %5314
    %5318 = vset.pattern.permute.xlu0 0
    %5319 = vperm.xlu0 %5318, %v5301
    %v5320 = vpop.permute.xlu0 %5319
    %v5322 = vmul.f32 %v5305, %v2644
    %v5323 = vmul.f32 %v5310, %v2645
    %v5324 = vmul.f32 %v5315, %v2646
    %v5325 = vmul.f32 %v5320, %v2647
    %v5326 = vsel %vm268, %v5322, 0.0
    %v5327 = vsel %vm268, %v5323, 0.0
    %v5328 = vadd.f32 %v5326, %v5327
    %v5329 = vrot.slane %v5328, 4
    %v5330 = vadd.f32 %v5328, %v5329
    %v5331 = vrot.slane %v5330, 2
    %v5332 = vadd.f32 %v5330, %v5331
    %v5333 = vrot.slane %v5332, 1
    %v5334 = vadd.f32 %v5332, %v5333
    %v5335 = vsel %vm268, %v5324, 0.0
    %v5336 = vsel %vm268, %v5325, 0.0
    %v5337 = vadd.f32 %v5335, %v5336
    %v5338 = vrot.slane %v5337, 4
    %v5339 = vadd.f32 %v5337, %v5338
    %v5340 = vrot.slane %v5339, 2
    %v5341 = vadd.f32 %v5339, %v5340
    %v5342 = vrot.slane %v5341, 1
    %v5343 = vadd.f32 %v5341, %v5342
    %s5344 = scalar_lea.vmem [#allocation4], 4
    %v5345 = vld [vmem:[%s5344] ss:$8 sm:$0x3]
    %s5346 = scalar_lea.vmem [#allocation4], 20
    %v5347 = vld [vmem:[%s5346] ss:$8 sm:$0x3]
    %v5350 = vsel %vm410, %v5343, %v5334
    %5352 = vrot.lane.b32.xlu0 %v4952, 64
    %v5353 = vpop.permute.xlu0 %5352
    %v5355 = vsel %vm268, %v5350, %v5353
    %v5357 = vsel %vm3083, %v5355, 0
    %5359 = vmatprep.subr.mxu0 0.0
    %5360 = vmatpush1.msra.mxu0 %v2765
    %5361 = vmatprep.subr.mxu0 0.0
    %5362 = vmatpush1.msra.mxu0 %v2766
    %5363 = vmatprep.subr.mxu0 0.0
    %5364 = vmatpush1.msra.mxu0 %v2767
    %5365 = vmatprep.subr.mxu0 0.0
    %5366 = vmatpush1.msra.mxu0 %v2768
    %5367 = vmatprep.subr.mxu0 0.0
    %5368 = vmatpush1.msra.mxu0 %v2769
    %5369 = vmatprep.subr.mxu0 0.0
    %5370 = vmatpush1.msra.mxu0 %v2770
    %5371 = vmatprep.subr.mxu0 0.0
    %5372 = vmatpush1.msra.mxu0 %v2771
    %5373 = vmatprep.subr.mxu0 0.0
    %5374 = vmatpush1.msra.mxu0 %v2772
    %5375 = vmatprep.subr.mxu0 0.0
    %5376 = vmatpush1.msra.mxu0 0.0
    %5377 = vmatprep.subr.mxu0 0.0
    %5378 = vmatpush1.msra.mxu0 0.0
    %5379 = vmatprep.subr.mxu0 0.0
    %5380 = vmatpush1.msra.mxu0 0.0
    %5381 = vmatprep.subr.mxu0 0.0
    %5382 = vmatpush1.msra.mxu0 0.0
    %5383 = vmatprep.subr.mxu0 0.0
    %5384 = vmatpush1.msra.mxu0 0.0
    %5385 = vmatprep.subr.mxu0 0.0
    %5386 = vmatpush1.msra.mxu0 0.0
    %5387 = vmatprep.subr.mxu0 0.0
    %5388 = vmatpush1.msra.mxu0 0.0
    %5389 = vmatprep.subr.mxu0 0.0
    %5390 = vmatpush1.msra.mxu0 0.0
    %5391 = vmatprep.subr.mxu0 0.0
    %5392 = vmatpush1.msra.mxu0 0.0
    %5393 = vmatprep.subr.mxu0 0.0
    %5394 = vmatpush1.msra.mxu0 0.0
    %5395 = vmatprep.subr.mxu0 0.0
    %5396 = vmatpush1.msra.mxu0 0.0
    %5397 = vmatprep.subr.mxu0 0.0
    %5398 = vmatpush1.msra.mxu0 0.0
    %5399 = vmatprep.subr.mxu0 0.0
    %5400 = vmatpush1.msra.mxu0 0.0
    %5401 = vmatprep.subr.mxu0 0.0
    %5402 = vmatpush1.msra.mxu0 0.0
    %5403 = vmatprep.subr.mxu0 0.0
    %5404 = vmatpush1.msra.mxu0 0.0
    %5405 = vmatprep.subr.mxu0 0.0
    %5406 = vmatpush1.msra.mxu0 0.0
    %5407 = vmatprep.subr.mxu0 0.0
    %5408 = vmatpush1.msra.mxu0 0.0
    %5409 = vmatprep.subr.mxu0 0.0
    %5410 = vmatpush1.msra.mxu0 0.0
    %5411 = vmatprep.subr.mxu0 0.0
    %5412 = vmatpush1.msra.mxu0 0.0
    %5413 = vmatprep.subr.mxu0 0.0
    %5414 = vmatpush1.msra.mxu0 0.0
    %5415 = vmatprep.subr.mxu0 0.0
    %5416 = vmatpush1.msra.mxu0 0.0
    %5417 = vmatprep.subr.mxu0 0.0
    %5418 = vmatpush1.msra.mxu0 0.0
    %5419 = vmatprep.subr.mxu0 0.0
    %5420 = vmatpush1.msra.mxu0 0.0
    %5421 = vmatprep.subr.mxu0 0.0
    %5422 = vmatpush1.msra.mxu0 0.0
    %5423 = vmatprep.mubr.f32.mxu0 0.0
    %5424 = vmatmul.mubr.f32.gmra.mrb[0].mxu0 %v5357
    %v5425 = vpop.f32.mrb[0].mxu0
    %v5426 = vadd.f32 0.0, %v5425
    %v5427 = vpop.f32.mrb[0].mxu0
    %5428 = vdwg.mxu0
    %v5431 = vunpack.c.l.s4 1966171168
    %v5432 = vunpack.c.0.s8 %v5431
    %v5433 = vlaneseq
    %v5434 = vshrl.u32 %v5433, 7
    %v5435 = vsub.s32 %v5432, %v5434
    %v5436 = vrot.slane %v5426, %v5435
    %v5437 = vcombine.high %v5436, %v5436
    %v5439 = vunpack.c.l.s4 1966171168
    %v5440 = vunpack.c.0.s8 %v5439
    %v5441 = vlaneseq
    %v5442 = vshrl.u32 %v5441, 7
    %v5443 = vsub.s32 %v5440, %v5442
    %v5444 = vrot.slane %v5436, %v5443
    %v5446 = vunpack.c.l.s4 1966171168
    %v5447 = vunpack.c.0.s8 %v5446
    %v5448 = vlaneseq
    %v5449 = vshrl.u32 %v5448, 7
    %v5450 = vsub.s32 %v5447, %v5449
    %v5451 = vrot.slane %v5437, %v5450
    %v5454 = vadd.f32 %v5345, %v5444
    %v5455 = vadd.f32 %v5347, %v5451
    %v5456 = vxor.u32 %v5454, 2147483648
    %v5457 = vxor.u32 %v5455, 2147483648
    %v5458 = vmul.f32 %v5456, 1.442695
    %v5459 = vpow.pop %v5458
    %v5460 = vmul.f32 %v5457, 1.442695
    %v5461 = vpow.pop %v5460
    %v5462 = vadd.f32 %v5459, 1.0
    %v5463 = vadd.f32 %v5461, 1.0
    %v5464 = vrcp.pop %v5462
    %v5465 = vmul.f32 1.0, %v5464
    %v5466 = vrcp.pop %v5463
    %v5467 = vmul.f32 1.0, %v5466
    %v5468 = vtanh.pop %v5454
    %v5469 = vtanh.pop %v5455
    %v5470 = vmul.f32 %v5465, %v4922
    %v5471 = vmul.f32 %v5467, %v4923
    %5474 = vrot.lane.b32.xlu0 %v5468, 64
    %v5475 = vpop.permute.xlu0 %5474
    %5476 = vrot.lane.b32.xlu0 %v5469, 64
    %v5477 = vpop.permute.xlu0 %5476
    %v5480 = vmul.f32 %v5465, %v5475
    %v5481 = vmul.f32 %v5467, %v5477
    %5484 = vrot.lane.b32.xlu0 %v5480, 32
    %v5485 = vpop.permute.xlu0 %5484
    %5486 = vrot.lane.b32.xlu0 %v5481, 32
    %v5487 = vpop.permute.xlu0 %5486
    %v5490 = vadd.f32 %v5470, %v5485
    %v5491 = vadd.f32 %v5471, %v5487
    %v5492 = vtanh.pop %v5490
    %v5493 = vtanh.pop %v5491
    %5496 = vrot.lane.b32.xlu0 %v5492, 64
    %v5497 = vpop.permute.xlu0 %5496
    %5498 = vrot.lane.b32.xlu0 %v5493, 64
    %v5499 = vpop.permute.xlu0 %5498
    %v5502 = vmul.f32 %v5465, %v5497
    %v5503 = vmul.f32 %v5467, %v5499
    %v5506 = vcombine.low %v5502, %v5503
    %v5508 = vunpack.c.l.s4 1966171168
    %v5509 = vunpack.c.0.s8 %v5508
    %v5510 = vlaneseq
    %v5511 = vshrl.u32 %v5510, 7
    %v5512 = vsub.s32 %v5509, %v5511
    %v5513 = vrot.slane %v5506, %v5512
    %v5515 = vunpack.c.l.s4 1966171168
    %v5516 = vunpack.c.0.s8 %v5515
    %v5517 = vlaneseq
    %v5518 = vshrl.u32 %v5517, 7
    %v5519 = vsub.s32 %v5516, %v5518
    %v5520 = vrot.slane %v5513, %v5519
    %5521 = vrot.lane.b32.xlu0 %v5520, 32
    %v5522 = vpop.permute.xlu0 %5521
    %5524 = vrot.lane.b32.xlu0 %v5350, 32
    %v5525 = vpop.permute.xlu0 %5524
    %v5527 = vsel %vm268, %v5522, %v5525
    %v5529 = vsel %vm3083, %v5527, 0
    %5531 = vmatprep.subr.mxu0 0.0
    %5532 = vmatpush1.msra.mxu0 %v2773
    %5533 = vmatprep.subr.mxu0 0.0
    %5534 = vmatpush1.msra.mxu0 %v2774
    %5535 = vmatprep.subr.mxu0 0.0
    %5536 = vmatpush1.msra.mxu0 %v2775
    %5537 = vmatprep.subr.mxu0 0.0
    %5538 = vmatpush1.msra.mxu0 %v2776
    %5539 = vmatprep.subr.mxu0 0.0
    %5540 = vmatpush1.msra.mxu0 %v2777
    %5541 = vmatprep.subr.mxu0 0.0
    %5542 = vmatpush1.msra.mxu0 %v2778
    %5543 = vmatprep.subr.mxu0 0.0
    %5544 = vmatpush1.msra.mxu0 %v2779
    %5545 = vmatprep.subr.mxu0 0.0
    %5546 = vmatpush1.msra.mxu0 %v2780
    %5547 = vmatprep.subr.mxu0 0.0
    %5548 = vmatpush1.msra.mxu0 0.0
    %5549 = vmatprep.subr.mxu0 0.0
    %5550 = vmatpush1.msra.mxu0 0.0
    %5551 = vmatprep.subr.mxu0 0.0
    %5552 = vmatpush1.msra.mxu0 0.0
    %5553 = vmatprep.subr.mxu0 0.0
    %5554 = vmatpush1.msra.mxu0 0.0
    %5555 = vmatprep.subr.mxu0 0.0
    %5556 = vmatpush1.msra.mxu0 0.0
    %5557 = vmatprep.subr.mxu0 0.0
    %5558 = vmatpush1.msra.mxu0 0.0
    %5559 = vmatprep.subr.mxu0 0.0
    %5560 = vmatpush1.msra.mxu0 0.0
    %5561 = vmatprep.subr.mxu0 0.0
    %5562 = vmatpush1.msra.mxu0 0.0
    %5563 = vmatprep.subr.mxu0 0.0
    %5564 = vmatpush1.msra.mxu0 0.0
    %5565 = vmatprep.subr.mxu0 0.0
    %5566 = vmatpush1.msra.mxu0 0.0
    %5567 = vmatprep.subr.mxu0 0.0
    %5568 = vmatpush1.msra.mxu0 0.0
    %5569 = vmatprep.subr.mxu0 0.0
    %5570 = vmatpush1.msra.mxu0 0.0
    %5571 = vmatprep.subr.mxu0 0.0
    %5572 = vmatpush1.msra.mxu0 0.0
    %5573 = vmatprep.subr.mxu0 0.0
    %5574 = vmatpush1.msra.mxu0 0.0
    %5575 = vmatprep.subr.mxu0 0.0
    %5576 = vmatpush1.msra.mxu0 0.0
    %5577 = vmatprep.subr.mxu0 0.0
    %5578 = vmatpush1.msra.mxu0 0.0
    %5579 = vmatprep.subr.mxu0 0.0
    %5580 = vmatpush1.msra.mxu0 0.0
    %5581 = vmatprep.subr.mxu0 0.0
    %5582 = vmatpush1.msra.mxu0 0.0
    %5583 = vmatprep.subr.mxu0 0.0
    %5584 = vmatpush1.msra.mxu0 0.0
    %5585 = vmatprep.subr.mxu0 0.0
    %5586 = vmatpush1.msra.mxu0 0.0
    %5587 = vmatprep.subr.mxu0 0.0
    %5588 = vmatpush1.msra.mxu0 0.0
    %5589 = vmatprep.subr.mxu0 0.0
    %5590 = vmatpush1.msra.mxu0 0.0
    %5591 = vmatprep.subr.mxu0 0.0
    %5592 = vmatpush1.msra.mxu0 0.0
    %5593 = vmatprep.subr.mxu0 0.0
    %5594 = vmatpush1.msra.mxu0 0.0
    %5595 = vmatprep.mubr.f32.mxu0 0.0
    %5596 = vmatmul.mubr.f32.gmra.mrb[0].mxu0 %v5529
    %v5597 = vpop.f32.mrb[0].mxu0
    %v5598 = vadd.f32 0.0, %v5597
    %v5599 = vpop.f32.mrb[0].mxu0
    %5600 = vdwg.mxu0
    %v5603 = vrot.slane %v5345, 1
    %v5604 = vrot.slane %v5347, 1
    %v5609 = vunpack.c.l.s4 1966171168
    %v5610 = vunpack.c.0.s8 %v5609
    %v5611 = vlaneseq
    %v5612 = vshrl.u32 %v5611, 7
    %v5613 = vsub.s32 %v5610, %v5612
    %v5614 = vrot.slane %v5598, %v5613
    %v5615 = vcombine.high %v5614, %v5614
    %v5617 = vunpack.c.l.s4 1966171168
    %v5618 = vunpack.c.0.s8 %v5617
    %v5619 = vlaneseq
    %v5620 = vshrl.u32 %v5619, 7
    %v5621 = vsub.s32 %v5618, %v5620
    %v5622 = vrot.slane %v5614, %v5621
    %v5624 = vunpack.c.l.s4 1966171168
    %v5625 = vunpack.c.0.s8 %v5624
    %v5626 = vlaneseq
    %v5627 = vshrl.u32 %v5626, 7
    %v5628 = vsub.s32 %v5625, %v5627
    %v5629 = vrot.slane %v5615, %v5628
    %v5632 = vadd.f32 %v5603, %v5622
    %v5633 = vadd.f32 %v5604, %v5629
    %5634 = vst [vmem:[#allocation19 + $0x4] sm:$0x1] %v5632
    %5635 = vst [vmem:[#allocation19 + $0xc] sm:$0x1] %v5633
    %v5636 = vsel %vm268, %v5522, 0
    %5638 = vmatprep.subr.mxu0 0.0
    %5639 = vmatpush1.msra.mxu0 %v2761
    %5640 = vmatprep.subr.mxu0 0.0
    %5641 = vmatpush1.msra.mxu0 %v2762
    %5642 = vmatprep.subr.mxu0 0.0
    %5643 = vmatpush1.msra.mxu0 %v2763
    %5644 = vmatprep.subr.mxu0 0.0
    %5645 = vmatpush1.msra.mxu0 %v2764
    %5646 = vmatprep.subr.mxu0 0.0
    %5647 = vmatpush1.msra.mxu0 0.0
    %5648 = vmatprep.subr.mxu0 0.0
    %5649 = vmatpush1.msra.mxu0 0.0
    %5650 = vmatprep.subr.mxu0 0.0
    %5651 = vmatpush1.msra.mxu0 0.0
    %5652 = vmatprep.subr.mxu0 0.0
    %5653 = vmatpush1.msra.mxu0 0.0
    %5654 = vmatprep.subr.mxu0 0.0
    %5655 = vmatpush1.msra.mxu0 0.0
    %5656 = vmatprep.subr.mxu0 0.0
    %5657 = vmatpush1.msra.mxu0 0.0
    %5658 = vmatprep.subr.mxu0 0.0
    %5659 = vmatpush1.msra.mxu0 0.0
    %5660 = vmatprep.subr.mxu0 0.0
    %5661 = vmatpush1.msra.mxu0 0.0
    %5662 = vmatprep.subr.mxu0 0.0
    %5663 = vmatpush1.msra.mxu0 0.0
    %5664 = vmatprep.subr.mxu0 0.0
    %5665 = vmatpush1.msra.mxu0 0.0
    %5666 = vmatprep.subr.mxu0 0.0
    %5667 = vmatpush1.msra.mxu0 0.0
    %5668 = vmatprep.subr.mxu0 0.0
    %5669 = vmatpush1.msra.mxu0 0.0
    %5670 = vmatprep.subr.mxu0 0.0
    %5671 = vmatpush1.msra.mxu0 0.0
    %5672 = vmatprep.subr.mxu0 0.0
    %5673 = vmatpush1.msra.mxu0 0.0
    %5674 = vmatprep.subr.mxu0 0.0
    %5675 = vmatpush1.msra.mxu0 0.0
    %5676 = vmatprep.subr.mxu0 0.0
    %5677 = vmatpush1.msra.mxu0 0.0
    %5678 = vmatprep.subr.mxu0 0.0
    %5679 = vmatpush1.msra.mxu0 0.0
    %5680 = vmatprep.subr.mxu0 0.0
    %5681 = vmatpush1.msra.mxu0 0.0
    %5682 = vmatprep.subr.mxu0 0.0
    %5683 = vmatpush1.msra.mxu0 0.0
    %5684 = vmatprep.subr.mxu0 0.0
    %5685 = vmatpush1.msra.mxu0 0.0
    %5686 = vmatprep.subr.mxu0 0.0
    %5687 = vmatpush1.msra.mxu0 0.0
    %5688 = vmatprep.subr.mxu0 0.0
    %5689 = vmatpush1.msra.mxu0 0.0
    %5690 = vmatprep.subr.mxu0 0.0
    %5691 = vmatpush1.msra.mxu0 0.0
    %5692 = vmatprep.subr.mxu0 0.0
    %5693 = vmatpush1.msra.mxu0 0.0
    %5694 = vmatprep.subr.mxu0 0.0
    %5695 = vmatpush1.msra.mxu0 0.0
    %5696 = vmatprep.subr.mxu0 0.0
    %5697 = vmatpush1.msra.mxu0 0.0
    %5698 = vmatprep.subr.mxu0 0.0
    %5699 = vmatpush1.msra.mxu0 0.0
    %5700 = vmatprep.subr.mxu0 0.0
    %5701 = vmatpush1.msra.mxu0 0.0
    %5702 = vmatprep.mubr.f32.mxu0 0.0
    %5703 = vmatmul.mubr.f32.gmra.mrb[0].mxu0 %v5636
    %v5704 = vpop.f32.mrb[0].mxu0
    %v5705 = vadd.f32 0.0, %v5704
    %v5706 = vpop.f32.mrb[0].mxu0
    %5707 = vdwg.mxu0
    %v5710 = vunpack.c.l.s4 1966171168
    %v5711 = vunpack.c.0.s8 %v5710
    %v5712 = vlaneseq
    %v5713 = vshrl.u32 %v5712, 7
    %v5714 = vsub.s32 %v5711, %v5713
    %v5715 = vrot.slane %v5705, %v5714
    %v5716 = vcombine.high %v5715, %v5715
    %v5718 = vunpack.c.l.s4 1966171168
    %v5719 = vunpack.c.0.s8 %v5718
    %v5720 = vlaneseq
    %v5721 = vshrl.u32 %v5720, 7
    %v5722 = vsub.s32 %v5719, %v5721
    %v5723 = vrot.slane %v5715, %v5722
    %v5725 = vunpack.c.l.s4 1966171168
    %v5726 = vunpack.c.0.s8 %v5725
    %v5727 = vlaneseq
    %v5728 = vshrl.u32 %v5727, 7
    %v5729 = vsub.s32 %v5726, %v5728
    %v5730 = vrot.slane %v5716, %v5729
    %v5731 = vlaneseq
    %v5732 = vshrl.u32 %v5731, 7
    %v5733 = vsub.s32 0, %v5732
    %v5734 = vrot.slane %v5723, %v5733
    %v5735 = vlaneseq
    %v5736 = vshrl.u32 %v5735, 7
    %v5737 = vsub.s32 0, %v5736
    %v5738 = vrot.slane %v5730, %v5737
    %v5741 = vadd.f32 %v5734, %v2756
    %v5742 = vadd.f32 %v5734, %v2757
    %v5743 = vadd.f32 %v5738, %v2758
    %v5744 = vadd.f32 %v5738, %v2759
    %v5745 = vtanh.pop %v5741
    %v5746 = vtanh.pop %v5742
    %v5747 = vtanh.pop %v5743
    %v5748 = vtanh.pop %v5744
    %v5749 = vmul.f32 %v5745, %v2902
    %v5750 = vmul.f32 %v5746, %v2902
    %v5751 = vmul.f32 %v5747, %v2902
    %v5752 = vmul.f32 %v5748, %v2902
    %v5753 = vsel %vm268, %v5749, 0.0
    %5754 = vadd.xlane.f32.xlu0 %v5753
    %v5755 = vpop.xlane.xlu0 %5754
    %v5756 = vsel %vm268, %v5750, 0.0
    %5757 = vadd.xlane.f32.xlu0 %v5756
    %v5758 = vpop.xlane.xlu0 %5757
    %v5759 = vsel %vm268, %v5751, 0.0
    %5760 = vadd.xlane.f32.xlu0 %v5759
    %v5761 = vpop.xlane.xlu0 %5760
    %v5762 = vsel %vm268, %v5752, 0.0
    %5763 = vadd.xlane.f32.xlu0 %v5762
    %v5764 = vpop.xlane.xlu0 %5763
    %v5769 = vlaneseq
    %v5770 = vshrl.u32 %v5769, 7
    %v5771 = vsub.s32 %v2925, %v5770
    %v5772 = vrot.slane %v5755, %v5771
    %v5773 = vlaneseq
    %v5774 = vshrl.u32 %v5773, 7
    %v5775 = vsub.s32 %v2930, %v5774
    %v5776 = vrot.slane %v5758, %v5775
    %v5777 = vsel %vm2935, %v5776, %v5772
    %v5778 = vlaneseq
    %v5779 = vshrl.u32 %v5778, 7
    %v5780 = vsub.s32 %v2925, %v5779
    %v5781 = vrot.slane %v5761, %v5780
    %v5782 = vlaneseq
    %v5783 = vshrl.u32 %v5782, 7
    %v5784 = vsub.s32 %v2930, %v5783
    %v5785 = vrot.slane %v5764, %v5784
    %v5786 = vsel %vm2935, %v5785, %v5781
    %v5787 = vsel %vm410, %v5786, %v5777
    %v5789 = vsel %vm2948, %v5787, -inf
    %5790 = vmax.xlane.f32.xlu0 %v5789
    %v5791 = vpop.xlane.xlu0 %5790
    %v5793 = vlaneseq
    %v5794 = vshrl.u32 %v5793, 7
    %v5795 = vsub.s32 0, %v5794
    %v5796 = vrot.slane %v5791, %v5795
    %v5797 = vlaneseq
    %v5798 = vshrl.u32 %v5797, 7
    %v5799 = vsub.s32 1, %v5798
    %v5800 = vrot.slane %v5791, %v5799
    %v5803 = vsub.f32 %v5755, %v5796
    %v5804 = vsub.f32 %v5758, %v5796
    %v5805 = vsub.f32 %v5761, %v5800
    %v5806 = vsub.f32 %v5764, %v5800
    %v5807 = vmul.f32 %v5803, 1.442695
    %v5808 = vpow.pop %v5807
    %v5809 = vmul.f32 %v5804, 1.442695
    %v5810 = vpow.pop %v5809
    %v5811 = vmul.f32 %v5805, 1.442695
    %v5812 = vpow.pop %v5811
    %v5813 = vmul.f32 %v5806, 1.442695
    %v5814 = vpow.pop %v5813
    %5819 = vset.pattern.permute.xlu0 0
    %5820 = vperm.xlu0 %5819, %v5808
    %v5821 = vpop.permute.xlu0 %5820
    %5822 = vset.pattern.permute.xlu0 0
    %5823 = vperm.xlu0 %5822, %v5810
    %v5824 = vpop.permute.xlu0 %5823
    %5825 = vset.pattern.permute.xlu0 0
    %5826 = vperm.xlu0 %5825, %v5812
    %v5827 = vpop.permute.xlu0 %5826
    %5828 = vset.pattern.permute.xlu0 0
    %5829 = vperm.xlu0 %5828, %v5814
    %v5830 = vpop.permute.xlu0 %5829
    %v5831 = vlaneseq
    %v5832 = vshrl.u32 %v5831, 7
    %v5833 = vsub.s32 %v2925, %v5832
    %v5834 = vrot.slane %v5821, %v5833
    %v5835 = vlaneseq
    %v5836 = vshrl.u32 %v5835, 7
    %v5837 = vsub.s32 %v2930, %v5836
    %v5838 = vrot.slane %v5824, %v5837
    %v5839 = vsel %vm2935, %v5838, %v5834
    %v5840 = vlaneseq
    %v5841 = vshrl.u32 %v5840, 7
    %v5842 = vsub.s32 %v2925, %v5841
    %v5843 = vrot.slane %v5827, %v5842
    %v5844 = vlaneseq
    %v5845 = vshrl.u32 %v5844, 7
    %v5846 = vsub.s32 %v2930, %v5845
    %v5847 = vrot.slane %v5830, %v5846
    %v5848 = vsel %vm2935, %v5847, %v5843
    %v5849 = vsel %vm410, %v5848, %v5839
    %v5851 = vsel %vm2948, %v5849, 0.0
    %5852 = vadd.xlane.f32.xlu0 %v5851
    %v5853 = vpop.xlane.xlu0 %5852
    %v5854 = vrcp.pop %v5853
    %v5856 = vlaneseq
    %v5857 = vshrl.u32 %v5856, 7
    %v5858 = vsub.s32 0, %v5857
    %v5859 = vrot.slane %v5854, %v5858
    %v5860 = vlaneseq
    %v5861 = vshrl.u32 %v5860, 7
    %v5862 = vsub.s32 1, %v5861
    %v5863 = vrot.slane %v5854, %v5862
    %v5866 = vmul.f32 %v5808, %v5859
    %v5867 = vmul.f32 %v5810, %v5859
    %v5868 = vmul.f32 %v5812, %v5863
    %v5869 = vmul.f32 %v5814, %v5863
    %5871 = vset.pattern.permute.xlu0 0
    %5872 = vperm.xlu0 %5871, %v5866
    %v5873 = vpop.permute.xlu0 %5872
    %5876 = vset.pattern.permute.xlu0 0
    %5877 = vperm.xlu0 %5876, %v5867
    %v5878 = vpop.permute.xlu0 %5877
    %5881 = vset.pattern.permute.xlu0 0
    %5882 = vperm.xlu0 %5881, %v5868
    %v5883 = vpop.permute.xlu0 %5882
    %5886 = vset.pattern.permute.xlu0 0
    %5887 = vperm.xlu0 %5886, %v5869
    %v5888 = vpop.permute.xlu0 %5887
    %v5890 = vmul.f32 %v5873, %v2644
    %v5891 = vmul.f32 %v5878, %v2645
    %v5892 = vmul.f32 %v5883, %v2646
    %v5893 = vmul.f32 %v5888, %v2647
    %v5894 = vsel %vm268, %v5890, 0.0
    %v5895 = vsel %vm268, %v5891, 0.0
    %v5896 = vadd.f32 %v5894, %v5895
    %v5897 = vrot.slane %v5896, 4
    %v5898 = vadd.f32 %v5896, %v5897
    %v5899 = vrot.slane %v5898, 2
    %v5900 = vadd.f32 %v5898, %v5899
    %v5901 = vrot.slane %v5900, 1
    %v5902 = vadd.f32 %v5900, %v5901
    %v5903 = vsel %vm268, %v5892, 0.0
    %v5904 = vsel %vm268, %v5893, 0.0
    %v5905 = vadd.f32 %v5903, %v5904
    %v5906 = vrot.slane %v5905, 4
    %v5907 = vadd.f32 %v5905, %v5906
    %v5908 = vrot.slane %v5907, 2
    %v5909 = vadd.f32 %v5907, %v5908
    %v5910 = vrot.slane %v5909, 1
    %v5911 = vadd.f32 %v5909, %v5910
    %s5912 = scalar_lea.vmem [#allocation4], 5
    %v5913 = vld [vmem:[%s5912] ss:$8 sm:$0x3]
    %s5914 = scalar_lea.vmem [#allocation4], 21
    %v5915 = vld [vmem:[%s5914] ss:$8 sm:$0x3]
    %v5918 = vsel %vm410, %v5911, %v5902
    %5920 = vrot.lane.b32.xlu0 %v5520, 64
    %v5921 = vpop.permute.xlu0 %5920
    %v5923 = vsel %vm268, %v5918, %v5921
    %v5925 = vsel %vm3083, %v5923, 0
    %5927 = vmatprep.subr.mxu0 0.0
    %5928 = vmatpush1.msra.mxu0 %v2765
    %5929 = vmatprep.subr.mxu0 0.0
    %5930 = vmatpush1.msra.mxu0 %v2766
    %5931 = vmatprep.subr.mxu0 0.0
    %5932 = vmatpush1.msra.mxu0 %v2767
    %5933 = vmatprep.subr.mxu0 0.0
    %5934 = vmatpush1.msra.mxu0 %v2768
    %5935 = vmatprep.subr.mxu0 0.0
    %5936 = vmatpush1.msra.mxu0 %v2769
    %5937 = vmatprep.subr.mxu0 0.0
    %5938 = vmatpush1.msra.mxu0 %v2770
    %5939 = vmatprep.subr.mxu0 0.0
    %5940 = vmatpush1.msra.mxu0 %v2771
    %5941 = vmatprep.subr.mxu0 0.0
    %5942 = vmatpush1.msra.mxu0 %v2772
    %5943 = vmatprep.subr.mxu0 0.0
    %5944 = vmatpush1.msra.mxu0 0.0
    %5945 = vmatprep.subr.mxu0 0.0
    %5946 = vmatpush1.msra.mxu0 0.0
    %5947 = vmatprep.subr.mxu0 0.0
    %5948 = vmatpush1.msra.mxu0 0.0
    %5949 = vmatprep.subr.mxu0 0.0
    %5950 = vmatpush1.msra.mxu0 0.0
    %5951 = vmatprep.subr.mxu0 0.0
    %5952 = vmatpush1.msra.mxu0 0.0
    %5953 = vmatprep.subr.mxu0 0.0
    %5954 = vmatpush1.msra.mxu0 0.0
    %5955 = vmatprep.subr.mxu0 0.0
    %5956 = vmatpush1.msra.mxu0 0.0
    %5957 = vmatprep.subr.mxu0 0.0
    %5958 = vmatpush1.msra.mxu0 0.0
    %5959 = vmatprep.subr.mxu0 0.0
    %5960 = vmatpush1.msra.mxu0 0.0
    %5961 = vmatprep.subr.mxu0 0.0
    %5962 = vmatpush1.msra.mxu0 0.0
    %5963 = vmatprep.subr.mxu0 0.0
    %5964 = vmatpush1.msra.mxu0 0.0
    %5965 = vmatprep.subr.mxu0 0.0
    %5966 = vmatpush1.msra.mxu0 0.0
    %5967 = vmatprep.subr.mxu0 0.0
    %5968 = vmatpush1.msra.mxu0 0.0
    %5969 = vmatprep.subr.mxu0 0.0
    %5970 = vmatpush1.msra.mxu0 0.0
    %5971 = vmatprep.subr.mxu0 0.0
    %5972 = vmatpush1.msra.mxu0 0.0
    %5973 = vmatprep.subr.mxu0 0.0
    %5974 = vmatpush1.msra.mxu0 0.0
    %5975 = vmatprep.subr.mxu0 0.0
    %5976 = vmatpush1.msra.mxu0 0.0
    %5977 = vmatprep.subr.mxu0 0.0
    %5978 = vmatpush1.msra.mxu0 0.0
    %5979 = vmatprep.subr.mxu0 0.0
    %5980 = vmatpush1.msra.mxu0 0.0
    %5981 = vmatprep.subr.mxu0 0.0
    %5982 = vmatpush1.msra.mxu0 0.0
    %5983 = vmatprep.subr.mxu0 0.0
    %5984 = vmatpush1.msra.mxu0 0.0
    %5985 = vmatprep.subr.mxu0 0.0
    %5986 = vmatpush1.msra.mxu0 0.0
    %5987 = vmatprep.subr.mxu0 0.0
    %5988 = vmatpush1.msra.mxu0 0.0
    %5989 = vmatprep.subr.mxu0 0.0
    %5990 = vmatpush1.msra.mxu0 0.0
    %5991 = vmatprep.mubr.f32.mxu0 0.0
    %5992 = vmatmul.mubr.f32.gmra.mrb[0].mxu0 %v5925
    %v5993 = vpop.f32.mrb[0].mxu0
    %v5994 = vadd.f32 0.0, %v5993
    %v5995 = vpop.f32.mrb[0].mxu0
    %5996 = vdwg.mxu0
    %v5999 = vunpack.c.l.s4 1966171168
    %v6000 = vunpack.c.0.s8 %v5999
    %v6001 = vlaneseq
    %v6002 = vshrl.u32 %v6001, 7
    %v6003 = vsub.s32 %v6000, %v6002
    %v6004 = vrot.slane %v5994, %v6003
    %v6005 = vcombine.high %v6004, %v6004
    %v6007 = vunpack.c.l.s4 1966171168
    %v6008 = vunpack.c.0.s8 %v6007
    %v6009 = vlaneseq
    %v6010 = vshrl.u32 %v6009, 7
    %v6011 = vsub.s32 %v6008, %v6010
    %v6012 = vrot.slane %v6004, %v6011
    %v6014 = vunpack.c.l.s4 1966171168
    %v6015 = vunpack.c.0.s8 %v6014
    %v6016 = vlaneseq
    %v6017 = vshrl.u32 %v6016, 7
    %v6018 = vsub.s32 %v6015, %v6017
    %v6019 = vrot.slane %v6005, %v6018
    %v6022 = vadd.f32 %v5913, %v6012
    %v6023 = vadd.f32 %v5915, %v6019
    %v6024 = vxor.u32 %v6022, 2147483648
    %v6025 = vxor.u32 %v6023, 2147483648
    %v6026 = vmul.f32 %v6024, 1.442695
    %v6027 = vpow.pop %v6026
    %v6028 = vmul.f32 %v6025, 1.442695
    %v6029 = vpow.pop %v6028
    %v6030 = vadd.f32 %v6027, 1.0
    %v6031 = vadd.f32 %v6029, 1.0
    %v6032 = vrcp.pop %v6030
    %v6033 = vmul.f32 1.0, %v6032
    %v6034 = vrcp.pop %v6031
    %v6035 = vmul.f32 1.0, %v6034
    %v6036 = vtanh.pop %v6022
    %v6037 = vtanh.pop %v6023
    %v6038 = vmul.f32 %v6033, %v5490
    %v6039 = vmul.f32 %v6035, %v5491
    %6042 = vrot.lane.b32.xlu0 %v6036, 64
    %v6043 = vpop.permute.xlu0 %6042
    %6044 = vrot.lane.b32.xlu0 %v6037, 64
    %v6045 = vpop.permute.xlu0 %6044
    %v6048 = vmul.f32 %v6033, %v6043
    %v6049 = vmul.f32 %v6035, %v6045
    %6052 = vrot.lane.b32.xlu0 %v6048, 32
    %v6053 = vpop.permute.xlu0 %6052
    %6054 = vrot.lane.b32.xlu0 %v6049, 32
    %v6055 = vpop.permute.xlu0 %6054
    %v6058 = vadd.f32 %v6038, %v6053
    %v6059 = vadd.f32 %v6039, %v6055
    %v6060 = vtanh.pop %v6058
    %v6061 = vtanh.pop %v6059
    %6064 = vrot.lane.b32.xlu0 %v6060, 64
    %v6065 = vpop.permute.xlu0 %6064
    %6066 = vrot.lane.b32.xlu0 %v6061, 64
    %v6067 = vpop.permute.xlu0 %6066
    %v6070 = vmul.f32 %v6033, %v6065
    %v6071 = vmul.f32 %v6035, %v6067
    %v6074 = vcombine.low %v6070, %v6071
    %v6076 = vunpack.c.l.s4 1966171168
    %v6077 = vunpack.c.0.s8 %v6076
    %v6078 = vlaneseq
    %v6079 = vshrl.u32 %v6078, 7
    %v6080 = vsub.s32 %v6077, %v6079
    %v6081 = vrot.slane %v6074, %v6080
    %v6083 = vunpack.c.l.s4 1966171168
    %v6084 = vunpack.c.0.s8 %v6083
    %v6085 = vlaneseq
    %v6086 = vshrl.u32 %v6085, 7
    %v6087 = vsub.s32 %v6084, %v6086
    %v6088 = vrot.slane %v6081, %v6087
    %6089 = vrot.lane.b32.xlu0 %v6088, 32
    %v6090 = vpop.permute.xlu0 %6089
    %6092 = vrot.lane.b32.xlu0 %v5918, 32
    %v6093 = vpop.permute.xlu0 %6092
    %v6095 = vsel %vm268, %v6090, %v6093
    %v6097 = vsel %vm3083, %v6095, 0
    %6099 = vmatprep.subr.mxu0 0.0
    %6100 = vmatpush1.msra.mxu0 %v2773
    %6101 = vmatprep.subr.mxu0 0.0
    %6102 = vmatpush1.msra.mxu0 %v2774
    %6103 = vmatprep.subr.mxu0 0.0
    %6104 = vmatpush1.msra.mxu0 %v2775
    %6105 = vmatprep.subr.mxu0 0.0
    %6106 = vmatpush1.msra.mxu0 %v2776
    %6107 = vmatprep.subr.mxu0 0.0
    %6108 = vmatpush1.msra.mxu0 %v2777
    %6109 = vmatprep.subr.mxu0 0.0
    %6110 = vmatpush1.msra.mxu0 %v2778
    %6111 = vmatprep.subr.mxu0 0.0
    %6112 = vmatpush1.msra.mxu0 %v2779
    %6113 = vmatprep.subr.mxu0 0.0
    %6114 = vmatpush1.msra.mxu0 %v2780
    %6115 = vmatprep.subr.mxu0 0.0
    %6116 = vmatpush1.msra.mxu0 0.0
    %6117 = vmatprep.subr.mxu0 0.0
    %6118 = vmatpush1.msra.mxu0 0.0
    %6119 = vmatprep.subr.mxu0 0.0
    %6120 = vmatpush1.msra.mxu0 0.0
    %6121 = vmatprep.subr.mxu0 0.0
    %6122 = vmatpush1.msra.mxu0 0.0
    %6123 = vmatprep.subr.mxu0 0.0
    %6124 = vmatpush1.msra.mxu0 0.0
    %6125 = vmatprep.subr.mxu0 0.0
    %6126 = vmatpush1.msra.mxu0 0.0
    %6127 = vmatprep.subr.mxu0 0.0
    %6128 = vmatpush1.msra.mxu0 0.0
    %6129 = vmatprep.subr.mxu0 0.0
    %6130 = vmatpush1.msra.mxu0 0.0
    %6131 = vmatprep.subr.mxu0 0.0
    %6132 = vmatpush1.msra.mxu0 0.0
    %6133 = vmatprep.subr.mxu0 0.0
    %6134 = vmatpush1.msra.mxu0 0.0
    %6135 = vmatprep.subr.mxu0 0.0
    %6136 = vmatpush1.msra.mxu0 0.0
    %6137 = vmatprep.subr.mxu0 0.0
    %6138 = vmatpush1.msra.mxu0 0.0
    %6139 = vmatprep.subr.mxu0 0.0
    %6140 = vmatpush1.msra.mxu0 0.0
    %6141 = vmatprep.subr.mxu0 0.0
    %6142 = vmatpush1.msra.mxu0 0.0
    %6143 = vmatprep.subr.mxu0 0.0
    %6144 = vmatpush1.msra.mxu0 0.0
    %6145 = vmatprep.subr.mxu0 0.0
    %6146 = vmatpush1.msra.mxu0 0.0
    %6147 = vmatprep.subr.mxu0 0.0
    %6148 = vmatpush1.msra.mxu0 0.0
    %6149 = vmatprep.subr.mxu0 0.0
    %6150 = vmatpush1.msra.mxu0 0.0
    %6151 = vmatprep.subr.mxu0 0.0
    %6152 = vmatpush1.msra.mxu0 0.0
    %6153 = vmatprep.subr.mxu0 0.0
    %6154 = vmatpush1.msra.mxu0 0.0
    %6155 = vmatprep.subr.mxu0 0.0
    %6156 = vmatpush1.msra.mxu0 0.0
    %6157 = vmatprep.subr.mxu0 0.0
    %6158 = vmatpush1.msra.mxu0 0.0
    %6159 = vmatprep.subr.mxu0 0.0
    %6160 = vmatpush1.msra.mxu0 0.0
    %6161 = vmatprep.subr.mxu0 0.0
    %6162 = vmatpush1.msra.mxu0 0.0
    %6163 = vmatprep.mubr.f32.mxu0 0.0
    %6164 = vmatmul.mubr.f32.gmra.mrb[0].mxu0 %v6097
    %v6165 = vpop.f32.mrb[0].mxu0
    %v6166 = vadd.f32 0.0, %v6165
    %v6167 = vpop.f32.mrb[0].mxu0
    %6168 = vdwg.mxu0
    %v6171 = vrot.slane %v5913, 1
    %v6172 = vrot.slane %v5915, 1
    %v6177 = vunpack.c.l.s4 1966171168
    %v6178 = vunpack.c.0.s8 %v6177
    %v6179 = vlaneseq
    %v6180 = vshrl.u32 %v6179, 7
    %v6181 = vsub.s32 %v6178, %v6180
    %v6182 = vrot.slane %v6166, %v6181
    %v6183 = vcombine.high %v6182, %v6182
    %v6185 = vunpack.c.l.s4 1966171168
    %v6186 = vunpack.c.0.s8 %v6185
    %v6187 = vlaneseq
    %v6188 = vshrl.u32 %v6187, 7
    %v6189 = vsub.s32 %v6186, %v6188
    %v6190 = vrot.slane %v6182, %v6189
    %v6192 = vunpack.c.l.s4 1966171168
    %v6193 = vunpack.c.0.s8 %v6192
    %v6194 = vlaneseq
    %v6195 = vshrl.u32 %v6194, 7
    %v6196 = vsub.s32 %v6193, %v6195
    %v6197 = vrot.slane %v6183, %v6196
    %v6200 = vadd.f32 %v6171, %v6190
    %v6201 = vadd.f32 %v6172, %v6197
    %6202 = vst [vmem:[#allocation19 + $0x5] sm:$0x1] %v6200
    %6203 = vst [vmem:[#allocation19 + $0xd] sm:$0x1] %v6201
    %v6204 = vsel %vm268, %v6090, 0
    %6206 = vmatprep.subr.mxu0 0.0
    %6207 = vmatpush1.msra.mxu0 %v2761
    %6208 = vmatprep.subr.mxu0 0.0
    %6209 = vmatpush1.msra.mxu0 %v2762
    %6210 = vmatprep.subr.mxu0 0.0
    %6211 = vmatpush1.msra.mxu0 %v2763
    %6212 = vmatprep.subr.mxu0 0.0
    %6213 = vmatpush1.msra.mxu0 %v2764
    %6214 = vmatprep.subr.mxu0 0.0
    %6215 = vmatpush1.msra.mxu0 0.0
    %6216 = vmatprep.subr.mxu0 0.0
    %6217 = vmatpush1.msra.mxu0 0.0
    %6218 = vmatprep.subr.mxu0 0.0
    %6219 = vmatpush1.msra.mxu0 0.0
    %6220 = vmatprep.subr.mxu0 0.0
    %6221 = vmatpush1.msra.mxu0 0.0
    %6222 = vmatprep.subr.mxu0 0.0
    %6223 = vmatpush1.msra.mxu0 0.0
    %6224 = vmatprep.subr.mxu0 0.0
    %6225 = vmatpush1.msra.mxu0 0.0
    %6226 = vmatprep.subr.mxu0 0.0
    %6227 = vmatpush1.msra.mxu0 0.0
    %6228 = vmatprep.subr.mxu0 0.0
    %6229 = vmatpush1.msra.mxu0 0.0
    %6230 = vmatprep.subr.mxu0 0.0
    %6231 = vmatpush1.msra.mxu0 0.0
    %6232 = vmatprep.subr.mxu0 0.0
    %6233 = vmatpush1.msra.mxu0 0.0
    %6234 = vmatprep.subr.mxu0 0.0
    %6235 = vmatpush1.msra.mxu0 0.0
    %6236 = vmatprep.subr.mxu0 0.0
    %6237 = vmatpush1.msra.mxu0 0.0
    %6238 = vmatprep.subr.mxu0 0.0
    %6239 = vmatpush1.msra.mxu0 0.0
    %6240 = vmatprep.subr.mxu0 0.0
    %6241 = vmatpush1.msra.mxu0 0.0
    %6242 = vmatprep.subr.mxu0 0.0
    %6243 = vmatpush1.msra.mxu0 0.0
    %6244 = vmatprep.subr.mxu0 0.0
    %6245 = vmatpush1.msra.mxu0 0.0
    %6246 = vmatprep.subr.mxu0 0.0
    %6247 = vmatpush1.msra.mxu0 0.0
    %6248 = vmatprep.subr.mxu0 0.0
    %6249 = vmatpush1.msra.mxu0 0.0
    %6250 = vmatprep.subr.mxu0 0.0
    %6251 = vmatpush1.msra.mxu0 0.0
    %6252 = vmatprep.subr.mxu0 0.0
    %6253 = vmatpush1.msra.mxu0 0.0
    %6254 = vmatprep.subr.mxu0 0.0
    %6255 = vmatpush1.msra.mxu0 0.0
    %6256 = vmatprep.subr.mxu0 0.0
    %6257 = vmatpush1.msra.mxu0 0.0
    %6258 = vmatprep.subr.mxu0 0.0
    %6259 = vmatpush1.msra.mxu0 0.0
    %6260 = vmatprep.subr.mxu0 0.0
    %6261 = vmatpush1.msra.mxu0 0.0
    %6262 = vmatprep.subr.mxu0 0.0
    %6263 = vmatpush1.msra.mxu0 0.0
    %6264 = vmatprep.subr.mxu0 0.0
    %6265 = vmatpush1.msra.mxu0 0.0
    %6266 = vmatprep.subr.mxu0 0.0
    %6267 = vmatpush1.msra.mxu0 0.0
    %6268 = vmatprep.subr.mxu0 0.0
    %6269 = vmatpush1.msra.mxu0 0.0
    %6270 = vmatprep.mubr.f32.mxu0 0.0
    %6271 = vmatmul.mubr.f32.gmra.mrb[0].mxu0 %v6204
    %v6272 = vpop.f32.mrb[0].mxu0
    %v6273 = vadd.f32 0.0, %v6272
    %v6274 = vpop.f32.mrb[0].mxu0
    %6275 = vdwg.mxu0
    %v6278 = vunpack.c.l.s4 1966171168
    %v6279 = vunpack.c.0.s8 %v6278
    %v6280 = vlaneseq
    %v6281 = vshrl.u32 %v6280, 7
    %v6282 = vsub.s32 %v6279, %v6281
    %v6283 = vrot.slane %v6273, %v6282
    %v6284 = vcombine.high %v6283, %v6283
    %v6286 = vunpack.c.l.s4 1966171168
    %v6287 = vunpack.c.0.s8 %v6286
    %v6288 = vlaneseq
    %v6289 = vshrl.u32 %v6288, 7
    %v6290 = vsub.s32 %v6287, %v6289
    %v6291 = vrot.slane %v6283, %v6290
    %v6293 = vunpack.c.l.s4 1966171168
    %v6294 = vunpack.c.0.s8 %v6293
    %v6295 = vlaneseq
    %v6296 = vshrl.u32 %v6295, 7
    %v6297 = vsub.s32 %v6294, %v6296
    %v6298 = vrot.slane %v6284, %v6297
    %v6299 = vlaneseq
    %v6300 = vshrl.u32 %v6299, 7
    %v6301 = vsub.s32 0, %v6300
    %v6302 = vrot.slane %v6291, %v6301
    %v6303 = vlaneseq
    %v6304 = vshrl.u32 %v6303, 7
    %v6305 = vsub.s32 0, %v6304
    %v6306 = vrot.slane %v6298, %v6305
    %v6309 = vadd.f32 %v6302, %v2756
    %v6310 = vadd.f32 %v6302, %v2757
    %v6311 = vadd.f32 %v6306, %v2758
    %v6312 = vadd.f32 %v6306, %v2759
    %v6313 = vtanh.pop %v6309
    %v6314 = vtanh.pop %v6310
    %v6315 = vtanh.pop %v6311
    %v6316 = vtanh.pop %v6312
    %v6317 = vmul.f32 %v6313, %v2902
    %v6318 = vmul.f32 %v6314, %v2902
    %v6319 = vmul.f32 %v6315, %v2902
    %v6320 = vmul.f32 %v6316, %v2902
    %v6321 = vsel %vm268, %v6317, 0.0
    %6322 = vadd.xlane.f32.xlu0 %v6321
    %v6323 = vpop.xlane.xlu0 %6322
    %v6324 = vsel %vm268, %v6318, 0.0
    %6325 = vadd.xlane.f32.xlu0 %v6324
    %v6326 = vpop.xlane.xlu0 %6325
    %v6327 = vsel %vm268, %v6319, 0.0
    %6328 = vadd.xlane.f32.xlu0 %v6327
    %v6329 = vpop.xlane.xlu0 %6328
    %v6330 = vsel %vm268, %v6320, 0.0
    %6331 = vadd.xlane.f32.xlu0 %v6330
    %v6332 = vpop.xlane.xlu0 %6331
    %v6337 = vlaneseq
    %v6338 = vshrl.u32 %v6337, 7
    %v6339 = vsub.s32 %v2925, %v6338
    %v6340 = vrot.slane %v6323, %v6339
    %v6341 = vlaneseq
    %v6342 = vshrl.u32 %v6341, 7
    %v6343 = vsub.s32 %v2930, %v6342
    %v6344 = vrot.slane %v6326, %v6343
    %v6345 = vsel %vm2935, %v6344, %v6340
    %v6346 = vlaneseq
    %v6347 = vshrl.u32 %v6346, 7
    %v6348 = vsub.s32 %v2925, %v6347
    %v6349 = vrot.slane %v6329, %v6348
    %v6350 = vlaneseq
    %v6351 = vshrl.u32 %v6350, 7
    %v6352 = vsub.s32 %v2930, %v6351
    %v6353 = vrot.slane %v6332, %v6352
    %v6354 = vsel %vm2935, %v6353, %v6349
    %v6355 = vsel %vm410, %v6354, %v6345
    %v6357 = vsel %vm2948, %v6355, -inf
    %6358 = vmax.xlane.f32.xlu0 %v6357
    %v6359 = vpop.xlane.xlu0 %6358
    %v6361 = vlaneseq
    %v6362 = vshrl.u32 %v6361, 7
    %v6363 = vsub.s32 0, %v6362
    %v6364 = vrot.slane %v6359, %v6363
    %v6365 = vlaneseq
    %v6366 = vshrl.u32 %v6365, 7
    %v6367 = vsub.s32 1, %v6366
    %v6368 = vrot.slane %v6359, %v6367
    %v6371 = vsub.f32 %v6323, %v6364
    %v6372 = vsub.f32 %v6326, %v6364
    %v6373 = vsub.f32 %v6329, %v6368
    %v6374 = vsub.f32 %v6332, %v6368
    %v6375 = vmul.f32 %v6371, 1.442695
    %v6376 = vpow.pop %v6375
    %v6377 = vmul.f32 %v6372, 1.442695
    %v6378 = vpow.pop %v6377
    %v6379 = vmul.f32 %v6373, 1.442695
    %v6380 = vpow.pop %v6379
    %v6381 = vmul.f32 %v6374, 1.442695
    %v6382 = vpow.pop %v6381
    %6387 = vset.pattern.permute.xlu0 0
    %6388 = vperm.xlu0 %6387, %v6376
    %v6389 = vpop.permute.xlu0 %6388
    %6390 = vset.pattern.permute.xlu0 0
    %6391 = vperm.xlu0 %6390, %v6378
    %v6392 = vpop.permute.xlu0 %6391
    %6393 = vset.pattern.permute.xlu0 0
    %6394 = vperm.xlu0 %6393, %v6380
    %v6395 = vpop.permute.xlu0 %6394
    %6396 = vset.pattern.permute.xlu0 0
    %6397 = vperm.xlu0 %6396, %v6382
    %v6398 = vpop.permute.xlu0 %6397
    %v6399 = vlaneseq
    %v6400 = vshrl.u32 %v6399, 7
    %v6401 = vsub.s32 %v2925, %v6400
    %v6402 = vrot.slane %v6389, %v6401
    %v6403 = vlaneseq
    %v6404 = vshrl.u32 %v6403, 7
    %v6405 = vsub.s32 %v2930, %v6404
    %v6406 = vrot.slane %v6392, %v6405
    %v6407 = vsel %vm2935, %v6406, %v6402
    %v6408 = vlaneseq
    %v6409 = vshrl.u32 %v6408, 7
    %v6410 = vsub.s32 %v2925, %v6409
    %v6411 = vrot.slane %v6395, %v6410
    %v6412 = vlaneseq
    %v6413 = vshrl.u32 %v6412, 7
    %v6414 = vsub.s32 %v2930, %v6413
    %v6415 = vrot.slane %v6398, %v6414
    %v6416 = vsel %vm2935, %v6415, %v6411
    %v6417 = vsel %vm410, %v6416, %v6407
    %v6419 = vsel %vm2948, %v6417, 0.0
    %6420 = vadd.xlane.f32.xlu0 %v6419
    %v6421 = vpop.xlane.xlu0 %6420
    %v6422 = vrcp.pop %v6421
    %v6424 = vlaneseq
    %v6425 = vshrl.u32 %v6424, 7
    %v6426 = vsub.s32 0, %v6425
    %v6427 = vrot.slane %v6422, %v6426
    %v6428 = vlaneseq
    %v6429 = vshrl.u32 %v6428, 7
    %v6430 = vsub.s32 1, %v6429
    %v6431 = vrot.slane %v6422, %v6430
    %v6434 = vmul.f32 %v6376, %v6427
    %v6435 = vmul.f32 %v6378, %v6427
    %v6436 = vmul.f32 %v6380, %v6431
    %v6437 = vmul.f32 %v6382, %v6431
    %6439 = vset.pattern.permute.xlu0 0
    %6440 = vperm.xlu0 %6439, %v6434
    %v6441 = vpop.permute.xlu0 %6440
    %6444 = vset.pattern.permute.xlu0 0
    %6445 = vperm.xlu0 %6444, %v6435
    %v6446 = vpop.permute.xlu0 %6445
    %6449 = vset.pattern.permute.xlu0 0
    %6450 = vperm.xlu0 %6449, %v6436
    %v6451 = vpop.permute.xlu0 %6450
    %6454 = vset.pattern.permute.xlu0 0
    %6455 = vperm.xlu0 %6454, %v6437
    %v6456 = vpop.permute.xlu0 %6455
    %v6458 = vmul.f32 %v6441, %v2644
    %v6459 = vmul.f32 %v6446, %v2645
    %v6460 = vmul.f32 %v6451, %v2646
    %v6461 = vmul.f32 %v6456, %v2647
    %v6462 = vsel %vm268, %v6458, 0.0
    %v6463 = vsel %vm268, %v6459, 0.0
    %v6464 = vadd.f32 %v6462, %v6463
    %v6465 = vrot.slane %v6464, 4
    %v6466 = vadd.f32 %v6464, %v6465
    %v6467 = vrot.slane %v6466, 2
    %v6468 = vadd.f32 %v6466, %v6467
    %v6469 = vrot.slane %v6468, 1
    %v6470 = vadd.f32 %v6468, %v6469
    %v6471 = vsel %vm268, %v6460, 0.0
    %v6472 = vsel %vm268, %v6461, 0.0
    %v6473 = vadd.f32 %v6471, %v6472
    %v6474 = vrot.slane %v6473, 4
    %v6475 = vadd.f32 %v6473, %v6474
    %v6476 = vrot.slane %v6475, 2
    %v6477 = vadd.f32 %v6475, %v6476
    %v6478 = vrot.slane %v6477, 1
    %v6479 = vadd.f32 %v6477, %v6478
    %s6480 = scalar_lea.vmem [#allocation4], 6
    %v6481 = vld [vmem:[%s6480] ss:$8 sm:$0x3]
    %s6482 = scalar_lea.vmem [#allocation4], 22
    %v6483 = vld [vmem:[%s6482] ss:$8 sm:$0x3]
    %v6486 = vsel %vm410, %v6479, %v6470
    %6488 = vrot.lane.b32.xlu0 %v6088, 64
    %v6489 = vpop.permute.xlu0 %6488
    %v6491 = vsel %vm268, %v6486, %v6489
    %v6493 = vsel %vm3083, %v6491, 0
    %6495 = vmatprep.subr.mxu0 0.0
    %6496 = vmatpush1.msra.mxu0 %v2765
    %6497 = vmatprep.subr.mxu0 0.0
    %6498 = vmatpush1.msra.mxu0 %v2766
    %6499 = vmatprep.subr.mxu0 0.0
    %6500 = vmatpush1.msra.mxu0 %v2767
    %6501 = vmatprep.subr.mxu0 0.0
    %6502 = vmatpush1.msra.mxu0 %v2768
    %6503 = vmatprep.subr.mxu0 0.0
    %6504 = vmatpush1.msra.mxu0 %v2769
    %6505 = vmatprep.subr.mxu0 0.0
    %6506 = vmatpush1.msra.mxu0 %v2770
    %6507 = vmatprep.subr.mxu0 0.0
    %6508 = vmatpush1.msra.mxu0 %v2771
    %6509 = vmatprep.subr.mxu0 0.0
    %6510 = vmatpush1.msra.mxu0 %v2772
    %6511 = vmatprep.subr.mxu0 0.0
    %6512 = vmatpush1.msra.mxu0 0.0
    %6513 = vmatprep.subr.mxu0 0.0
    %6514 = vmatpush1.msra.mxu0 0.0
    %6515 = vmatprep.subr.mxu0 0.0
    %6516 = vmatpush1.msra.mxu0 0.0
    %6517 = vmatprep.subr.mxu0 0.0
    %6518 = vmatpush1.msra.mxu0 0.0
    %6519 = vmatprep.subr.mxu0 0.0
    %6520 = vmatpush1.msra.mxu0 0.0
    %6521 = vmatprep.subr.mxu0 0.0
    %6522 = vmatpush1.msra.mxu0 0.0
    %6523 = vmatprep.subr.mxu0 0.0
    %6524 = vmatpush1.msra.mxu0 0.0
    %6525 = vmatprep.subr.mxu0 0.0
    %6526 = vmatpush1.msra.mxu0 0.0
    %6527 = vmatprep.subr.mxu0 0.0
    %6528 = vmatpush1.msra.mxu0 0.0
    %6529 = vmatprep.subr.mxu0 0.0
    %6530 = vmatpush1.msra.mxu0 0.0
    %6531 = vmatprep.subr.mxu0 0.0
    %6532 = vmatpush1.msra.mxu0 0.0
    %6533 = vmatprep.subr.mxu0 0.0
    %6534 = vmatpush1.msra.mxu0 0.0
    %6535 = vmatprep.subr.mxu0 0.0
    %6536 = vmatpush1.msra.mxu0 0.0
    %6537 = vmatprep.subr.mxu0 0.0
    %6538 = vmatpush1.msra.mxu0 0.0
    %6539 = vmatprep.subr.mxu0 0.0
    %6540 = vmatpush1.msra.mxu0 0.0
    %6541 = vmatprep.subr.mxu0 0.0
    %6542 = vmatpush1.msra.mxu0 0.0
    %6543 = vmatprep.subr.mxu0 0.0
    %6544 = vmatpush1.msra.mxu0 0.0
    %6545 = vmatprep.subr.mxu0 0.0
    %6546 = vmatpush1.msra.mxu0 0.0
    %6547 = vmatprep.subr.mxu0 0.0
    %6548 = vmatpush1.msra.mxu0 0.0
    %6549 = vmatprep.subr.mxu0 0.0
    %6550 = vmatpush1.msra.mxu0 0.0
    %6551 = vmatprep.subr.mxu0 0.0
    %6552 = vmatpush1.msra.mxu0 0.0
    %6553 = vmatprep.subr.mxu0 0.0
    %6554 = vmatpush1.msra.mxu0 0.0
    %6555 = vmatprep.subr.mxu0 0.0
    %6556 = vmatpush1.msra.mxu0 0.0
    %6557 = vmatprep.subr.mxu0 0.0
    %6558 = vmatpush1.msra.mxu0 0.0
    %6559 = vmatprep.mubr.f32.mxu0 0.0
    %6560 = vmatmul.mubr.f32.gmra.mrb[0].mxu0 %v6493
    %v6561 = vpop.f32.mrb[0].mxu0
    %v6562 = vadd.f32 0.0, %v6561
    %v6563 = vpop.f32.mrb[0].mxu0
    %6564 = vdwg.mxu0
    %v6567 = vunpack.c.l.s4 1966171168
    %v6568 = vunpack.c.0.s8 %v6567
    %v6569 = vlaneseq
    %v6570 = vshrl.u32 %v6569, 7
    %v6571 = vsub.s32 %v6568, %v6570
    %v6572 = vrot.slane %v6562, %v6571
    %v6573 = vcombine.high %v6572, %v6572
    %v6575 = vunpack.c.l.s4 1966171168
    %v6576 = vunpack.c.0.s8 %v6575
    %v6577 = vlaneseq
    %v6578 = vshrl.u32 %v6577, 7
    %v6579 = vsub.s32 %v6576, %v6578
    %v6580 = vrot.slane %v6572, %v6579
    %v6582 = vunpack.c.l.s4 1966171168
    %v6583 = vunpack.c.0.s8 %v6582
    %v6584 = vlaneseq
    %v6585 = vshrl.u32 %v6584, 7
    %v6586 = vsub.s32 %v6583, %v6585
    %v6587 = vrot.slane %v6573, %v6586
    %v6590 = vadd.f32 %v6481, %v6580
    %v6591 = vadd.f32 %v6483, %v6587
    %v6592 = vxor.u32 %v6590, 2147483648
    %v6593 = vxor.u32 %v6591, 2147483648
    %v6594 = vmul.f32 %v6592, 1.442695
    %v6595 = vpow.pop %v6594
    %v6596 = vmul.f32 %v6593, 1.442695
    %v6597 = vpow.pop %v6596
    %v6598 = vadd.f32 %v6595, 1.0
    %v6599 = vadd.f32 %v6597, 1.0
    %v6600 = vrcp.pop %v6598
    %v6601 = vmul.f32 1.0, %v6600
    %v6602 = vrcp.pop %v6599
    %v6603 = vmul.f32 1.0, %v6602
    %v6604 = vtanh.pop %v6590
    %v6605 = vtanh.pop %v6591
    %v6606 = vmul.f32 %v6601, %v6058
    %v6607 = vmul.f32 %v6603, %v6059
    %6610 = vrot.lane.b32.xlu0 %v6604, 64
    %v6611 = vpop.permute.xlu0 %6610
    %6612 = vrot.lane.b32.xlu0 %v6605, 64
    %v6613 = vpop.permute.xlu0 %6612
    %v6616 = vmul.f32 %v6601, %v6611
    %v6617 = vmul.f32 %v6603, %v6613
    %6620 = vrot.lane.b32.xlu0 %v6616, 32
    %v6621 = vpop.permute.xlu0 %6620
    %6622 = vrot.lane.b32.xlu0 %v6617, 32
    %v6623 = vpop.permute.xlu0 %6622
    %v6626 = vadd.f32 %v6606, %v6621
    %v6627 = vadd.f32 %v6607, %v6623
    %v6628 = vtanh.pop %v6626
    %v6629 = vtanh.pop %v6627
    %6632 = vrot.lane.b32.xlu0 %v6628, 64
    %v6633 = vpop.permute.xlu0 %6632
    %6634 = vrot.lane.b32.xlu0 %v6629, 64
    %v6635 = vpop.permute.xlu0 %6634
    %v6638 = vmul.f32 %v6601, %v6633
    %v6639 = vmul.f32 %v6603, %v6635
    %v6642 = vcombine.low %v6638, %v6639
    %v6644 = vunpack.c.l.s4 1966171168
    %v6645 = vunpack.c.0.s8 %v6644
    %v6646 = vlaneseq
    %v6647 = vshrl.u32 %v6646, 7
    %v6648 = vsub.s32 %v6645, %v6647
    %v6649 = vrot.slane %v6642, %v6648
    %v6651 = vunpack.c.l.s4 1966171168
    %v6652 = vunpack.c.0.s8 %v6651
    %v6653 = vlaneseq
    %v6654 = vshrl.u32 %v6653, 7
    %v6655 = vsub.s32 %v6652, %v6654
    %v6656 = vrot.slane %v6649, %v6655
    %6657 = vrot.lane.b32.xlu0 %v6656, 32
    %v6658 = vpop.permute.xlu0 %6657
    %6660 = vrot.lane.b32.xlu0 %v6486, 32
    %v6661 = vpop.permute.xlu0 %6660
    %v6663 = vsel %vm268, %v6658, %v6661
    %v6665 = vsel %vm3083, %v6663, 0
    %6667 = vmatprep.subr.mxu0 0.0
    %6668 = vmatpush1.msra.mxu0 %v2773
    %6669 = vmatprep.subr.mxu0 0.0
    %6670 = vmatpush1.msra.mxu0 %v2774
    %6671 = vmatprep.subr.mxu0 0.0
    %6672 = vmatpush1.msra.mxu0 %v2775
    %6673 = vmatprep.subr.mxu0 0.0
    %6674 = vmatpush1.msra.mxu0 %v2776
    %6675 = vmatprep.subr.mxu0 0.0
    %6676 = vmatpush1.msra.mxu0 %v2777
    %6677 = vmatprep.subr.mxu0 0.0
    %6678 = vmatpush1.msra.mxu0 %v2778
    %6679 = vmatprep.subr.mxu0 0.0
    %6680 = vmatpush1.msra.mxu0 %v2779
    %6681 = vmatprep.subr.mxu0 0.0
    %6682 = vmatpush1.msra.mxu0 %v2780
    %6683 = vmatprep.subr.mxu0 0.0
    %6684 = vmatpush1.msra.mxu0 0.0
    %6685 = vmatprep.subr.mxu0 0.0
    %6686 = vmatpush1.msra.mxu0 0.0
    %6687 = vmatprep.subr.mxu0 0.0
    %6688 = vmatpush1.msra.mxu0 0.0
    %6689 = vmatprep.subr.mxu0 0.0
    %6690 = vmatpush1.msra.mxu0 0.0
    %6691 = vmatprep.subr.mxu0 0.0
    %6692 = vmatpush1.msra.mxu0 0.0
    %6693 = vmatprep.subr.mxu0 0.0
    %6694 = vmatpush1.msra.mxu0 0.0
    %6695 = vmatprep.subr.mxu0 0.0
    %6696 = vmatpush1.msra.mxu0 0.0
    %6697 = vmatprep.subr.mxu0 0.0
    %6698 = vmatpush1.msra.mxu0 0.0
    %6699 = vmatprep.subr.mxu0 0.0
    %6700 = vmatpush1.msra.mxu0 0.0
    %6701 = vmatprep.subr.mxu0 0.0
    %6702 = vmatpush1.msra.mxu0 0.0
    %6703 = vmatprep.subr.mxu0 0.0
    %6704 = vmatpush1.msra.mxu0 0.0
    %6705 = vmatprep.subr.mxu0 0.0
    %6706 = vmatpush1.msra.mxu0 0.0
    %6707 = vmatprep.subr.mxu0 0.0
    %6708 = vmatpush1.msra.mxu0 0.0
    %6709 = vmatprep.subr.mxu0 0.0
    %6710 = vmatpush1.msra.mxu0 0.0
    %6711 = vmatprep.subr.mxu0 0.0
    %6712 = vmatpush1.msra.mxu0 0.0
    %6713 = vmatprep.subr.mxu0 0.0
    %6714 = vmatpush1.msra.mxu0 0.0
    %6715 = vmatprep.subr.mxu0 0.0
    %6716 = vmatpush1.msra.mxu0 0.0
    %6717 = vmatprep.subr.mxu0 0.0
    %6718 = vmatpush1.msra.mxu0 0.0
    %6719 = vmatprep.subr.mxu0 0.0
    %6720 = vmatpush1.msra.mxu0 0.0
    %6721 = vmatprep.subr.mxu0 0.0
    %6722 = vmatpush1.msra.mxu0 0.0
    %6723 = vmatprep.subr.mxu0 0.0
    %6724 = vmatpush1.msra.mxu0 0.0
    %6725 = vmatprep.subr.mxu0 0.0
    %6726 = vmatpush1.msra.mxu0 0.0
    %6727 = vmatprep.subr.mxu0 0.0
    %6728 = vmatpush1.msra.mxu0 0.0
    %6729 = vmatprep.subr.mxu0 0.0
    %6730 = vmatpush1.msra.mxu0 0.0
    %6731 = vmatprep.mubr.f32.mxu0 0.0
    %6732 = vmatmul.mubr.f32.gmra.mrb[0].mxu0 %v6665
    %v6733 = vpop.f32.mrb[0].mxu0
    %v6734 = vadd.f32 0.0, %v6733
    %v6735 = vpop.f32.mrb[0].mxu0
    %6736 = vdwg.mxu0
    %v6739 = vrot.slane %v6481, 1
    %v6740 = vrot.slane %v6483, 1
    %v6745 = vunpack.c.l.s4 1966171168
    %v6746 = vunpack.c.0.s8 %v6745
    %v6747 = vlaneseq
    %v6748 = vshrl.u32 %v6747, 7
    %v6749 = vsub.s32 %v6746, %v6748
    %v6750 = vrot.slane %v6734, %v6749
    %v6751 = vcombine.high %v6750, %v6750
    %v6753 = vunpack.c.l.s4 1966171168
    %v6754 = vunpack.c.0.s8 %v6753
    %v6755 = vlaneseq
    %v6756 = vshrl.u32 %v6755, 7
    %v6757 = vsub.s32 %v6754, %v6756
    %v6758 = vrot.slane %v6750, %v6757
    %v6760 = vunpack.c.l.s4 1966171168
    %v6761 = vunpack.c.0.s8 %v6760
    %v6762 = vlaneseq
    %v6763 = vshrl.u32 %v6762, 7
    %v6764 = vsub.s32 %v6761, %v6763
    %v6765 = vrot.slane %v6751, %v6764
    %v6768 = vadd.f32 %v6739, %v6758
    %v6769 = vadd.f32 %v6740, %v6765
    %6770 = vst [vmem:[#allocation19 + $0x6] sm:$0x1] %v6768
    %6771 = vst [vmem:[#allocation19 + $0xe] sm:$0x1] %v6769
    %v6772 = vsel %vm268, %v6658, 0
    %6774 = vmatprep.subr.mxu0 0.0
    %6775 = vmatpush1.msra.mxu0 %v2761
    %6776 = vmatprep.subr.mxu0 0.0
    %6777 = vmatpush1.msra.mxu0 %v2762
    %6778 = vmatprep.subr.mxu0 0.0
    %6779 = vmatpush1.msra.mxu0 %v2763
    %6780 = vmatprep.subr.mxu0 0.0
    %6781 = vmatpush1.msra.mxu0 %v2764
    %6782 = vmatprep.subr.mxu0 0.0
    %6783 = vmatpush1.msra.mxu0 0.0
    %6784 = vmatprep.subr.mxu0 0.0
    %6785 = vmatpush1.msra.mxu0 0.0
    %6786 = vmatprep.subr.mxu0 0.0
    %6787 = vmatpush1.msra.mxu0 0.0
    %6788 = vmatprep.subr.mxu0 0.0
    %6789 = vmatpush1.msra.mxu0 0.0
    %6790 = vmatprep.subr.mxu0 0.0
    %6791 = vmatpush1.msra.mxu0 0.0
    %6792 = vmatprep.subr.mxu0 0.0
    %6793 = vmatpush1.msra.mxu0 0.0
    %6794 = vmatprep.subr.mxu0 0.0
    %6795 = vmatpush1.msra.mxu0 0.0
    %6796 = vmatprep.subr.mxu0 0.0
    %6797 = vmatpush1.msra.mxu0 0.0
    %6798 = vmatprep.subr.mxu0 0.0
    %6799 = vmatpush1.msra.mxu0 0.0
    %6800 = vmatprep.subr.mxu0 0.0
    %6801 = vmatpush1.msra.mxu0 0.0
    %6802 = vmatprep.subr.mxu0 0.0
    %6803 = vmatpush1.msra.mxu0 0.0
    %6804 = vmatprep.subr.mxu0 0.0
    %6805 = vmatpush1.msra.mxu0 0.0
    %6806 = vmatprep.subr.mxu0 0.0
    %6807 = vmatpush1.msra.mxu0 0.0
    %6808 = vmatprep.subr.mxu0 0.0
    %6809 = vmatpush1.msra.mxu0 0.0
    %6810 = vmatprep.subr.mxu0 0.0
    %6811 = vmatpush1.msra.mxu0 0.0
    %6812 = vmatprep.subr.mxu0 0.0
    %6813 = vmatpush1.msra.mxu0 0.0
    %6814 = vmatprep.subr.mxu0 0.0
    %6815 = vmatpush1.msra.mxu0 0.0
    %6816 = vmatprep.subr.mxu0 0.0
    %6817 = vmatpush1.msra.mxu0 0.0
    %6818 = vmatprep.subr.mxu0 0.0
    %6819 = vmatpush1.msra.mxu0 0.0
    %6820 = vmatprep.subr.mxu0 0.0
    %6821 = vmatpush1.msra.mxu0 0.0
    %6822 = vmatprep.subr.mxu0 0.0
    %6823 = vmatpush1.msra.mxu0 0.0
    %6824 = vmatprep.subr.mxu0 0.0
    %6825 = vmatpush1.msra.mxu0 0.0
    %6826 = vmatprep.subr.mxu0 0.0
    %6827 = vmatpush1.msra.mxu0 0.0
    %6828 = vmatprep.subr.mxu0 0.0
    %6829 = vmatpush1.msra.mxu0 0.0
    %6830 = vmatprep.subr.mxu0 0.0
    %6831 = vmatpush1.msra.mxu0 0.0
    %6832 = vmatprep.subr.mxu0 0.0
    %6833 = vmatpush1.msra.mxu0 0.0
    %6834 = vmatprep.subr.mxu0 0.0
    %6835 = vmatpush1.msra.mxu0 0.0
    %6836 = vmatprep.subr.mxu0 0.0
    %6837 = vmatpush1.msra.mxu0 0.0
    %6838 = vmatprep.mubr.f32.mxu0 0.0
    %6839 = vmatmul.mubr.f32.gmra.mrb[0].mxu0 %v6772
    %v6840 = vpop.f32.mrb[0].mxu0
    %v6841 = vadd.f32 0.0, %v6840
    %v6842 = vpop.f32.mrb[0].mxu0
    %6843 = vdwg.mxu0
    %v6846 = vunpack.c.l.s4 1966171168
    %v6847 = vunpack.c.0.s8 %v6846
    %v6848 = vlaneseq
    %v6849 = vshrl.u32 %v6848, 7
    %v6850 = vsub.s32 %v6847, %v6849
    %v6851 = vrot.slane %v6841, %v6850
    %v6852 = vcombine.high %v6851, %v6851
    %v6854 = vunpack.c.l.s4 1966171168
    %v6855 = vunpack.c.0.s8 %v6854
    %v6856 = vlaneseq
    %v6857 = vshrl.u32 %v6856, 7
    %v6858 = vsub.s32 %v6855, %v6857
    %v6859 = vrot.slane %v6851, %v6858
    %v6861 = vunpack.c.l.s4 1966171168
    %v6862 = vunpack.c.0.s8 %v6861
    %v6863 = vlaneseq
    %v6864 = vshrl.u32 %v6863, 7
    %v6865 = vsub.s32 %v6862, %v6864
    %v6866 = vrot.slane %v6852, %v6865
    %v6867 = vlaneseq
    %v6868 = vshrl.u32 %v6867, 7
    %v6869 = vsub.s32 0, %v6868
    %v6870 = vrot.slane %v6859, %v6869
    %v6871 = vlaneseq
    %v6872 = vshrl.u32 %v6871, 7
    %v6873 = vsub.s32 0, %v6872
    %v6874 = vrot.slane %v6866, %v6873
    %v6877 = vadd.f32 %v6870, %v2756
    %v6878 = vadd.f32 %v6870, %v2757
    %v6879 = vadd.f32 %v6874, %v2758
    %v6880 = vadd.f32 %v6874, %v2759
    %v6881 = vtanh.pop %v6877
    %v6882 = vtanh.pop %v6878
    %v6883 = vtanh.pop %v6879
    %v6884 = vtanh.pop %v6880
    %v6885 = vmul.f32 %v6881, %v2902
    %v6886 = vmul.f32 %v6882, %v2902
    %v6887 = vmul.f32 %v6883, %v2902
    %v6888 = vmul.f32 %v6884, %v2902
    %v6889 = vsel %vm268, %v6885, 0.0
    %6890 = vadd.xlane.f32.xlu0 %v6889
    %v6891 = vpop.xlane.xlu0 %6890
    %v6892 = vsel %vm268, %v6886, 0.0
    %6893 = vadd.xlane.f32.xlu0 %v6892
    %v6894 = vpop.xlane.xlu0 %6893
    %v6895 = vsel %vm268, %v6887, 0.0
    %6896 = vadd.xlane.f32.xlu0 %v6895
    %v6897 = vpop.xlane.xlu0 %6896
    %v6898 = vsel %vm268, %v6888, 0.0
    %6899 = vadd.xlane.f32.xlu0 %v6898
    %v6900 = vpop.xlane.xlu0 %6899
    %v6905 = vlaneseq
    %v6906 = vshrl.u32 %v6905, 7
    %v6907 = vsub.s32 %v2925, %v6906
    %v6908 = vrot.slane %v6891, %v6907
    %v6909 = vlaneseq
    %v6910 = vshrl.u32 %v6909, 7
    %v6911 = vsub.s32 %v2930, %v6910
    %v6912 = vrot.slane %v6894, %v6911
    %v6913 = vsel %vm2935, %v6912, %v6908
    %v6914 = vlaneseq
    %v6915 = vshrl.u32 %v6914, 7
    %v6916 = vsub.s32 %v2925, %v6915
    %v6917 = vrot.slane %v6897, %v6916
    %v6918 = vlaneseq
    %v6919 = vshrl.u32 %v6918, 7
    %v6920 = vsub.s32 %v2930, %v6919
    %v6921 = vrot.slane %v6900, %v6920
    %v6922 = vsel %vm2935, %v6921, %v6917
    %v6923 = vsel %vm410, %v6922, %v6913
    %v6925 = vsel %vm2948, %v6923, -inf
    %6926 = vmax.xlane.f32.xlu0 %v6925
    %v6927 = vpop.xlane.xlu0 %6926
    %v6929 = vlaneseq
    %v6930 = vshrl.u32 %v6929, 7
    %v6931 = vsub.s32 0, %v6930
    %v6932 = vrot.slane %v6927, %v6931
    %v6933 = vlaneseq
    %v6934 = vshrl.u32 %v6933, 7
    %v6935 = vsub.s32 1, %v6934
    %v6936 = vrot.slane %v6927, %v6935
    %v6939 = vsub.f32 %v6891, %v6932
    %v6940 = vsub.f32 %v6894, %v6932
    %v6941 = vsub.f32 %v6897, %v6936
    %v6942 = vsub.f32 %v6900, %v6936
    %v6943 = vmul.f32 %v6939, 1.442695
    %v6944 = vpow.pop %v6943
    %v6945 = vmul.f32 %v6940, 1.442695
    %v6946 = vpow.pop %v6945
    %v6947 = vmul.f32 %v6941, 1.442695
    %v6948 = vpow.pop %v6947
    %v6949 = vmul.f32 %v6942, 1.442695
    %v6950 = vpow.pop %v6949
    %6955 = vset.pattern.permute.xlu0 0
    %6956 = vperm.xlu0 %6955, %v6944
    %v6957 = vpop.permute.xlu0 %6956
    %6958 = vset.pattern.permute.xlu0 0
    %6959 = vperm.xlu0 %6958, %v6946
    %v6960 = vpop.permute.xlu0 %6959
    %6961 = vset.pattern.permute.xlu0 0
    %6962 = vperm.xlu0 %6961, %v6948
    %v6963 = vpop.permute.xlu0 %6962
    %6964 = vset.pattern.permute.xlu0 0
    %6965 = vperm.xlu0 %6964, %v6950
    %v6966 = vpop.permute.xlu0 %6965
    %v6967 = vlaneseq
    %v6968 = vshrl.u32 %v6967, 7
    %v6969 = vsub.s32 %v2925, %v6968
    %v6970 = vrot.slane %v6957, %v6969
    %v6971 = vlaneseq
    %v6972 = vshrl.u32 %v6971, 7
    %v6973 = vsub.s32 %v2930, %v6972
    %v6974 = vrot.slane %v6960, %v6973
    %v6975 = vsel %vm2935, %v6974, %v6970
    %v6976 = vlaneseq
    %v6977 = vshrl.u32 %v6976, 7
    %v6978 = vsub.s32 %v2925, %v6977
    %v6979 = vrot.slane %v6963, %v6978
    %v6980 = vlaneseq
    %v6981 = vshrl.u32 %v6980, 7
    %v6982 = vsub.s32 %v2930, %v6981
    %v6983 = vrot.slane %v6966, %v6982
    %v6984 = vsel %vm2935, %v6983, %v6979
    %v6985 = vsel %vm410, %v6984, %v6975
    %v6987 = vsel %vm2948, %v6985, 0.0
    %6988 = vadd.xlane.f32.xlu0 %v6987
    %v6989 = vpop.xlane.xlu0 %6988
    %v6990 = vrcp.pop %v6989
    %v6992 = vlaneseq
    %v6993 = vshrl.u32 %v6992, 7
    %v6994 = vsub.s32 0, %v6993
    %v6995 = vrot.slane %v6990, %v6994
    %v6996 = vlaneseq
    %v6997 = vshrl.u32 %v6996, 7
    %v6998 = vsub.s32 1, %v6997
    %v6999 = vrot.slane %v6990, %v6998
    %v7002 = vmul.f32 %v6944, %v6995
    %v7003 = vmul.f32 %v6946, %v6995
    %v7004 = vmul.f32 %v6948, %v6999
    %v7005 = vmul.f32 %v6950, %v6999
    %7007 = vset.pattern.permute.xlu0 0
    %7008 = vperm.xlu0 %7007, %v7002
    %v7009 = vpop.permute.xlu0 %7008
    %7012 = vset.pattern.permute.xlu0 0
    %7013 = vperm.xlu0 %7012, %v7003
    %v7014 = vpop.permute.xlu0 %7013
    %7017 = vset.pattern.permute.xlu0 0
    %7018 = vperm.xlu0 %7017, %v7004
    %v7019 = vpop.permute.xlu0 %7018
    %7022 = vset.pattern.permute.xlu0 0
    %7023 = vperm.xlu0 %7022, %v7005
    %v7024 = vpop.permute.xlu0 %7023
    %v7026 = vmul.f32 %v7009, %v2644
    %v7027 = vmul.f32 %v7014, %v2645
    %v7028 = vmul.f32 %v7019, %v2646
    %v7029 = vmul.f32 %v7024, %v2647
    %v7030 = vsel %vm268, %v7026, 0.0
    %v7031 = vsel %vm268, %v7027, 0.0
    %v7032 = vadd.f32 %v7030, %v7031
    %v7033 = vrot.slane %v7032, 4
    %v7034 = vadd.f32 %v7032, %v7033
    %v7035 = vrot.slane %v7034, 2
    %v7036 = vadd.f32 %v7034, %v7035
    %v7037 = vrot.slane %v7036, 1
    %v7038 = vadd.f32 %v7036, %v7037
    %v7039 = vsel %vm268, %v7028, 0.0
    %v7040 = vsel %vm268, %v7029, 0.0
    %v7041 = vadd.f32 %v7039, %v7040
    %v7042 = vrot.slane %v7041, 4
    %v7043 = vadd.f32 %v7041, %v7042
    %v7044 = vrot.slane %v7043, 2
    %v7045 = vadd.f32 %v7043, %v7044
    %v7046 = vrot.slane %v7045, 1
    %v7047 = vadd.f32 %v7045, %v7046
    %s7048 = scalar_lea.vmem [#allocation4], 7
    %v7049 = vld [vmem:[%s7048] ss:$8 sm:$0x3]
    %s7050 = scalar_lea.vmem [#allocation4], 23
    %v7051 = vld [vmem:[%s7050] ss:$8 sm:$0x3]
    %v7054 = vsel %vm410, %v7047, %v7038
    %7056 = vrot.lane.b32.xlu0 %v6656, 64
    %v7057 = vpop.permute.xlu0 %7056
    %v7059 = vsel %vm268, %v7054, %v7057
    %v7061 = vsel %vm3083, %v7059, 0
    %7063 = vmatprep.subr.mxu0 0.0
    %7064 = vmatpush1.msra.mxu0 %v2765
    %7065 = vmatprep.subr.mxu0 0.0
    %7066 = vmatpush1.msra.mxu0 %v2766
    %7067 = vmatprep.subr.mxu0 0.0
    %7068 = vmatpush1.msra.mxu0 %v2767
    %7069 = vmatprep.subr.mxu0 0.0
    %7070 = vmatpush1.msra.mxu0 %v2768
    %7071 = vmatprep.subr.mxu0 0.0
    %7072 = vmatpush1.msra.mxu0 %v2769
    %7073 = vmatprep.subr.mxu0 0.0
    %7074 = vmatpush1.msra.mxu0 %v2770
    %7075 = vmatprep.subr.mxu0 0.0
    %7076 = vmatpush1.msra.mxu0 %v2771
    %7077 = vmatprep.subr.mxu0 0.0
    %7078 = vmatpush1.msra.mxu0 %v2772
    %7079 = vmatprep.subr.mxu0 0.0
    %7080 = vmatpush1.msra.mxu0 0.0
    %7081 = vmatprep.subr.mxu0 0.0
    %7082 = vmatpush1.msra.mxu0 0.0
    %7083 = vmatprep.subr.mxu0 0.0
    %7084 = vmatpush1.msra.mxu0 0.0
    %7085 = vmatprep.subr.mxu0 0.0
    %7086 = vmatpush1.msra.mxu0 0.0
    %7087 = vmatprep.subr.mxu0 0.0
    %7088 = vmatpush1.msra.mxu0 0.0
    %7089 = vmatprep.subr.mxu0 0.0
    %7090 = vmatpush1.msra.mxu0 0.0
    %7091 = vmatprep.subr.mxu0 0.0
    %7092 = vmatpush1.msra.mxu0 0.0
    %7093 = vmatprep.subr.mxu0 0.0
    %7094 = vmatpush1.msra.mxu0 0.0
    %7095 = vmatprep.subr.mxu0 0.0
    %7096 = vmatpush1.msra.mxu0 0.0
    %7097 = vmatprep.subr.mxu0 0.0
    %7098 = vmatpush1.msra.mxu0 0.0
    %7099 = vmatprep.subr.mxu0 0.0
    %7100 = vmatpush1.msra.mxu0 0.0
    %7101 = vmatprep.subr.mxu0 0.0
    %7102 = vmatpush1.msra.mxu0 0.0
    %7103 = vmatprep.subr.mxu0 0.0
    %7104 = vmatpush1.msra.mxu0 0.0
    %7105 = vmatprep.subr.mxu0 0.0
    %7106 = vmatpush1.msra.mxu0 0.0
    %7107 = vmatprep.subr.mxu0 0.0
    %7108 = vmatpush1.msra.mxu0 0.0
    %7109 = vmatprep.subr.mxu0 0.0
    %7110 = vmatpush1.msra.mxu0 0.0
    %7111 = vmatprep.subr.mxu0 0.0
    %7112 = vmatpush1.msra.mxu0 0.0
    %7113 = vmatprep.subr.mxu0 0.0
    %7114 = vmatpush1.msra.mxu0 0.0
    %7115 = vmatprep.subr.mxu0 0.0
    %7116 = vmatpush1.msra.mxu0 0.0
    %7117 = vmatprep.subr.mxu0 0.0
    %7118 = vmatpush1.msra.mxu0 0.0
    %7119 = vmatprep.subr.mxu0 0.0
    %7120 = vmatpush1.msra.mxu0 0.0
    %7121 = vmatprep.subr.mxu0 0.0
    %7122 = vmatpush1.msra.mxu0 0.0
    %7123 = vmatprep.subr.mxu0 0.0
    %7124 = vmatpush1.msra.mxu0 0.0
    %7125 = vmatprep.subr.mxu0 0.0
    %7126 = vmatpush1.msra.mxu0 0.0
    %7127 = vmatprep.mubr.f32.mxu0 0.0
    %7128 = vmatmul.mubr.f32.gmra.mrb[0].mxu0 %v7061
    %v7129 = vpop.f32.mrb[0].mxu0
    %v7130 = vadd.f32 0.0, %v7129
    %v7131 = vpop.f32.mrb[0].mxu0
    %7132 = vdwg.mxu0
    %v7135 = vunpack.c.l.s4 1966171168
    %v7136 = vunpack.c.0.s8 %v7135
    %v7137 = vlaneseq
    %v7138 = vshrl.u32 %v7137, 7
    %v7139 = vsub.s32 %v7136, %v7138
    %v7140 = vrot.slane %v7130, %v7139
    %v7141 = vcombine.high %v7140, %v7140
    %v7143 = vunpack.c.l.s4 1966171168
    %v7144 = vunpack.c.0.s8 %v7143
    %v7145 = vlaneseq
    %v7146 = vshrl.u32 %v7145, 7
    %v7147 = vsub.s32 %v7144, %v7146
    %v7148 = vrot.slane %v7140, %v7147
    %v7150 = vunpack.c.l.s4 1966171168
    %v7151 = vunpack.c.0.s8 %v7150
    %v7152 = vlaneseq
    %v7153 = vshrl.u32 %v7152, 7
    %v7154 = vsub.s32 %v7151, %v7153
    %v7155 = vrot.slane %v7141, %v7154
    %v7158 = vadd.f32 %v7049, %v7148
    %v7159 = vadd.f32 %v7051, %v7155
    %v7160 = vxor.u32 %v7158, 2147483648
    %v7161 = vxor.u32 %v7159, 2147483648
    %v7162 = vmul.f32 %v7160, 1.442695
    %v7163 = vpow.pop %v7162
    %v7164 = vmul.f32 %v7161, 1.442695
    %v7165 = vpow.pop %v7164
    %v7166 = vadd.f32 %v7163, 1.0
    %v7167 = vadd.f32 %v7165, 1.0
    %v7168 = vrcp.pop %v7166
    %v7169 = vmul.f32 1.0, %v7168
    %v7170 = vrcp.pop %v7167
    %v7171 = vmul.f32 1.0, %v7170
    %v7172 = vtanh.pop %v7158
    %v7173 = vtanh.pop %v7159
    %v7174 = vmul.f32 %v7169, %v6626
    %v7175 = vmul.f32 %v7171, %v6627
    %7178 = vrot.lane.b32.xlu0 %v7172, 64
    %v7179 = vpop.permute.xlu0 %7178
    %7180 = vrot.lane.b32.xlu0 %v7173, 64
    %v7181 = vpop.permute.xlu0 %7180
    %v7184 = vmul.f32 %v7169, %v7179
    %v7185 = vmul.f32 %v7171, %v7181
    %7188 = vrot.lane.b32.xlu0 %v7184, 32
    %v7189 = vpop.permute.xlu0 %7188
    %7190 = vrot.lane.b32.xlu0 %v7185, 32
    %v7191 = vpop.permute.xlu0 %7190
    %v7194 = vadd.f32 %v7174, %v7189
    %v7195 = vadd.f32 %v7175, %v7191
    %v7196 = vtanh.pop %v7194
    %v7197 = vtanh.pop %v7195
    %7200 = vrot.lane.b32.xlu0 %v7196, 64
    %v7201 = vpop.permute.xlu0 %7200
    %7202 = vrot.lane.b32.xlu0 %v7197, 64
    %v7203 = vpop.permute.xlu0 %7202
    %v7206 = vmul.f32 %v7169, %v7201
    %v7207 = vmul.f32 %v7171, %v7203
    %v7210 = vcombine.low %v7206, %v7207
    %v7212 = vunpack.c.l.s4 1966171168
    %v7213 = vunpack.c.0.s8 %v7212
    %v7214 = vlaneseq
    %v7215 = vshrl.u32 %v7214, 7
    %v7216 = vsub.s32 %v7213, %v7215
    %v7217 = vrot.slane %v7210, %v7216
    %v7219 = vunpack.c.l.s4 1966171168
    %v7220 = vunpack.c.0.s8 %v7219
    %v7221 = vlaneseq
    %v7222 = vshrl.u32 %v7221, 7
    %v7223 = vsub.s32 %v7220, %v7222
    %v7224 = vrot.slane %v7217, %v7223
    %7225 = vrot.lane.b32.xlu0 %v7224, 32
    %v7226 = vpop.permute.xlu0 %7225
    %7228 = vrot.lane.b32.xlu0 %v7054, 32
    %v7229 = vpop.permute.xlu0 %7228
    %v7231 = vsel %vm268, %v7226, %v7229
    %v7233 = vsel %vm3083, %v7231, 0
    %7235 = vmatprep.subr.mxu0 0.0
    %7236 = vmatpush1.msra.mxu0 %v2773
    %7237 = vmatprep.subr.mxu0 0.0
    %7238 = vmatpush1.msra.mxu0 %v2774
    %7239 = vmatprep.subr.mxu0 0.0
    %7240 = vmatpush1.msra.mxu0 %v2775
    %7241 = vmatprep.subr.mxu0 0.0
    %7242 = vmatpush1.msra.mxu0 %v2776
    %7243 = vmatprep.subr.mxu0 0.0
    %7244 = vmatpush1.msra.mxu0 %v2777
    %7245 = vmatprep.subr.mxu0 0.0
    %7246 = vmatpush1.msra.mxu0 %v2778
    %7247 = vmatprep.subr.mxu0 0.0
    %7248 = vmatpush1.msra.mxu0 %v2779
    %7249 = vmatprep.subr.mxu0 0.0
    %7250 = vmatpush1.msra.mxu0 %v2780
    %7251 = vmatprep.subr.mxu0 0.0
    %7252 = vmatpush1.msra.mxu0 0.0
    %7253 = vmatprep.subr.mxu0 0.0
    %7254 = vmatpush1.msra.mxu0 0.0
    %7255 = vmatprep.subr.mxu0 0.0
    %7256 = vmatpush1.msra.mxu0 0.0
    %7257 = vmatprep.subr.mxu0 0.0
    %7258 = vmatpush1.msra.mxu0 0.0
    %7259 = vmatprep.subr.mxu0 0.0
    %7260 = vmatpush1.msra.mxu0 0.0
    %7261 = vmatprep.subr.mxu0 0.0
    %7262 = vmatpush1.msra.mxu0 0.0
    %7263 = vmatprep.subr.mxu0 0.0
    %7264 = vmatpush1.msra.mxu0 0.0
    %7265 = vmatprep.subr.mxu0 0.0
    %7266 = vmatpush1.msra.mxu0 0.0
    %7267 = vmatprep.subr.mxu0 0.0
    %7268 = vmatpush1.msra.mxu0 0.0
    %7269 = vmatprep.subr.mxu0 0.0
    %7270 = vmatpush1.msra.mxu0 0.0
    %7271 = vmatprep.subr.mxu0 0.0
    %7272 = vmatpush1.msra.mxu0 0.0
    %7273 = vmatprep.subr.mxu0 0.0
    %7274 = vmatpush1.msra.mxu0 0.0
    %7275 = vmatprep.subr.mxu0 0.0
    %7276 = vmatpush1.msra.mxu0 0.0
    %7277 = vmatprep.subr.mxu0 0.0
    %7278 = vmatpush1.msra.mxu0 0.0
    %7279 = vmatprep.subr.mxu0 0.0
    %7280 = vmatpush1.msra.mxu0 0.0
    %7281 = vmatprep.subr.mxu0 0.0
    %7282 = vmatpush1.msra.mxu0 0.0
    %7283 = vmatprep.subr.mxu0 0.0
    %7284 = vmatpush1.msra.mxu0 0.0
    %7285 = vmatprep.subr.mxu0 0.0
    %7286 = vmatpush1.msra.mxu0 0.0
    %7287 = vmatprep.subr.mxu0 0.0
    %7288 = vmatpush1.msra.mxu0 0.0
    %7289 = vmatprep.subr.mxu0 0.0
    %7290 = vmatpush1.msra.mxu0 0.0
    %7291 = vmatprep.subr.mxu0 0.0
    %7292 = vmatpush1.msra.mxu0 0.0
    %7293 = vmatprep.subr.mxu0 0.0
    %7294 = vmatpush1.msra.mxu0 0.0
    %7295 = vmatprep.subr.mxu0 0.0
    %7296 = vmatpush1.msra.mxu0 0.0
    %7297 = vmatprep.subr.mxu0 0.0
    %7298 = vmatpush1.msra.mxu0 0.0
    %7299 = vmatprep.mubr.f32.mxu0 0.0
    %7300 = vmatmul.mubr.f32.gmra.mrb[0].mxu0 %v7233
    %v7301 = vpop.f32.mrb[0].mxu0
    %v7302 = vadd.f32 0.0, %v7301
    %v7303 = vpop.f32.mrb[0].mxu0
    %7304 = vdwg.mxu0
    %v7307 = vrot.slane %v7049, 1
    %v7308 = vrot.slane %v7051, 1
    %v7313 = vunpack.c.l.s4 1966171168
    %v7314 = vunpack.c.0.s8 %v7313
    %v7315 = vlaneseq
    %v7316 = vshrl.u32 %v7315, 7
    %v7317 = vsub.s32 %v7314, %v7316
    %v7318 = vrot.slane %v7302, %v7317
    %v7319 = vcombine.high %v7318, %v7318
    %v7321 = vunpack.c.l.s4 1966171168
    %v7322 = vunpack.c.0.s8 %v7321
    %v7323 = vlaneseq
    %v7324 = vshrl.u32 %v7323, 7
    %v7325 = vsub.s32 %v7322, %v7324
    %v7326 = vrot.slane %v7318, %v7325
    %v7328 = vunpack.c.l.s4 1966171168
    %v7329 = vunpack.c.0.s8 %v7328
    %v7330 = vlaneseq
    %v7331 = vshrl.u32 %v7330, 7
    %v7332 = vsub.s32 %v7329, %v7331
    %v7333 = vrot.slane %v7319, %v7332
    %v7336 = vadd.f32 %v7307, %v7326
    %v7337 = vadd.f32 %v7308, %v7333
    %7338 = vst [vmem:[#allocation19 + $0x7] sm:$0x1] %v7336
    %7339 = vst [vmem:[#allocation19 + $0xf] sm:$0x1] %v7337
    // Predicated region
    $region86: #{tpu_custom_call.1} parent=1 // pred_check
      _
    $region87: #{tpu_custom_call.1} parent=1 // pred_check_branch
      %7341 = sbr.rel (0) target = $region89
    $region88: #{tpu_custom_call.1} parent=1 // pred_region
      %s7343 = ssub.s32 256, 256
      %7344 = vsyncadd [#allocation7], %s7343
      %s7345 = sshll.u32 [#allocation19], 4
      %s7346 = int_to_ptr.vmem [resolvable:$true] %s7345
      %7351 = dma.vmem_to_hbm [thread:$0]  %s7346, 256, %s13, [#allocation7], 128, 128, 8
    $region89: #{tpu_custom_call.1} parent=1 // pred_fallthru
      _
    // Predicated region
    $region90: #{tpu_custom_call.1} parent=1 // pred_check
      _
    $region91: #{tpu_custom_call.1} parent=1 // pred_check_branch
      %7353 = sbr.rel (0) target = $region93
    $region92: #{tpu_custom_call.1} parent=1 // pred_region
      %7354 = dma.done [#allocation7], 256
    $region93: #{tpu_custom_call.1} parent=1 // pred_fallthru
      _
    %7355 = vsyncpa [#allocation6], 1
    %7356 = vsyncpa [#allocation9], 1
    %7357 = vsyncpa [#allocation12], 1
    %7358 = vsyncpa [#allocation15], 1
    %7359 = vsyncpa [#allocation18], 1
    %7360 = vsyncpa [#allocation7], 1

</llo_original>
